<compile_context>
chip_gen: v7x
topology: tpu7x:2x2x1
jax: 0.10.0
libtpu: 0.0.40
codegen_flags: <defaults>
</compile_context>

<pallas_src>
import functools

import jax
import jax.numpy as jnp
from jax.experimental import pallas as pl
from jax.experimental.pallas import tpu as pltpu


def _round_up(x, m):
    return (x + m - 1) // m * m


def _pick_tm(M, tm_max):
    """Largest row tile up to tm_max, but aim for >=2 grid steps when M is big
    enough so the 'parallel' axis can shard across v7x's two TensorCores."""
    if M <= 16:
        return _round_up(M, 8)
    return min(tm_max, _round_up((M + 1) // 2, 8))


# ----------------------------------------------------------------------------
# Pallas kernel: out = [relu]( A @ W + b ); A,W bf16 on the MXU, f32 accumulate.
# A tile: (TM, K) bf16, W: (K, N) bf16 (resident, constant index), b: (1, N) f32.
# ----------------------------------------------------------------------------
def _matmul_bias_kernel(a_ref, w_ref, b_ref, o_ref, *, relu):
    acc = jnp.dot(a_ref[...], w_ref[...], preferred_element_type=jnp.float32)
    acc = acc + b_ref[...]
    if relu:
        acc = jnp.maximum(acc, 0.0)
    o_ref[...] = acc.astype(o_ref.dtype)


def pallas_matmul_bias(a, w, b, *, relu=True, out_dtype=jnp.bfloat16, tm=1024):
    """a: (M, K) bf16 @ w: (K, N) bf16 + b: (N,) f32 -> (M, N) out_dtype.

    M-tiled 'parallel' grid; boundary block handled by Pallas partial-block
    masking (no full-matrix padding copies)."""
    M, K = a.shape
    Kw, N = w.shape
    assert K == Kw
    Mp = max(M, 8)
    if Mp != M:                      # tiny-batch guard only (<=7 rows of padding)
        a = jnp.pad(a, ((0, Mp - M), (0, 0)))
    tm_eff = _pick_tm(Mp, tm)
    grid = (Mp + tm_eff - 1) // tm_eff
    out = pl.pallas_call(
        functools.partial(_matmul_bias_kernel, relu=relu),
        out_shape=jax.ShapeDtypeStruct((Mp, N), out_dtype),
        grid=(grid,),
        in_specs=[
            pl.BlockSpec((tm_eff, K), lambda i: (i, 0)),
            pl.BlockSpec((K, N), lambda i: (0, 0)),
            pl.BlockSpec((1, N), lambda i: (0, 0)),
        ],
        out_specs=pl.BlockSpec((tm_eff, N), lambda i: (i, 0)),
        compiler_params=pltpu.CompilerParams(
            dimension_semantics=("parallel",),
            vmem_limit_bytes=32 * 1024 * 1024,
        ),
    )(a, w, b.reshape(1, N))
    return out[:M] if Mp != M else out


# ----------------------------------------------------------------------------
# Fused FC(3136->512)+ReLU + critic head (512->128 padded), one pallas_call.
# x is bf16; the 512-d feature tile stays in VMEM between the two matmuls.
# ----------------------------------------------------------------------------
def _fc_head_kernel(x_ref, w1_ref, b1_ref, w2_ref, b2_ref, feat_ref, val_ref):
    h = jnp.dot(x_ref[...], w1_ref[...], preferred_element_type=jnp.float32)
    h = jnp.maximum(h + b1_ref[...], 0.0)
    feat_ref[...] = h
    v = jnp.dot(h.astype(jnp.bfloat16), w2_ref[...],
                preferred_element_type=jnp.float32)
    val_ref[...] = v + b2_ref[...]


def fused_fc_critic(flat, fcw, fcb, cw, cb, *, tm=512):
    """flat: (M, 3136) bf16 -> (feat (M,512) f32, vals (M,128) f32)."""
    M, K = flat.shape
    N1 = fcw.shape[1]
    N2 = cw.shape[1]
    Mp = max(M, 8)
    if Mp != M:
        flat = jnp.pad(flat, ((0, Mp - M), (0, 0)))
    tm_eff = _pick_tm(Mp, tm)
    grid = (Mp + tm_eff - 1) // tm_eff
    feat, vals = pl.pallas_call(
        _fc_head_kernel,
        out_shape=(jax.ShapeDtypeStruct((Mp, N1), jnp.float32),
                   jax.ShapeDtypeStruct((Mp, N2), jnp.float32)),
        grid=(grid,),
        in_specs=[
            pl.BlockSpec((tm_eff, K), lambda i: (i, 0)),
            pl.BlockSpec((K, N1), lambda i: (0, 0)),
            pl.BlockSpec((1, N1), lambda i: (0, 0)),
            pl.BlockSpec((N1, N2), lambda i: (0, 0)),
            pl.BlockSpec((1, N2), lambda i: (0, 0)),
        ],
        out_specs=(pl.BlockSpec((tm_eff, N1), lambda i: (i, 0)),
                   pl.BlockSpec((tm_eff, N2), lambda i: (i, 0))),
        compiler_params=pltpu.CompilerParams(
            dimension_semantics=("parallel",),
            vmem_limit_bytes=32 * 1024 * 1024,
        ),
    )(flat, fcw, fcb.reshape(1, N1), cw, cb.reshape(1, N2))
    if Mp != M:
        return feat[:M], vals[:M]
    return feat, vals


# ----------------------------------------------------------------------------
# Conv2d (NHWC, valid padding) = im2col (XLA slice/concat glue, bf16) + Pallas
# matmul. Patch K-ordering is (KH, KW, C), matching the init-time weight reshape.
# When M % pack == 0 the columns are viewed as (M/pack, pack*K) and multiplied by
# the block-diagonal weight -> lane-dense (M/pack, 128) output slab.
# ----------------------------------------------------------------------------
def _im2col_nhwc(x, kh, kw, sh, sw):
    B, H, W, C = x.shape
    OH = (H - kh) // sh + 1
    OW = (W - kw) // sw + 1
    cols = jnp.concatenate(
        [x[:, i:i + sh * OH:sh, j:j + sw * OW:sw, :]
         for i in range(kh) for j in range(kw)],
        axis=-1)
    return cols.reshape(B * OH * OW, kh * kw * C), OH, OW


def conv2d_relu(x_nhwc, wk, b, kh, kw, stride, *, oc, pack):
    B = x_nhwc.shape[0]
    cols, OH, OW = _im2col_nhwc(x_nhwc, kh, kw, *stride)     # (M, K) bf16
    M, K = cols.shape
    if pack > 1 and M % pack == 0:
        a = cols.reshape(M // pack, pack * K)                # free row-major view
        out = pallas_matmul_bias(a, wk, b, relu=True, out_dtype=jnp.bfloat16)
    else:
        # Fallback: plain (K, OC) weight = top-left block of the block-diagonal.
        out = pallas_matmul_bias(cols, wk[:K, :oc], b[:oc], relu=True,
                                 out_dtype=jnp.bfloat16)
    return out.reshape(B, OH, OW, oc)


# ----------------------------------------------------------------------------
# Init: orthogonal layer_init (QR based) + init-time layout conversion.
# (Distributionally matches torch layer_init; won't match torch RNG bitwise.)
# ----------------------------------------------------------------------------
def _orthogonal(key, rows, cols, gain):
    big, small = max(rows, cols), min(rows, cols)
    mat = jax.random.normal(key, (big, small), jnp.float32)
    q, r = jnp.linalg.qr(mat)
    q = q * jnp.sign(jnp.diagonal(r))
    if rows < cols:
        q = q.T
    return gain * q[:rows, :cols]


def _conv_w_to_kernel(w_oihw, scale=1.0, pack=1):
    # torch (OC, C, KH, KW) -> (KH*KW*C, OC) for NHWC im2col, fold scale, then
    # block-diagonalize (kron with I_pack) so the matmul output is 128-lane dense.
    OC, C, KH, KW = w_oihw.shape
    w = jnp.transpose(w_oihw, (2, 3, 1, 0)).reshape(KH * KW * C, OC) * scale
    if pack > 1:
        w = jnp.kron(jnp.eye(pack, dtype=w.dtype), w)        # (pack*K, pack*OC)
    return w.astype(jnp.bfloat16)


def _fc_w_to_kernel(w_out_in):
    # torch Linear (512, 3136); columns indexed C-major (C=64, H=7, W=7).
    # Our flatten is NHWC (H, W, C) -> permute rows once, store (3136, 512) bf16.
    w = w_out_in.reshape(512, 64, 7, 7).transpose(0, 2, 3, 1).reshape(512, 3136)
    return w.T.astype(jnp.bfloat16)


def _head_w_to_kernel(w_out_in, pad_to=128):
    # torch (A, 512) -> (512, pad_to) zero-padded, bf16 (lane-dense output).
    A, D = w_out_in.shape
    w = jnp.pad(w_out_in.T, ((0, 0), (0, pad_to - A)))
    return w.astype(jnp.bfloat16)


def init_params(key, action_space):
    ks = jax.random.split(key, 5)
    g = 2.0 ** 0.5
    c1 = _orthogonal(ks[0], 32, 4 * 8 * 8, g).reshape(32, 4, 8, 8)
    c2 = _orthogonal(ks[1], 64, 32 * 4 * 4, g).reshape(64, 32, 4, 4)
    c3 = _orthogonal(ks[2], 64, 64 * 3 * 3, g).reshape(64, 64, 3, 3)
    fc = _orthogonal(ks[3], 512, 3136, g)                     # torch (out, in)
    cr = _orthogonal(ks[4], action_space, 512, 1.0)           # torch (out, in)
    head_pad = max(128, _round_up(action_space, 128))
    return {
        "c1w": _conv_w_to_kernel(c1, scale=1.0 / 255.0, pack=4),  # Scale folded in
        "c1b": jnp.zeros((32 * 4,), jnp.float32),
        "c2w": _conv_w_to_kernel(c2, pack=2),
        "c2b": jnp.zeros((64 * 2,), jnp.float32),
        "c3w": _conv_w_to_kernel(c3, pack=2),
        "c3b": jnp.zeros((64 * 2,), jnp.float32),
        "fcw": _fc_w_to_kernel(fc),                               # (3136, 512) bf16
        "fcb": jnp.zeros((512,), jnp.float32),
        "cw":  _head_w_to_kernel(cr, pad_to=head_pad),            # (512, 128) bf16
        "cb":  jnp.zeros((head_pad,), jnp.float32),
    }


# ----------------------------------------------------------------------------
# Critic forward: feat = self.network(x); values = self.critic(feat)
# ----------------------------------------------------------------------------
def critic_forward(params, x, action_space):
    # x: (B, 4, 84, 84) f32 raw pixels 0..255 (PyTorch NCHW layout).
    xh = jnp.transpose(x, (0, 2, 3, 1)).astype(jnp.bfloat16)              # NHWC, bf16
    h = conv2d_relu(xh, params["c1w"], params["c1b"], 8, 8, (4, 4),
                    oc=32, pack=4)                                         # (B,20,20,32)
    h = conv2d_relu(h, params["c2w"], params["c2b"], 4, 4, (2, 2),
                    oc=64, pack=2)                                         # (B,9,9,64)
    h = conv2d_relu(h, params["c3w"], params["c3b"], 3, 3, (1, 1),
                    oc=64, pack=2)                                         # (B,7,7,64)
    flat = h.reshape(h.shape[0], -1)                                       # (B,3136) bf16
    feat, vals_pad = fused_fc_critic(flat, params["fcw"], params["fcb"],
                                     params["cw"], params["cb"])
    return feat, vals_pad[:, :action_space]


critic_forward_jit = jax.jit(critic_forward, static_argnums=2)


if __name__ == "__main__":
    key = jax.random.PRNGKey(0)
    kp, kx = jax.random.split(key)

    ACTION_SPACE = 6
    B = 2
    params = init_params(kp, ACTION_SPACE)

    # Synthetic Atari-style frames: (B, 4, 84, 84), values in [0, 255).
    # (84x84 is implied by the module's Linear(3136, 512) = 64*7*7.)
    x = jax.random.uniform(kx, (B, 4, 84, 84), jnp.float32, 0.0, 255.0)

    feat, values = critic_forward_jit(params, x, ACTION_SPACE)
    jax.block_until_ready((feat, values))

    assert feat.shape == (B, 512)              # Critic.forward(x)
    assert values.shape == (B, ACTION_SPACE)   # Critic.get_values(x)
    assert bool(jnp.all(jnp.isfinite(feat))) and bool(jnp.all(jnp.isfinite(values)))
    print("KERNEL_OK")
</pallas_src>

<mosaic_0001>
module attributes {stable_mosaic.version = 11 : i64} {
  func.func @_matmul_bias_kernel(%arg0: i32, %arg1: memref<104x1024xbf16, #tpu.memory_space<vmem>>, %arg2: memref<1024x128xbf16, #tpu.memory_space<vmem>>, %arg3: memref<1x128xf32, #tpu.memory_space<vmem>>, %arg4: memref<104x128xbf16, #tpu.memory_space<vmem>>) attributes {dimension_semantics = [#tpu.dimension_semantics<parallel>], iteration_bounds = array<i64: 2>, scalar_prefetch = 0 : i64, scratch_operands = 0 : i64, tpu.core_type = #tpu.core_type<tc>, window_params = [{transform_indices = @transform_0, window_bounds = array<i64: 104, 1024>}, {pipeline_mode = #tpu.pipeline_mode<synchronous>, transform_indices = @transform_1, window_bounds = array<i64: 1024, 128>}, {pipeline_mode = #tpu.pipeline_mode<synchronous>, transform_indices = @transform_2, window_bounds = array<i64: 1, 128>}, {transform_indices = @transform_3, window_bounds = array<i64: 104, 128>}]} {
    %c0 = arith.constant 0 : index
    %c0_0 = arith.constant 0 : index
    %0 = vector.load %arg1[%c0, %c0_0] : memref<104x1024xbf16, #tpu.memory_space<vmem>>, vector<104x1024xbf16>
    %c0_1 = arith.constant 0 : index
    %c0_2 = arith.constant 0 : index
    %1 = vector.load %arg2[%c0_1, %c0_2] : memref<1024x128xbf16, #tpu.memory_space<vmem>>, vector<1024x128xbf16>
    %cst = arith.constant dense<0.000000e+00> : vector<104x128xf32>
    %2 = tpu.matmul %0, %1, %cst {dimension_numbers = #tpu.dot_dimension_numbers<[1], [0], [0], [1], [0, 0, 1, 1], [], []>} : vector<104x1024xbf16>, vector<1024x128xbf16>, vector<104x128xf32> -> vector<104x128xf32>
    %c0_3 = arith.constant 0 : index
    %c0_4 = arith.constant 0 : index
    %3 = vector.load %arg3[%c0_3, %c0_4] : memref<1x128xf32, #tpu.memory_space<vmem>>, vector<1x128xf32>
    %4 = vector.broadcast %3 : vector<1x128xf32> to vector<104x128xf32>
    %5 = arith.addf %2, %4 : vector<104x128xf32>
    %cst_5 = arith.constant 0.000000e+00 : f32
    %6 = vector.broadcast %cst_5 : f32 to vector<104x128xf32>
    %7 = arith.maximumf %5, %6 : vector<104x128xf32>
    %8 = arith.truncf %7 : vector<104x128xf32> to vector<104x128xbf16>
    %c0_6 = arith.constant 0 : index
    %c0_7 = arith.constant 0 : index
    %9 = vector.load %arg4[%c0_6, %c0_7] : memref<104x128xbf16, #tpu.memory_space<vmem>>, vector<104x128xbf16>
    tpu.vector_store %arg4[%c0_6, %c0_7], %8 {strides = array<i32>} : memref<104x128xbf16, #tpu.memory_space<vmem>>, vector<104x128xbf16>,
    return
  }
  func.func @transform_0(%arg0: i32) -> (i32, i32) {
    %c0_i32 = arith.constant 0 : i32
    %c0_i32_0 = arith.constant 0 : i32
    return %arg0, %c0_i32 : i32, i32
  }
  func.func @transform_1(%arg0: i32) -> (i32, i32) {
    %c0_i32 = arith.constant 0 : i32
    %c0_i32_0 = arith.constant 0 : i32
    %c0_i32_1 = arith.constant 0 : i32
    return %c0_i32, %c0_i32_0 : i32, i32
  }
  func.func @transform_2(%arg0: i32) -> (i32, i32) {
    %c0_i32 = arith.constant 0 : i32
    %c0_i32_0 = arith.constant 0 : i32
    %c0_i32_1 = arith.constant 0 : i32
    return %c0_i32, %c0_i32_0 : i32, i32
  }
  func.func @transform_3(%arg0: i32) -> (i32, i32) {
    %c0_i32 = arith.constant 0 : i32
    %c0_i32_0 = arith.constant 0 : i32
    return %arg0, %c0_i32 : i32, i32
  }
}

module attributes {stable_mosaic.version = 11 : i64} {
  func.func @_matmul_bias_kernel(%arg0: i32, %arg1: memref<48x1024xbf16, #tpu.memory_space<vmem>>, %arg2: memref<1024x128xbf16, #tpu.memory_space<vmem>>, %arg3: memref<1x128xf32, #tpu.memory_space<vmem>>, %arg4: memref<48x128xbf16, #tpu.memory_space<vmem>>) attributes {dimension_semantics = [#tpu.dimension_semantics<parallel>], iteration_bounds = array<i64: 2>, scalar_prefetch = 0 : i64, scratch_operands = 0 : i64, tpu.core_type = #tpu.core_type<tc>, window_params = [{transform_indices = @transform_0, window_bounds = array<i64: 48, 1024>}, {pipeline_mode = #tpu.pipeline_mode<synchronous>, transform_indices = @transform_1, window_bounds = array<i64: 1024, 128>}, {pipeline_mode = #tpu.pipeline_mode<synchronous>, transform_indices = @transform_2, window_bounds = array<i64: 1, 128>}, {transform_indices = @transform_3, window_bounds = array<i64: 48, 128>}]} {
    %c0 = arith.constant 0 : index
    %c0_0 = arith.constant 0 : index
    %0 = vector.load %arg1[%c0, %c0_0] : memref<48x1024xbf16, #tpu.memory_space<vmem>>, vector<48x1024xbf16>
    %c0_1 = arith.constant 0 : index
    %c0_2 = arith.constant 0 : index
    %1 = vector.load %arg2[%c0_1, %c0_2] : memref<1024x128xbf16, #tpu.memory_space<vmem>>, vector<1024x128xbf16>
    %cst = arith.constant dense<0.000000e+00> : vector<48x128xf32>
    %2 = tpu.matmul %0, %1, %cst {dimension_numbers = #tpu.dot_dimension_numbers<[1], [0], [0], [1], [0, 0, 1, 1], [], []>} : vector<48x1024xbf16>, vector<1024x128xbf16>, vector<48x128xf32> -> vector<48x128xf32>
    %c0_3 = arith.constant 0 : index
    %c0_4 = arith.constant 0 : index
    %3 = vector.load %arg3[%c0_3, %c0_4] : memref<1x128xf32, #tpu.memory_space<vmem>>, vector<1x128xf32>
    %4 = vector.broadcast %3 : vector<1x128xf32> to vector<48x128xf32>
    %5 = arith.addf %2, %4 : vector<48x128xf32>
    %cst_5 = arith.constant 0.000000e+00 : f32
    %6 = vector.broadcast %cst_5 : f32 to vector<48x128xf32>
    %7 = arith.maximumf %5, %6 : vector<48x128xf32>
    %8 = arith.truncf %7 : vector<48x128xf32> to vector<48x128xbf16>
    %c0_6 = arith.constant 0 : index
    %c0_7 = arith.constant 0 : index
    %9 = vector.load %arg4[%c0_6, %c0_7] : memref<48x128xbf16, #tpu.memory_space<vmem>>, vector<48x128xbf16>
    tpu.vector_store %arg4[%c0_6, %c0_7], %8 {strides = array<i32>} : memref<48x128xbf16, #tpu.memory_space<vmem>>, vector<48x128xbf16>,
    return
  }
  func.func @transform_0(%arg0: i32) -> (i32, i32) {
    %c0_i32 = arith.constant 0 : i32
    %c0_i32_0 = arith.constant 0 : i32
    return %arg0, %c0_i32 : i32, i32
  }
  func.func @transform_1(%arg0: i32) -> (i32, i32) {
    %c0_i32 = arith.constant 0 : i32
    %c0_i32_0 = arith.constant 0 : i32
    %c0_i32_1 = arith.constant 0 : i32
    return %c0_i32, %c0_i32_0 : i32, i32
  }
  func.func @transform_2(%arg0: i32) -> (i32, i32) {
    %c0_i32 = arith.constant 0 : i32
    %c0_i32_0 = arith.constant 0 : i32
    %c0_i32_1 = arith.constant 0 : i32
    return %c0_i32, %c0_i32_0 : i32, i32
  }
  func.func @transform_3(%arg0: i32) -> (i32, i32) {
    %c0_i32 = arith.constant 0 : i32
    %c0_i32_0 = arith.constant 0 : i32
    return %arg0, %c0_i32 : i32, i32
  }
}

module attributes {stable_mosaic.version = 11 : i64} {
  func.func @_matmul_bias_kernel(%arg0: i32, %arg1: memref<32x1152xbf16, #tpu.memory_space<vmem>>, %arg2: memref<1152x128xbf16, #tpu.memory_space<vmem>>, %arg3: memref<1x128xf32, #tpu.memory_space<vmem>>, %arg4: memref<32x128xbf16, #tpu.memory_space<vmem>>) attributes {dimension_semantics = [#tpu.dimension_semantics<parallel>], iteration_bounds = array<i64: 2>, scalar_prefetch = 0 : i64, scratch_operands = 0 : i64, tpu.core_type = #tpu.core_type<tc>, window_params = [{transform_indices = @transform_0, window_bounds = array<i64: 32, 1152>}, {pipeline_mode = #tpu.pipeline_mode<synchronous>, transform_indices = @transform_1, window_bounds = array<i64: 1152, 128>}, {pipeline_mode = #tpu.pipeline_mode<synchronous>, transform_indices = @transform_2, window_bounds = array<i64: 1, 128>}, {transform_indices = @transform_3, window_bounds = array<i64: 32, 128>}]} {
    %c0 = arith.constant 0 : index
    %c0_0 = arith.constant 0 : index
    %0 = vector.load %arg1[%c0, %c0_0] : memref<32x1152xbf16, #tpu.memory_space<vmem>>, vector<32x1152xbf16>
    %c0_1 = arith.constant 0 : index
    %c0_2 = arith.constant 0 : index
    %1 = vector.load %arg2[%c0_1, %c0_2] : memref<1152x128xbf16, #tpu.memory_space<vmem>>, vector<1152x128xbf16>
    %cst = arith.constant dense<0.000000e+00> : vector<32x128xf32>
    %2 = tpu.matmul %0, %1, %cst {dimension_numbers = #tpu.dot_dimension_numbers<[1], [0], [0], [1], [0, 0, 1, 1], [], []>} : vector<32x1152xbf16>, vector<1152x128xbf16>, vector<32x128xf32> -> vector<32x128xf32>
    %c0_3 = arith.constant 0 : index
    %c0_4 = arith.constant 0 : index
    %3 = vector.load %arg3[%c0_3, %c0_4] : memref<1x128xf32, #tpu.memory_space<vmem>>, vector<1x128xf32>
    %4 = vector.broadcast %3 : vector<1x128xf32> to vector<32x128xf32>
    %5 = arith.addf %2, %4 : vector<32x128xf32>
    %cst_5 = arith.constant 0.000000e+00 : f32
    %6 = vector.broadcast %cst_5 : f32 to vector<32x128xf32>
    %7 = arith.maximumf %5, %6 : vector<32x128xf32>
    %8 = arith.truncf %7 : vector<32x128xf32> to vector<32x128xbf16>
    %c0_6 = arith.constant 0 : index
    %c0_7 = arith.constant 0 : index
    %9 = vector.load %arg4[%c0_6, %c0_7] : memref<32x128xbf16, #tpu.memory_space<vmem>>, vector<32x128xbf16>
    tpu.vector_store %arg4[%c0_6, %c0_7], %8 {strides = array<i32>} : memref<32x128xbf16, #tpu.memory_space<vmem>>, vector<32x128xbf16>,
    return
  }
  func.func @transform_0(%arg0: i32) -> (i32, i32) {
    %c0_i32 = arith.constant 0 : i32
    %c0_i32_0 = arith.constant 0 : i32
    return %arg0, %c0_i32 : i32, i32
  }
  func.func @transform_1(%arg0: i32) -> (i32, i32) {
    %c0_i32 = arith.constant 0 : i32
    %c0_i32_0 = arith.constant 0 : i32
    %c0_i32_1 = arith.constant 0 : i32
    return %c0_i32, %c0_i32_0 : i32, i32
  }
  func.func @transform_2(%arg0: i32) -> (i32, i32) {
    %c0_i32 = arith.constant 0 : i32
    %c0_i32_0 = arith.constant 0 : i32
    %c0_i32_1 = arith.constant 0 : i32
    return %c0_i32, %c0_i32_0 : i32, i32
  }
  func.func @transform_3(%arg0: i32) -> (i32, i32) {
    %c0_i32 = arith.constant 0 : i32
    %c0_i32_0 = arith.constant 0 : i32
    return %arg0, %c0_i32 : i32, i32
  }
}

module attributes {stable_mosaic.version = 11 : i64} {
  func.func @_fc_head_kernel(%arg0: i32, %arg1: memref<8x3136xbf16, #tpu.memory_space<vmem>>, %arg2: memref<3136x512xbf16, #tpu.memory_space<vmem>>, %arg3: memref<1x512xf32, #tpu.memory_space<vmem>>, %arg4: memref<512x128xbf16, #tpu.memory_space<vmem>>, %arg5: memref<1x128xf32, #tpu.memory_space<vmem>>, %arg6: memref<8x512xf32, #tpu.memory_space<vmem>>, %arg7: memref<8x128xf32, #tpu.memory_space<vmem>>) attributes {dimension_semantics = [#tpu.dimension_semantics<parallel>], iteration_bounds = array<i64: 1>, scalar_prefetch = 0 : i64, scratch_operands = 0 : i64, tpu.core_type = #tpu.core_type<tc>, window_params = [{transform_indices = @transform_0, window_bounds = array<i64: 8, 3136>}, {pipeline_mode = #tpu.pipeline_mode<synchronous>, transform_indices = @transform_1, window_bounds = array<i64: 3136, 512>}, {pipeline_mode = #tpu.pipeline_mode<synchronous>, transform_indices = @transform_2, window_bounds = array<i64: 1, 512>}, {pipeline_mode = #tpu.pipeline_mode<synchronous>, transform_indices = @transform_3, window_bounds = array<i64: 512, 128>}, {pipeline_mode = #tpu.pipeline_mode<synchronous>, transform_indices = @transform_4, window_bounds = array<i64: 1, 128>}, {transform_indices = @transform_5, window_bounds = array<i64: 8, 512>}, {transform_indices = @transform_6, window_bounds = array<i64: 8, 128>}]} {
    %c0 = arith.constant 0 : index
    %c0_0 = arith.constant 0 : index
    %0 = vector.load %arg1[%c0, %c0_0] : memref<8x3136xbf16, #tpu.memory_space<vmem>>, vector<8x3136xbf16>
    %c0_1 = arith.constant 0 : index
    %c0_2 = arith.constant 0 : index
    %1 = vector.load %arg2[%c0_1, %c0_2] : memref<3136x512xbf16, #tpu.memory_space<vmem>>, vector<3136x512xbf16>
    %cst = arith.constant dense<0.000000e+00> : vector<8x512xf32>
    %2 = tpu.matmul %0, %1, %cst {dimension_numbers = #tpu.dot_dimension_numbers<[1], [0], [0], [1], [0, 0, 1, 1], [], []>} : vector<8x3136xbf16>, vector<3136x512xbf16>, vector<8x512xf32> -> vector<8x512xf32>
    %c0_3 = arith.constant 0 : index
    %c0_4 = arith.constant 0 : index
    %3 = vector.load %arg3[%c0_3, %c0_4] : memref<1x512xf32, #tpu.memory_space<vmem>>, vector<1x512xf32>
    %4 = vector.broadcast %3 : vector<1x512xf32> to vector<8x512xf32>
    %5 = arith.addf %2, %4 : vector<8x512xf32>
    %cst_5 = arith.constant 0.000000e+00 : f32
    %6 = vector.broadcast %cst_5 : f32 to vector<8x512xf32>
    %7 = arith.maximumf %5, %6 : vector<8x512xf32>
    %c0_6 = arith.constant 0 : index
    %c0_7 = arith.constant 0 : index
    %8 = vector.load %arg6[%c0_6, %c0_7] : memref<8x512xf32, #tpu.memory_space<vmem>>, vector<8x512xf32>
    tpu.vector_store %arg6[%c0_6, %c0_7], %7 {strides = array<i32>} : memref<8x512xf32, #tpu.memory_space<vmem>>, vector<8x512xf32>,
    %9 = arith.truncf %7 : vector<8x512xf32> to vector<8x512xbf16>
    %c0_8 = arith.constant 0 : index
    %c0_9 = arith.constant 0 : index
    %10 = vector.load %arg4[%c0_8, %c0_9] : memref<512x128xbf16, #tpu.memory_space<vmem>>, vector<512x128xbf16>
    %cst_10 = arith.constant dense<0.000000e+00> : vector<8x128xf32>
    %11 = tpu.matmul %9, %10, %cst_10 {dimension_numbers = #tpu.dot_dimension_numbers<[1], [0], [0], [1], [0, 0, 1, 1], [], []>} : vector<8x512xbf16>, vector<512x128xbf16>, vector<8x128xf32> -> vector<8x128xf32>
    %c0_11 = arith.constant 0 : index
    %c0_12 = arith.constant 0 : index
    %12 = vector.load %arg5[%c0_11, %c0_12] : memref<1x128xf32, #tpu.memory_space<vmem>>, vector<1x128xf32>
    %13 = vector.broadcast %12 : vector<1x128xf32> to vector<8x128xf32>
    %14 = arith.addf %11, %13 : vector<8x128xf32>
    %c0_13 = arith.constant 0 : index
    %c0_14 = arith.constant 0 : index
    %15 = vector.load %arg7[%c0_13, %c0_14] : memref<8x128xf32, #tpu.memory_space<vmem>>, vector<8x128xf32>
    tpu.vector_store %arg7[%c0_13, %c0_14], %14 {strides = array<i32>} : memref<8x128xf32, #tpu.memory_space<vmem>>, vector<8x128xf32>,
    return
  }
  func.func @transform_0(%arg0: i32) -> (i32, i32) {
    %c0_i32 = arith.constant 0 : i32
    %c0_i32_0 = arith.constant 0 : i32
    return %arg0, %c0_i32 : i32, i32
  }
  func.func @transform_1(%arg0: i32) -> (i32, i32) {
    %c0_i32 = arith.constant 0 : i32
    %c0_i32_0 = arith.constant 0 : i32
    %c0_i32_1 = arith.constant 0 : i32
    return %c0_i32, %c0_i32_0 : i32, i32
  }
  func.func @transform_2(%arg0: i32) -> (i32, i32) {
    %c0_i32 = arith.constant 0 : i32
    %c0_i32_0 = arith.constant 0 : i32
    %c0_i32_1 = arith.constant 0 : i32
    return %c0_i32, %c0_i32_0 : i32, i32
  }
  func.func @transform_3(%arg0: i32) -> (i32, i32) {
    %c0_i32 = arith.constant 0 : i32
    %c0_i32_0 = arith.constant 0 : i32
    %c0_i32_1 = arith.constant 0 : i32
    return %c0_i32, %c0_i32_0 : i32, i32
  }
  func.func @transform_4(%arg0: i32) -> (i32, i32) {
    %c0_i32 = arith.constant 0 : i32
    %c0_i32_0 = arith.constant 0 : i32
    %c0_i32_1 = arith.constant 0 : i32
    return %c0_i32, %c0_i32_0 : i32, i32
  }
  func.func @transform_5(%arg0: i32) -> (i32, i32) {
    %c0_i32 = arith.constant 0 : i32
    %c0_i32_0 = arith.constant 0 : i32
    return %arg0, %c0_i32 : i32, i32
  }
  func.func @transform_6(%arg0: i32) -> (i32, i32) {
    %c0_i32 = arith.constant 0 : i32
    %c0_i32_0 = arith.constant 0 : i32
    return %arg0, %c0_i32 : i32, i32
  }
}

</mosaic_0001>

<llo_original>
// kernel: critic_forward.4
$region0: #{critic_forward.4}
  #allocation0 [shape = 'u32[]', space=smem, size = 0x4, offset = 0x4, fixed_abs, tag = 'smem constant byte address 0x4 - core index']
  #allocation1 [shape = 'u32[144,128]{1,0:T(1,128)}', space=vmem, size = 0x12000, scoped, tag = 'internal scratch']
  %s0 = inlined_call_operand.vmem [shape: bf16[200,1024], index: 0, kind: input, shape index: {}]
  %s1 = inlined_call_operand.vmem [shape: bf16[1024,128], index: 1, kind: input, shape index: {}]
  %s2 = inlined_call_operand.vmem [shape: f32[1,128], index: 2, kind: input, shape index: {}]
  %s3 = inlined_call_operand.vmem [shape: bf16[200,128], index: 3, kind: output, shape index: {}]
  %s4 = sld [smem:[#allocation0]]
  $region89: #{critic_forward.4} parent=0
    _
  %s6 = ssub.s32 1, %s4
  %s7 = scalar_select 0, %s6, %s4
  $region1: #{critic_forward.4} parent=0
    #allocation2 [shape = 'u8[53248]{0}', space=vmem, size = 0xd000, scoped, tag = 'output window, operand 0']
    loop: start=0, step=1, limit=4
    $region2: #{critic_forward.4} parent=1 // loop_pre_header
      _
    $region3: #{critic_forward.4} parent=1 // loop_header
      %s9 = sphi 0, %s13
      %p10 = scmp.ge.s32.totalorder %s9, 4
      %s19 = sphi 0, %s21
      %s22 = sphi 0, %s19
      %s23 = sphi 0, %s22
      %s39 = sphi 0, %s23
      %s43 = sphi 0, %s43
      %s45 = sphi 0, %s43
      %s46 = sphi 0, %s45
      %s60 = sphi 0, %s46
      %s64 = sphi 0, %s64
      %s66 = sphi 0, %s64
      %s67 = sphi 0, %s66
      %s81 = sphi 0, %s67
      %s87 = sphi 0, %s89
      %s90 = sphi 0, %s87
      %s91 = sphi 0, %s90
      %s107 = sphi 0, %s91
    $region4: #{critic_forward.4} parent=1 // loop_header_branch
      %12 = sbr.rel (%p10) target = $region8
    $region5: #{critic_forward.4} parent=1 // loop_body
      %s14 = ssub.s32 %s9, 1
      %s15 = ssub.s32 %s9, 2
      %s16 = sadd.s32 %s9, 1
      %s17 = ssub.s32 %s9, %s16
      %p18 = scmp.eq.s32.totalorder %s17, 0
      %s20 = sadd.s32 %s19, 1
      %s21 = scalar_select %p18, %s19, %s20
      %p24 = pneg %p18
      %p25 = scmp.eq.s32.totalorder %s9, 1
      %p26 = por %p24, %p25
      %p27 = scmp.ne.s32.totalorder %s19, %s22
      %p28 = scmp.eq.s32.totalorder %s9, 0
      %p29 = por %p27, %p28
      %p30 = scmp.ne.s32.totalorder %s19, %s22
      %p31 = scmp.eq.s32.totalorder %s14, 1
      %p32 = por %p30, %p31
      %p33 = scmp.ne.s32.totalorder %s22, %s23
      %p34 = scmp.eq.s32.totalorder %s14, 0
      %p35 = por %p33, %p34
      %p36 = scmp.ne.s32.totalorder %s22, %s23
      %p37 = scmp.eq.s32.totalorder %s15, 1
      %p38 = por %p36, %p37
      %p40 = scmp.ne.s32.totalorder %s23, %s39
      %p41 = scmp.eq.s32.totalorder %s15, 0
      %p42 = por %p40, %p41
      %s44 = sadd.s32 %s43, 1
      %p47 = scmp.eq.s32.totalorder %s9, 1
      %p48 = scmp.ne.s32.totalorder %s43, %s45
      %p49 = scmp.eq.s32.totalorder %s9, 0
      %p50 = por %p48, %p49
      %p51 = scmp.ne.s32.totalorder %s43, %s45
      %p52 = scmp.eq.s32.totalorder %s14, 1
      %p53 = por %p51, %p52
      %p54 = scmp.ne.s32.totalorder %s45, %s46
      %p55 = scmp.eq.s32.totalorder %s14, 0
      %p56 = por %p54, %p55
      %p57 = scmp.ne.s32.totalorder %s45, %s46
      %p58 = scmp.eq.s32.totalorder %s15, 1
      %p59 = por %p57, %p58
      %p61 = scmp.ne.s32.totalorder %s46, %s60
      %p62 = scmp.eq.s32.totalorder %s15, 0
      %p63 = por %p61, %p62
      %s65 = sadd.s32 %s64, 1
      %p68 = scmp.eq.s32.totalorder %s9, 1
      %p69 = scmp.ne.s32.totalorder %s64, %s66
      %p70 = scmp.eq.s32.totalorder %s9, 0
      %p71 = por %p69, %p70
      %p72 = scmp.ne.s32.totalorder %s64, %s66
      %p73 = scmp.eq.s32.totalorder %s14, 1
      %p74 = por %p72, %p73
      %p75 = scmp.ne.s32.totalorder %s66, %s67
      %p76 = scmp.eq.s32.totalorder %s14, 0
      %p77 = por %p75, %p76
      %p78 = scmp.ne.s32.totalorder %s66, %s67
      %p79 = scmp.eq.s32.totalorder %s15, 1
      %p80 = por %p78, %p79
      %p82 = scmp.ne.s32.totalorder %s67, %s81
      %p83 = scmp.eq.s32.totalorder %s15, 0
      %p84 = por %p82, %p83
      %s85 = ssub.s32 %s9, %s16
      %p86 = scmp.eq.s32.totalorder %s85, 0
      %s88 = sadd.s32 %s87, 1
      %s89 = scalar_select %p86, %s87, %s88
      %p92 = pneg %p86
      %p93 = scmp.eq.s32.totalorder %s9, 1
      %p94 = por %p92, %p93
      %p95 = scmp.ne.s32.totalorder %s87, %s90
      %p96 = scmp.eq.s32.totalorder %s9, 0
      %p97 = por %p95, %p96
      %p98 = scmp.ne.s32.totalorder %s87, %s90
      %p99 = scmp.eq.s32.totalorder %s14, 1
      %p100 = por %p98, %p99
      %p101 = scmp.ne.s32.totalorder %s90, %s91
      %p102 = scmp.eq.s32.totalorder %s14, 0
      %p103 = por %p101, %p102
      %p104 = scmp.ne.s32.totalorder %s90, %s91
      %p105 = scmp.eq.s32.totalorder %s15, 1
      %p106 = por %p104, %p105
      %p108 = scmp.ne.s32.totalorder %s91, %s107
      %p109 = scmp.eq.s32.totalorder %s15, 0
      %p110 = por %p108, %p109
      %p111 = scmp.le.s32.totalorder 1, %s9
      %p112 = scmp.lt.s32.totalorder %s9, 3
      %p113 = pnand %p111, %p112
      %p114 = pneg %p113
      // Predicated region
      $region9: #{critic_forward.4} parent=5 // pred_check
        _
      $region10: #{critic_forward.4} parent=5 // pred_check_branch
        %116 = sbr.rel (%p113) target = $region12
      $region11: #{critic_forward.4} parent=5 // pred_region
        %s117 = ssub.s32 %s9, 1
        // Predicated region
        $region13: #{critic_forward.4} parent=11 // pred_check
          %p118 = pneg %p56
        $region14: #{critic_forward.4} parent=11 // pred_check_branch
          %120 = sbr.rel (%p118) target = $region16
        $region15: #{critic_forward.4} parent=11 // pred_region
          _
        $region16: #{critic_forward.4} parent=11 // pred_fallthru
          _
        // Predicated region
        $region17: #{critic_forward.4} parent=11 // pred_check
          %p121 = pneg %p77
        $region18: #{critic_forward.4} parent=11 // pred_check_branch
          %123 = sbr.rel (%p121) target = $region20
        $region19: #{critic_forward.4} parent=11 // pred_region
          _
        $region20: #{critic_forward.4} parent=11 // pred_fallthru
          _
      $region12: #{critic_forward.4} parent=5 // pred_fallthru
        _
      %p124 = scmp.lt.s32.totalorder %s9, 2
      // Predicated region
      $region21: #{critic_forward.4} parent=5 // pred_check
        %p125 = pneg %p124
      $region22: #{critic_forward.4} parent=5 // pred_check_branch
        %127 = sbr.rel (%p125) target = $region24
      $region23: #{critic_forward.4} parent=5 // pred_region
        // Predicated region
        $region25: #{critic_forward.4} parent=23 // pred_check
          %p128 = pneg %p29
        $region26: #{critic_forward.4} parent=23 // pred_check_branch
          %130 = sbr.rel (%p128) target = $region28
        $region27: #{critic_forward.4} parent=23 // pred_region
          %s131 = smul.u32 13, %s9
          %s132 = ssub.s32 25, %s131
          %p133 = scmp.lt.s32.totalorder %s132, 13
          %s134 = scalar_select %p133, %s132, 13
          %s135 = smul.u32 64, %s134
          %s136 = smul.u32 %s135, 8
          %p137 = scmp.lt.s32.totalorder %s131, 24
          %s138 = scalar_select %p137, %s131, 24
          %s139 = smul.addr %s138, 8
          %s140 = smul.addr %s139, 4
          %s141 = scalar_lea.vmem %s0, %s140
          %s142 = smul.u32 13, %s9
          %s143 = ssub.s32 25, %s142
          %p144 = scmp.lt.s32.totalorder %s143, 13
          %s145 = scalar_select %p144, %s143, 13
          %s146 = smul.u32 64, %s145
          %s147 = smul.u32 %s146, 8
        $region28: #{critic_forward.4} parent=23 // pred_fallthru
          _
      $region24: #{critic_forward.4} parent=5 // pred_fallthru
        _
      %p148 = scmp.le.s32.totalorder 1, %s9
      %p149 = scmp.lt.s32.totalorder %s9, 3
      %p150 = pnand %p148, %p149
      %p151 = pneg %p150
      // Predicated region
      $region29: #{critic_forward.4} parent=5 // pred_check
        _
      $region30: #{critic_forward.4} parent=5 // pred_check_branch
        %153 = sbr.rel (%p150) target = $region32
      $region31: #{critic_forward.4} parent=5 // pred_region
        %s154 = ssub.s32 %s9, 1
        %s155 = smul.u32 13, %s14
        %s156 = ssub.s32 25, %s155
        %p157 = scmp.lt.s32.totalorder %s156, 13
        %s158 = scalar_select %p157, %s156, 13
        %s159 = smul.u32 64, %s158
        %s160 = smul.u32 %s159, 8
        %p161 = scmp.lt.s32.totalorder %s155, 24
        %s162 = scalar_select %p161, %s155, 24
        %s163 = smul.addr %s162, 8
        %s164 = smul.addr %s163, 4
        %s165 = scalar_lea.vmem %s0, %s164
        %p166 = pneg %p35
        %p167 = pneg %p32
        %p168 = pneg %p56
        %p169 = pneg %p53
        %p170 = pneg %p77
        %p171 = pneg %p74
        %p172 = pneg %p103
        %p173 = pneg %p100
        %s174 = sand.u32 %s90, 1
        %s175 = sand.u32 %s90, 1
        %s176 = smul.addr %s175, 52
        %s177 = scalar_lea.vmem [#allocation2], %s176
        %s178 = smul.u32 13, %s14
        %s179 = ssub.s32 25, %s178
        %p180 = scmp.lt.s32.totalorder %s179, 13
        %s181 = scalar_select %p180, %s179, 13
        %s182 = smul.u32 64, %s181
        %s183 = smul.u32 %s182, 8
        %p184 = scmp.lt.s32.totalorder %s178, 24
        %s185 = scalar_select %p184, %s178, 24
        %s186 = smul.addr %s185, 8
        %s187 = smul.addr %s186, 4
        %s188 = scalar_lea.vmem %s0, %s187
        %s189 = smul.u32 13, %s14
        %s190 = ssub.s32 25, %s189
        %p191 = scmp.lt.s32.totalorder %s190, 13
        %s192 = scalar_select %p191, %s190, 13
        %s193 = smul.u32 64, %s192
        %s194 = smul.u32 %s193, 8
        %s195 = smul.u32 13, %s14
        %s196 = ssub.s32 25, %s195
        %p197 = scmp.lt.s32.totalorder %s196, 13
        %s198 = scalar_select %p197, %s196, 13
        %s199 = smul.u32 64, %s198
        %v201 = vld [vmem:[%s188] sm:$0xff]
        %v202 = vld [vmem:[%s188 + $0x8] sm:$0xff]
        %v203 = vld [vmem:[%s188 + $0x10] sm:$0xff]
        %v204 = vld [vmem:[%s188 + $0x18] sm:$0xff]
        %v205 = vld [vmem:[%s188 + $0x20] sm:$0xff]
        %v206 = vld [vmem:[%s188 + $0x28] sm:$0xff]
        %v207 = vld [vmem:[%s188 + $0x30] sm:$0xff]
        %v208 = vld [vmem:[%s188 + $0x38] sm:$0xff]
        %v209 = vld [vmem:[%s188 + $0x40] sm:$0xff]
        %v210 = vld [vmem:[%s188 + $0x48] sm:$0xff]
        %v211 = vld [vmem:[%s188 + $0x50] sm:$0xff]
        %v212 = vld [vmem:[%s188 + $0x58] sm:$0xff]
        %v213 = vld [vmem:[%s188 + $0x60] sm:$0xff]
        %v214 = vld [vmem:[%s188 + $0x68] sm:$0xff]
        %v215 = vld [vmem:[%s188 + $0x70] sm:$0xff]
        %v216 = vld [vmem:[%s188 + $0x78] sm:$0xff]
        %v217 = vld [vmem:[%s188 + $0x80] sm:$0xff]
        %v218 = vld [vmem:[%s188 + $0x88] sm:$0xff]
        %v219 = vld [vmem:[%s188 + $0x90] sm:$0xff]
        %v220 = vld [vmem:[%s188 + $0x98] sm:$0xff]
        %v221 = vld [vmem:[%s188 + $0xa0] sm:$0xff]
        %v222 = vld [vmem:[%s188 + $0xa8] sm:$0xff]
        %v223 = vld [vmem:[%s188 + $0xb0] sm:$0xff]
        %v224 = vld [vmem:[%s188 + $0xb8] sm:$0xff]
        %v225 = vld [vmem:[%s188 + $0xc0] sm:$0xff]
        %v226 = vld [vmem:[%s188 + $0xc8] sm:$0xff]
        %v227 = vld [vmem:[%s188 + $0xd0] sm:$0xff]
        %v228 = vld [vmem:[%s188 + $0xd8] sm:$0xff]
        %v229 = vld [vmem:[%s188 + $0xe0] sm:$0xff]
        %v230 = vld [vmem:[%s188 + $0xe8] sm:$0xff]
        %v231 = vld [vmem:[%s188 + $0xf0] sm:$0xff]
        %v232 = vld [vmem:[%s188 + $0xf8] sm:$0xff]
        %v233 = vld [vmem:[%s188 + $0x100] sm:$0xff]
        %v234 = vld [vmem:[%s188 + $0x108] sm:$0xff]
        %v235 = vld [vmem:[%s188 + $0x110] sm:$0xff]
        %v236 = vld [vmem:[%s188 + $0x118] sm:$0xff]
        %v237 = vld [vmem:[%s188 + $0x120] sm:$0xff]
        %v238 = vld [vmem:[%s188 + $0x128] sm:$0xff]
        %v239 = vld [vmem:[%s188 + $0x130] sm:$0xff]
        %v240 = vld [vmem:[%s188 + $0x138] sm:$0xff]
        %v241 = vld [vmem:[%s188 + $0x140] sm:$0xff]
        %v242 = vld [vmem:[%s188 + $0x148] sm:$0xff]
        %v243 = vld [vmem:[%s188 + $0x150] sm:$0xff]
        %v244 = vld [vmem:[%s188 + $0x158] sm:$0xff]
        %v245 = vld [vmem:[%s188 + $0x160] sm:$0xff]
        %v246 = vld [vmem:[%s188 + $0x168] sm:$0xff]
        %v247 = vld [vmem:[%s188 + $0x170] sm:$0xff]
        %v248 = vld [vmem:[%s188 + $0x178] sm:$0xff]
        %v249 = vld [vmem:[%s188 + $0x180] sm:$0xff]
        %v250 = vld [vmem:[%s188 + $0x188] sm:$0xff]
        %v251 = vld [vmem:[%s188 + $0x190] sm:$0xff]
        %v252 = vld [vmem:[%s188 + $0x198] sm:$0xff]
        %v253 = vld [vmem:[%s1] sm:$0xf]
        %v254 = vld [vmem:[%s1 + $0x4] sm:$0xf]
        %v255 = vld [vmem:[%s1 + $0x8] sm:$0xf]
        %v256 = vld [vmem:[%s1 + $0xc] sm:$0xf]
        %v257 = vld [vmem:[%s1 + $0x10] sm:$0xf]
        %v258 = vld [vmem:[%s1 + $0x14] sm:$0xf]
        %v259 = vld [vmem:[%s1 + $0x18] sm:$0xf]
        %v260 = vld [vmem:[%s1 + $0x1c] sm:$0xf]
        %v261 = vld [vmem:[%s1 + $0x20] sm:$0xf]
        %v262 = vld [vmem:[%s1 + $0x24] sm:$0xf]
        %v263 = vld [vmem:[%s1 + $0x28] sm:$0xf]
        %v264 = vld [vmem:[%s1 + $0x2c] sm:$0xf]
        %v265 = vld [vmem:[%s1 + $0x30] sm:$0xf]
        %v266 = vld [vmem:[%s1 + $0x34] sm:$0xf]
        %v267 = vld [vmem:[%s1 + $0x38] sm:$0xf]
        %v268 = vld [vmem:[%s1 + $0x3c] sm:$0xf]
        %v269 = vld [vmem:[%s1 + $0x40] sm:$0xf]
        %v270 = vld [vmem:[%s1 + $0x44] sm:$0xf]
        %v271 = vld [vmem:[%s1 + $0x48] sm:$0xf]
        %v272 = vld [vmem:[%s1 + $0x4c] sm:$0xf]
        %v273 = vld [vmem:[%s1 + $0x50] sm:$0xf]
        %v274 = vld [vmem:[%s1 + $0x54] sm:$0xf]
        %v275 = vld [vmem:[%s1 + $0x58] sm:$0xf]
        %v276 = vld [vmem:[%s1 + $0x5c] sm:$0xf]
        %v277 = vld [vmem:[%s1 + $0x60] sm:$0xf]
        %v278 = vld [vmem:[%s1 + $0x64] sm:$0xf]
        %v279 = vld [vmem:[%s1 + $0x68] sm:$0xf]
        %v280 = vld [vmem:[%s1 + $0x6c] sm:$0xf]
        %v281 = vld [vmem:[%s1 + $0x70] sm:$0xf]
        %v282 = vld [vmem:[%s1 + $0x74] sm:$0xf]
        %v283 = vld [vmem:[%s1 + $0x78] sm:$0xf]
        %v284 = vld [vmem:[%s1 + $0x7c] sm:$0xf]
        %v285 = vld [vmem:[%s1 + $0x80] sm:$0xf]
        %v286 = vld [vmem:[%s1 + $0x84] sm:$0xf]
        %v287 = vld [vmem:[%s1 + $0x88] sm:$0xf]
        %v288 = vld [vmem:[%s1 + $0x8c] sm:$0xf]
        %v289 = vld [vmem:[%s1 + $0x90] sm:$0xf]
        %v290 = vld [vmem:[%s1 + $0x94] sm:$0xf]
        %v291 = vld [vmem:[%s1 + $0x98] sm:$0xf]
        %v292 = vld [vmem:[%s1 + $0x9c] sm:$0xf]
        %v293 = vld [vmem:[%s1 + $0xa0] sm:$0xf]
        %v294 = vld [vmem:[%s1 + $0xa4] sm:$0xf]
        %v295 = vld [vmem:[%s1 + $0xa8] sm:$0xf]
        %v296 = vld [vmem:[%s1 + $0xac] sm:$0xf]
        %v297 = vld [vmem:[%s1 + $0xb0] sm:$0xf]
        %v298 = vld [vmem:[%s1 + $0xb4] sm:$0xf]
        %v299 = vld [vmem:[%s1 + $0xb8] sm:$0xf]
        %v300 = vld [vmem:[%s1 + $0xbc] sm:$0xf]
        %v301 = vld [vmem:[%s1 + $0xc0] sm:$0xf]
        %v302 = vld [vmem:[%s1 + $0xc4] sm:$0xf]
        %v303 = vld [vmem:[%s1 + $0xc8] sm:$0xf]
        %v304 = vld [vmem:[%s1 + $0xcc] sm:$0xf]
        %v305 = vld [vmem:[%s1 + $0xd0] sm:$0xf]
        %v306 = vld [vmem:[%s1 + $0xd4] sm:$0xf]
        %v307 = vld [vmem:[%s1 + $0xd8] sm:$0xf]
        %v308 = vld [vmem:[%s1 + $0xdc] sm:$0xf]
        %v309 = vld [vmem:[%s1 + $0xe0] sm:$0xf]
        %v310 = vld [vmem:[%s1 + $0xe4] sm:$0xf]
        %v311 = vld [vmem:[%s1 + $0xe8] sm:$0xf]
        %v312 = vld [vmem:[%s1 + $0xec] sm:$0xf]
        %v313 = vld [vmem:[%s1 + $0xf0] sm:$0xf]
        %v314 = vld [vmem:[%s1 + $0xf4] sm:$0xf]
        %v315 = vld [vmem:[%s1 + $0xf8] sm:$0xf]
        %v316 = vld [vmem:[%s1 + $0xfc] sm:$0xf]
        %v317 = vld [vmem:[%s1 + $0x100] sm:$0xf]
        %v318 = vld [vmem:[%s1 + $0x104] sm:$0xf]
        %v319 = vld [vmem:[%s1 + $0x108] sm:$0xf]
        %v320 = vld [vmem:[%s1 + $0x10c] sm:$0xf]
        %v321 = vld [vmem:[%s1 + $0x110] sm:$0xf]
        %v322 = vld [vmem:[%s1 + $0x114] sm:$0xf]
        %v323 = vld [vmem:[%s1 + $0x118] sm:$0xf]
        %v324 = vld [vmem:[%s1 + $0x11c] sm:$0xf]
        %v325 = vld [vmem:[%s1 + $0x120] sm:$0xf]
        %v326 = vld [vmem:[%s1 + $0x124] sm:$0xf]
        %v327 = vld [vmem:[%s1 + $0x128] sm:$0xf]
        %v328 = vld [vmem:[%s1 + $0x12c] sm:$0xf]
        %v329 = vld [vmem:[%s1 + $0x130] sm:$0xf]
        %v330 = vld [vmem:[%s1 + $0x134] sm:$0xf]
        %v331 = vld [vmem:[%s1 + $0x138] sm:$0xf]
        %v332 = vld [vmem:[%s1 + $0x13c] sm:$0xf]
        %v333 = vld [vmem:[%s1 + $0x140] sm:$0xf]
        %v334 = vld [vmem:[%s1 + $0x144] sm:$0xf]
        %v335 = vld [vmem:[%s1 + $0x148] sm:$0xf]
        %v336 = vld [vmem:[%s1 + $0x14c] sm:$0xf]
        %v337 = vld [vmem:[%s1 + $0x150] sm:$0xf]
        %v338 = vld [vmem:[%s1 + $0x154] sm:$0xf]
        %v339 = vld [vmem:[%s1 + $0x158] sm:$0xf]
        %v340 = vld [vmem:[%s1 + $0x15c] sm:$0xf]
        %v341 = vld [vmem:[%s1 + $0x160] sm:$0xf]
        %v342 = vld [vmem:[%s1 + $0x164] sm:$0xf]
        %v343 = vld [vmem:[%s1 + $0x168] sm:$0xf]
        %v344 = vld [vmem:[%s1 + $0x16c] sm:$0xf]
        %v345 = vld [vmem:[%s1 + $0x170] sm:$0xf]
        %v346 = vld [vmem:[%s1 + $0x174] sm:$0xf]
        %v347 = vld [vmem:[%s1 + $0x178] sm:$0xf]
        %v348 = vld [vmem:[%s1 + $0x17c] sm:$0xf]
        %v349 = vld [vmem:[%s1 + $0x180] sm:$0xf]
        %v350 = vld [vmem:[%s1 + $0x184] sm:$0xf]
        %v351 = vld [vmem:[%s1 + $0x188] sm:$0xf]
        %v352 = vld [vmem:[%s1 + $0x18c] sm:$0xf]
        %v353 = vld [vmem:[%s1 + $0x190] sm:$0xf]
        %v354 = vld [vmem:[%s1 + $0x194] sm:$0xf]
        %v355 = vld [vmem:[%s1 + $0x198] sm:$0xf]
        %v356 = vld [vmem:[%s1 + $0x19c] sm:$0xf]
        %v357 = vld [vmem:[%s1 + $0x1a0] sm:$0xf]
        %v358 = vld [vmem:[%s1 + $0x1a4] sm:$0xf]
        %v359 = vld [vmem:[%s1 + $0x1a8] sm:$0xf]
        %v360 = vld [vmem:[%s1 + $0x1ac] sm:$0xf]
        %v361 = vld [vmem:[%s1 + $0x1b0] sm:$0xf]
        %v362 = vld [vmem:[%s1 + $0x1b4] sm:$0xf]
        %v363 = vld [vmem:[%s1 + $0x1b8] sm:$0xf]
        %v364 = vld [vmem:[%s1 + $0x1bc] sm:$0xf]
        %v365 = vld [vmem:[%s1 + $0x1c0] sm:$0xf]
        %v366 = vld [vmem:[%s1 + $0x1c4] sm:$0xf]
        %v367 = vld [vmem:[%s1 + $0x1c8] sm:$0xf]
        %v368 = vld [vmem:[%s1 + $0x1cc] sm:$0xf]
        %v369 = vld [vmem:[%s1 + $0x1d0] sm:$0xf]
        %v370 = vld [vmem:[%s1 + $0x1d4] sm:$0xf]
        %v371 = vld [vmem:[%s1 + $0x1d8] sm:$0xf]
        %v372 = vld [vmem:[%s1 + $0x1dc] sm:$0xf]
        %v373 = vld [vmem:[%s1 + $0x1e0] sm:$0xf]
        %v374 = vld [vmem:[%s1 + $0x1e4] sm:$0xf]
        %v375 = vld [vmem:[%s1 + $0x1e8] sm:$0xf]
        %v376 = vld [vmem:[%s1 + $0x1ec] sm:$0xf]
        %v377 = vld [vmem:[%s1 + $0x1f0] sm:$0xf]
        %v378 = vld [vmem:[%s1 + $0x1f4] sm:$0xf]
        %v379 = vld [vmem:[%s1 + $0x1f8] sm:$0xf]
        %v380 = vld [vmem:[%s1 + $0x1fc] sm:$0xf]
        %v381 = vld [vmem:[%s2] sm:$0x1]
        %v383 = vlaneseq
        %v384 = vshrl.u32 %v383, 7
        %v385 = vsub.s32 0, %v384
        %v386 = vrot.slane %v381, %v385
        %v440 = vunpack.c.l.b16 %v201
        %v441 = vunpack.c.h.b16 %v201
        %v442 = vunpack.c.l.b16 %v202
        %v443 = vunpack.c.h.b16 %v202
        %v444 = vunpack.c.l.b16 %v203
        %v445 = vunpack.c.h.b16 %v203
        %v446 = vunpack.c.l.b16 %v204
        %v447 = vunpack.c.h.b16 %v204
        %v448 = vunpack.c.l.b16 %v205
        %v449 = vunpack.c.h.b16 %v205
        %v450 = vunpack.c.l.b16 %v206
        %v451 = vunpack.c.h.b16 %v206
        %v452 = vunpack.c.l.b16 %v207
        %v453 = vunpack.c.h.b16 %v207
        %v454 = vunpack.c.l.b16 %v208
        %v455 = vunpack.c.h.b16 %v208
        %v456 = vunpack.c.l.b16 %v209
        %v457 = vunpack.c.h.b16 %v209
        %v458 = vunpack.c.l.b16 %v210
        %v459 = vunpack.c.h.b16 %v210
        %v460 = vunpack.c.l.b16 %v211
        %v461 = vunpack.c.h.b16 %v211
        %v462 = vunpack.c.l.b16 %v212
        %v463 = vunpack.c.h.b16 %v212
        %v464 = vunpack.c.l.b16 %v213
        %v465 = vunpack.c.h.b16 %v213
        %v466 = vunpack.c.l.b16 %v214
        %v467 = vunpack.c.h.b16 %v214
        %v468 = vunpack.c.l.b16 %v215
        %v469 = vunpack.c.h.b16 %v215
        %v470 = vunpack.c.l.b16 %v216
        %v471 = vunpack.c.h.b16 %v216
        %v472 = vunpack.c.l.b16 %v217
        %v473 = vunpack.c.h.b16 %v217
        %v474 = vunpack.c.l.b16 %v218
        %v475 = vunpack.c.h.b16 %v218
        %v476 = vunpack.c.l.b16 %v219
        %v477 = vunpack.c.h.b16 %v219
        %v478 = vunpack.c.l.b16 %v220
        %v479 = vunpack.c.h.b16 %v220
        %v480 = vunpack.c.l.b16 %v221
        %v481 = vunpack.c.h.b16 %v221
        %v482 = vunpack.c.l.b16 %v222
        %v483 = vunpack.c.h.b16 %v222
        %v484 = vunpack.c.l.b16 %v223
        %v485 = vunpack.c.h.b16 %v223
        %v486 = vunpack.c.l.b16 %v224
        %v487 = vunpack.c.h.b16 %v224
        %v488 = vunpack.c.l.b16 %v225
        %v489 = vunpack.c.h.b16 %v225
        %v490 = vunpack.c.l.b16 %v226
        %v491 = vunpack.c.h.b16 %v226
        %v492 = vunpack.c.l.b16 %v227
        %v493 = vunpack.c.h.b16 %v227
        %v494 = vunpack.c.l.b16 %v228
        %v495 = vunpack.c.h.b16 %v228
        %v496 = vunpack.c.l.b16 %v229
        %v497 = vunpack.c.h.b16 %v229
        %v498 = vunpack.c.l.b16 %v230
        %v499 = vunpack.c.h.b16 %v230
        %v500 = vunpack.c.l.b16 %v231
        %v501 = vunpack.c.h.b16 %v231
        %v502 = vunpack.c.l.b16 %v232
        %v503 = vunpack.c.h.b16 %v232
        %v504 = vunpack.c.l.b16 %v233
        %v505 = vunpack.c.h.b16 %v233
        %v506 = vunpack.c.l.b16 %v234
        %v507 = vunpack.c.h.b16 %v234
        %v508 = vunpack.c.l.b16 %v235
        %v509 = vunpack.c.h.b16 %v235
        %v510 = vunpack.c.l.b16 %v236
        %v511 = vunpack.c.h.b16 %v236
        %v512 = vunpack.c.l.b16 %v237
        %v513 = vunpack.c.h.b16 %v237
        %v514 = vunpack.c.l.b16 %v238
        %v515 = vunpack.c.h.b16 %v238
        %v516 = vunpack.c.l.b16 %v239
        %v517 = vunpack.c.h.b16 %v239
        %v518 = vunpack.c.l.b16 %v240
        %v519 = vunpack.c.h.b16 %v240
        %v520 = vunpack.c.l.b16 %v241
        %v521 = vunpack.c.h.b16 %v241
        %v522 = vunpack.c.l.b16 %v242
        %v523 = vunpack.c.h.b16 %v242
        %v524 = vunpack.c.l.b16 %v243
        %v525 = vunpack.c.h.b16 %v243
        %v526 = vunpack.c.l.b16 %v244
        %v527 = vunpack.c.h.b16 %v244
        %v528 = vunpack.c.l.b16 %v245
        %v529 = vunpack.c.h.b16 %v245
        %v530 = vunpack.c.l.b16 %v246
        %v531 = vunpack.c.h.b16 %v246
        %v532 = vunpack.c.l.b16 %v247
        %v533 = vunpack.c.h.b16 %v247
        %v534 = vunpack.c.l.b16 %v248
        %v535 = vunpack.c.h.b16 %v248
        %v536 = vunpack.c.l.b16 %v249
        %v537 = vunpack.c.h.b16 %v249
        %v538 = vunpack.c.l.b16 %v250
        %v539 = vunpack.c.h.b16 %v250
        %v540 = vunpack.c.l.b16 %v251
        %v541 = vunpack.c.h.b16 %v251
        %v542 = vunpack.c.l.b16 %v252
        %v543 = vunpack.c.h.b16 %v252
        %v544 = vpack.c.b16 %v448, %v440
        %v545 = vpack.c.b16 %v449, %v441
        %v546 = vpack.c.b16 %v450, %v442
        %v547 = vpack.c.b16 %v451, %v443
        %v548 = vpack.c.b16 %v452, %v444
        %v549 = vpack.c.b16 %v453, %v445
        %v550 = vpack.c.b16 %v454, %v446
        %v551 = vpack.c.b16 %v455, %v447
        %v552 = vpack.c.b16 %v464, %v456
        %v553 = vpack.c.b16 %v465, %v457
        %v554 = vpack.c.b16 %v466, %v458
        %v555 = vpack.c.b16 %v467, %v459
        %v556 = vpack.c.b16 %v468, %v460
        %v557 = vpack.c.b16 %v469, %v461
        %v558 = vpack.c.b16 %v470, %v462
        %v559 = vpack.c.b16 %v471, %v463
        %v560 = vpack.c.b16 %v480, %v472
        %v561 = vpack.c.b16 %v481, %v473
        %v562 = vpack.c.b16 %v482, %v474
        %v563 = vpack.c.b16 %v483, %v475
        %v564 = vpack.c.b16 %v484, %v476
        %v565 = vpack.c.b16 %v485, %v477
        %v566 = vpack.c.b16 %v486, %v478
        %v567 = vpack.c.b16 %v487, %v479
        %v568 = vpack.c.b16 %v496, %v488
        %v569 = vpack.c.b16 %v497, %v489
        %v570 = vpack.c.b16 %v498, %v490
        %v571 = vpack.c.b16 %v499, %v491
        %v572 = vpack.c.b16 %v500, %v492
        %v573 = vpack.c.b16 %v501, %v493
        %v574 = vpack.c.b16 %v502, %v494
        %v575 = vpack.c.b16 %v503, %v495
        %v576 = vpack.c.b16 %v512, %v504
        %v577 = vpack.c.b16 %v513, %v505
        %v578 = vpack.c.b16 %v514, %v506
        %v579 = vpack.c.b16 %v515, %v507
        %v580 = vpack.c.b16 %v516, %v508
        %v581 = vpack.c.b16 %v517, %v509
        %v582 = vpack.c.b16 %v518, %v510
        %v583 = vpack.c.b16 %v519, %v511
        %v584 = vpack.c.b16 %v528, %v520
        %v585 = vpack.c.b16 %v529, %v521
        %v586 = vpack.c.b16 %v530, %v522
        %v587 = vpack.c.b16 %v531, %v523
        %v588 = vpack.c.b16 %v532, %v524
        %v589 = vpack.c.b16 %v533, %v525
        %v590 = vpack.c.b16 %v534, %v526
        %v591 = vpack.c.b16 %v535, %v527
        %v592 = vpack.c.b16 %v536, %v536
        %v593 = vpack.c.b16 %v537, %v537
        %v594 = vpack.c.b16 %v538, %v538
        %v595 = vpack.c.b16 %v539, %v539
        %v596 = vpack.c.b16 %v540, %v540
        %v597 = vpack.c.b16 %v541, %v541
        %v598 = vpack.c.b16 %v542, %v542
        %v599 = vpack.c.b16 %v543, %v543
        %v784 = vunpack.c.l.b16 %v253
        %v785 = vunpack.c.l.b16 %v254
        %v786 = vunpack.c.l.b16 %v255
        %v787 = vunpack.c.l.b16 %v256
        %v788 = vunpack.c.l.b16 %v257
        %v789 = vunpack.c.l.b16 %v258
        %v790 = vunpack.c.l.b16 %v259
        %v791 = vunpack.c.l.b16 %v260
        %v792 = vunpack.c.l.b16 %v261
        %v793 = vunpack.c.l.b16 %v262
        %v794 = vunpack.c.l.b16 %v263
        %v795 = vunpack.c.l.b16 %v264
        %v796 = vunpack.c.l.b16 %v265
        %v797 = vunpack.c.l.b16 %v266
        %v798 = vunpack.c.l.b16 %v267
        %v799 = vunpack.c.l.b16 %v268
        %v800 = vunpack.c.l.b16 %v269
        %v801 = vunpack.c.l.b16 %v270
        %v802 = vunpack.c.l.b16 %v271
        %v803 = vunpack.c.l.b16 %v272
        %v804 = vunpack.c.l.b16 %v273
        %v805 = vunpack.c.l.b16 %v274
        %v806 = vunpack.c.l.b16 %v275
        %v807 = vunpack.c.l.b16 %v276
        %v808 = vunpack.c.l.b16 %v277
        %v809 = vunpack.c.l.b16 %v278
        %v810 = vunpack.c.l.b16 %v279
        %v811 = vunpack.c.l.b16 %v280
        %v812 = vunpack.c.l.b16 %v281
        %v813 = vunpack.c.l.b16 %v282
        %v814 = vunpack.c.l.b16 %v283
        %v815 = vunpack.c.l.b16 %v284
        %v816 = vunpack.c.l.b16 %v285
        %v817 = vunpack.c.l.b16 %v286
        %v818 = vunpack.c.l.b16 %v287
        %v819 = vunpack.c.l.b16 %v288
        %v820 = vunpack.c.l.b16 %v289
        %v821 = vunpack.c.l.b16 %v290
        %v822 = vunpack.c.l.b16 %v291
        %v823 = vunpack.c.l.b16 %v292
        %v824 = vunpack.c.l.b16 %v293
        %v825 = vunpack.c.l.b16 %v294
        %v826 = vunpack.c.l.b16 %v295
        %v827 = vunpack.c.l.b16 %v296
        %v828 = vunpack.c.l.b16 %v297
        %v829 = vunpack.c.l.b16 %v298
        %v830 = vunpack.c.l.b16 %v299
        %v831 = vunpack.c.l.b16 %v300
        %v832 = vunpack.c.l.b16 %v301
        %v833 = vunpack.c.l.b16 %v302
        %v834 = vunpack.c.l.b16 %v303
        %v835 = vunpack.c.l.b16 %v304
        %v836 = vunpack.c.l.b16 %v305
        %v837 = vunpack.c.l.b16 %v306
        %v838 = vunpack.c.l.b16 %v307
        %v839 = vunpack.c.l.b16 %v308
        %v840 = vunpack.c.l.b16 %v309
        %v841 = vunpack.c.l.b16 %v310
        %v842 = vunpack.c.l.b16 %v311
        %v843 = vunpack.c.l.b16 %v312
        %v844 = vunpack.c.l.b16 %v313
        %v845 = vunpack.c.l.b16 %v314
        %v846 = vunpack.c.l.b16 %v315
        %v847 = vunpack.c.l.b16 %v316
        %v848 = vunpack.c.l.b16 %v317
        %v849 = vunpack.c.l.b16 %v318
        %v850 = vunpack.c.l.b16 %v319
        %v851 = vunpack.c.l.b16 %v320
        %v852 = vunpack.c.l.b16 %v321
        %v853 = vunpack.c.l.b16 %v322
        %v854 = vunpack.c.l.b16 %v323
        %v855 = vunpack.c.l.b16 %v324
        %v856 = vunpack.c.l.b16 %v325
        %v857 = vunpack.c.l.b16 %v326
        %v858 = vunpack.c.l.b16 %v327
        %v859 = vunpack.c.l.b16 %v328
        %v860 = vunpack.c.l.b16 %v329
        %v861 = vunpack.c.l.b16 %v330
        %v862 = vunpack.c.l.b16 %v331
        %v863 = vunpack.c.l.b16 %v332
        %v864 = vunpack.c.l.b16 %v333
        %v865 = vunpack.c.l.b16 %v334
        %v866 = vunpack.c.l.b16 %v335
        %v867 = vunpack.c.l.b16 %v336
        %v868 = vunpack.c.l.b16 %v337
        %v869 = vunpack.c.l.b16 %v338
        %v870 = vunpack.c.l.b16 %v339
        %v871 = vunpack.c.l.b16 %v340
        %v872 = vunpack.c.l.b16 %v341
        %v873 = vunpack.c.l.b16 %v342
        %v874 = vunpack.c.l.b16 %v343
        %v875 = vunpack.c.l.b16 %v344
        %v876 = vunpack.c.l.b16 %v345
        %v877 = vunpack.c.l.b16 %v346
        %v878 = vunpack.c.l.b16 %v347
        %v879 = vunpack.c.l.b16 %v348
        %v880 = vunpack.c.l.b16 %v349
        %v881 = vunpack.c.l.b16 %v350
        %v882 = vunpack.c.l.b16 %v351
        %v883 = vunpack.c.l.b16 %v352
        %v884 = vunpack.c.l.b16 %v353
        %v885 = vunpack.c.l.b16 %v354
        %v886 = vunpack.c.l.b16 %v355
        %v887 = vunpack.c.l.b16 %v356
        %v888 = vunpack.c.l.b16 %v357
        %v889 = vunpack.c.l.b16 %v358
        %v890 = vunpack.c.l.b16 %v359
        %v891 = vunpack.c.l.b16 %v360
        %v892 = vunpack.c.l.b16 %v361
        %v893 = vunpack.c.l.b16 %v362
        %v894 = vunpack.c.l.b16 %v363
        %v895 = vunpack.c.l.b16 %v364
        %v896 = vunpack.c.l.b16 %v365
        %v897 = vunpack.c.l.b16 %v366
        %v898 = vunpack.c.l.b16 %v367
        %v899 = vunpack.c.l.b16 %v368
        %v900 = vunpack.c.l.b16 %v369
        %v901 = vunpack.c.l.b16 %v370
        %v902 = vunpack.c.l.b16 %v371
        %v903 = vunpack.c.l.b16 %v372
        %v904 = vunpack.c.l.b16 %v373
        %v905 = vunpack.c.l.b16 %v374
        %v906 = vunpack.c.l.b16 %v375
        %v907 = vunpack.c.l.b16 %v376
        %v908 = vunpack.c.l.b16 %v377
        %v909 = vunpack.c.l.b16 %v378
        %v910 = vunpack.c.l.b16 %v379
        %v911 = vunpack.c.l.b16 %v380
        %v912 = vpack.c.b16 %v785, %v784
        %v913 = vpack.c.b16 %v787, %v786
        %v914 = vpack.c.b16 %v789, %v788
        %v915 = vpack.c.b16 %v791, %v790
        %v916 = vpack.c.b16 %v793, %v792
        %v917 = vpack.c.b16 %v795, %v794
        %v918 = vpack.c.b16 %v797, %v796
        %v919 = vpack.c.b16 %v799, %v798
        %v920 = vpack.c.b16 %v801, %v800
        %v921 = vpack.c.b16 %v803, %v802
        %v922 = vpack.c.b16 %v805, %v804
        %v923 = vpack.c.b16 %v807, %v806
        %v924 = vpack.c.b16 %v809, %v808
        %v925 = vpack.c.b16 %v811, %v810
        %v926 = vpack.c.b16 %v813, %v812
        %v927 = vpack.c.b16 %v815, %v814
        %v928 = vpack.c.b16 %v817, %v816
        %v929 = vpack.c.b16 %v819, %v818
        %v930 = vpack.c.b16 %v821, %v820
        %v931 = vpack.c.b16 %v823, %v822
        %v932 = vpack.c.b16 %v825, %v824
        %v933 = vpack.c.b16 %v827, %v826
        %v934 = vpack.c.b16 %v829, %v828
        %v935 = vpack.c.b16 %v831, %v830
        %v936 = vpack.c.b16 %v833, %v832
        %v937 = vpack.c.b16 %v835, %v834
        %v938 = vpack.c.b16 %v837, %v836
        %v939 = vpack.c.b16 %v839, %v838
        %v940 = vpack.c.b16 %v841, %v840
        %v941 = vpack.c.b16 %v843, %v842
        %v942 = vpack.c.b16 %v845, %v844
        %v943 = vpack.c.b16 %v847, %v846
        %v944 = vpack.c.b16 %v849, %v848
        %v945 = vpack.c.b16 %v851, %v850
        %v946 = vpack.c.b16 %v853, %v852
        %v947 = vpack.c.b16 %v855, %v854
        %v948 = vpack.c.b16 %v857, %v856
        %v949 = vpack.c.b16 %v859, %v858
        %v950 = vpack.c.b16 %v861, %v860
        %v951 = vpack.c.b16 %v863, %v862
        %v952 = vpack.c.b16 %v865, %v864
        %v953 = vpack.c.b16 %v867, %v866
        %v954 = vpack.c.b16 %v869, %v868
        %v955 = vpack.c.b16 %v871, %v870
        %v956 = vpack.c.b16 %v873, %v872
        %v957 = vpack.c.b16 %v875, %v874
        %v958 = vpack.c.b16 %v877, %v876
        %v959 = vpack.c.b16 %v879, %v878
        %v960 = vpack.c.b16 %v881, %v880
        %v961 = vpack.c.b16 %v883, %v882
        %v962 = vpack.c.b16 %v885, %v884
        %v963 = vpack.c.b16 %v887, %v886
        %v964 = vpack.c.b16 %v889, %v888
        %v965 = vpack.c.b16 %v891, %v890
        %v966 = vpack.c.b16 %v893, %v892
        %v967 = vpack.c.b16 %v895, %v894
        %v968 = vpack.c.b16 %v897, %v896
        %v969 = vpack.c.b16 %v899, %v898
        %v970 = vpack.c.b16 %v901, %v900
        %v971 = vpack.c.b16 %v903, %v902
        %v972 = vpack.c.b16 %v905, %v904
        %v973 = vpack.c.b16 %v907, %v906
        %v974 = vpack.c.b16 %v909, %v908
        %v975 = vpack.c.b16 %v911, %v910
        %1040 = vmatprep.subr.bf16.mxu0 0
        %1041 = vmatpush1.bf16.msra.mxu0 %v912
        %1042 = vmatprep.subr.bf16.mxu0 0
        %1043 = vmatpush1.bf16.msra.mxu0 %v913
        %1044 = vmatprep.subr.bf16.mxu0 0
        %1045 = vmatpush1.bf16.msra.mxu0 %v914
        %1046 = vmatprep.subr.bf16.mxu0 0
        %1047 = vmatpush1.bf16.msra.mxu0 %v915
        %1048 = vmatprep.subr.bf16.mxu0 0
        %1049 = vmatpush1.bf16.msra.mxu0 %v916
        %1050 = vmatprep.subr.bf16.mxu0 0
        %1051 = vmatpush1.bf16.msra.mxu0 %v917
        %1052 = vmatprep.subr.bf16.mxu0 0
        %1053 = vmatpush1.bf16.msra.mxu0 %v918
        %1054 = vmatprep.subr.bf16.mxu0 0
        %1055 = vmatpush1.bf16.msra.mxu0 %v919
        %1056 = vmatprep.subr.bf16.mxu0 0
        %1057 = vmatpush1.bf16.msra.mxu0 %v920
        %1058 = vmatprep.subr.bf16.mxu0 0
        %1059 = vmatpush1.bf16.msra.mxu0 %v921
        %1060 = vmatprep.subr.bf16.mxu0 0
        %1061 = vmatpush1.bf16.msra.mxu0 %v922
        %1062 = vmatprep.subr.bf16.mxu0 0
        %1063 = vmatpush1.bf16.msra.mxu0 %v923
        %1064 = vmatprep.subr.bf16.mxu0 0
        %1065 = vmatpush1.bf16.msra.mxu0 %v924
        %1066 = vmatprep.subr.bf16.mxu0 0
        %1067 = vmatpush1.bf16.msra.mxu0 %v925
        %1068 = vmatprep.subr.bf16.mxu0 0
        %1069 = vmatpush1.bf16.msra.mxu0 %v926
        %1070 = vmatprep.subr.bf16.mxu0 0
        %1071 = vmatpush1.bf16.msra.mxu0 %v927
        %1072 = vmatprep.mubr.bf16.mxu0 %v545
        %1073 = vmatmul.mubr.bf16.gmra.mrb[0].mxu0 %v544
        %v1074 = vpop.f32.mrb[0].mxu0
        %v1075 = vadd.f32 %v386, %v1074
        %v1076 = vpop.f32.mrb[0].mxu0
        %v1077 = vpop.f32.mrb[0].mxu0
        %v1078 = vadd.f32 %v386, %v1077
        %v1079 = vpop.f32.mrb[0].mxu0
        %1080 = vmatprep.mubr.bf16.mxu0 %v553
        %1081 = vmatmul.mubr.bf16.gmra.mrb[0].mxu0 %v552
        %v1082 = vpop.f32.mrb[0].mxu0
        %v1083 = vadd.f32 %v386, %v1082
        %v1084 = vpop.f32.mrb[0].mxu0
        %v1085 = vpop.f32.mrb[0].mxu0
        %v1086 = vadd.f32 %v386, %v1085
        %v1087 = vpop.f32.mrb[0].mxu0
        %1088 = vmatprep.mubr.bf16.mxu0 %v561
        %1089 = vmatmul.mubr.bf16.gmra.mrb[0].mxu0 %v560
        %v1090 = vpop.f32.mrb[0].mxu0
        %v1091 = vadd.f32 %v386, %v1090
        %v1092 = vpop.f32.mrb[0].mxu0
        %v1093 = vpop.f32.mrb[0].mxu0
        %v1094 = vadd.f32 %v386, %v1093
        %v1095 = vpop.f32.mrb[0].mxu0
        %1096 = vmatprep.mubr.bf16.mxu0 %v569
        %1097 = vmatmul.mubr.bf16.gmra.mrb[0].mxu0 %v568
        %v1098 = vpop.f32.mrb[0].mxu0
        %v1099 = vadd.f32 %v386, %v1098
        %v1100 = vpop.f32.mrb[0].mxu0
        %v1101 = vpop.f32.mrb[0].mxu0
        %v1102 = vadd.f32 %v386, %v1101
        %v1103 = vpop.f32.mrb[0].mxu0
        %1104 = vmatprep.mubr.bf16.mxu0 %v577
        %1105 = vmatmul.mubr.bf16.gmra.mrb[0].mxu0 %v576
        %v1106 = vpop.f32.mrb[0].mxu0
        %v1107 = vadd.f32 %v386, %v1106
        %v1108 = vpop.f32.mrb[0].mxu0
        %v1109 = vpop.f32.mrb[0].mxu0
        %v1110 = vadd.f32 %v386, %v1109
        %v1111 = vpop.f32.mrb[0].mxu0
        %1112 = vmatprep.mubr.bf16.mxu0 %v585
        %1113 = vmatmul.mubr.bf16.gmra.mrb[0].mxu0 %v584
        %v1114 = vpop.f32.mrb[0].mxu0
        %v1115 = vadd.f32 %v386, %v1114
        %v1116 = vpop.f32.mrb[0].mxu0
        %v1117 = vpop.f32.mrb[0].mxu0
        %v1118 = vadd.f32 %v386, %v1117
        %v1119 = vpop.f32.mrb[0].mxu0
        %1120 = vmatprep.mubr.bf16.mxu0 %v593
        %1121 = vmatmul.mubr.bf16.gmra.mrb[0].mxu0 %v592
        %v1122 = vpop.f32.mrb[0].mxu0
        %v1123 = vadd.f32 %v386, %v1122
        %v1124 = vpop.f32.mrb[0].mxu0
        %v1125 = vpop.f32.mrb[0].mxu0
        %v1126 = vpop.f32.mrb[0].mxu0
        %1127 = vdwg.mxu0
        %1128 = vmatprep.subr.bf16.mxu0 0
        %1129 = vmatpush1.bf16.msra.mxu0 %v928
        %1130 = vmatprep.subr.bf16.mxu0 0
        %1131 = vmatpush1.bf16.msra.mxu0 %v929
        %1132 = vmatprep.subr.bf16.mxu0 0
        %1133 = vmatpush1.bf16.msra.mxu0 %v930
        %1134 = vmatprep.subr.bf16.mxu0 0
        %1135 = vmatpush1.bf16.msra.mxu0 %v931
        %1136 = vmatprep.subr.bf16.mxu0 0
        %1137 = vmatpush1.bf16.msra.mxu0 %v932
        %1138 = vmatprep.subr.bf16.mxu0 0
        %1139 = vmatpush1.bf16.msra.mxu0 %v933
        %1140 = vmatprep.subr.bf16.mxu0 0
        %1141 = vmatpush1.bf16.msra.mxu0 %v934
        %1142 = vmatprep.subr.bf16.mxu0 0
        %1143 = vmatpush1.bf16.msra.mxu0 %v935
        %1144 = vmatprep.subr.bf16.mxu0 0
        %1145 = vmatpush1.bf16.msra.mxu0 %v936
        %1146 = vmatprep.subr.bf16.mxu0 0
        %1147 = vmatpush1.bf16.msra.mxu0 %v937
        %1148 = vmatprep.subr.bf16.mxu0 0
        %1149 = vmatpush1.bf16.msra.mxu0 %v938
        %1150 = vmatprep.subr.bf16.mxu0 0
        %1151 = vmatpush1.bf16.msra.mxu0 %v939
        %1152 = vmatprep.subr.bf16.mxu0 0
        %1153 = vmatpush1.bf16.msra.mxu0 %v940
        %1154 = vmatprep.subr.bf16.mxu0 0
        %1155 = vmatpush1.bf16.msra.mxu0 %v941
        %1156 = vmatprep.subr.bf16.mxu0 0
        %1157 = vmatpush1.bf16.msra.mxu0 %v942
        %1158 = vmatprep.subr.bf16.mxu0 0
        %1159 = vmatpush1.bf16.msra.mxu0 %v943
        %1160 = vmatprep.mubr.bf16.mxu0 %v547
        %1161 = vmatmul.mubr.bf16.gmra.mrb[0].mxu0 %v546
        %v1162 = vpop.f32.mrb[0].mxu0
        %v1163 = vadd.f32 %v1075, %v1162
        %v1164 = vpop.f32.mrb[0].mxu0
        %v1165 = vpop.f32.mrb[0].mxu0
        %v1166 = vadd.f32 %v1078, %v1165
        %v1167 = vpop.f32.mrb[0].mxu0
        %1168 = vmatprep.mubr.bf16.mxu0 %v555
        %1169 = vmatmul.mubr.bf16.gmra.mrb[0].mxu0 %v554
        %v1170 = vpop.f32.mrb[0].mxu0
        %v1171 = vadd.f32 %v1083, %v1170
        %v1172 = vpop.f32.mrb[0].mxu0
        %v1173 = vpop.f32.mrb[0].mxu0
        %v1174 = vadd.f32 %v1086, %v1173
        %v1175 = vpop.f32.mrb[0].mxu0
        %1176 = vmatprep.mubr.bf16.mxu0 %v563
        %1177 = vmatmul.mubr.bf16.gmra.mrb[0].mxu0 %v562
        %v1178 = vpop.f32.mrb[0].mxu0
        %v1179 = vadd.f32 %v1091, %v1178
        %v1180 = vpop.f32.mrb[0].mxu0
        %v1181 = vpop.f32.mrb[0].mxu0
        %v1182 = vadd.f32 %v1094, %v1181
        %v1183 = vpop.f32.mrb[0].mxu0
        %1184 = vmatprep.mubr.bf16.mxu0 %v571
        %1185 = vmatmul.mubr.bf16.gmra.mrb[0].mxu0 %v570
        %v1186 = vpop.f32.mrb[0].mxu0
        %v1187 = vadd.f32 %v1099, %v1186
        %v1188 = vpop.f32.mrb[0].mxu0
        %v1189 = vpop.f32.mrb[0].mxu0
        %v1190 = vadd.f32 %v1102, %v1189
        %v1191 = vpop.f32.mrb[0].mxu0
        %1192 = vmatprep.mubr.bf16.mxu0 %v579
        %1193 = vmatmul.mubr.bf16.gmra.mrb[0].mxu0 %v578
        %v1194 = vpop.f32.mrb[0].mxu0
        %v1195 = vadd.f32 %v1107, %v1194
        %v1196 = vpop.f32.mrb[0].mxu0
        %v1197 = vpop.f32.mrb[0].mxu0
        %v1198 = vadd.f32 %v1110, %v1197
        %v1199 = vpop.f32.mrb[0].mxu0
        %1200 = vmatprep.mubr.bf16.mxu0 %v587
        %1201 = vmatmul.mubr.bf16.gmra.mrb[0].mxu0 %v586
        %v1202 = vpop.f32.mrb[0].mxu0
        %v1203 = vadd.f32 %v1115, %v1202
        %v1204 = vpop.f32.mrb[0].mxu0
        %v1205 = vpop.f32.mrb[0].mxu0
        %v1206 = vadd.f32 %v1118, %v1205
        %v1207 = vpop.f32.mrb[0].mxu0
        %1208 = vmatprep.mubr.bf16.mxu0 %v595
        %1209 = vmatmul.mubr.bf16.gmra.mrb[0].mxu0 %v594
        %v1210 = vpop.f32.mrb[0].mxu0
        %v1211 = vadd.f32 %v1123, %v1210
        %v1212 = vpop.f32.mrb[0].mxu0
        %v1213 = vpop.f32.mrb[0].mxu0
        %v1214 = vpop.f32.mrb[0].mxu0
        %1215 = vdwg.mxu0
        %1216 = vmatprep.subr.bf16.mxu0 0
        %1217 = vmatpush1.bf16.msra.mxu0 %v944
        %1218 = vmatprep.subr.bf16.mxu0 0
        %1219 = vmatpush1.bf16.msra.mxu0 %v945
        %1220 = vmatprep.subr.bf16.mxu0 0
        %1221 = vmatpush1.bf16.msra.mxu0 %v946
        %1222 = vmatprep.subr.bf16.mxu0 0
        %1223 = vmatpush1.bf16.msra.mxu0 %v947
        %1224 = vmatprep.subr.bf16.mxu0 0
        %1225 = vmatpush1.bf16.msra.mxu0 %v948
        %1226 = vmatprep.subr.bf16.mxu0 0
        %1227 = vmatpush1.bf16.msra.mxu0 %v949
        %1228 = vmatprep.subr.bf16.mxu0 0
        %1229 = vmatpush1.bf16.msra.mxu0 %v950
        %1230 = vmatprep.subr.bf16.mxu0 0
        %1231 = vmatpush1.bf16.msra.mxu0 %v951
        %1232 = vmatprep.subr.bf16.mxu0 0
        %1233 = vmatpush1.bf16.msra.mxu0 %v952
        %1234 = vmatprep.subr.bf16.mxu0 0
        %1235 = vmatpush1.bf16.msra.mxu0 %v953
        %1236 = vmatprep.subr.bf16.mxu0 0
        %1237 = vmatpush1.bf16.msra.mxu0 %v954
        %1238 = vmatprep.subr.bf16.mxu0 0
        %1239 = vmatpush1.bf16.msra.mxu0 %v955
        %1240 = vmatprep.subr.bf16.mxu0 0
        %1241 = vmatpush1.bf16.msra.mxu0 %v956
        %1242 = vmatprep.subr.bf16.mxu0 0
        %1243 = vmatpush1.bf16.msra.mxu0 %v957
        %1244 = vmatprep.subr.bf16.mxu0 0
        %1245 = vmatpush1.bf16.msra.mxu0 %v958
        %1246 = vmatprep.subr.bf16.mxu0 0
        %1247 = vmatpush1.bf16.msra.mxu0 %v959
        %1248 = vmatprep.mubr.bf16.mxu0 %v549
        %1249 = vmatmul.mubr.bf16.gmra.mrb[0].mxu0 %v548
        %v1250 = vpop.f32.mrb[0].mxu0
        %v1251 = vadd.f32 %v1163, %v1250
        %v1252 = vpop.f32.mrb[0].mxu0
        %v1253 = vpop.f32.mrb[0].mxu0
        %v1254 = vadd.f32 %v1166, %v1253
        %v1255 = vpop.f32.mrb[0].mxu0
        %1256 = vmatprep.mubr.bf16.mxu0 %v557
        %1257 = vmatmul.mubr.bf16.gmra.mrb[0].mxu0 %v556
        %v1258 = vpop.f32.mrb[0].mxu0
        %v1259 = vadd.f32 %v1171, %v1258
        %v1260 = vpop.f32.mrb[0].mxu0
        %v1261 = vpop.f32.mrb[0].mxu0
        %v1262 = vadd.f32 %v1174, %v1261
        %v1263 = vpop.f32.mrb[0].mxu0
        %1264 = vmatprep.mubr.bf16.mxu0 %v565
        %1265 = vmatmul.mubr.bf16.gmra.mrb[0].mxu0 %v564
        %v1266 = vpop.f32.mrb[0].mxu0
        %v1267 = vadd.f32 %v1179, %v1266
        %v1268 = vpop.f32.mrb[0].mxu0
        %v1269 = vpop.f32.mrb[0].mxu0
        %v1270 = vadd.f32 %v1182, %v1269
        %v1271 = vpop.f32.mrb[0].mxu0
        %1272 = vmatprep.mubr.bf16.mxu0 %v573
        %1273 = vmatmul.mubr.bf16.gmra.mrb[0].mxu0 %v572
        %v1274 = vpop.f32.mrb[0].mxu0
        %v1275 = vadd.f32 %v1187, %v1274
        %v1276 = vpop.f32.mrb[0].mxu0
        %v1277 = vpop.f32.mrb[0].mxu0
        %v1278 = vadd.f32 %v1190, %v1277
        %v1279 = vpop.f32.mrb[0].mxu0
        %1280 = vmatprep.mubr.bf16.mxu0 %v581
        %1281 = vmatmul.mubr.bf16.gmra.mrb[0].mxu0 %v580
        %v1282 = vpop.f32.mrb[0].mxu0
        %v1283 = vadd.f32 %v1195, %v1282
        %v1284 = vpop.f32.mrb[0].mxu0
        %v1285 = vpop.f32.mrb[0].mxu0
        %v1286 = vadd.f32 %v1198, %v1285
        %v1287 = vpop.f32.mrb[0].mxu0
        %1288 = vmatprep.mubr.bf16.mxu0 %v589
        %1289 = vmatmul.mubr.bf16.gmra.mrb[0].mxu0 %v588
        %v1290 = vpop.f32.mrb[0].mxu0
        %v1291 = vadd.f32 %v1203, %v1290
        %v1292 = vpop.f32.mrb[0].mxu0
        %v1293 = vpop.f32.mrb[0].mxu0
        %v1294 = vadd.f32 %v1206, %v1293
        %v1295 = vpop.f32.mrb[0].mxu0
        %1296 = vmatprep.mubr.bf16.mxu0 %v597
        %1297 = vmatmul.mubr.bf16.gmra.mrb[0].mxu0 %v596
        %v1298 = vpop.f32.mrb[0].mxu0
        %v1299 = vadd.f32 %v1211, %v1298
        %v1300 = vpop.f32.mrb[0].mxu0
        %v1301 = vpop.f32.mrb[0].mxu0
        %v1302 = vpop.f32.mrb[0].mxu0
        %1303 = vdwg.mxu0
        %1304 = vmatprep.subr.bf16.mxu0 0
        %1305 = vmatpush1.bf16.msra.mxu0 %v960
        %1306 = vmatprep.subr.bf16.mxu0 0
        %1307 = vmatpush1.bf16.msra.mxu0 %v961
        %1308 = vmatprep.subr.bf16.mxu0 0
        %1309 = vmatpush1.bf16.msra.mxu0 %v962
        %1310 = vmatprep.subr.bf16.mxu0 0
        %1311 = vmatpush1.bf16.msra.mxu0 %v963
        %1312 = vmatprep.subr.bf16.mxu0 0
        %1313 = vmatpush1.bf16.msra.mxu0 %v964
        %1314 = vmatprep.subr.bf16.mxu0 0
        %1315 = vmatpush1.bf16.msra.mxu0 %v965
        %1316 = vmatprep.subr.bf16.mxu0 0
        %1317 = vmatpush1.bf16.msra.mxu0 %v966
        %1318 = vmatprep.subr.bf16.mxu0 0
        %1319 = vmatpush1.bf16.msra.mxu0 %v967
        %1320 = vmatprep.subr.bf16.mxu0 0
        %1321 = vmatpush1.bf16.msra.mxu0 %v968
        %1322 = vmatprep.subr.bf16.mxu0 0
        %1323 = vmatpush1.bf16.msra.mxu0 %v969
        %1324 = vmatprep.subr.bf16.mxu0 0
        %1325 = vmatpush1.bf16.msra.mxu0 %v970
        %1326 = vmatprep.subr.bf16.mxu0 0
        %1327 = vmatpush1.bf16.msra.mxu0 %v971
        %1328 = vmatprep.subr.bf16.mxu0 0
        %1329 = vmatpush1.bf16.msra.mxu0 %v972
        %1330 = vmatprep.subr.bf16.mxu0 0
        %1331 = vmatpush1.bf16.msra.mxu0 %v973
        %1332 = vmatprep.subr.bf16.mxu0 0
        %1333 = vmatpush1.bf16.msra.mxu0 %v974
        %1334 = vmatprep.subr.bf16.mxu0 0
        %1335 = vmatpush1.bf16.msra.mxu0 %v975
        %1336 = vmatprep.mubr.bf16.mxu0 %v551
        %1337 = vmatmul.mubr.bf16.gmra.mrb[0].mxu0 %v550
        %v1338 = vpop.f32.mrb[0].mxu0
        %v1339 = vadd.f32 %v1251, %v1338
        %v1340 = vpop.f32.mrb[0].mxu0
        %v1341 = vpop.f32.mrb[0].mxu0
        %v1342 = vadd.f32 %v1254, %v1341
        %v1343 = vpop.f32.mrb[0].mxu0
        %1344 = vmatprep.mubr.bf16.mxu0 %v559
        %1345 = vmatmul.mubr.bf16.gmra.mrb[0].mxu0 %v558
        %v1346 = vpop.f32.mrb[0].mxu0
        %v1347 = vadd.f32 %v1259, %v1346
        %v1348 = vpop.f32.mrb[0].mxu0
        %v1349 = vpop.f32.mrb[0].mxu0
        %v1350 = vadd.f32 %v1262, %v1349
        %v1351 = vpop.f32.mrb[0].mxu0
        %1352 = vmatprep.mubr.bf16.mxu0 %v567
        %1353 = vmatmul.mubr.bf16.gmra.mrb[0].mxu0 %v566
        %v1354 = vpop.f32.mrb[0].mxu0
        %v1355 = vadd.f32 %v1267, %v1354
        %v1356 = vpop.f32.mrb[0].mxu0
        %v1357 = vpop.f32.mrb[0].mxu0
        %v1358 = vadd.f32 %v1270, %v1357
        %v1359 = vpop.f32.mrb[0].mxu0
        %1360 = vmatprep.mubr.bf16.mxu0 %v575
        %1361 = vmatmul.mubr.bf16.gmra.mrb[0].mxu0 %v574
        %v1362 = vpop.f32.mrb[0].mxu0
        %v1363 = vadd.f32 %v1275, %v1362
        %v1364 = vpop.f32.mrb[0].mxu0
        %v1365 = vpop.f32.mrb[0].mxu0
        %v1366 = vadd.f32 %v1278, %v1365
        %v1367 = vpop.f32.mrb[0].mxu0
        %1368 = vmatprep.mubr.bf16.mxu0 %v583
        %1369 = vmatmul.mubr.bf16.gmra.mrb[0].mxu0 %v582
        %v1370 = vpop.f32.mrb[0].mxu0
        %v1371 = vadd.f32 %v1283, %v1370
        %v1372 = vpop.f32.mrb[0].mxu0
        %v1373 = vpop.f32.mrb[0].mxu0
        %v1374 = vadd.f32 %v1286, %v1373
        %v1375 = vpop.f32.mrb[0].mxu0
        %1376 = vmatprep.mubr.bf16.mxu0 %v591
        %1377 = vmatmul.mubr.bf16.gmra.mrb[0].mxu0 %v590
        %v1378 = vpop.f32.mrb[0].mxu0
        %v1379 = vadd.f32 %v1291, %v1378
        %v1380 = vpop.f32.mrb[0].mxu0
        %v1381 = vpop.f32.mrb[0].mxu0
        %v1382 = vadd.f32 %v1294, %v1381
        %v1383 = vpop.f32.mrb[0].mxu0
        %1384 = vmatprep.mubr.bf16.mxu0 %v599
        %1385 = vmatmul.mubr.bf16.gmra.mrb[0].mxu0 %v598
        %v1386 = vpop.f32.mrb[0].mxu0
        %v1387 = vadd.f32 %v1299, %v1386
        %v1388 = vpop.f32.mrb[0].mxu0
        %v1389 = vpop.f32.mrb[0].mxu0
        %v1390 = vpop.f32.mrb[0].mxu0
        %1391 = vdwg.mxu0
        %v1392 = vmax.f32 %v1339, 0.0
        %v1393 = vmax.f32 %v1342, 0.0
        %v1394 = vmax.f32 %v1347, 0.0
        %v1395 = vmax.f32 %v1350, 0.0
        %v1396 = vmax.f32 %v1355, 0.0
        %v1397 = vmax.f32 %v1358, 0.0
        %v1398 = vmax.f32 %v1363, 0.0
        %v1399 = vmax.f32 %v1366, 0.0
        %v1400 = vmax.f32 %v1371, 0.0
        %v1401 = vmax.f32 %v1374, 0.0
        %v1402 = vmax.f32 %v1379, 0.0
        %v1403 = vmax.f32 %v1382, 0.0
        %v1404 = vmax.f32 %v1387, 0.0
        %v1405 = vpack.c.bf16 %v1393, %v1392
        %v1406 = vpack.c.bf16 %v1395, %v1394
        %v1407 = vpack.c.bf16 %v1397, %v1396
        %v1408 = vpack.c.bf16 %v1399, %v1398
        %v1409 = vpack.c.bf16 %v1401, %v1400
        %v1410 = vpack.c.bf16 %v1403, %v1402
        %v1411 = vpack.c.bf16 %v1404, %v1404
        %v1419 = vunpack.c.l.b16 %v1405
        %v1420 = vunpack.c.h.b16 %v1405
        %v1421 = vunpack.c.l.b16 %v1406
        %v1422 = vunpack.c.h.b16 %v1406
        %v1423 = vunpack.c.l.b16 %v1407
        %v1424 = vunpack.c.h.b16 %v1407
        %v1425 = vunpack.c.l.b16 %v1408
        %v1426 = vunpack.c.h.b16 %v1408
        %v1427 = vunpack.c.l.b16 %v1409
        %v1428 = vunpack.c.h.b16 %v1409
        %v1429 = vunpack.c.l.b16 %v1410
        %v1430 = vunpack.c.h.b16 %v1410
        %v1431 = vunpack.c.l.b16 %v1411
        %v1432 = vpack.c.b16 %v1419, %v1419
        %v1433 = vpack.c.b16 %v1420, %v1420
        %v1434 = vpack.c.b16 %v1421, %v1421
        %v1435 = vpack.c.b16 %v1422, %v1422
        %v1436 = vpack.c.b16 %v1423, %v1423
        %v1437 = vpack.c.b16 %v1424, %v1424
        %v1438 = vpack.c.b16 %v1425, %v1425
        %v1439 = vpack.c.b16 %v1426, %v1426
        %v1440 = vpack.c.b16 %v1427, %v1427
        %v1441 = vpack.c.b16 %v1428, %v1428
        %v1442 = vpack.c.b16 %v1429, %v1429
        %v1443 = vpack.c.b16 %v1430, %v1430
        %v1444 = vpack.c.b16 %v1431, %v1431
        %1458 = vst [vmem:[%s177] sm:$0xf] %v1432
        %1459 = vst [vmem:[%s177 + $0x4] sm:$0xf] %v1433
        %1460 = vst [vmem:[%s177 + $0x8] sm:$0xf] %v1434
        %1461 = vst [vmem:[%s177 + $0xc] sm:$0xf] %v1435
        %1462 = vst [vmem:[%s177 + $0x10] sm:$0xf] %v1436
        %1463 = vst [vmem:[%s177 + $0x14] sm:$0xf] %v1437
        %1464 = vst [vmem:[%s177 + $0x18] sm:$0xf] %v1438
        %1465 = vst [vmem:[%s177 + $0x1c] sm:$0xf] %v1439
        %1466 = vst [vmem:[%s177 + $0x20] sm:$0xf] %v1440
        %1467 = vst [vmem:[%s177 + $0x24] sm:$0xf] %v1441
        %1468 = vst [vmem:[%s177 + $0x28] sm:$0xf] %v1442
        %1469 = vst [vmem:[%s177 + $0x2c] sm:$0xf] %v1443
        %1470 = vst [vmem:[%s177 + $0x30] sm:$0xf] %v1444
        %s1471 = sand.u32 %s90, 1
        %s1472 = sand.u32 %s90, 1
        %s1473 = smul.addr %s1472, 52
        %s1474 = scalar_lea.vmem [#allocation2], %s1473
        // Predicated region
        $region33: #{critic_forward.4} parent=31 // pred_check
          %p1475 = pneg %p100
        $region34: #{critic_forward.4} parent=31 // pred_check_branch
          %1477 = sbr.rel (%p1475) target = $region36
        $region35: #{critic_forward.4} parent=31 // pred_region
          %s1478 = smul.u32 13, %s14
          %s1479 = ssub.s32 25, %s1478
          %p1480 = scmp.lt.s32.totalorder %s1479, 13
          %s1481 = scalar_select %p1480, %s1479, 13
          %s1482 = smul.u32 64, %s1481
          %p1483 = scmp.ne.s32.totalorder 0, %s1482
          %s1484 = smul.addr %s1478, 4
          %s1485 = scalar_lea.vmem %s3, %s1484
          // Predicated region
          $region37: #{critic_forward.4} parent=35 // pred_check
            %p1486 = pneg %p1483
          $region38: #{critic_forward.4} parent=35 // pred_check_branch
            %1488 = sbr.rel (%p1486) target = $region40
          $region39: #{critic_forward.4} parent=35 // pred_region
            // Predicated region
            $region41: #{critic_forward.4} parent=39 // pred_check
              _
            $region42: #{critic_forward.4} parent=39 // pred_check_branch
              %1490 = sbr.rel target = $region44
            $region43: #{critic_forward.4} parent=39 // pred_region
              // Predicated region
              $region63: #{critic_forward.4} parent=43 // pred_check
                _
              $region64: #{critic_forward.4} parent=43 // pred_check_branch
                %1564 = sbr.rel (0) target = $region66
              $region65: #{critic_forward.4} parent=43 // pred_region
                %s1566 = sdiv.u32.pop %s1481, 13
                %s1567 = srem.u32.pop %s1481, 13
                // While loop
                $region67: #{critic_forward.4} parent=65 // loop_pre_header
                  _
                $region68: #{critic_forward.4} parent=65 // loop_header
                  %s1569 = sphi 0, %s1571
                  %p1570 = scmp.ge.s32.totalorder %s1569, %s1566
                  %s1574 = sphi 0, %s1605
                  %s1575 = sphi %s1474, %s1608
                  %s1576 = sphi %s1485, %s1609
                $region69: #{critic_forward.4} parent=65 // loop_header_branch
                  %1573 = sbr.rel (%p1570) target = $region73
                $region70: #{critic_forward.4} parent=65 // loop_body
                  %v1577 = vld [vmem:[%s1575] sm:$0xf]
                  %1578 = vst [vmem:[%s1576] sm:$0xf] %v1577
                  %v1579 = vld [vmem:[%s1575 + $0x4] sm:$0xf]
                  %1580 = vst [vmem:[%s1576 + $0x4] sm:$0xf] %v1579
                  %v1581 = vld [vmem:[%s1575 + $0x8] sm:$0xf]
                  %1582 = vst [vmem:[%s1576 + $0x8] sm:$0xf] %v1581
                  %v1583 = vld [vmem:[%s1575 + $0xc] sm:$0xf]
                  %1584 = vst [vmem:[%s1576 + $0xc] sm:$0xf] %v1583
                  %v1585 = vld [vmem:[%s1575 + $0x10] sm:$0xf]
                  %1586 = vst [vmem:[%s1576 + $0x10] sm:$0xf] %v1585
                  %v1587 = vld [vmem:[%s1575 + $0x14] sm:$0xf]
                  %1588 = vst [vmem:[%s1576 + $0x14] sm:$0xf] %v1587
                  %v1589 = vld [vmem:[%s1575 + $0x18] sm:$0xf]
                  %1590 = vst [vmem:[%s1576 + $0x18] sm:$0xf] %v1589
                  %v1591 = vld [vmem:[%s1575 + $0x1c] sm:$0xf]
                  %1592 = vst [vmem:[%s1576 + $0x1c] sm:$0xf] %v1591
                  %v1593 = vld [vmem:[%s1575 + $0x20] sm:$0xf]
                  %1594 = vst [vmem:[%s1576 + $0x20] sm:$0xf] %v1593
                  %v1595 = vld [vmem:[%s1575 + $0x24] sm:$0xf]
                  %1596 = vst [vmem:[%s1576 + $0x24] sm:$0xf] %v1595
                  %v1597 = vld [vmem:[%s1575 + $0x28] sm:$0xf]
                  %1598 = vst [vmem:[%s1576 + $0x28] sm:$0xf] %v1597
                  %v1599 = vld [vmem:[%s1575 + $0x2c] sm:$0xf]
                  %1600 = vst [vmem:[%s1576 + $0x2c] sm:$0xf] %v1599
                  %v1601 = vld [vmem:[%s1575 + $0x30] sm:$0xf]
                  %1602 = vst [vmem:[%s1576 + $0x30] sm:$0xf] %v1601
                  %s1603 = sadd.s32 1, %s1574
                  %p1604 = scmp.ge.s32.totalorder %s1603, %s1566
                  %s1605 = scalar_select %p1604, 0, %s1603
                  %s1606 = smul.u32 %s1605, 52
                  %s1607 = smul.u32 %s1605, 52
                  %s1608 = scalar_lea.vmem %s1474, %s1606 [#allocation2]
                  %s1609 = scalar_lea.vmem %s1485, %s1607
                $region71: #{critic_forward.4} parent=65 // loop_footer
                  %s1571 = sadd.s32 %s1569, 1
                $region72: #{critic_forward.4} parent=65 // loop_footer_branch
                  %1568 = sbr.rel target = $region68
                $region73: #{critic_forward.4} parent=65 // loop_exit
                  _
                %s1610 = sdiv.u32.pop %s1481, 13
                %s1611 = srem.u32.pop %s1481, 13
                %s1612 = smul.u32 %s1610, 13
                %s1613 = smul.u32 4, %s1612
                %s1614 = scalar_lea.vmem %s1474, %s1613 [#allocation2]
                %s1615 = smul.u32 4, %s1612
                %s1616 = scalar_lea.vmem %s1485, %s1615
                // While loop
                $region74: #{critic_forward.4} parent=65 // loop_pre_header
                  _
                $region75: #{critic_forward.4} parent=65 // loop_header
                  %s1618 = sphi 0, %s1620
                  %p1619 = scmp.ge.s32.totalorder %s1618, %s1611
                  %s1623 = sphi 0, %s1630
                  %s1624 = sphi %s1614, %s1633
                  %s1625 = sphi %s1616, %s1634
                $region76: #{critic_forward.4} parent=65 // loop_header_branch
                  %1622 = sbr.rel (%p1619) target = $region80
                $region77: #{critic_forward.4} parent=65 // loop_body
                  %v1626 = vld [vmem:[%s1624] sm:$0xf]
                  %1627 = vst [vmem:[%s1625] sm:$0xf] %v1626
                  %s1628 = sadd.s32 1, %s1623
                  %p1629 = scmp.ge.s32.totalorder %s1628, %s1611
                  %s1630 = scalar_select %p1629, 0, %s1628
                  %s1631 = smul.u32 %s1630, 4
                  %s1632 = smul.u32 %s1630, 4
                  %s1633 = scalar_lea.vmem %s1614, %s1631 [#allocation2]
                  %s1634 = scalar_lea.vmem %s1616, %s1632
                $region78: #{critic_forward.4} parent=65 // loop_footer
                  %s1620 = sadd.s32 %s1618, 1
                $region79: #{critic_forward.4} parent=65 // loop_footer_branch
                  %1617 = sbr.rel target = $region75
                $region80: #{critic_forward.4} parent=65 // loop_exit
                  _
              $region66: #{critic_forward.4} parent=43 // pred_fallthru
                _
            $region44: #{critic_forward.4} parent=39 // pred_fallthru
              _
            // Predicated region
            $region45: #{critic_forward.4} parent=39 // pred_check
              _
            $region46: #{critic_forward.4} parent=39 // pred_check_branch
              %1492 = sbr.rel (0) target = $region48
            $region47: #{critic_forward.4} parent=39 // pred_region
              %s1494 = sdiv.u32.pop %s1481, 13
              %s1495 = srem.u32.pop %s1481, 13
              // While loop
              $region49: #{critic_forward.4} parent=47 // loop_pre_header
                _
              $region50: #{critic_forward.4} parent=47 // loop_header
                %s1497 = sphi 0, %s1499
                %p1498 = scmp.ge.s32.totalorder %s1497, %s1494
                %s1502 = sphi 0, %s1533
                %s1503 = sphi %s1474, %s1536
                %s1504 = sphi %s1485, %s1537
              $region51: #{critic_forward.4} parent=47 // loop_header_branch
                %1501 = sbr.rel (%p1498) target = $region55
              $region52: #{critic_forward.4} parent=47 // loop_body
                %v1505 = vld [vmem:[%s1503] sm:$0xf]
                %1506 = vst [vmem:[%s1504] sm:$0xf] %v1505
                %v1507 = vld [vmem:[%s1503 + $0x4] sm:$0xf]
                %1508 = vst [vmem:[%s1504 + $0x4] sm:$0xf] %v1507
                %v1509 = vld [vmem:[%s1503 + $0x8] sm:$0xf]
                %1510 = vst [vmem:[%s1504 + $0x8] sm:$0xf] %v1509
                %v1511 = vld [vmem:[%s1503 + $0xc] sm:$0xf]
                %1512 = vst [vmem:[%s1504 + $0xc] sm:$0xf] %v1511
                %v1513 = vld [vmem:[%s1503 + $0x10] sm:$0xf]
                %1514 = vst [vmem:[%s1504 + $0x10] sm:$0xf] %v1513
                %v1515 = vld [vmem:[%s1503 + $0x14] sm:$0xf]
                %1516 = vst [vmem:[%s1504 + $0x14] sm:$0xf] %v1515
                %v1517 = vld [vmem:[%s1503 + $0x18] sm:$0xf]
                %1518 = vst [vmem:[%s1504 + $0x18] sm:$0xf] %v1517
                %v1519 = vld [vmem:[%s1503 + $0x1c] sm:$0xf]
                %1520 = vst [vmem:[%s1504 + $0x1c] sm:$0xf] %v1519
                %v1521 = vld [vmem:[%s1503 + $0x20] sm:$0xf]
                %1522 = vst [vmem:[%s1504 + $0x20] sm:$0xf] %v1521
                %v1523 = vld [vmem:[%s1503 + $0x24] sm:$0xf]
                %1524 = vst [vmem:[%s1504 + $0x24] sm:$0xf] %v1523
                %v1525 = vld [vmem:[%s1503 + $0x28] sm:$0xf]
                %1526 = vst [vmem:[%s1504 + $0x28] sm:$0xf] %v1525
                %v1527 = vld [vmem:[%s1503 + $0x2c] sm:$0xf]
                %1528 = vst [vmem:[%s1504 + $0x2c] sm:$0xf] %v1527
                %v1529 = vld [vmem:[%s1503 + $0x30] sm:$0xf]
                %1530 = vst [vmem:[%s1504 + $0x30] sm:$0xf] %v1529
                %s1531 = sadd.s32 1, %s1502
                %p1532 = scmp.ge.s32.totalorder %s1531, %s1494
                %s1533 = scalar_select %p1532, 0, %s1531
                %s1534 = smul.u32 %s1533, 52
                %s1535 = smul.u32 %s1533, 52
                %s1536 = scalar_lea.vmem %s1474, %s1534 [#allocation2]
                %s1537 = scalar_lea.vmem %s1485, %s1535
              $region53: #{critic_forward.4} parent=47 // loop_footer
                %s1499 = sadd.s32 %s1497, 1
              $region54: #{critic_forward.4} parent=47 // loop_footer_branch
                %1496 = sbr.rel target = $region50
              $region55: #{critic_forward.4} parent=47 // loop_exit
                _
              %s1538 = sdiv.u32.pop %s1481, 13
              %s1539 = srem.u32.pop %s1481, 13
              %s1540 = smul.u32 %s1538, 13
              %s1541 = smul.u32 4, %s1540
              %s1542 = scalar_lea.vmem %s1474, %s1541 [#allocation2]
              %s1543 = smul.u32 4, %s1540
              %s1544 = scalar_lea.vmem %s1485, %s1543
              // While loop
              $region56: #{critic_forward.4} parent=47 // loop_pre_header
                _
              $region57: #{critic_forward.4} parent=47 // loop_header
                %s1546 = sphi 0, %s1548
                %p1547 = scmp.ge.s32.totalorder %s1546, %s1539
                %s1551 = sphi 0, %s1558
                %s1552 = sphi %s1542, %s1561
                %s1553 = sphi %s1544, %s1562
              $region58: #{critic_forward.4} parent=47 // loop_header_branch
                %1550 = sbr.rel (%p1547) target = $region62
              $region59: #{critic_forward.4} parent=47 // loop_body
                %v1554 = vld [vmem:[%s1552] sm:$0xf]
                %1555 = vst [vmem:[%s1553] sm:$0xf] %v1554
                %s1556 = sadd.s32 1, %s1551
                %p1557 = scmp.ge.s32.totalorder %s1556, %s1539
                %s1558 = scalar_select %p1557, 0, %s1556
                %s1559 = smul.u32 %s1558, 4
                %s1560 = smul.u32 %s1558, 4
                %s1561 = scalar_lea.vmem %s1542, %s1559 [#allocation2]
                %s1562 = scalar_lea.vmem %s1544, %s1560
              $region60: #{critic_forward.4} parent=47 // loop_footer
                %s1548 = sadd.s32 %s1546, 1
              $region61: #{critic_forward.4} parent=47 // loop_footer_branch
                %1545 = sbr.rel target = $region57
              $region62: #{critic_forward.4} parent=47 // loop_exit
                _
            $region48: #{critic_forward.4} parent=39 // pred_fallthru
              _
          $region40: #{critic_forward.4} parent=35 // pred_fallthru
            _
          %1635 = vnop
        $region36: #{critic_forward.4} parent=31 // pred_fallthru
          _
      $region32: #{critic_forward.4} parent=5 // pred_fallthru
        _
      %p1636 = scmp.le.s32.totalorder 2, %s9
      // Predicated region
      $region81: #{critic_forward.4} parent=5 // pred_check
        %p1637 = pneg %p1636
      $region82: #{critic_forward.4} parent=5 // pred_check_branch
        %1639 = sbr.rel (%p1637) target = $region84
      $region83: #{critic_forward.4} parent=5 // pred_region
        %s1640 = ssub.s32 %s9, 2
        // Predicated region
        $region85: #{critic_forward.4} parent=83 // pred_check
          %p1641 = pneg %p106
        $region86: #{critic_forward.4} parent=83 // pred_check_branch
          %1643 = sbr.rel (%p1641) target = $region88
        $region87: #{critic_forward.4} parent=83 // pred_region
          %s1644 = sand.u32 %s91, 1
          %s1645 = sand.u32 %s91, 1
          %s1646 = smul.addr %s1645, 52
          %s1647 = scalar_lea.vmem [#allocation2], %s1646
        $region88: #{critic_forward.4} parent=83 // pred_fallthru
          _
      $region84: #{critic_forward.4} parent=5 // pred_fallthru
        _
    $region6: #{critic_forward.4} parent=1 // loop_footer
      %s13 = sadd.s32 1, %s9
    $region7: #{critic_forward.4} parent=1 // loop_footer_branch
      %8 = sbr.rel target = $region3
    $region8: #{critic_forward.4} parent=1 // loop_exit
      _

// kernel: critic_forward.5
$region0: #{critic_forward.5}
  #allocation0 [shape = 'u32[]', space=smem, size = 0x4, offset = 0x4, fixed_abs, tag = 'smem constant byte address 0x4 - core index']
  #allocation1 [shape = 'u32[144,128]{1,0:T(1,128)}', space=vmem, size = 0x12000, scoped, tag = 'internal scratch']
  %s0 = inlined_call_operand.vmem [shape: bf16[81,1024], index: 0, kind: input, shape index: {}]
  %s1 = inlined_call_operand.vmem [shape: bf16[1024,128], index: 1, kind: input, shape index: {}]
  %s2 = inlined_call_operand.vmem [shape: f32[1,128], index: 2, kind: input, shape index: {}]
  %s3 = inlined_call_operand.vmem [shape: bf16[81,128], index: 3, kind: output, shape index: {}]
  %s4 = sld [smem:[#allocation0]]
  $region89: #{critic_forward.5} parent=0
    _
  %s6 = ssub.s32 1, %s4
  %s7 = scalar_select 0, %s6, %s4
  $region1: #{critic_forward.5} parent=0
    #allocation2 [shape = 'u8[24576]{0}', space=vmem, size = 0x6000, scoped, tag = 'output window, operand 0']
    loop: start=0, step=1, limit=4
    $region2: #{critic_forward.5} parent=1 // loop_pre_header
      _
    $region3: #{critic_forward.5} parent=1 // loop_header
      %s9 = sphi 0, %s13
      %p10 = scmp.ge.s32.totalorder %s9, 4
      %s19 = sphi 0, %s21
      %s22 = sphi 0, %s19
      %s23 = sphi 0, %s22
      %s39 = sphi 0, %s23
      %s43 = sphi 0, %s43
      %s45 = sphi 0, %s43
      %s46 = sphi 0, %s45
      %s60 = sphi 0, %s46
      %s64 = sphi 0, %s64
      %s66 = sphi 0, %s64
      %s67 = sphi 0, %s66
      %s81 = sphi 0, %s67
      %s87 = sphi 0, %s89
      %s90 = sphi 0, %s87
      %s91 = sphi 0, %s90
      %s107 = sphi 0, %s91
    $region4: #{critic_forward.5} parent=1 // loop_header_branch
      %12 = sbr.rel (%p10) target = $region8
    $region5: #{critic_forward.5} parent=1 // loop_body
      %s14 = ssub.s32 %s9, 1
      %s15 = ssub.s32 %s9, 2
      %s16 = sadd.s32 %s9, 1
      %s17 = ssub.s32 %s9, %s16
      %p18 = scmp.eq.s32.totalorder %s17, 0
      %s20 = sadd.s32 %s19, 1
      %s21 = scalar_select %p18, %s19, %s20
      %p24 = pneg %p18
      %p25 = scmp.eq.s32.totalorder %s9, 1
      %p26 = por %p24, %p25
      %p27 = scmp.ne.s32.totalorder %s19, %s22
      %p28 = scmp.eq.s32.totalorder %s9, 0
      %p29 = por %p27, %p28
      %p30 = scmp.ne.s32.totalorder %s19, %s22
      %p31 = scmp.eq.s32.totalorder %s14, 1
      %p32 = por %p30, %p31
      %p33 = scmp.ne.s32.totalorder %s22, %s23
      %p34 = scmp.eq.s32.totalorder %s14, 0
      %p35 = por %p33, %p34
      %p36 = scmp.ne.s32.totalorder %s22, %s23
      %p37 = scmp.eq.s32.totalorder %s15, 1
      %p38 = por %p36, %p37
      %p40 = scmp.ne.s32.totalorder %s23, %s39
      %p41 = scmp.eq.s32.totalorder %s15, 0
      %p42 = por %p40, %p41
      %s44 = sadd.s32 %s43, 1
      %p47 = scmp.eq.s32.totalorder %s9, 1
      %p48 = scmp.ne.s32.totalorder %s43, %s45
      %p49 = scmp.eq.s32.totalorder %s9, 0
      %p50 = por %p48, %p49
      %p51 = scmp.ne.s32.totalorder %s43, %s45
      %p52 = scmp.eq.s32.totalorder %s14, 1
      %p53 = por %p51, %p52
      %p54 = scmp.ne.s32.totalorder %s45, %s46
      %p55 = scmp.eq.s32.totalorder %s14, 0
      %p56 = por %p54, %p55
      %p57 = scmp.ne.s32.totalorder %s45, %s46
      %p58 = scmp.eq.s32.totalorder %s15, 1
      %p59 = por %p57, %p58
      %p61 = scmp.ne.s32.totalorder %s46, %s60
      %p62 = scmp.eq.s32.totalorder %s15, 0
      %p63 = por %p61, %p62
      %s65 = sadd.s32 %s64, 1
      %p68 = scmp.eq.s32.totalorder %s9, 1
      %p69 = scmp.ne.s32.totalorder %s64, %s66
      %p70 = scmp.eq.s32.totalorder %s9, 0
      %p71 = por %p69, %p70
      %p72 = scmp.ne.s32.totalorder %s64, %s66
      %p73 = scmp.eq.s32.totalorder %s14, 1
      %p74 = por %p72, %p73
      %p75 = scmp.ne.s32.totalorder %s66, %s67
      %p76 = scmp.eq.s32.totalorder %s14, 0
      %p77 = por %p75, %p76
      %p78 = scmp.ne.s32.totalorder %s66, %s67
      %p79 = scmp.eq.s32.totalorder %s15, 1
      %p80 = por %p78, %p79
      %p82 = scmp.ne.s32.totalorder %s67, %s81
      %p83 = scmp.eq.s32.totalorder %s15, 0
      %p84 = por %p82, %p83
      %s85 = ssub.s32 %s9, %s16
      %p86 = scmp.eq.s32.totalorder %s85, 0
      %s88 = sadd.s32 %s87, 1
      %s89 = scalar_select %p86, %s87, %s88
      %p92 = pneg %p86
      %p93 = scmp.eq.s32.totalorder %s9, 1
      %p94 = por %p92, %p93
      %p95 = scmp.ne.s32.totalorder %s87, %s90
      %p96 = scmp.eq.s32.totalorder %s9, 0
      %p97 = por %p95, %p96
      %p98 = scmp.ne.s32.totalorder %s87, %s90
      %p99 = scmp.eq.s32.totalorder %s14, 1
      %p100 = por %p98, %p99
      %p101 = scmp.ne.s32.totalorder %s90, %s91
      %p102 = scmp.eq.s32.totalorder %s14, 0
      %p103 = por %p101, %p102
      %p104 = scmp.ne.s32.totalorder %s90, %s91
      %p105 = scmp.eq.s32.totalorder %s15, 1
      %p106 = por %p104, %p105
      %p108 = scmp.ne.s32.totalorder %s91, %s107
      %p109 = scmp.eq.s32.totalorder %s15, 0
      %p110 = por %p108, %p109
      %p111 = scmp.le.s32.totalorder 1, %s9
      %p112 = scmp.lt.s32.totalorder %s9, 3
      %p113 = pnand %p111, %p112
      %p114 = pneg %p113
      // Predicated region
      $region9: #{critic_forward.5} parent=5 // pred_check
        _
      $region10: #{critic_forward.5} parent=5 // pred_check_branch
        %116 = sbr.rel (%p113) target = $region12
      $region11: #{critic_forward.5} parent=5 // pred_region
        %s117 = ssub.s32 %s9, 1
        // Predicated region
        $region13: #{critic_forward.5} parent=11 // pred_check
          %p118 = pneg %p56
        $region14: #{critic_forward.5} parent=11 // pred_check_branch
          %120 = sbr.rel (%p118) target = $region16
        $region15: #{critic_forward.5} parent=11 // pred_region
          _
        $region16: #{critic_forward.5} parent=11 // pred_fallthru
          _
        // Predicated region
        $region17: #{critic_forward.5} parent=11 // pred_check
          %p121 = pneg %p77
        $region18: #{critic_forward.5} parent=11 // pred_check_branch
          %123 = sbr.rel (%p121) target = $region20
        $region19: #{critic_forward.5} parent=11 // pred_region
          _
        $region20: #{critic_forward.5} parent=11 // pred_fallthru
          _
      $region12: #{critic_forward.5} parent=5 // pred_fallthru
        _
      %p124 = scmp.lt.s32.totalorder %s9, 2
      // Predicated region
      $region21: #{critic_forward.5} parent=5 // pred_check
        %p125 = pneg %p124
      $region22: #{critic_forward.5} parent=5 // pred_check_branch
        %127 = sbr.rel (%p125) target = $region24
      $region23: #{critic_forward.5} parent=5 // pred_region
        // Predicated region
        $region25: #{critic_forward.5} parent=23 // pred_check
          %p128 = pneg %p29
        $region26: #{critic_forward.5} parent=23 // pred_check_branch
          %130 = sbr.rel (%p128) target = $region28
        $region27: #{critic_forward.5} parent=23 // pred_region
          %s131 = smul.u32 6, %s9
          %s132 = ssub.s32 11, %s131
          %p133 = scmp.lt.s32.totalorder %s132, 6
          %s134 = scalar_select %p133, %s132, 6
          %s135 = smul.u32 64, %s134
          %s136 = smul.u32 %s135, 8
          %p137 = scmp.lt.s32.totalorder %s131, 10
          %s138 = scalar_select %p137, %s131, 10
          %s139 = smul.addr %s138, 8
          %s140 = smul.addr %s139, 4
          %s141 = scalar_lea.vmem %s0, %s140
          %s142 = smul.u32 6, %s9
          %s143 = ssub.s32 11, %s142
          %p144 = scmp.lt.s32.totalorder %s143, 6
          %s145 = scalar_select %p144, %s143, 6
          %s146 = smul.u32 64, %s145
          %s147 = smul.u32 %s146, 8
        $region28: #{critic_forward.5} parent=23 // pred_fallthru
          _
      $region24: #{critic_forward.5} parent=5 // pred_fallthru
        _
      %p148 = scmp.le.s32.totalorder 1, %s9
      %p149 = scmp.lt.s32.totalorder %s9, 3
      %p150 = pnand %p148, %p149
      %p151 = pneg %p150
      // Predicated region
      $region29: #{critic_forward.5} parent=5 // pred_check
        _
      $region30: #{critic_forward.5} parent=5 // pred_check_branch
        %153 = sbr.rel (%p150) target = $region32
      $region31: #{critic_forward.5} parent=5 // pred_region
        %s154 = ssub.s32 %s9, 1
        %s155 = smul.u32 6, %s14
        %s156 = ssub.s32 11, %s155
        %p157 = scmp.lt.s32.totalorder %s156, 6
        %s158 = scalar_select %p157, %s156, 6
        %s159 = smul.u32 64, %s158
        %s160 = smul.u32 %s159, 8
        %p161 = scmp.lt.s32.totalorder %s155, 10
        %s162 = scalar_select %p161, %s155, 10
        %s163 = smul.addr %s162, 8
        %s164 = smul.addr %s163, 4
        %s165 = scalar_lea.vmem %s0, %s164
        %p166 = pneg %p35
        %p167 = pneg %p32
        %p168 = pneg %p56
        %p169 = pneg %p53
        %p170 = pneg %p77
        %p171 = pneg %p74
        %p172 = pneg %p103
        %p173 = pneg %p100
        %s174 = sand.u32 %s90, 1
        %s175 = sand.u32 %s90, 1
        %s176 = smul.addr %s175, 24
        %s177 = scalar_lea.vmem [#allocation2], %s176
        %s178 = smul.u32 6, %s14
        %s179 = ssub.s32 11, %s178
        %p180 = scmp.lt.s32.totalorder %s179, 6
        %s181 = scalar_select %p180, %s179, 6
        %s182 = smul.u32 64, %s181
        %s183 = smul.u32 %s182, 8
        %p184 = scmp.lt.s32.totalorder %s178, 10
        %s185 = scalar_select %p184, %s178, 10
        %s186 = smul.addr %s185, 8
        %s187 = smul.addr %s186, 4
        %s188 = scalar_lea.vmem %s0, %s187
        %s189 = smul.u32 6, %s14
        %s190 = ssub.s32 11, %s189
        %p191 = scmp.lt.s32.totalorder %s190, 6
        %s192 = scalar_select %p191, %s190, 6
        %s193 = smul.u32 64, %s192
        %s194 = smul.u32 %s193, 8
        %s195 = smul.u32 6, %s14
        %s196 = ssub.s32 11, %s195
        %p197 = scmp.lt.s32.totalorder %s196, 6
        %s198 = scalar_select %p197, %s196, 6
        %s199 = smul.u32 64, %s198
        %v201 = vld [vmem:[%s188] sm:$0xff]
        %v202 = vld [vmem:[%s188 + $0x8] sm:$0xff]
        %v203 = vld [vmem:[%s188 + $0x10] sm:$0xff]
        %v204 = vld [vmem:[%s188 + $0x18] sm:$0xff]
        %v205 = vld [vmem:[%s188 + $0x20] sm:$0xff]
        %v206 = vld [vmem:[%s188 + $0x28] sm:$0xff]
        %v207 = vld [vmem:[%s188 + $0x30] sm:$0xff]
        %v208 = vld [vmem:[%s188 + $0x38] sm:$0xff]
        %v209 = vld [vmem:[%s188 + $0x40] sm:$0xff]
        %v210 = vld [vmem:[%s188 + $0x48] sm:$0xff]
        %v211 = vld [vmem:[%s188 + $0x50] sm:$0xff]
        %v212 = vld [vmem:[%s188 + $0x58] sm:$0xff]
        %v213 = vld [vmem:[%s188 + $0x60] sm:$0xff]
        %v214 = vld [vmem:[%s188 + $0x68] sm:$0xff]
        %v215 = vld [vmem:[%s188 + $0x70] sm:$0xff]
        %v216 = vld [vmem:[%s188 + $0x78] sm:$0xff]
        %v217 = vld [vmem:[%s188 + $0x80] sm:$0xff]
        %v218 = vld [vmem:[%s188 + $0x88] sm:$0xff]
        %v219 = vld [vmem:[%s188 + $0x90] sm:$0xff]
        %v220 = vld [vmem:[%s188 + $0x98] sm:$0xff]
        %v221 = vld [vmem:[%s188 + $0xa0] sm:$0xff]
        %v222 = vld [vmem:[%s188 + $0xa8] sm:$0xff]
        %v223 = vld [vmem:[%s188 + $0xb0] sm:$0xff]
        %v224 = vld [vmem:[%s188 + $0xb8] sm:$0xff]
        %v225 = vld [vmem:[%s1] sm:$0xf]
        %v226 = vld [vmem:[%s1 + $0x4] sm:$0xf]
        %v227 = vld [vmem:[%s1 + $0x8] sm:$0xf]
        %v228 = vld [vmem:[%s1 + $0xc] sm:$0xf]
        %v229 = vld [vmem:[%s1 + $0x10] sm:$0xf]
        %v230 = vld [vmem:[%s1 + $0x14] sm:$0xf]
        %v231 = vld [vmem:[%s1 + $0x18] sm:$0xf]
        %v232 = vld [vmem:[%s1 + $0x1c] sm:$0xf]
        %v233 = vld [vmem:[%s1 + $0x20] sm:$0xf]
        %v234 = vld [vmem:[%s1 + $0x24] sm:$0xf]
        %v235 = vld [vmem:[%s1 + $0x28] sm:$0xf]
        %v236 = vld [vmem:[%s1 + $0x2c] sm:$0xf]
        %v237 = vld [vmem:[%s1 + $0x30] sm:$0xf]
        %v238 = vld [vmem:[%s1 + $0x34] sm:$0xf]
        %v239 = vld [vmem:[%s1 + $0x38] sm:$0xf]
        %v240 = vld [vmem:[%s1 + $0x3c] sm:$0xf]
        %v241 = vld [vmem:[%s1 + $0x40] sm:$0xf]
        %v242 = vld [vmem:[%s1 + $0x44] sm:$0xf]
        %v243 = vld [vmem:[%s1 + $0x48] sm:$0xf]
        %v244 = vld [vmem:[%s1 + $0x4c] sm:$0xf]
        %v245 = vld [vmem:[%s1 + $0x50] sm:$0xf]
        %v246 = vld [vmem:[%s1 + $0x54] sm:$0xf]
        %v247 = vld [vmem:[%s1 + $0x58] sm:$0xf]
        %v248 = vld [vmem:[%s1 + $0x5c] sm:$0xf]
        %v249 = vld [vmem:[%s1 + $0x60] sm:$0xf]
        %v250 = vld [vmem:[%s1 + $0x64] sm:$0xf]
        %v251 = vld [vmem:[%s1 + $0x68] sm:$0xf]
        %v252 = vld [vmem:[%s1 + $0x6c] sm:$0xf]
        %v253 = vld [vmem:[%s1 + $0x70] sm:$0xf]
        %v254 = vld [vmem:[%s1 + $0x74] sm:$0xf]
        %v255 = vld [vmem:[%s1 + $0x78] sm:$0xf]
        %v256 = vld [vmem:[%s1 + $0x7c] sm:$0xf]
        %v257 = vld [vmem:[%s1 + $0x80] sm:$0xf]
        %v258 = vld [vmem:[%s1 + $0x84] sm:$0xf]
        %v259 = vld [vmem:[%s1 + $0x88] sm:$0xf]
        %v260 = vld [vmem:[%s1 + $0x8c] sm:$0xf]
        %v261 = vld [vmem:[%s1 + $0x90] sm:$0xf]
        %v262 = vld [vmem:[%s1 + $0x94] sm:$0xf]
        %v263 = vld [vmem:[%s1 + $0x98] sm:$0xf]
        %v264 = vld [vmem:[%s1 + $0x9c] sm:$0xf]
        %v265 = vld [vmem:[%s1 + $0xa0] sm:$0xf]
        %v266 = vld [vmem:[%s1 + $0xa4] sm:$0xf]
        %v267 = vld [vmem:[%s1 + $0xa8] sm:$0xf]
        %v268 = vld [vmem:[%s1 + $0xac] sm:$0xf]
        %v269 = vld [vmem:[%s1 + $0xb0] sm:$0xf]
        %v270 = vld [vmem:[%s1 + $0xb4] sm:$0xf]
        %v271 = vld [vmem:[%s1 + $0xb8] sm:$0xf]
        %v272 = vld [vmem:[%s1 + $0xbc] sm:$0xf]
        %v273 = vld [vmem:[%s1 + $0xc0] sm:$0xf]
        %v274 = vld [vmem:[%s1 + $0xc4] sm:$0xf]
        %v275 = vld [vmem:[%s1 + $0xc8] sm:$0xf]
        %v276 = vld [vmem:[%s1 + $0xcc] sm:$0xf]
        %v277 = vld [vmem:[%s1 + $0xd0] sm:$0xf]
        %v278 = vld [vmem:[%s1 + $0xd4] sm:$0xf]
        %v279 = vld [vmem:[%s1 + $0xd8] sm:$0xf]
        %v280 = vld [vmem:[%s1 + $0xdc] sm:$0xf]
        %v281 = vld [vmem:[%s1 + $0xe0] sm:$0xf]
        %v282 = vld [vmem:[%s1 + $0xe4] sm:$0xf]
        %v283 = vld [vmem:[%s1 + $0xe8] sm:$0xf]
        %v284 = vld [vmem:[%s1 + $0xec] sm:$0xf]
        %v285 = vld [vmem:[%s1 + $0xf0] sm:$0xf]
        %v286 = vld [vmem:[%s1 + $0xf4] sm:$0xf]
        %v287 = vld [vmem:[%s1 + $0xf8] sm:$0xf]
        %v288 = vld [vmem:[%s1 + $0xfc] sm:$0xf]
        %v289 = vld [vmem:[%s1 + $0x100] sm:$0xf]
        %v290 = vld [vmem:[%s1 + $0x104] sm:$0xf]
        %v291 = vld [vmem:[%s1 + $0x108] sm:$0xf]
        %v292 = vld [vmem:[%s1 + $0x10c] sm:$0xf]
        %v293 = vld [vmem:[%s1 + $0x110] sm:$0xf]
        %v294 = vld [vmem:[%s1 + $0x114] sm:$0xf]
        %v295 = vld [vmem:[%s1 + $0x118] sm:$0xf]
        %v296 = vld [vmem:[%s1 + $0x11c] sm:$0xf]
        %v297 = vld [vmem:[%s1 + $0x120] sm:$0xf]
        %v298 = vld [vmem:[%s1 + $0x124] sm:$0xf]
        %v299 = vld [vmem:[%s1 + $0x128] sm:$0xf]
        %v300 = vld [vmem:[%s1 + $0x12c] sm:$0xf]
        %v301 = vld [vmem:[%s1 + $0x130] sm:$0xf]
        %v302 = vld [vmem:[%s1 + $0x134] sm:$0xf]
        %v303 = vld [vmem:[%s1 + $0x138] sm:$0xf]
        %v304 = vld [vmem:[%s1 + $0x13c] sm:$0xf]
        %v305 = vld [vmem:[%s1 + $0x140] sm:$0xf]
        %v306 = vld [vmem:[%s1 + $0x144] sm:$0xf]
        %v307 = vld [vmem:[%s1 + $0x148] sm:$0xf]
        %v308 = vld [vmem:[%s1 + $0x14c] sm:$0xf]
        %v309 = vld [vmem:[%s1 + $0x150] sm:$0xf]
        %v310 = vld [vmem:[%s1 + $0x154] sm:$0xf]
        %v311 = vld [vmem:[%s1 + $0x158] sm:$0xf]
        %v312 = vld [vmem:[%s1 + $0x15c] sm:$0xf]
        %v313 = vld [vmem:[%s1 + $0x160] sm:$0xf]
        %v314 = vld [vmem:[%s1 + $0x164] sm:$0xf]
        %v315 = vld [vmem:[%s1 + $0x168] sm:$0xf]
        %v316 = vld [vmem:[%s1 + $0x16c] sm:$0xf]
        %v317 = vld [vmem:[%s1 + $0x170] sm:$0xf]
        %v318 = vld [vmem:[%s1 + $0x174] sm:$0xf]
        %v319 = vld [vmem:[%s1 + $0x178] sm:$0xf]
        %v320 = vld [vmem:[%s1 + $0x17c] sm:$0xf]
        %v321 = vld [vmem:[%s1 + $0x180] sm:$0xf]
        %v322 = vld [vmem:[%s1 + $0x184] sm:$0xf]
        %v323 = vld [vmem:[%s1 + $0x188] sm:$0xf]
        %v324 = vld [vmem:[%s1 + $0x18c] sm:$0xf]
        %v325 = vld [vmem:[%s1 + $0x190] sm:$0xf]
        %v326 = vld [vmem:[%s1 + $0x194] sm:$0xf]
        %v327 = vld [vmem:[%s1 + $0x198] sm:$0xf]
        %v328 = vld [vmem:[%s1 + $0x19c] sm:$0xf]
        %v329 = vld [vmem:[%s1 + $0x1a0] sm:$0xf]
        %v330 = vld [vmem:[%s1 + $0x1a4] sm:$0xf]
        %v331 = vld [vmem:[%s1 + $0x1a8] sm:$0xf]
        %v332 = vld [vmem:[%s1 + $0x1ac] sm:$0xf]
        %v333 = vld [vmem:[%s1 + $0x1b0] sm:$0xf]
        %v334 = vld [vmem:[%s1 + $0x1b4] sm:$0xf]
        %v335 = vld [vmem:[%s1 + $0x1b8] sm:$0xf]
        %v336 = vld [vmem:[%s1 + $0x1bc] sm:$0xf]
        %v337 = vld [vmem:[%s1 + $0x1c0] sm:$0xf]
        %v338 = vld [vmem:[%s1 + $0x1c4] sm:$0xf]
        %v339 = vld [vmem:[%s1 + $0x1c8] sm:$0xf]
        %v340 = vld [vmem:[%s1 + $0x1cc] sm:$0xf]
        %v341 = vld [vmem:[%s1 + $0x1d0] sm:$0xf]
        %v342 = vld [vmem:[%s1 + $0x1d4] sm:$0xf]
        %v343 = vld [vmem:[%s1 + $0x1d8] sm:$0xf]
        %v344 = vld [vmem:[%s1 + $0x1dc] sm:$0xf]
        %v345 = vld [vmem:[%s1 + $0x1e0] sm:$0xf]
        %v346 = vld [vmem:[%s1 + $0x1e4] sm:$0xf]
        %v347 = vld [vmem:[%s1 + $0x1e8] sm:$0xf]
        %v348 = vld [vmem:[%s1 + $0x1ec] sm:$0xf]
        %v349 = vld [vmem:[%s1 + $0x1f0] sm:$0xf]
        %v350 = vld [vmem:[%s1 + $0x1f4] sm:$0xf]
        %v351 = vld [vmem:[%s1 + $0x1f8] sm:$0xf]
        %v352 = vld [vmem:[%s1 + $0x1fc] sm:$0xf]
        %v353 = vld [vmem:[%s2] sm:$0x1]
        %v355 = vlaneseq
        %v356 = vshrl.u32 %v355, 7
        %v357 = vsub.s32 0, %v356
        %v358 = vrot.slane %v353, %v357
        %v384 = vunpack.c.l.b16 %v201
        %v385 = vunpack.c.h.b16 %v201
        %v386 = vunpack.c.l.b16 %v202
        %v387 = vunpack.c.h.b16 %v202
        %v388 = vunpack.c.l.b16 %v203
        %v389 = vunpack.c.h.b16 %v203
        %v390 = vunpack.c.l.b16 %v204
        %v391 = vunpack.c.h.b16 %v204
        %v392 = vunpack.c.l.b16 %v205
        %v393 = vunpack.c.h.b16 %v205
        %v394 = vunpack.c.l.b16 %v206
        %v395 = vunpack.c.h.b16 %v206
        %v396 = vunpack.c.l.b16 %v207
        %v397 = vunpack.c.h.b16 %v207
        %v398 = vunpack.c.l.b16 %v208
        %v399 = vunpack.c.h.b16 %v208
        %v400 = vunpack.c.l.b16 %v209
        %v401 = vunpack.c.h.b16 %v209
        %v402 = vunpack.c.l.b16 %v210
        %v403 = vunpack.c.h.b16 %v210
        %v404 = vunpack.c.l.b16 %v211
        %v405 = vunpack.c.h.b16 %v211
        %v406 = vunpack.c.l.b16 %v212
        %v407 = vunpack.c.h.b16 %v212
        %v408 = vunpack.c.l.b16 %v213
        %v409 = vunpack.c.h.b16 %v213
        %v410 = vunpack.c.l.b16 %v214
        %v411 = vunpack.c.h.b16 %v214
        %v412 = vunpack.c.l.b16 %v215
        %v413 = vunpack.c.h.b16 %v215
        %v414 = vunpack.c.l.b16 %v216
        %v415 = vunpack.c.h.b16 %v216
        %v416 = vunpack.c.l.b16 %v217
        %v417 = vunpack.c.h.b16 %v217
        %v418 = vunpack.c.l.b16 %v218
        %v419 = vunpack.c.h.b16 %v218
        %v420 = vunpack.c.l.b16 %v219
        %v421 = vunpack.c.h.b16 %v219
        %v422 = vunpack.c.l.b16 %v220
        %v423 = vunpack.c.h.b16 %v220
        %v424 = vunpack.c.l.b16 %v221
        %v425 = vunpack.c.h.b16 %v221
        %v426 = vunpack.c.l.b16 %v222
        %v427 = vunpack.c.h.b16 %v222
        %v428 = vunpack.c.l.b16 %v223
        %v429 = vunpack.c.h.b16 %v223
        %v430 = vunpack.c.l.b16 %v224
        %v431 = vunpack.c.h.b16 %v224
        %v432 = vpack.c.b16 %v392, %v384
        %v433 = vpack.c.b16 %v393, %v385
        %v434 = vpack.c.b16 %v394, %v386
        %v435 = vpack.c.b16 %v395, %v387
        %v436 = vpack.c.b16 %v396, %v388
        %v437 = vpack.c.b16 %v397, %v389
        %v438 = vpack.c.b16 %v398, %v390
        %v439 = vpack.c.b16 %v399, %v391
        %v440 = vpack.c.b16 %v408, %v400
        %v441 = vpack.c.b16 %v409, %v401
        %v442 = vpack.c.b16 %v410, %v402
        %v443 = vpack.c.b16 %v411, %v403
        %v444 = vpack.c.b16 %v412, %v404
        %v445 = vpack.c.b16 %v413, %v405
        %v446 = vpack.c.b16 %v414, %v406
        %v447 = vpack.c.b16 %v415, %v407
        %v448 = vpack.c.b16 %v424, %v416
        %v449 = vpack.c.b16 %v425, %v417
        %v450 = vpack.c.b16 %v426, %v418
        %v451 = vpack.c.b16 %v427, %v419
        %v452 = vpack.c.b16 %v428, %v420
        %v453 = vpack.c.b16 %v429, %v421
        %v454 = vpack.c.b16 %v430, %v422
        %v455 = vpack.c.b16 %v431, %v423
        %v608 = vunpack.c.l.b16 %v225
        %v609 = vunpack.c.l.b16 %v226
        %v610 = vunpack.c.l.b16 %v227
        %v611 = vunpack.c.l.b16 %v228
        %v612 = vunpack.c.l.b16 %v229
        %v613 = vunpack.c.l.b16 %v230
        %v614 = vunpack.c.l.b16 %v231
        %v615 = vunpack.c.l.b16 %v232
        %v616 = vunpack.c.l.b16 %v233
        %v617 = vunpack.c.l.b16 %v234
        %v618 = vunpack.c.l.b16 %v235
        %v619 = vunpack.c.l.b16 %v236
        %v620 = vunpack.c.l.b16 %v237
        %v621 = vunpack.c.l.b16 %v238
        %v622 = vunpack.c.l.b16 %v239
        %v623 = vunpack.c.l.b16 %v240
        %v624 = vunpack.c.l.b16 %v241
        %v625 = vunpack.c.l.b16 %v242
        %v626 = vunpack.c.l.b16 %v243
        %v627 = vunpack.c.l.b16 %v244
        %v628 = vunpack.c.l.b16 %v245
        %v629 = vunpack.c.l.b16 %v246
        %v630 = vunpack.c.l.b16 %v247
        %v631 = vunpack.c.l.b16 %v248
        %v632 = vunpack.c.l.b16 %v249
        %v633 = vunpack.c.l.b16 %v250
        %v634 = vunpack.c.l.b16 %v251
        %v635 = vunpack.c.l.b16 %v252
        %v636 = vunpack.c.l.b16 %v253
        %v637 = vunpack.c.l.b16 %v254
        %v638 = vunpack.c.l.b16 %v255
        %v639 = vunpack.c.l.b16 %v256
        %v640 = vunpack.c.l.b16 %v257
        %v641 = vunpack.c.l.b16 %v258
        %v642 = vunpack.c.l.b16 %v259
        %v643 = vunpack.c.l.b16 %v260
        %v644 = vunpack.c.l.b16 %v261
        %v645 = vunpack.c.l.b16 %v262
        %v646 = vunpack.c.l.b16 %v263
        %v647 = vunpack.c.l.b16 %v264
        %v648 = vunpack.c.l.b16 %v265
        %v649 = vunpack.c.l.b16 %v266
        %v650 = vunpack.c.l.b16 %v267
        %v651 = vunpack.c.l.b16 %v268
        %v652 = vunpack.c.l.b16 %v269
        %v653 = vunpack.c.l.b16 %v270
        %v654 = vunpack.c.l.b16 %v271
        %v655 = vunpack.c.l.b16 %v272
        %v656 = vunpack.c.l.b16 %v273
        %v657 = vunpack.c.l.b16 %v274
        %v658 = vunpack.c.l.b16 %v275
        %v659 = vunpack.c.l.b16 %v276
        %v660 = vunpack.c.l.b16 %v277
        %v661 = vunpack.c.l.b16 %v278
        %v662 = vunpack.c.l.b16 %v279
        %v663 = vunpack.c.l.b16 %v280
        %v664 = vunpack.c.l.b16 %v281
        %v665 = vunpack.c.l.b16 %v282
        %v666 = vunpack.c.l.b16 %v283
        %v667 = vunpack.c.l.b16 %v284
        %v668 = vunpack.c.l.b16 %v285
        %v669 = vunpack.c.l.b16 %v286
        %v670 = vunpack.c.l.b16 %v287
        %v671 = vunpack.c.l.b16 %v288
        %v672 = vunpack.c.l.b16 %v289
        %v673 = vunpack.c.l.b16 %v290
        %v674 = vunpack.c.l.b16 %v291
        %v675 = vunpack.c.l.b16 %v292
        %v676 = vunpack.c.l.b16 %v293
        %v677 = vunpack.c.l.b16 %v294
        %v678 = vunpack.c.l.b16 %v295
        %v679 = vunpack.c.l.b16 %v296
        %v680 = vunpack.c.l.b16 %v297
        %v681 = vunpack.c.l.b16 %v298
        %v682 = vunpack.c.l.b16 %v299
        %v683 = vunpack.c.l.b16 %v300
        %v684 = vunpack.c.l.b16 %v301
        %v685 = vunpack.c.l.b16 %v302
        %v686 = vunpack.c.l.b16 %v303
        %v687 = vunpack.c.l.b16 %v304
        %v688 = vunpack.c.l.b16 %v305
        %v689 = vunpack.c.l.b16 %v306
        %v690 = vunpack.c.l.b16 %v307
        %v691 = vunpack.c.l.b16 %v308
        %v692 = vunpack.c.l.b16 %v309
        %v693 = vunpack.c.l.b16 %v310
        %v694 = vunpack.c.l.b16 %v311
        %v695 = vunpack.c.l.b16 %v312
        %v696 = vunpack.c.l.b16 %v313
        %v697 = vunpack.c.l.b16 %v314
        %v698 = vunpack.c.l.b16 %v315
        %v699 = vunpack.c.l.b16 %v316
        %v700 = vunpack.c.l.b16 %v317
        %v701 = vunpack.c.l.b16 %v318
        %v702 = vunpack.c.l.b16 %v319
        %v703 = vunpack.c.l.b16 %v320
        %v704 = vunpack.c.l.b16 %v321
        %v705 = vunpack.c.l.b16 %v322
        %v706 = vunpack.c.l.b16 %v323
        %v707 = vunpack.c.l.b16 %v324
        %v708 = vunpack.c.l.b16 %v325
        %v709 = vunpack.c.l.b16 %v326
        %v710 = vunpack.c.l.b16 %v327
        %v711 = vunpack.c.l.b16 %v328
        %v712 = vunpack.c.l.b16 %v329
        %v713 = vunpack.c.l.b16 %v330
        %v714 = vunpack.c.l.b16 %v331
        %v715 = vunpack.c.l.b16 %v332
        %v716 = vunpack.c.l.b16 %v333
        %v717 = vunpack.c.l.b16 %v334
        %v718 = vunpack.c.l.b16 %v335
        %v719 = vunpack.c.l.b16 %v336
        %v720 = vunpack.c.l.b16 %v337
        %v721 = vunpack.c.l.b16 %v338
        %v722 = vunpack.c.l.b16 %v339
        %v723 = vunpack.c.l.b16 %v340
        %v724 = vunpack.c.l.b16 %v341
        %v725 = vunpack.c.l.b16 %v342
        %v726 = vunpack.c.l.b16 %v343
        %v727 = vunpack.c.l.b16 %v344
        %v728 = vunpack.c.l.b16 %v345
        %v729 = vunpack.c.l.b16 %v346
        %v730 = vunpack.c.l.b16 %v347
        %v731 = vunpack.c.l.b16 %v348
        %v732 = vunpack.c.l.b16 %v349
        %v733 = vunpack.c.l.b16 %v350
        %v734 = vunpack.c.l.b16 %v351
        %v735 = vunpack.c.l.b16 %v352
        %v736 = vpack.c.b16 %v609, %v608
        %v737 = vpack.c.b16 %v611, %v610
        %v738 = vpack.c.b16 %v613, %v612
        %v739 = vpack.c.b16 %v615, %v614
        %v740 = vpack.c.b16 %v617, %v616
        %v741 = vpack.c.b16 %v619, %v618
        %v742 = vpack.c.b16 %v621, %v620
        %v743 = vpack.c.b16 %v623, %v622
        %v744 = vpack.c.b16 %v625, %v624
        %v745 = vpack.c.b16 %v627, %v626
        %v746 = vpack.c.b16 %v629, %v628
        %v747 = vpack.c.b16 %v631, %v630
        %v748 = vpack.c.b16 %v633, %v632
        %v749 = vpack.c.b16 %v635, %v634
        %v750 = vpack.c.b16 %v637, %v636
        %v751 = vpack.c.b16 %v639, %v638
        %v752 = vpack.c.b16 %v641, %v640
        %v753 = vpack.c.b16 %v643, %v642
        %v754 = vpack.c.b16 %v645, %v644
        %v755 = vpack.c.b16 %v647, %v646
        %v756 = vpack.c.b16 %v649, %v648
        %v757 = vpack.c.b16 %v651, %v650
        %v758 = vpack.c.b16 %v653, %v652
        %v759 = vpack.c.b16 %v655, %v654
        %v760 = vpack.c.b16 %v657, %v656
        %v761 = vpack.c.b16 %v659, %v658
        %v762 = vpack.c.b16 %v661, %v660
        %v763 = vpack.c.b16 %v663, %v662
        %v764 = vpack.c.b16 %v665, %v664
        %v765 = vpack.c.b16 %v667, %v666
        %v766 = vpack.c.b16 %v669, %v668
        %v767 = vpack.c.b16 %v671, %v670
        %v768 = vpack.c.b16 %v673, %v672
        %v769 = vpack.c.b16 %v675, %v674
        %v770 = vpack.c.b16 %v677, %v676
        %v771 = vpack.c.b16 %v679, %v678
        %v772 = vpack.c.b16 %v681, %v680
        %v773 = vpack.c.b16 %v683, %v682
        %v774 = vpack.c.b16 %v685, %v684
        %v775 = vpack.c.b16 %v687, %v686
        %v776 = vpack.c.b16 %v689, %v688
        %v777 = vpack.c.b16 %v691, %v690
        %v778 = vpack.c.b16 %v693, %v692
        %v779 = vpack.c.b16 %v695, %v694
        %v780 = vpack.c.b16 %v697, %v696
        %v781 = vpack.c.b16 %v699, %v698
        %v782 = vpack.c.b16 %v701, %v700
        %v783 = vpack.c.b16 %v703, %v702
        %v784 = vpack.c.b16 %v705, %v704
        %v785 = vpack.c.b16 %v707, %v706
        %v786 = vpack.c.b16 %v709, %v708
        %v787 = vpack.c.b16 %v711, %v710
        %v788 = vpack.c.b16 %v713, %v712
        %v789 = vpack.c.b16 %v715, %v714
        %v790 = vpack.c.b16 %v717, %v716
        %v791 = vpack.c.b16 %v719, %v718
        %v792 = vpack.c.b16 %v721, %v720
        %v793 = vpack.c.b16 %v723, %v722
        %v794 = vpack.c.b16 %v725, %v724
        %v795 = vpack.c.b16 %v727, %v726
        %v796 = vpack.c.b16 %v729, %v728
        %v797 = vpack.c.b16 %v731, %v730
        %v798 = vpack.c.b16 %v733, %v732
        %v799 = vpack.c.b16 %v735, %v734
        %864 = vmatprep.subr.bf16.mxu0 0
        %865 = vmatpush1.bf16.msra.mxu0 %v736
        %866 = vmatprep.subr.bf16.mxu0 0
        %867 = vmatpush1.bf16.msra.mxu0 %v737
        %868 = vmatprep.subr.bf16.mxu0 0
        %869 = vmatpush1.bf16.msra.mxu0 %v738
        %870 = vmatprep.subr.bf16.mxu0 0
        %871 = vmatpush1.bf16.msra.mxu0 %v739
        %872 = vmatprep.subr.bf16.mxu0 0
        %873 = vmatpush1.bf16.msra.mxu0 %v740
        %874 = vmatprep.subr.bf16.mxu0 0
        %875 = vmatpush1.bf16.msra.mxu0 %v741
        %876 = vmatprep.subr.bf16.mxu0 0
        %877 = vmatpush1.bf16.msra.mxu0 %v742
        %878 = vmatprep.subr.bf16.mxu0 0
        %879 = vmatpush1.bf16.msra.mxu0 %v743
        %880 = vmatprep.subr.bf16.mxu0 0
        %881 = vmatpush1.bf16.msra.mxu0 %v744
        %882 = vmatprep.subr.bf16.mxu0 0
        %883 = vmatpush1.bf16.msra.mxu0 %v745
        %884 = vmatprep.subr.bf16.mxu0 0
        %885 = vmatpush1.bf16.msra.mxu0 %v746
        %886 = vmatprep.subr.bf16.mxu0 0
        %887 = vmatpush1.bf16.msra.mxu0 %v747
        %888 = vmatprep.subr.bf16.mxu0 0
        %889 = vmatpush1.bf16.msra.mxu0 %v748
        %890 = vmatprep.subr.bf16.mxu0 0
        %891 = vmatpush1.bf16.msra.mxu0 %v749
        %892 = vmatprep.subr.bf16.mxu0 0
        %893 = vmatpush1.bf16.msra.mxu0 %v750
        %894 = vmatprep.subr.bf16.mxu0 0
        %895 = vmatpush1.bf16.msra.mxu0 %v751
        %896 = vmatprep.mubr.bf16.mxu0 %v433
        %897 = vmatmul.mubr.bf16.gmra.mrb[0].mxu0 %v432
        %v898 = vpop.f32.mrb[0].mxu0
        %v899 = vadd.f32 %v358, %v898
        %v900 = vpop.f32.mrb[0].mxu0
        %v901 = vpop.f32.mrb[0].mxu0
        %v902 = vadd.f32 %v358, %v901
        %v903 = vpop.f32.mrb[0].mxu0
        %904 = vmatprep.mubr.bf16.mxu0 %v441
        %905 = vmatmul.mubr.bf16.gmra.mrb[0].mxu0 %v440
        %v906 = vpop.f32.mrb[0].mxu0
        %v907 = vadd.f32 %v358, %v906
        %v908 = vpop.f32.mrb[0].mxu0
        %v909 = vpop.f32.mrb[0].mxu0
        %v910 = vadd.f32 %v358, %v909
        %v911 = vpop.f32.mrb[0].mxu0
        %912 = vmatprep.mubr.bf16.mxu0 %v449
        %913 = vmatmul.mubr.bf16.gmra.mrb[0].mxu0 %v448
        %v914 = vpop.f32.mrb[0].mxu0
        %v915 = vadd.f32 %v358, %v914
        %v916 = vpop.f32.mrb[0].mxu0
        %v917 = vpop.f32.mrb[0].mxu0
        %v918 = vadd.f32 %v358, %v917
        %v919 = vpop.f32.mrb[0].mxu0
        %920 = vdwg.mxu0
        %921 = vmatprep.subr.bf16.mxu0 0
        %922 = vmatpush1.bf16.msra.mxu0 %v752
        %923 = vmatprep.subr.bf16.mxu0 0
        %924 = vmatpush1.bf16.msra.mxu0 %v753
        %925 = vmatprep.subr.bf16.mxu0 0
        %926 = vmatpush1.bf16.msra.mxu0 %v754
        %927 = vmatprep.subr.bf16.mxu0 0
        %928 = vmatpush1.bf16.msra.mxu0 %v755
        %929 = vmatprep.subr.bf16.mxu0 0
        %930 = vmatpush1.bf16.msra.mxu0 %v756
        %931 = vmatprep.subr.bf16.mxu0 0
        %932 = vmatpush1.bf16.msra.mxu0 %v757
        %933 = vmatprep.subr.bf16.mxu0 0
        %934 = vmatpush1.bf16.msra.mxu0 %v758
        %935 = vmatprep.subr.bf16.mxu0 0
        %936 = vmatpush1.bf16.msra.mxu0 %v759
        %937 = vmatprep.subr.bf16.mxu0 0
        %938 = vmatpush1.bf16.msra.mxu0 %v760
        %939 = vmatprep.subr.bf16.mxu0 0
        %940 = vmatpush1.bf16.msra.mxu0 %v761
        %941 = vmatprep.subr.bf16.mxu0 0
        %942 = vmatpush1.bf16.msra.mxu0 %v762
        %943 = vmatprep.subr.bf16.mxu0 0
        %944 = vmatpush1.bf16.msra.mxu0 %v763
        %945 = vmatprep.subr.bf16.mxu0 0
        %946 = vmatpush1.bf16.msra.mxu0 %v764
        %947 = vmatprep.subr.bf16.mxu0 0
        %948 = vmatpush1.bf16.msra.mxu0 %v765
        %949 = vmatprep.subr.bf16.mxu0 0
        %950 = vmatpush1.bf16.msra.mxu0 %v766
        %951 = vmatprep.subr.bf16.mxu0 0
        %952 = vmatpush1.bf16.msra.mxu0 %v767
        %953 = vmatprep.mubr.bf16.mxu0 %v435
        %954 = vmatmul.mubr.bf16.gmra.mrb[0].mxu0 %v434
        %v955 = vpop.f32.mrb[0].mxu0
        %v956 = vadd.f32 %v899, %v955
        %v957 = vpop.f32.mrb[0].mxu0
        %v958 = vpop.f32.mrb[0].mxu0
        %v959 = vadd.f32 %v902, %v958
        %v960 = vpop.f32.mrb[0].mxu0
        %961 = vmatprep.mubr.bf16.mxu0 %v443
        %962 = vmatmul.mubr.bf16.gmra.mrb[0].mxu0 %v442
        %v963 = vpop.f32.mrb[0].mxu0
        %v964 = vadd.f32 %v907, %v963
        %v965 = vpop.f32.mrb[0].mxu0
        %v966 = vpop.f32.mrb[0].mxu0
        %v967 = vadd.f32 %v910, %v966
        %v968 = vpop.f32.mrb[0].mxu0
        %969 = vmatprep.mubr.bf16.mxu0 %v451
        %970 = vmatmul.mubr.bf16.gmra.mrb[0].mxu0 %v450
        %v971 = vpop.f32.mrb[0].mxu0
        %v972 = vadd.f32 %v915, %v971
        %v973 = vpop.f32.mrb[0].mxu0
        %v974 = vpop.f32.mrb[0].mxu0
        %v975 = vadd.f32 %v918, %v974
        %v976 = vpop.f32.mrb[0].mxu0
        %977 = vdwg.mxu0
        %978 = vmatprep.subr.bf16.mxu0 0
        %979 = vmatpush1.bf16.msra.mxu0 %v768
        %980 = vmatprep.subr.bf16.mxu0 0
        %981 = vmatpush1.bf16.msra.mxu0 %v769
        %982 = vmatprep.subr.bf16.mxu0 0
        %983 = vmatpush1.bf16.msra.mxu0 %v770
        %984 = vmatprep.subr.bf16.mxu0 0
        %985 = vmatpush1.bf16.msra.mxu0 %v771
        %986 = vmatprep.subr.bf16.mxu0 0
        %987 = vmatpush1.bf16.msra.mxu0 %v772
        %988 = vmatprep.subr.bf16.mxu0 0
        %989 = vmatpush1.bf16.msra.mxu0 %v773
        %990 = vmatprep.subr.bf16.mxu0 0
        %991 = vmatpush1.bf16.msra.mxu0 %v774
        %992 = vmatprep.subr.bf16.mxu0 0
        %993 = vmatpush1.bf16.msra.mxu0 %v775
        %994 = vmatprep.subr.bf16.mxu0 0
        %995 = vmatpush1.bf16.msra.mxu0 %v776
        %996 = vmatprep.subr.bf16.mxu0 0
        %997 = vmatpush1.bf16.msra.mxu0 %v777
        %998 = vmatprep.subr.bf16.mxu0 0
        %999 = vmatpush1.bf16.msra.mxu0 %v778
        %1000 = vmatprep.subr.bf16.mxu0 0
        %1001 = vmatpush1.bf16.msra.mxu0 %v779
        %1002 = vmatprep.subr.bf16.mxu0 0
        %1003 = vmatpush1.bf16.msra.mxu0 %v780
        %1004 = vmatprep.subr.bf16.mxu0 0
        %1005 = vmatpush1.bf16.msra.mxu0 %v781
        %1006 = vmatprep.subr.bf16.mxu0 0
        %1007 = vmatpush1.bf16.msra.mxu0 %v782
        %1008 = vmatprep.subr.bf16.mxu0 0
        %1009 = vmatpush1.bf16.msra.mxu0 %v783
        %1010 = vmatprep.mubr.bf16.mxu0 %v437
        %1011 = vmatmul.mubr.bf16.gmra.mrb[0].mxu0 %v436
        %v1012 = vpop.f32.mrb[0].mxu0
        %v1013 = vadd.f32 %v956, %v1012
        %v1014 = vpop.f32.mrb[0].mxu0
        %v1015 = vpop.f32.mrb[0].mxu0
        %v1016 = vadd.f32 %v959, %v1015
        %v1017 = vpop.f32.mrb[0].mxu0
        %1018 = vmatprep.mubr.bf16.mxu0 %v445
        %1019 = vmatmul.mubr.bf16.gmra.mrb[0].mxu0 %v444
        %v1020 = vpop.f32.mrb[0].mxu0
        %v1021 = vadd.f32 %v964, %v1020
        %v1022 = vpop.f32.mrb[0].mxu0
        %v1023 = vpop.f32.mrb[0].mxu0
        %v1024 = vadd.f32 %v967, %v1023
        %v1025 = vpop.f32.mrb[0].mxu0
        %1026 = vmatprep.mubr.bf16.mxu0 %v453
        %1027 = vmatmul.mubr.bf16.gmra.mrb[0].mxu0 %v452
        %v1028 = vpop.f32.mrb[0].mxu0
        %v1029 = vadd.f32 %v972, %v1028
        %v1030 = vpop.f32.mrb[0].mxu0
        %v1031 = vpop.f32.mrb[0].mxu0
        %v1032 = vadd.f32 %v975, %v1031
        %v1033 = vpop.f32.mrb[0].mxu0
        %1034 = vdwg.mxu0
        %1035 = vmatprep.subr.bf16.mxu0 0
        %1036 = vmatpush1.bf16.msra.mxu0 %v784
        %1037 = vmatprep.subr.bf16.mxu0 0
        %1038 = vmatpush1.bf16.msra.mxu0 %v785
        %1039 = vmatprep.subr.bf16.mxu0 0
        %1040 = vmatpush1.bf16.msra.mxu0 %v786
        %1041 = vmatprep.subr.bf16.mxu0 0
        %1042 = vmatpush1.bf16.msra.mxu0 %v787
        %1043 = vmatprep.subr.bf16.mxu0 0
        %1044 = vmatpush1.bf16.msra.mxu0 %v788
        %1045 = vmatprep.subr.bf16.mxu0 0
        %1046 = vmatpush1.bf16.msra.mxu0 %v789
        %1047 = vmatprep.subr.bf16.mxu0 0
        %1048 = vmatpush1.bf16.msra.mxu0 %v790
        %1049 = vmatprep.subr.bf16.mxu0 0
        %1050 = vmatpush1.bf16.msra.mxu0 %v791
        %1051 = vmatprep.subr.bf16.mxu0 0
        %1052 = vmatpush1.bf16.msra.mxu0 %v792
        %1053 = vmatprep.subr.bf16.mxu0 0
        %1054 = vmatpush1.bf16.msra.mxu0 %v793
        %1055 = vmatprep.subr.bf16.mxu0 0
        %1056 = vmatpush1.bf16.msra.mxu0 %v794
        %1057 = vmatprep.subr.bf16.mxu0 0
        %1058 = vmatpush1.bf16.msra.mxu0 %v795
        %1059 = vmatprep.subr.bf16.mxu0 0
        %1060 = vmatpush1.bf16.msra.mxu0 %v796
        %1061 = vmatprep.subr.bf16.mxu0 0
        %1062 = vmatpush1.bf16.msra.mxu0 %v797
        %1063 = vmatprep.subr.bf16.mxu0 0
        %1064 = vmatpush1.bf16.msra.mxu0 %v798
        %1065 = vmatprep.subr.bf16.mxu0 0
        %1066 = vmatpush1.bf16.msra.mxu0 %v799
        %1067 = vmatprep.mubr.bf16.mxu0 %v439
        %1068 = vmatmul.mubr.bf16.gmra.mrb[0].mxu0 %v438
        %v1069 = vpop.f32.mrb[0].mxu0
        %v1070 = vadd.f32 %v1013, %v1069
        %v1071 = vpop.f32.mrb[0].mxu0
        %v1072 = vpop.f32.mrb[0].mxu0
        %v1073 = vadd.f32 %v1016, %v1072
        %v1074 = vpop.f32.mrb[0].mxu0
        %1075 = vmatprep.mubr.bf16.mxu0 %v447
        %1076 = vmatmul.mubr.bf16.gmra.mrb[0].mxu0 %v446
        %v1077 = vpop.f32.mrb[0].mxu0
        %v1078 = vadd.f32 %v1021, %v1077
        %v1079 = vpop.f32.mrb[0].mxu0
        %v1080 = vpop.f32.mrb[0].mxu0
        %v1081 = vadd.f32 %v1024, %v1080
        %v1082 = vpop.f32.mrb[0].mxu0
        %1083 = vmatprep.mubr.bf16.mxu0 %v455
        %1084 = vmatmul.mubr.bf16.gmra.mrb[0].mxu0 %v454
        %v1085 = vpop.f32.mrb[0].mxu0
        %v1086 = vadd.f32 %v1029, %v1085
        %v1087 = vpop.f32.mrb[0].mxu0
        %v1088 = vpop.f32.mrb[0].mxu0
        %v1089 = vadd.f32 %v1032, %v1088
        %v1090 = vpop.f32.mrb[0].mxu0
        %1091 = vdwg.mxu0
        %v1092 = vmax.f32 %v1070, 0.0
        %v1093 = vmax.f32 %v1073, 0.0
        %v1094 = vmax.f32 %v1078, 0.0
        %v1095 = vmax.f32 %v1081, 0.0
        %v1096 = vmax.f32 %v1086, 0.0
        %v1097 = vmax.f32 %v1089, 0.0
        %v1098 = vpack.c.bf16 %v1093, %v1092
        %v1099 = vpack.c.bf16 %v1095, %v1094
        %v1100 = vpack.c.bf16 %v1097, %v1096
        %v1104 = vunpack.c.l.b16 %v1098
        %v1105 = vunpack.c.h.b16 %v1098
        %v1106 = vunpack.c.l.b16 %v1099
        %v1107 = vunpack.c.h.b16 %v1099
        %v1108 = vunpack.c.l.b16 %v1100
        %v1109 = vunpack.c.h.b16 %v1100
        %v1110 = vpack.c.b16 %v1104, %v1104
        %v1111 = vpack.c.b16 %v1105, %v1105
        %v1112 = vpack.c.b16 %v1106, %v1106
        %v1113 = vpack.c.b16 %v1107, %v1107
        %v1114 = vpack.c.b16 %v1108, %v1108
        %v1115 = vpack.c.b16 %v1109, %v1109
        %1122 = vst [vmem:[%s177] sm:$0xf] %v1110
        %1123 = vst [vmem:[%s177 + $0x4] sm:$0xf] %v1111
        %1124 = vst [vmem:[%s177 + $0x8] sm:$0xf] %v1112
        %1125 = vst [vmem:[%s177 + $0xc] sm:$0xf] %v1113
        %1126 = vst [vmem:[%s177 + $0x10] sm:$0xf] %v1114
        %1127 = vst [vmem:[%s177 + $0x14] sm:$0xf] %v1115
        %s1128 = sand.u32 %s90, 1
        %s1129 = sand.u32 %s90, 1
        %s1130 = smul.addr %s1129, 24
        %s1131 = scalar_lea.vmem [#allocation2], %s1130
        // Predicated region
        $region33: #{critic_forward.5} parent=31 // pred_check
          %p1132 = pneg %p100
        $region34: #{critic_forward.5} parent=31 // pred_check_branch
          %1134 = sbr.rel (%p1132) target = $region36
        $region35: #{critic_forward.5} parent=31 // pred_region
          %s1135 = smul.u32 6, %s14
          %s1136 = ssub.s32 11, %s1135
          %p1137 = scmp.lt.s32.totalorder %s1136, 6
          %s1138 = scalar_select %p1137, %s1136, 6
          %s1139 = smul.u32 64, %s1138
          %p1140 = scmp.ne.s32.totalorder 0, %s1139
          %s1141 = smul.addr %s1135, 4
          %s1142 = scalar_lea.vmem %s3, %s1141
          // Predicated region
          $region37: #{critic_forward.5} parent=35 // pred_check
            %p1143 = pneg %p1140
          $region38: #{critic_forward.5} parent=35 // pred_check_branch
            %1145 = sbr.rel (%p1143) target = $region40
          $region39: #{critic_forward.5} parent=35 // pred_region
            // Predicated region
            $region41: #{critic_forward.5} parent=39 // pred_check
              _
            $region42: #{critic_forward.5} parent=39 // pred_check_branch
              %1147 = sbr.rel target = $region44
            $region43: #{critic_forward.5} parent=39 // pred_region
              // Predicated region
              $region63: #{critic_forward.5} parent=43 // pred_check
                _
              $region64: #{critic_forward.5} parent=43 // pred_check_branch
                %1207 = sbr.rel (0) target = $region66
              $region65: #{critic_forward.5} parent=43 // pred_region
                %s1209 = sdiv.u32.pop %s1138, 6
                %s1210 = srem.u32.pop %s1138, 6
                // While loop
                $region67: #{critic_forward.5} parent=65 // loop_pre_header
                  _
                $region68: #{critic_forward.5} parent=65 // loop_header
                  %s1212 = sphi 0, %s1214
                  %p1213 = scmp.ge.s32.totalorder %s1212, %s1209
                  %s1217 = sphi 0, %s1234
                  %s1218 = sphi %s1131, %s1237
                  %s1219 = sphi %s1142, %s1238
                $region69: #{critic_forward.5} parent=65 // loop_header_branch
                  %1216 = sbr.rel (%p1213) target = $region73
                $region70: #{critic_forward.5} parent=65 // loop_body
                  %v1220 = vld [vmem:[%s1218] sm:$0xf]
                  %1221 = vst [vmem:[%s1219] sm:$0xf] %v1220
                  %v1222 = vld [vmem:[%s1218 + $0x4] sm:$0xf]
                  %1223 = vst [vmem:[%s1219 + $0x4] sm:$0xf] %v1222
                  %v1224 = vld [vmem:[%s1218 + $0x8] sm:$0xf]
                  %1225 = vst [vmem:[%s1219 + $0x8] sm:$0xf] %v1224
                  %v1226 = vld [vmem:[%s1218 + $0xc] sm:$0xf]
                  %1227 = vst [vmem:[%s1219 + $0xc] sm:$0xf] %v1226
                  %v1228 = vld [vmem:[%s1218 + $0x10] sm:$0xf]
                  %1229 = vst [vmem:[%s1219 + $0x10] sm:$0xf] %v1228
                  %v1230 = vld [vmem:[%s1218 + $0x14] sm:$0xf]
                  %1231 = vst [vmem:[%s1219 + $0x14] sm:$0xf] %v1230
                  %s1232 = sadd.s32 1, %s1217
                  %p1233 = scmp.ge.s32.totalorder %s1232, %s1209
                  %s1234 = scalar_select %p1233, 0, %s1232
                  %s1235 = smul.u32 %s1234, 24
                  %s1236 = smul.u32 %s1234, 24
                  %s1237 = scalar_lea.vmem %s1131, %s1235 [#allocation2]
                  %s1238 = scalar_lea.vmem %s1142, %s1236
                $region71: #{critic_forward.5} parent=65 // loop_footer
                  %s1214 = sadd.s32 %s1212, 1
                $region72: #{critic_forward.5} parent=65 // loop_footer_branch
                  %1211 = sbr.rel target = $region68
                $region73: #{critic_forward.5} parent=65 // loop_exit
                  _
                %s1239 = sdiv.u32.pop %s1138, 6
                %s1240 = srem.u32.pop %s1138, 6
                %s1241 = smul.u32 %s1239, 6
                %s1242 = smul.u32 4, %s1241
                %s1243 = scalar_lea.vmem %s1131, %s1242 [#allocation2]
                %s1244 = smul.u32 4, %s1241
                %s1245 = scalar_lea.vmem %s1142, %s1244
                // While loop
                $region74: #{critic_forward.5} parent=65 // loop_pre_header
                  _
                $region75: #{critic_forward.5} parent=65 // loop_header
                  %s1247 = sphi 0, %s1249
                  %p1248 = scmp.ge.s32.totalorder %s1247, %s1240
                  %s1252 = sphi 0, %s1259
                  %s1253 = sphi %s1243, %s1262
                  %s1254 = sphi %s1245, %s1263
                $region76: #{critic_forward.5} parent=65 // loop_header_branch
                  %1251 = sbr.rel (%p1248) target = $region80
                $region77: #{critic_forward.5} parent=65 // loop_body
                  %v1255 = vld [vmem:[%s1253] sm:$0xf]
                  %1256 = vst [vmem:[%s1254] sm:$0xf] %v1255
                  %s1257 = sadd.s32 1, %s1252
                  %p1258 = scmp.ge.s32.totalorder %s1257, %s1240
                  %s1259 = scalar_select %p1258, 0, %s1257
                  %s1260 = smul.u32 %s1259, 4
                  %s1261 = smul.u32 %s1259, 4
                  %s1262 = scalar_lea.vmem %s1243, %s1260 [#allocation2]
                  %s1263 = scalar_lea.vmem %s1245, %s1261
                $region78: #{critic_forward.5} parent=65 // loop_footer
                  %s1249 = sadd.s32 %s1247, 1
                $region79: #{critic_forward.5} parent=65 // loop_footer_branch
                  %1246 = sbr.rel target = $region75
                $region80: #{critic_forward.5} parent=65 // loop_exit
                  _
              $region66: #{critic_forward.5} parent=43 // pred_fallthru
                _
            $region44: #{critic_forward.5} parent=39 // pred_fallthru
              _
            // Predicated region
            $region45: #{critic_forward.5} parent=39 // pred_check
              _
            $region46: #{critic_forward.5} parent=39 // pred_check_branch
              %1149 = sbr.rel (0) target = $region48
            $region47: #{critic_forward.5} parent=39 // pred_region
              %s1151 = sdiv.u32.pop %s1138, 6
              %s1152 = srem.u32.pop %s1138, 6
              // While loop
              $region49: #{critic_forward.5} parent=47 // loop_pre_header
                _
              $region50: #{critic_forward.5} parent=47 // loop_header
                %s1154 = sphi 0, %s1156
                %p1155 = scmp.ge.s32.totalorder %s1154, %s1151
                %s1159 = sphi 0, %s1176
                %s1160 = sphi %s1131, %s1179
                %s1161 = sphi %s1142, %s1180
              $region51: #{critic_forward.5} parent=47 // loop_header_branch
                %1158 = sbr.rel (%p1155) target = $region55
              $region52: #{critic_forward.5} parent=47 // loop_body
                %v1162 = vld [vmem:[%s1160] sm:$0xf]
                %1163 = vst [vmem:[%s1161] sm:$0xf] %v1162
                %v1164 = vld [vmem:[%s1160 + $0x4] sm:$0xf]
                %1165 = vst [vmem:[%s1161 + $0x4] sm:$0xf] %v1164
                %v1166 = vld [vmem:[%s1160 + $0x8] sm:$0xf]
                %1167 = vst [vmem:[%s1161 + $0x8] sm:$0xf] %v1166
                %v1168 = vld [vmem:[%s1160 + $0xc] sm:$0xf]
                %1169 = vst [vmem:[%s1161 + $0xc] sm:$0xf] %v1168
                %v1170 = vld [vmem:[%s1160 + $0x10] sm:$0xf]
                %1171 = vst [vmem:[%s1161 + $0x10] sm:$0xf] %v1170
                %v1172 = vld [vmem:[%s1160 + $0x14] sm:$0xf]
                %1173 = vst [vmem:[%s1161 + $0x14] sm:$0xf] %v1172
                %s1174 = sadd.s32 1, %s1159
                %p1175 = scmp.ge.s32.totalorder %s1174, %s1151
                %s1176 = scalar_select %p1175, 0, %s1174
                %s1177 = smul.u32 %s1176, 24
                %s1178 = smul.u32 %s1176, 24
                %s1179 = scalar_lea.vmem %s1131, %s1177 [#allocation2]
                %s1180 = scalar_lea.vmem %s1142, %s1178
              $region53: #{critic_forward.5} parent=47 // loop_footer
                %s1156 = sadd.s32 %s1154, 1
              $region54: #{critic_forward.5} parent=47 // loop_footer_branch
                %1153 = sbr.rel target = $region50
              $region55: #{critic_forward.5} parent=47 // loop_exit
                _
              %s1181 = sdiv.u32.pop %s1138, 6
              %s1182 = srem.u32.pop %s1138, 6
              %s1183 = smul.u32 %s1181, 6
              %s1184 = smul.u32 4, %s1183
              %s1185 = scalar_lea.vmem %s1131, %s1184 [#allocation2]
              %s1186 = smul.u32 4, %s1183
              %s1187 = scalar_lea.vmem %s1142, %s1186
              // While loop
              $region56: #{critic_forward.5} parent=47 // loop_pre_header
                _
              $region57: #{critic_forward.5} parent=47 // loop_header
                %s1189 = sphi 0, %s1191
                %p1190 = scmp.ge.s32.totalorder %s1189, %s1182
                %s1194 = sphi 0, %s1201
                %s1195 = sphi %s1185, %s1204
                %s1196 = sphi %s1187, %s1205
              $region58: #{critic_forward.5} parent=47 // loop_header_branch
                %1193 = sbr.rel (%p1190) target = $region62
              $region59: #{critic_forward.5} parent=47 // loop_body
                %v1197 = vld [vmem:[%s1195] sm:$0xf]
                %1198 = vst [vmem:[%s1196] sm:$0xf] %v1197
                %s1199 = sadd.s32 1, %s1194
                %p1200 = scmp.ge.s32.totalorder %s1199, %s1182
                %s1201 = scalar_select %p1200, 0, %s1199
                %s1202 = smul.u32 %s1201, 4
                %s1203 = smul.u32 %s1201, 4
                %s1204 = scalar_lea.vmem %s1185, %s1202 [#allocation2]
                %s1205 = scalar_lea.vmem %s1187, %s1203
              $region60: #{critic_forward.5} parent=47 // loop_footer
                %s1191 = sadd.s32 %s1189, 1
              $region61: #{critic_forward.5} parent=47 // loop_footer_branch
                %1188 = sbr.rel target = $region57
              $region62: #{critic_forward.5} parent=47 // loop_exit
                _
            $region48: #{critic_forward.5} parent=39 // pred_fallthru
              _
          $region40: #{critic_forward.5} parent=35 // pred_fallthru
            _
          %1264 = vnop
        $region36: #{critic_forward.5} parent=31 // pred_fallthru
          _
      $region32: #{critic_forward.5} parent=5 // pred_fallthru
        _
      %p1265 = scmp.le.s32.totalorder 2, %s9
      // Predicated region
      $region81: #{critic_forward.5} parent=5 // pred_check
        %p1266 = pneg %p1265
      $region82: #{critic_forward.5} parent=5 // pred_check_branch
        %1268 = sbr.rel (%p1266) target = $region84
      $region83: #{critic_forward.5} parent=5 // pred_region
        %s1269 = ssub.s32 %s9, 2
        // Predicated region
        $region85: #{critic_forward.5} parent=83 // pred_check
          %p1270 = pneg %p106
        $region86: #{critic_forward.5} parent=83 // pred_check_branch
          %1272 = sbr.rel (%p1270) target = $region88
        $region87: #{critic_forward.5} parent=83 // pred_region
          %s1273 = sand.u32 %s91, 1
          %s1274 = sand.u32 %s91, 1
          %s1275 = smul.addr %s1274, 24
          %s1276 = scalar_lea.vmem [#allocation2], %s1275
        $region88: #{critic_forward.5} parent=83 // pred_fallthru
          _
      $region84: #{critic_forward.5} parent=5 // pred_fallthru
        _
    $region6: #{critic_forward.5} parent=1 // loop_footer
      %s13 = sadd.s32 1, %s9
    $region7: #{critic_forward.5} parent=1 // loop_footer_branch
      %8 = sbr.rel target = $region3
    $region8: #{critic_forward.5} parent=1 // loop_exit
      _

// kernel: critic_forward.6
$region0: #{critic_forward.6}
  #allocation0 [shape = 'u32[]', space=smem, size = 0x4, offset = 0x4, fixed_abs, tag = 'smem constant byte address 0x4 - core index']
  #allocation1 [shape = 'u32[144,128]{1,0:T(1,128)}', space=vmem, size = 0x12000, scoped, tag = 'internal scratch']
  %s0 = inlined_call_operand.vmem [shape: bf16[49,1152], index: 0, kind: input, shape index: {}]
  %s1 = inlined_call_operand.vmem [shape: bf16[1152,128], index: 1, kind: input, shape index: {}]
  %s2 = inlined_call_operand.vmem [shape: f32[1,128], index: 2, kind: input, shape index: {}]
  %s3 = inlined_call_operand.vmem [shape: bf16[49,128], index: 3, kind: output, shape index: {}]
  %s4 = sld [smem:[#allocation0]]
  $region89: #{critic_forward.6} parent=0
    _
  %s6 = ssub.s32 1, %s4
  %s7 = scalar_select 0, %s6, %s4
  $region1: #{critic_forward.6} parent=0
    #allocation2 [shape = 'u8[16384]{0}', space=vmem, size = 0x4000, scoped, tag = 'output window, operand 0']
    loop: start=0, step=1, limit=4
    $region2: #{critic_forward.6} parent=1 // loop_pre_header
      _
    $region3: #{critic_forward.6} parent=1 // loop_header
      %s9 = sphi 0, %s13
      %p10 = scmp.ge.s32.totalorder %s9, 4
      %s19 = sphi 0, %s21
      %s22 = sphi 0, %s19
      %s23 = sphi 0, %s22
      %s39 = sphi 0, %s23
      %s43 = sphi 0, %s43
      %s45 = sphi 0, %s43
      %s46 = sphi 0, %s45
      %s60 = sphi 0, %s46
      %s64 = sphi 0, %s64
      %s66 = sphi 0, %s64
      %s67 = sphi 0, %s66
      %s81 = sphi 0, %s67
      %s87 = sphi 0, %s89
      %s90 = sphi 0, %s87
      %s91 = sphi 0, %s90
      %s107 = sphi 0, %s91
    $region4: #{critic_forward.6} parent=1 // loop_header_branch
      %12 = sbr.rel (%p10) target = $region8
    $region5: #{critic_forward.6} parent=1 // loop_body
      %s14 = ssub.s32 %s9, 1
      %s15 = ssub.s32 %s9, 2
      %s16 = sadd.s32 %s9, 1
      %s17 = ssub.s32 %s9, %s16
      %p18 = scmp.eq.s32.totalorder %s17, 0
      %s20 = sadd.s32 %s19, 1
      %s21 = scalar_select %p18, %s19, %s20
      %p24 = pneg %p18
      %p25 = scmp.eq.s32.totalorder %s9, 1
      %p26 = por %p24, %p25
      %p27 = scmp.ne.s32.totalorder %s19, %s22
      %p28 = scmp.eq.s32.totalorder %s9, 0
      %p29 = por %p27, %p28
      %p30 = scmp.ne.s32.totalorder %s19, %s22
      %p31 = scmp.eq.s32.totalorder %s14, 1
      %p32 = por %p30, %p31
      %p33 = scmp.ne.s32.totalorder %s22, %s23
      %p34 = scmp.eq.s32.totalorder %s14, 0
      %p35 = por %p33, %p34
      %p36 = scmp.ne.s32.totalorder %s22, %s23
      %p37 = scmp.eq.s32.totalorder %s15, 1
      %p38 = por %p36, %p37
      %p40 = scmp.ne.s32.totalorder %s23, %s39
      %p41 = scmp.eq.s32.totalorder %s15, 0
      %p42 = por %p40, %p41
      %s44 = sadd.s32 %s43, 1
      %p47 = scmp.eq.s32.totalorder %s9, 1
      %p48 = scmp.ne.s32.totalorder %s43, %s45
      %p49 = scmp.eq.s32.totalorder %s9, 0
      %p50 = por %p48, %p49
      %p51 = scmp.ne.s32.totalorder %s43, %s45
      %p52 = scmp.eq.s32.totalorder %s14, 1
      %p53 = por %p51, %p52
      %p54 = scmp.ne.s32.totalorder %s45, %s46
      %p55 = scmp.eq.s32.totalorder %s14, 0
      %p56 = por %p54, %p55
      %p57 = scmp.ne.s32.totalorder %s45, %s46
      %p58 = scmp.eq.s32.totalorder %s15, 1
      %p59 = por %p57, %p58
      %p61 = scmp.ne.s32.totalorder %s46, %s60
      %p62 = scmp.eq.s32.totalorder %s15, 0
      %p63 = por %p61, %p62
      %s65 = sadd.s32 %s64, 1
      %p68 = scmp.eq.s32.totalorder %s9, 1
      %p69 = scmp.ne.s32.totalorder %s64, %s66
      %p70 = scmp.eq.s32.totalorder %s9, 0
      %p71 = por %p69, %p70
      %p72 = scmp.ne.s32.totalorder %s64, %s66
      %p73 = scmp.eq.s32.totalorder %s14, 1
      %p74 = por %p72, %p73
      %p75 = scmp.ne.s32.totalorder %s66, %s67
      %p76 = scmp.eq.s32.totalorder %s14, 0
      %p77 = por %p75, %p76
      %p78 = scmp.ne.s32.totalorder %s66, %s67
      %p79 = scmp.eq.s32.totalorder %s15, 1
      %p80 = por %p78, %p79
      %p82 = scmp.ne.s32.totalorder %s67, %s81
      %p83 = scmp.eq.s32.totalorder %s15, 0
      %p84 = por %p82, %p83
      %s85 = ssub.s32 %s9, %s16
      %p86 = scmp.eq.s32.totalorder %s85, 0
      %s88 = sadd.s32 %s87, 1
      %s89 = scalar_select %p86, %s87, %s88
      %p92 = pneg %p86
      %p93 = scmp.eq.s32.totalorder %s9, 1
      %p94 = por %p92, %p93
      %p95 = scmp.ne.s32.totalorder %s87, %s90
      %p96 = scmp.eq.s32.totalorder %s9, 0
      %p97 = por %p95, %p96
      %p98 = scmp.ne.s32.totalorder %s87, %s90
      %p99 = scmp.eq.s32.totalorder %s14, 1
      %p100 = por %p98, %p99
      %p101 = scmp.ne.s32.totalorder %s90, %s91
      %p102 = scmp.eq.s32.totalorder %s14, 0
      %p103 = por %p101, %p102
      %p104 = scmp.ne.s32.totalorder %s90, %s91
      %p105 = scmp.eq.s32.totalorder %s15, 1
      %p106 = por %p104, %p105
      %p108 = scmp.ne.s32.totalorder %s91, %s107
      %p109 = scmp.eq.s32.totalorder %s15, 0
      %p110 = por %p108, %p109
      %p111 = scmp.le.s32.totalorder 1, %s9
      %p112 = scmp.lt.s32.totalorder %s9, 3
      %p113 = pnand %p111, %p112
      %p114 = pneg %p113
      // Predicated region
      $region9: #{critic_forward.6} parent=5 // pred_check
        _
      $region10: #{critic_forward.6} parent=5 // pred_check_branch
        %116 = sbr.rel (%p113) target = $region12
      $region11: #{critic_forward.6} parent=5 // pred_region
        %s117 = ssub.s32 %s9, 1
        // Predicated region
        $region13: #{critic_forward.6} parent=11 // pred_check
          %p118 = pneg %p56
        $region14: #{critic_forward.6} parent=11 // pred_check_branch
          %120 = sbr.rel (%p118) target = $region16
        $region15: #{critic_forward.6} parent=11 // pred_region
          _
        $region16: #{critic_forward.6} parent=11 // pred_fallthru
          _
        // Predicated region
        $region17: #{critic_forward.6} parent=11 // pred_check
          %p121 = pneg %p77
        $region18: #{critic_forward.6} parent=11 // pred_check_branch
          %123 = sbr.rel (%p121) target = $region20
        $region19: #{critic_forward.6} parent=11 // pred_region
          _
        $region20: #{critic_forward.6} parent=11 // pred_fallthru
          _
      $region12: #{critic_forward.6} parent=5 // pred_fallthru
        _
      %p124 = scmp.lt.s32.totalorder %s9, 2
      // Predicated region
      $region21: #{critic_forward.6} parent=5 // pred_check
        %p125 = pneg %p124
      $region22: #{critic_forward.6} parent=5 // pred_check_branch
        %127 = sbr.rel (%p125) target = $region24
      $region23: #{critic_forward.6} parent=5 // pred_region
        // Predicated region
        $region25: #{critic_forward.6} parent=23 // pred_check
          %p128 = pneg %p29
        $region26: #{critic_forward.6} parent=23 // pred_check_branch
          %130 = sbr.rel (%p128) target = $region28
        $region27: #{critic_forward.6} parent=23 // pred_region
          %s131 = smul.u32 4, %s9
          %s132 = ssub.s32 7, %s131
          %p133 = scmp.lt.s32.totalorder %s132, 4
          %s134 = scalar_select %p133, %s132, 4
          %s135 = smul.u32 64, %s134
          %s136 = smul.u32 %s135, 9
          %p137 = scmp.lt.s32.totalorder %s131, 6
          %s138 = scalar_select %p137, %s131, 6
          %s139 = smul.addr %s138, 9
          %s140 = smul.addr %s139, 4
          %s141 = scalar_lea.vmem %s0, %s140
          %s142 = smul.u32 4, %s9
          %s143 = ssub.s32 7, %s142
          %p144 = scmp.lt.s32.totalorder %s143, 4
          %s145 = scalar_select %p144, %s143, 4
          %s146 = smul.u32 64, %s145
          %s147 = smul.u32 %s146, 9
        $region28: #{critic_forward.6} parent=23 // pred_fallthru
          _
      $region24: #{critic_forward.6} parent=5 // pred_fallthru
        _
      %p148 = scmp.le.s32.totalorder 1, %s9
      %p149 = scmp.lt.s32.totalorder %s9, 3
      %p150 = pnand %p148, %p149
      %p151 = pneg %p150
      // Predicated region
      $region29: #{critic_forward.6} parent=5 // pred_check
        _
      $region30: #{critic_forward.6} parent=5 // pred_check_branch
        %153 = sbr.rel (%p150) target = $region32
      $region31: #{critic_forward.6} parent=5 // pred_region
        %s154 = ssub.s32 %s9, 1
        %s155 = smul.u32 4, %s14
        %s156 = ssub.s32 7, %s155
        %p157 = scmp.lt.s32.totalorder %s156, 4
        %s158 = scalar_select %p157, %s156, 4
        %s159 = smul.u32 64, %s158
        %s160 = smul.u32 %s159, 9
        %p161 = scmp.lt.s32.totalorder %s155, 6
        %s162 = scalar_select %p161, %s155, 6
        %s163 = smul.addr %s162, 9
        %s164 = smul.addr %s163, 4
        %s165 = scalar_lea.vmem %s0, %s164
        %p166 = pneg %p35
        %p167 = pneg %p32
        %p168 = pneg %p56
        %p169 = pneg %p53
        %p170 = pneg %p77
        %p171 = pneg %p74
        %p172 = pneg %p103
        %p173 = pneg %p100
        %s174 = sand.u32 %s90, 1
        %s175 = sand.u32 %s90, 1
        %s176 = smul.addr %s175, 16
        %s177 = scalar_lea.vmem [#allocation2], %s176
        %s178 = smul.u32 4, %s14
        %s179 = ssub.s32 7, %s178
        %p180 = scmp.lt.s32.totalorder %s179, 4
        %s181 = scalar_select %p180, %s179, 4
        %s182 = smul.u32 64, %s181
        %s183 = smul.u32 %s182, 9
        %p184 = scmp.lt.s32.totalorder %s178, 6
        %s185 = scalar_select %p184, %s178, 6
        %s186 = smul.addr %s185, 9
        %s187 = smul.addr %s186, 4
        %s188 = scalar_lea.vmem %s0, %s187
        %s189 = smul.u32 4, %s14
        %s190 = ssub.s32 7, %s189
        %p191 = scmp.lt.s32.totalorder %s190, 4
        %s192 = scalar_select %p191, %s190, 4
        %s193 = smul.u32 64, %s192
        %s194 = smul.u32 %s193, 9
        %s195 = smul.u32 4, %s14
        %s196 = ssub.s32 7, %s195
        %p197 = scmp.lt.s32.totalorder %s196, 4
        %s198 = scalar_select %p197, %s196, 4
        %s199 = smul.u32 64, %s198
        %v201 = vld [vmem:[%s188] sm:$0xff]
        %v202 = vld [vmem:[%s188 + $0x8] sm:$0xff]
        %v203 = vld [vmem:[%s188 + $0x10] sm:$0xff]
        %v204 = vld [vmem:[%s188 + $0x18] sm:$0xff]
        %v205 = vld [vmem:[%s188 + $0x20] sm:$0xf]
        %v206 = vld [vmem:[%s188 + $0x24] sm:$0xff]
        %v207 = vld [vmem:[%s188 + $0x2c] sm:$0xff]
        %v208 = vld [vmem:[%s188 + $0x34] sm:$0xff]
        %v209 = vld [vmem:[%s188 + $0x3c] sm:$0xff]
        %v210 = vld [vmem:[%s188 + $0x44] sm:$0xf]
        %v211 = vld [vmem:[%s188 + $0x48] sm:$0xff]
        %v212 = vld [vmem:[%s188 + $0x50] sm:$0xff]
        %v213 = vld [vmem:[%s188 + $0x58] sm:$0xff]
        %v214 = vld [vmem:[%s188 + $0x60] sm:$0xff]
        %v215 = vld [vmem:[%s188 + $0x68] sm:$0xf]
        %v216 = vld [vmem:[%s188 + $0x6c] sm:$0xff]
        %v217 = vld [vmem:[%s188 + $0x74] sm:$0xff]
        %v218 = vld [vmem:[%s188 + $0x7c] sm:$0xff]
        %v219 = vld [vmem:[%s188 + $0x84] sm:$0xff]
        %v220 = vld [vmem:[%s188 + $0x8c] sm:$0xf]
        %v221 = vld [vmem:[%s1] sm:$0xf]
        %v222 = vld [vmem:[%s1 + $0x4] sm:$0xf]
        %v223 = vld [vmem:[%s1 + $0x8] sm:$0xf]
        %v224 = vld [vmem:[%s1 + $0xc] sm:$0xf]
        %v225 = vld [vmem:[%s1 + $0x10] sm:$0xf]
        %v226 = vld [vmem:[%s1 + $0x14] sm:$0xf]
        %v227 = vld [vmem:[%s1 + $0x18] sm:$0xf]
        %v228 = vld [vmem:[%s1 + $0x1c] sm:$0xf]
        %v229 = vld [vmem:[%s1 + $0x20] sm:$0xf]
        %v230 = vld [vmem:[%s1 + $0x24] sm:$0xf]
        %v231 = vld [vmem:[%s1 + $0x28] sm:$0xf]
        %v232 = vld [vmem:[%s1 + $0x2c] sm:$0xf]
        %v233 = vld [vmem:[%s1 + $0x30] sm:$0xf]
        %v234 = vld [vmem:[%s1 + $0x34] sm:$0xf]
        %v235 = vld [vmem:[%s1 + $0x38] sm:$0xf]
        %v236 = vld [vmem:[%s1 + $0x3c] sm:$0xf]
        %v237 = vld [vmem:[%s1 + $0x40] sm:$0xf]
        %v238 = vld [vmem:[%s1 + $0x44] sm:$0xf]
        %v239 = vld [vmem:[%s1 + $0x48] sm:$0xf]
        %v240 = vld [vmem:[%s1 + $0x4c] sm:$0xf]
        %v241 = vld [vmem:[%s1 + $0x50] sm:$0xf]
        %v242 = vld [vmem:[%s1 + $0x54] sm:$0xf]
        %v243 = vld [vmem:[%s1 + $0x58] sm:$0xf]
        %v244 = vld [vmem:[%s1 + $0x5c] sm:$0xf]
        %v245 = vld [vmem:[%s1 + $0x60] sm:$0xf]
        %v246 = vld [vmem:[%s1 + $0x64] sm:$0xf]
        %v247 = vld [vmem:[%s1 + $0x68] sm:$0xf]
        %v248 = vld [vmem:[%s1 + $0x6c] sm:$0xf]
        %v249 = vld [vmem:[%s1 + $0x70] sm:$0xf]
        %v250 = vld [vmem:[%s1 + $0x74] sm:$0xf]
        %v251 = vld [vmem:[%s1 + $0x78] sm:$0xf]
        %v252 = vld [vmem:[%s1 + $0x7c] sm:$0xf]
        %v253 = vld [vmem:[%s1 + $0x80] sm:$0xf]
        %v254 = vld [vmem:[%s1 + $0x84] sm:$0xf]
        %v255 = vld [vmem:[%s1 + $0x88] sm:$0xf]
        %v256 = vld [vmem:[%s1 + $0x8c] sm:$0xf]
        %v257 = vld [vmem:[%s1 + $0x90] sm:$0xf]
        %v258 = vld [vmem:[%s1 + $0x94] sm:$0xf]
        %v259 = vld [vmem:[%s1 + $0x98] sm:$0xf]
        %v260 = vld [vmem:[%s1 + $0x9c] sm:$0xf]
        %v261 = vld [vmem:[%s1 + $0xa0] sm:$0xf]
        %v262 = vld [vmem:[%s1 + $0xa4] sm:$0xf]
        %v263 = vld [vmem:[%s1 + $0xa8] sm:$0xf]
        %v264 = vld [vmem:[%s1 + $0xac] sm:$0xf]
        %v265 = vld [vmem:[%s1 + $0xb0] sm:$0xf]
        %v266 = vld [vmem:[%s1 + $0xb4] sm:$0xf]
        %v267 = vld [vmem:[%s1 + $0xb8] sm:$0xf]
        %v268 = vld [vmem:[%s1 + $0xbc] sm:$0xf]
        %v269 = vld [vmem:[%s1 + $0xc0] sm:$0xf]
        %v270 = vld [vmem:[%s1 + $0xc4] sm:$0xf]
        %v271 = vld [vmem:[%s1 + $0xc8] sm:$0xf]
        %v272 = vld [vmem:[%s1 + $0xcc] sm:$0xf]
        %v273 = vld [vmem:[%s1 + $0xd0] sm:$0xf]
        %v274 = vld [vmem:[%s1 + $0xd4] sm:$0xf]
        %v275 = vld [vmem:[%s1 + $0xd8] sm:$0xf]
        %v276 = vld [vmem:[%s1 + $0xdc] sm:$0xf]
        %v277 = vld [vmem:[%s1 + $0xe0] sm:$0xf]
        %v278 = vld [vmem:[%s1 + $0xe4] sm:$0xf]
        %v279 = vld [vmem:[%s1 + $0xe8] sm:$0xf]
        %v280 = vld [vmem:[%s1 + $0xec] sm:$0xf]
        %v281 = vld [vmem:[%s1 + $0xf0] sm:$0xf]
        %v282 = vld [vmem:[%s1 + $0xf4] sm:$0xf]
        %v283 = vld [vmem:[%s1 + $0xf8] sm:$0xf]
        %v284 = vld [vmem:[%s1 + $0xfc] sm:$0xf]
        %v285 = vld [vmem:[%s1 + $0x100] sm:$0xf]
        %v286 = vld [vmem:[%s1 + $0x104] sm:$0xf]
        %v287 = vld [vmem:[%s1 + $0x108] sm:$0xf]
        %v288 = vld [vmem:[%s1 + $0x10c] sm:$0xf]
        %v289 = vld [vmem:[%s1 + $0x110] sm:$0xf]
        %v290 = vld [vmem:[%s1 + $0x114] sm:$0xf]
        %v291 = vld [vmem:[%s1 + $0x118] sm:$0xf]
        %v292 = vld [vmem:[%s1 + $0x11c] sm:$0xf]
        %v293 = vld [vmem:[%s1 + $0x120] sm:$0xf]
        %v294 = vld [vmem:[%s1 + $0x124] sm:$0xf]
        %v295 = vld [vmem:[%s1 + $0x128] sm:$0xf]
        %v296 = vld [vmem:[%s1 + $0x12c] sm:$0xf]
        %v297 = vld [vmem:[%s1 + $0x130] sm:$0xf]
        %v298 = vld [vmem:[%s1 + $0x134] sm:$0xf]
        %v299 = vld [vmem:[%s1 + $0x138] sm:$0xf]
        %v300 = vld [vmem:[%s1 + $0x13c] sm:$0xf]
        %v301 = vld [vmem:[%s1 + $0x140] sm:$0xf]
        %v302 = vld [vmem:[%s1 + $0x144] sm:$0xf]
        %v303 = vld [vmem:[%s1 + $0x148] sm:$0xf]
        %v304 = vld [vmem:[%s1 + $0x14c] sm:$0xf]
        %v305 = vld [vmem:[%s1 + $0x150] sm:$0xf]
        %v306 = vld [vmem:[%s1 + $0x154] sm:$0xf]
        %v307 = vld [vmem:[%s1 + $0x158] sm:$0xf]
        %v308 = vld [vmem:[%s1 + $0x15c] sm:$0xf]
        %v309 = vld [vmem:[%s1 + $0x160] sm:$0xf]
        %v310 = vld [vmem:[%s1 + $0x164] sm:$0xf]
        %v311 = vld [vmem:[%s1 + $0x168] sm:$0xf]
        %v312 = vld [vmem:[%s1 + $0x16c] sm:$0xf]
        %v313 = vld [vmem:[%s1 + $0x170] sm:$0xf]
        %v314 = vld [vmem:[%s1 + $0x174] sm:$0xf]
        %v315 = vld [vmem:[%s1 + $0x178] sm:$0xf]
        %v316 = vld [vmem:[%s1 + $0x17c] sm:$0xf]
        %v317 = vld [vmem:[%s1 + $0x180] sm:$0xf]
        %v318 = vld [vmem:[%s1 + $0x184] sm:$0xf]
        %v319 = vld [vmem:[%s1 + $0x188] sm:$0xf]
        %v320 = vld [vmem:[%s1 + $0x18c] sm:$0xf]
        %v321 = vld [vmem:[%s1 + $0x190] sm:$0xf]
        %v322 = vld [vmem:[%s1 + $0x194] sm:$0xf]
        %v323 = vld [vmem:[%s1 + $0x198] sm:$0xf]
        %v324 = vld [vmem:[%s1 + $0x19c] sm:$0xf]
        %v325 = vld [vmem:[%s1 + $0x1a0] sm:$0xf]
        %v326 = vld [vmem:[%s1 + $0x1a4] sm:$0xf]
        %v327 = vld [vmem:[%s1 + $0x1a8] sm:$0xf]
        %v328 = vld [vmem:[%s1 + $0x1ac] sm:$0xf]
        %v329 = vld [vmem:[%s1 + $0x1b0] sm:$0xf]
        %v330 = vld [vmem:[%s1 + $0x1b4] sm:$0xf]
        %v331 = vld [vmem:[%s1 + $0x1b8] sm:$0xf]
        %v332 = vld [vmem:[%s1 + $0x1bc] sm:$0xf]
        %v333 = vld [vmem:[%s1 + $0x1c0] sm:$0xf]
        %v334 = vld [vmem:[%s1 + $0x1c4] sm:$0xf]
        %v335 = vld [vmem:[%s1 + $0x1c8] sm:$0xf]
        %v336 = vld [vmem:[%s1 + $0x1cc] sm:$0xf]
        %v337 = vld [vmem:[%s1 + $0x1d0] sm:$0xf]
        %v338 = vld [vmem:[%s1 + $0x1d4] sm:$0xf]
        %v339 = vld [vmem:[%s1 + $0x1d8] sm:$0xf]
        %v340 = vld [vmem:[%s1 + $0x1dc] sm:$0xf]
        %v341 = vld [vmem:[%s1 + $0x1e0] sm:$0xf]
        %v342 = vld [vmem:[%s1 + $0x1e4] sm:$0xf]
        %v343 = vld [vmem:[%s1 + $0x1e8] sm:$0xf]
        %v344 = vld [vmem:[%s1 + $0x1ec] sm:$0xf]
        %v345 = vld [vmem:[%s1 + $0x1f0] sm:$0xf]
        %v346 = vld [vmem:[%s1 + $0x1f4] sm:$0xf]
        %v347 = vld [vmem:[%s1 + $0x1f8] sm:$0xf]
        %v348 = vld [vmem:[%s1 + $0x1fc] sm:$0xf]
        %v349 = vld [vmem:[%s1 + $0x200] sm:$0xf]
        %v350 = vld [vmem:[%s1 + $0x204] sm:$0xf]
        %v351 = vld [vmem:[%s1 + $0x208] sm:$0xf]
        %v352 = vld [vmem:[%s1 + $0x20c] sm:$0xf]
        %v353 = vld [vmem:[%s1 + $0x210] sm:$0xf]
        %v354 = vld [vmem:[%s1 + $0x214] sm:$0xf]
        %v355 = vld [vmem:[%s1 + $0x218] sm:$0xf]
        %v356 = vld [vmem:[%s1 + $0x21c] sm:$0xf]
        %v357 = vld [vmem:[%s1 + $0x220] sm:$0xf]
        %v358 = vld [vmem:[%s1 + $0x224] sm:$0xf]
        %v359 = vld [vmem:[%s1 + $0x228] sm:$0xf]
        %v360 = vld [vmem:[%s1 + $0x22c] sm:$0xf]
        %v361 = vld [vmem:[%s1 + $0x230] sm:$0xf]
        %v362 = vld [vmem:[%s1 + $0x234] sm:$0xf]
        %v363 = vld [vmem:[%s1 + $0x238] sm:$0xf]
        %v364 = vld [vmem:[%s1 + $0x23c] sm:$0xf]
        %v365 = vld [vmem:[%s2] sm:$0x1]
        %v367 = vlaneseq
        %v368 = vshrl.u32 %v367, 7
        %v369 = vsub.s32 0, %v368
        %v370 = vrot.slane %v365, %v369
        %v392 = vunpack.c.l.b16 %v201
        %v393 = vunpack.c.h.b16 %v201
        %v394 = vunpack.c.l.b16 %v202
        %v395 = vunpack.c.h.b16 %v202
        %v396 = vunpack.c.l.b16 %v203
        %v397 = vunpack.c.h.b16 %v203
        %v398 = vunpack.c.l.b16 %v204
        %v399 = vunpack.c.h.b16 %v204
        %v400 = vunpack.c.l.b16 %v205
        %v401 = vunpack.c.l.b16 %v206
        %v402 = vunpack.c.h.b16 %v206
        %v403 = vunpack.c.l.b16 %v207
        %v404 = vunpack.c.h.b16 %v207
        %v405 = vunpack.c.l.b16 %v208
        %v406 = vunpack.c.h.b16 %v208
        %v407 = vunpack.c.l.b16 %v209
        %v408 = vunpack.c.h.b16 %v209
        %v409 = vunpack.c.l.b16 %v210
        %v410 = vunpack.c.l.b16 %v211
        %v411 = vunpack.c.h.b16 %v211
        %v412 = vunpack.c.l.b16 %v212
        %v413 = vunpack.c.h.b16 %v212
        %v414 = vunpack.c.l.b16 %v213
        %v415 = vunpack.c.h.b16 %v213
        %v416 = vunpack.c.l.b16 %v214
        %v417 = vunpack.c.h.b16 %v214
        %v418 = vunpack.c.l.b16 %v215
        %v419 = vunpack.c.l.b16 %v216
        %v420 = vunpack.c.h.b16 %v216
        %v421 = vunpack.c.l.b16 %v217
        %v422 = vunpack.c.h.b16 %v217
        %v423 = vunpack.c.l.b16 %v218
        %v424 = vunpack.c.h.b16 %v218
        %v425 = vunpack.c.l.b16 %v219
        %v426 = vunpack.c.h.b16 %v219
        %v427 = vunpack.c.l.b16 %v220
        %v428 = vpack.c.b16 %v401, %v392
        %v429 = vpack.c.b16 %v402, %v393
        %v430 = vpack.c.b16 %v403, %v394
        %v431 = vpack.c.b16 %v404, %v395
        %v432 = vpack.c.b16 %v405, %v396
        %v433 = vpack.c.b16 %v406, %v397
        %v434 = vpack.c.b16 %v407, %v398
        %v435 = vpack.c.b16 %v408, %v399
        %v436 = vpack.c.b16 %v409, %v400
        %v437 = vpack.c.b16 %v419, %v410
        %v438 = vpack.c.b16 %v420, %v411
        %v439 = vpack.c.b16 %v421, %v412
        %v440 = vpack.c.b16 %v422, %v413
        %v441 = vpack.c.b16 %v423, %v414
        %v442 = vpack.c.b16 %v424, %v415
        %v443 = vpack.c.b16 %v425, %v416
        %v444 = vpack.c.b16 %v426, %v417
        %v445 = vpack.c.b16 %v427, %v418
        %v608 = vunpack.c.l.b16 %v221
        %v609 = vunpack.c.l.b16 %v222
        %v610 = vunpack.c.l.b16 %v223
        %v611 = vunpack.c.l.b16 %v224
        %v612 = vunpack.c.l.b16 %v225
        %v613 = vunpack.c.l.b16 %v226
        %v614 = vunpack.c.l.b16 %v227
        %v615 = vunpack.c.l.b16 %v228
        %v616 = vunpack.c.l.b16 %v229
        %v617 = vunpack.c.l.b16 %v230
        %v618 = vunpack.c.l.b16 %v231
        %v619 = vunpack.c.l.b16 %v232
        %v620 = vunpack.c.l.b16 %v233
        %v621 = vunpack.c.l.b16 %v234
        %v622 = vunpack.c.l.b16 %v235
        %v623 = vunpack.c.l.b16 %v236
        %v624 = vunpack.c.l.b16 %v237
        %v625 = vunpack.c.l.b16 %v238
        %v626 = vunpack.c.l.b16 %v239
        %v627 = vunpack.c.l.b16 %v240
        %v628 = vunpack.c.l.b16 %v241
        %v629 = vunpack.c.l.b16 %v242
        %v630 = vunpack.c.l.b16 %v243
        %v631 = vunpack.c.l.b16 %v244
        %v632 = vunpack.c.l.b16 %v245
        %v633 = vunpack.c.l.b16 %v246
        %v634 = vunpack.c.l.b16 %v247
        %v635 = vunpack.c.l.b16 %v248
        %v636 = vunpack.c.l.b16 %v249
        %v637 = vunpack.c.l.b16 %v250
        %v638 = vunpack.c.l.b16 %v251
        %v639 = vunpack.c.l.b16 %v252
        %v640 = vunpack.c.l.b16 %v253
        %v641 = vunpack.c.l.b16 %v254
        %v642 = vunpack.c.l.b16 %v255
        %v643 = vunpack.c.l.b16 %v256
        %v644 = vunpack.c.l.b16 %v257
        %v645 = vunpack.c.l.b16 %v258
        %v646 = vunpack.c.l.b16 %v259
        %v647 = vunpack.c.l.b16 %v260
        %v648 = vunpack.c.l.b16 %v261
        %v649 = vunpack.c.l.b16 %v262
        %v650 = vunpack.c.l.b16 %v263
        %v651 = vunpack.c.l.b16 %v264
        %v652 = vunpack.c.l.b16 %v265
        %v653 = vunpack.c.l.b16 %v266
        %v654 = vunpack.c.l.b16 %v267
        %v655 = vunpack.c.l.b16 %v268
        %v656 = vunpack.c.l.b16 %v269
        %v657 = vunpack.c.l.b16 %v270
        %v658 = vunpack.c.l.b16 %v271
        %v659 = vunpack.c.l.b16 %v272
        %v660 = vunpack.c.l.b16 %v273
        %v661 = vunpack.c.l.b16 %v274
        %v662 = vunpack.c.l.b16 %v275
        %v663 = vunpack.c.l.b16 %v276
        %v664 = vunpack.c.l.b16 %v277
        %v665 = vunpack.c.l.b16 %v278
        %v666 = vunpack.c.l.b16 %v279
        %v667 = vunpack.c.l.b16 %v280
        %v668 = vunpack.c.l.b16 %v281
        %v669 = vunpack.c.l.b16 %v282
        %v670 = vunpack.c.l.b16 %v283
        %v671 = vunpack.c.l.b16 %v284
        %v672 = vunpack.c.l.b16 %v285
        %v673 = vunpack.c.l.b16 %v286
        %v674 = vunpack.c.l.b16 %v287
        %v675 = vunpack.c.l.b16 %v288
        %v676 = vunpack.c.l.b16 %v289
        %v677 = vunpack.c.l.b16 %v290
        %v678 = vunpack.c.l.b16 %v291
        %v679 = vunpack.c.l.b16 %v292
        %v680 = vunpack.c.l.b16 %v293
        %v681 = vunpack.c.l.b16 %v294
        %v682 = vunpack.c.l.b16 %v295
        %v683 = vunpack.c.l.b16 %v296
        %v684 = vunpack.c.l.b16 %v297
        %v685 = vunpack.c.l.b16 %v298
        %v686 = vunpack.c.l.b16 %v299
        %v687 = vunpack.c.l.b16 %v300
        %v688 = vunpack.c.l.b16 %v301
        %v689 = vunpack.c.l.b16 %v302
        %v690 = vunpack.c.l.b16 %v303
        %v691 = vunpack.c.l.b16 %v304
        %v692 = vunpack.c.l.b16 %v305
        %v693 = vunpack.c.l.b16 %v306
        %v694 = vunpack.c.l.b16 %v307
        %v695 = vunpack.c.l.b16 %v308
        %v696 = vunpack.c.l.b16 %v309
        %v697 = vunpack.c.l.b16 %v310
        %v698 = vunpack.c.l.b16 %v311
        %v699 = vunpack.c.l.b16 %v312
        %v700 = vunpack.c.l.b16 %v313
        %v701 = vunpack.c.l.b16 %v314
        %v702 = vunpack.c.l.b16 %v315
        %v703 = vunpack.c.l.b16 %v316
        %v704 = vunpack.c.l.b16 %v317
        %v705 = vunpack.c.l.b16 %v318
        %v706 = vunpack.c.l.b16 %v319
        %v707 = vunpack.c.l.b16 %v320
        %v708 = vunpack.c.l.b16 %v321
        %v709 = vunpack.c.l.b16 %v322
        %v710 = vunpack.c.l.b16 %v323
        %v711 = vunpack.c.l.b16 %v324
        %v712 = vunpack.c.l.b16 %v325
        %v713 = vunpack.c.l.b16 %v326
        %v714 = vunpack.c.l.b16 %v327
        %v715 = vunpack.c.l.b16 %v328
        %v716 = vunpack.c.l.b16 %v329
        %v717 = vunpack.c.l.b16 %v330
        %v718 = vunpack.c.l.b16 %v331
        %v719 = vunpack.c.l.b16 %v332
        %v720 = vunpack.c.l.b16 %v333
        %v721 = vunpack.c.l.b16 %v334
        %v722 = vunpack.c.l.b16 %v335
        %v723 = vunpack.c.l.b16 %v336
        %v724 = vunpack.c.l.b16 %v337
        %v725 = vunpack.c.l.b16 %v338
        %v726 = vunpack.c.l.b16 %v339
        %v727 = vunpack.c.l.b16 %v340
        %v728 = vunpack.c.l.b16 %v341
        %v729 = vunpack.c.l.b16 %v342
        %v730 = vunpack.c.l.b16 %v343
        %v731 = vunpack.c.l.b16 %v344
        %v732 = vunpack.c.l.b16 %v345
        %v733 = vunpack.c.l.b16 %v346
        %v734 = vunpack.c.l.b16 %v347
        %v735 = vunpack.c.l.b16 %v348
        %v736 = vunpack.c.l.b16 %v349
        %v737 = vunpack.c.l.b16 %v350
        %v738 = vunpack.c.l.b16 %v351
        %v739 = vunpack.c.l.b16 %v352
        %v740 = vunpack.c.l.b16 %v353
        %v741 = vunpack.c.l.b16 %v354
        %v742 = vunpack.c.l.b16 %v355
        %v743 = vunpack.c.l.b16 %v356
        %v744 = vunpack.c.l.b16 %v357
        %v745 = vunpack.c.l.b16 %v358
        %v746 = vunpack.c.l.b16 %v359
        %v747 = vunpack.c.l.b16 %v360
        %v748 = vunpack.c.l.b16 %v361
        %v749 = vunpack.c.l.b16 %v362
        %v750 = vunpack.c.l.b16 %v363
        %v751 = vunpack.c.l.b16 %v364
        %v752 = vpack.c.b16 %v609, %v608
        %v753 = vpack.c.b16 %v611, %v610
        %v754 = vpack.c.b16 %v613, %v612
        %v755 = vpack.c.b16 %v615, %v614
        %v756 = vpack.c.b16 %v617, %v616
        %v757 = vpack.c.b16 %v619, %v618
        %v758 = vpack.c.b16 %v621, %v620
        %v759 = vpack.c.b16 %v623, %v622
        %v760 = vpack.c.b16 %v625, %v624
        %v761 = vpack.c.b16 %v627, %v626
        %v762 = vpack.c.b16 %v629, %v628
        %v763 = vpack.c.b16 %v631, %v630
        %v764 = vpack.c.b16 %v633, %v632
        %v765 = vpack.c.b16 %v635, %v634
        %v766 = vpack.c.b16 %v637, %v636
        %v767 = vpack.c.b16 %v639, %v638
        %v768 = vpack.c.b16 %v641, %v640
        %v769 = vpack.c.b16 %v643, %v642
        %v770 = vpack.c.b16 %v645, %v644
        %v771 = vpack.c.b16 %v647, %v646
        %v772 = vpack.c.b16 %v649, %v648
        %v773 = vpack.c.b16 %v651, %v650
        %v774 = vpack.c.b16 %v653, %v652
        %v775 = vpack.c.b16 %v655, %v654
        %v776 = vpack.c.b16 %v657, %v656
        %v777 = vpack.c.b16 %v659, %v658
        %v778 = vpack.c.b16 %v661, %v660
        %v779 = vpack.c.b16 %v663, %v662
        %v780 = vpack.c.b16 %v665, %v664
        %v781 = vpack.c.b16 %v667, %v666
        %v782 = vpack.c.b16 %v669, %v668
        %v783 = vpack.c.b16 %v671, %v670
        %v784 = vpack.c.b16 %v673, %v672
        %v785 = vpack.c.b16 %v675, %v674
        %v786 = vpack.c.b16 %v677, %v676
        %v787 = vpack.c.b16 %v679, %v678
        %v788 = vpack.c.b16 %v681, %v680
        %v789 = vpack.c.b16 %v683, %v682
        %v790 = vpack.c.b16 %v685, %v684
        %v791 = vpack.c.b16 %v687, %v686
        %v792 = vpack.c.b16 %v689, %v688
        %v793 = vpack.c.b16 %v691, %v690
        %v794 = vpack.c.b16 %v693, %v692
        %v795 = vpack.c.b16 %v695, %v694
        %v796 = vpack.c.b16 %v697, %v696
        %v797 = vpack.c.b16 %v699, %v698
        %v798 = vpack.c.b16 %v701, %v700
        %v799 = vpack.c.b16 %v703, %v702
        %v800 = vpack.c.b16 %v705, %v704
        %v801 = vpack.c.b16 %v707, %v706
        %v802 = vpack.c.b16 %v709, %v708
        %v803 = vpack.c.b16 %v711, %v710
        %v804 = vpack.c.b16 %v713, %v712
        %v805 = vpack.c.b16 %v715, %v714
        %v806 = vpack.c.b16 %v717, %v716
        %v807 = vpack.c.b16 %v719, %v718
        %v808 = vpack.c.b16 %v721, %v720
        %v809 = vpack.c.b16 %v723, %v722
        %v810 = vpack.c.b16 %v725, %v724
        %v811 = vpack.c.b16 %v727, %v726
        %v812 = vpack.c.b16 %v729, %v728
        %v813 = vpack.c.b16 %v731, %v730
        %v814 = vpack.c.b16 %v733, %v732
        %v815 = vpack.c.b16 %v735, %v734
        %v816 = vpack.c.b16 %v737, %v736
        %v817 = vpack.c.b16 %v739, %v738
        %v818 = vpack.c.b16 %v741, %v740
        %v819 = vpack.c.b16 %v743, %v742
        %v820 = vpack.c.b16 %v745, %v744
        %v821 = vpack.c.b16 %v747, %v746
        %v822 = vpack.c.b16 %v749, %v748
        %v823 = vpack.c.b16 %v751, %v750
        %896 = vmatprep.subr.bf16.mxu0 0
        %897 = vmatpush1.bf16.msra.mxu0 %v752
        %898 = vmatprep.subr.bf16.mxu0 0
        %899 = vmatpush1.bf16.msra.mxu0 %v753
        %900 = vmatprep.subr.bf16.mxu0 0
        %901 = vmatpush1.bf16.msra.mxu0 %v754
        %902 = vmatprep.subr.bf16.mxu0 0
        %903 = vmatpush1.bf16.msra.mxu0 %v755
        %904 = vmatprep.subr.bf16.mxu0 0
        %905 = vmatpush1.bf16.msra.mxu0 %v756
        %906 = vmatprep.subr.bf16.mxu0 0
        %907 = vmatpush1.bf16.msra.mxu0 %v757
        %908 = vmatprep.subr.bf16.mxu0 0
        %909 = vmatpush1.bf16.msra.mxu0 %v758
        %910 = vmatprep.subr.bf16.mxu0 0
        %911 = vmatpush1.bf16.msra.mxu0 %v759
        %912 = vmatprep.subr.bf16.mxu0 0
        %913 = vmatpush1.bf16.msra.mxu0 %v760
        %914 = vmatprep.subr.bf16.mxu0 0
        %915 = vmatpush1.bf16.msra.mxu0 %v761
        %916 = vmatprep.subr.bf16.mxu0 0
        %917 = vmatpush1.bf16.msra.mxu0 %v762
        %918 = vmatprep.subr.bf16.mxu0 0
        %919 = vmatpush1.bf16.msra.mxu0 %v763
        %920 = vmatprep.subr.bf16.mxu0 0
        %921 = vmatpush1.bf16.msra.mxu0 %v764
        %922 = vmatprep.subr.bf16.mxu0 0
        %923 = vmatpush1.bf16.msra.mxu0 %v765
        %924 = vmatprep.subr.bf16.mxu0 0
        %925 = vmatpush1.bf16.msra.mxu0 %v766
        %926 = vmatprep.subr.bf16.mxu0 0
        %927 = vmatpush1.bf16.msra.mxu0 %v767
        %928 = vmatprep.mubr.bf16.mxu0 %v429
        %929 = vmatmul.mubr.bf16.gmra.mrb[0].mxu0 %v428
        %v930 = vpop.f32.mrb[0].mxu0
        %v931 = vadd.f32 %v370, %v930
        %v932 = vpop.f32.mrb[0].mxu0
        %v933 = vpop.f32.mrb[0].mxu0
        %v934 = vadd.f32 %v370, %v933
        %v935 = vpop.f32.mrb[0].mxu0
        %936 = vmatprep.mubr.bf16.mxu0 %v438
        %937 = vmatmul.mubr.bf16.gmra.mrb[0].mxu0 %v437
        %v938 = vpop.f32.mrb[0].mxu0
        %v939 = vadd.f32 %v370, %v938
        %v940 = vpop.f32.mrb[0].mxu0
        %v941 = vpop.f32.mrb[0].mxu0
        %v942 = vadd.f32 %v370, %v941
        %v943 = vpop.f32.mrb[0].mxu0
        %944 = vdwg.mxu0
        %945 = vmatprep.subr.bf16.mxu0 0
        %946 = vmatpush1.bf16.msra.mxu0 %v768
        %947 = vmatprep.subr.bf16.mxu0 0
        %948 = vmatpush1.bf16.msra.mxu0 %v769
        %949 = vmatprep.subr.bf16.mxu0 0
        %950 = vmatpush1.bf16.msra.mxu0 %v770
        %951 = vmatprep.subr.bf16.mxu0 0
        %952 = vmatpush1.bf16.msra.mxu0 %v771
        %953 = vmatprep.subr.bf16.mxu0 0
        %954 = vmatpush1.bf16.msra.mxu0 %v772
        %955 = vmatprep.subr.bf16.mxu0 0
        %956 = vmatpush1.bf16.msra.mxu0 %v773
        %957 = vmatprep.subr.bf16.mxu0 0
        %958 = vmatpush1.bf16.msra.mxu0 %v774
        %959 = vmatprep.subr.bf16.mxu0 0
        %960 = vmatpush1.bf16.msra.mxu0 %v775
        %961 = vmatprep.subr.bf16.mxu0 0
        %962 = vmatpush1.bf16.msra.mxu0 %v776
        %963 = vmatprep.subr.bf16.mxu0 0
        %964 = vmatpush1.bf16.msra.mxu0 %v777
        %965 = vmatprep.subr.bf16.mxu0 0
        %966 = vmatpush1.bf16.msra.mxu0 %v778
        %967 = vmatprep.subr.bf16.mxu0 0
        %968 = vmatpush1.bf16.msra.mxu0 %v779
        %969 = vmatprep.subr.bf16.mxu0 0
        %970 = vmatpush1.bf16.msra.mxu0 %v780
        %971 = vmatprep.subr.bf16.mxu0 0
        %972 = vmatpush1.bf16.msra.mxu0 %v781
        %973 = vmatprep.subr.bf16.mxu0 0
        %974 = vmatpush1.bf16.msra.mxu0 %v782
        %975 = vmatprep.subr.bf16.mxu0 0
        %976 = vmatpush1.bf16.msra.mxu0 %v783
        %977 = vmatprep.mubr.bf16.mxu0 %v431
        %978 = vmatmul.mubr.bf16.gmra.mrb[0].mxu0 %v430
        %v979 = vpop.f32.mrb[0].mxu0
        %v980 = vadd.f32 %v931, %v979
        %v981 = vpop.f32.mrb[0].mxu0
        %v982 = vpop.f32.mrb[0].mxu0
        %v983 = vadd.f32 %v934, %v982
        %v984 = vpop.f32.mrb[0].mxu0
        %985 = vmatprep.mubr.bf16.mxu0 %v440
        %986 = vmatmul.mubr.bf16.gmra.mrb[0].mxu0 %v439
        %v987 = vpop.f32.mrb[0].mxu0
        %v988 = vadd.f32 %v939, %v987
        %v989 = vpop.f32.mrb[0].mxu0
        %v990 = vpop.f32.mrb[0].mxu0
        %v991 = vadd.f32 %v942, %v990
        %v992 = vpop.f32.mrb[0].mxu0
        %993 = vdwg.mxu0
        %994 = vmatprep.subr.bf16.mxu0 0
        %995 = vmatpush1.bf16.msra.mxu0 %v784
        %996 = vmatprep.subr.bf16.mxu0 0
        %997 = vmatpush1.bf16.msra.mxu0 %v785
        %998 = vmatprep.subr.bf16.mxu0 0
        %999 = vmatpush1.bf16.msra.mxu0 %v786
        %1000 = vmatprep.subr.bf16.mxu0 0
        %1001 = vmatpush1.bf16.msra.mxu0 %v787
        %1002 = vmatprep.subr.bf16.mxu0 0
        %1003 = vmatpush1.bf16.msra.mxu0 %v788
        %1004 = vmatprep.subr.bf16.mxu0 0
        %1005 = vmatpush1.bf16.msra.mxu0 %v789
        %1006 = vmatprep.subr.bf16.mxu0 0
        %1007 = vmatpush1.bf16.msra.mxu0 %v790
        %1008 = vmatprep.subr.bf16.mxu0 0
        %1009 = vmatpush1.bf16.msra.mxu0 %v791
        %1010 = vmatprep.subr.bf16.mxu0 0
        %1011 = vmatpush1.bf16.msra.mxu0 %v792
        %1012 = vmatprep.subr.bf16.mxu0 0
        %1013 = vmatpush1.bf16.msra.mxu0 %v793
        %1014 = vmatprep.subr.bf16.mxu0 0
        %1015 = vmatpush1.bf16.msra.mxu0 %v794
        %1016 = vmatprep.subr.bf16.mxu0 0
        %1017 = vmatpush1.bf16.msra.mxu0 %v795
        %1018 = vmatprep.subr.bf16.mxu0 0
        %1019 = vmatpush1.bf16.msra.mxu0 %v796
        %1020 = vmatprep.subr.bf16.mxu0 0
        %1021 = vmatpush1.bf16.msra.mxu0 %v797
        %1022 = vmatprep.subr.bf16.mxu0 0
        %1023 = vmatpush1.bf16.msra.mxu0 %v798
        %1024 = vmatprep.subr.bf16.mxu0 0
        %1025 = vmatpush1.bf16.msra.mxu0 %v799
        %1026 = vmatprep.mubr.bf16.mxu0 %v433
        %1027 = vmatmul.mubr.bf16.gmra.mrb[0].mxu0 %v432
        %v1028 = vpop.f32.mrb[0].mxu0
        %v1029 = vadd.f32 %v980, %v1028
        %v1030 = vpop.f32.mrb[0].mxu0
        %v1031 = vpop.f32.mrb[0].mxu0
        %v1032 = vadd.f32 %v983, %v1031
        %v1033 = vpop.f32.mrb[0].mxu0
        %1034 = vmatprep.mubr.bf16.mxu0 %v442
        %1035 = vmatmul.mubr.bf16.gmra.mrb[0].mxu0 %v441
        %v1036 = vpop.f32.mrb[0].mxu0
        %v1037 = vadd.f32 %v988, %v1036
        %v1038 = vpop.f32.mrb[0].mxu0
        %v1039 = vpop.f32.mrb[0].mxu0
        %v1040 = vadd.f32 %v991, %v1039
        %v1041 = vpop.f32.mrb[0].mxu0
        %1042 = vdwg.mxu0
        %1043 = vmatprep.subr.bf16.mxu0 0
        %1044 = vmatpush1.bf16.msra.mxu0 %v800
        %1045 = vmatprep.subr.bf16.mxu0 0
        %1046 = vmatpush1.bf16.msra.mxu0 %v801
        %1047 = vmatprep.subr.bf16.mxu0 0
        %1048 = vmatpush1.bf16.msra.mxu0 %v802
        %1049 = vmatprep.subr.bf16.mxu0 0
        %1050 = vmatpush1.bf16.msra.mxu0 %v803
        %1051 = vmatprep.subr.bf16.mxu0 0
        %1052 = vmatpush1.bf16.msra.mxu0 %v804
        %1053 = vmatprep.subr.bf16.mxu0 0
        %1054 = vmatpush1.bf16.msra.mxu0 %v805
        %1055 = vmatprep.subr.bf16.mxu0 0
        %1056 = vmatpush1.bf16.msra.mxu0 %v806
        %1057 = vmatprep.subr.bf16.mxu0 0
        %1058 = vmatpush1.bf16.msra.mxu0 %v807
        %1059 = vmatprep.subr.bf16.mxu0 0
        %1060 = vmatpush1.bf16.msra.mxu0 %v808
        %1061 = vmatprep.subr.bf16.mxu0 0
        %1062 = vmatpush1.bf16.msra.mxu0 %v809
        %1063 = vmatprep.subr.bf16.mxu0 0
        %1064 = vmatpush1.bf16.msra.mxu0 %v810
        %1065 = vmatprep.subr.bf16.mxu0 0
        %1066 = vmatpush1.bf16.msra.mxu0 %v811
        %1067 = vmatprep.subr.bf16.mxu0 0
        %1068 = vmatpush1.bf16.msra.mxu0 %v812
        %1069 = vmatprep.subr.bf16.mxu0 0
        %1070 = vmatpush1.bf16.msra.mxu0 %v813
        %1071 = vmatprep.subr.bf16.mxu0 0
        %1072 = vmatpush1.bf16.msra.mxu0 %v814
        %1073 = vmatprep.subr.bf16.mxu0 0
        %1074 = vmatpush1.bf16.msra.mxu0 %v815
        %1075 = vmatprep.mubr.bf16.mxu0 %v435
        %1076 = vmatmul.mubr.bf16.gmra.mrb[0].mxu0 %v434
        %v1077 = vpop.f32.mrb[0].mxu0
        %v1078 = vadd.f32 %v1029, %v1077
        %v1079 = vpop.f32.mrb[0].mxu0
        %v1080 = vpop.f32.mrb[0].mxu0
        %v1081 = vadd.f32 %v1032, %v1080
        %v1082 = vpop.f32.mrb[0].mxu0
        %1083 = vmatprep.mubr.bf16.mxu0 %v444
        %1084 = vmatmul.mubr.bf16.gmra.mrb[0].mxu0 %v443
        %v1085 = vpop.f32.mrb[0].mxu0
        %v1086 = vadd.f32 %v1037, %v1085
        %v1087 = vpop.f32.mrb[0].mxu0
        %v1088 = vpop.f32.mrb[0].mxu0
        %v1089 = vadd.f32 %v1040, %v1088
        %v1090 = vpop.f32.mrb[0].mxu0
        %1091 = vdwg.mxu0
        %1092 = vmatprep.subr.bf16.mxu0 0
        %1093 = vmatpush1.bf16.msra.mxu0 %v816
        %1094 = vmatprep.subr.bf16.mxu0 0
        %1095 = vmatpush1.bf16.msra.mxu0 %v817
        %1096 = vmatprep.subr.bf16.mxu0 0
        %1097 = vmatpush1.bf16.msra.mxu0 %v818
        %1098 = vmatprep.subr.bf16.mxu0 0
        %1099 = vmatpush1.bf16.msra.mxu0 %v819
        %1100 = vmatprep.subr.bf16.mxu0 0
        %1101 = vmatpush1.bf16.msra.mxu0 %v820
        %1102 = vmatprep.subr.bf16.mxu0 0
        %1103 = vmatpush1.bf16.msra.mxu0 %v821
        %1104 = vmatprep.subr.bf16.mxu0 0
        %1105 = vmatpush1.bf16.msra.mxu0 %v822
        %1106 = vmatprep.subr.bf16.mxu0 0
        %1107 = vmatpush1.bf16.msra.mxu0 %v823
        %1108 = vmatprep.subr.bf16.mxu0 0
        %1109 = vmatpush1.bf16.msra.mxu0 0
        %1110 = vmatprep.subr.bf16.mxu0 0
        %1111 = vmatpush1.bf16.msra.mxu0 0
        %1112 = vmatprep.subr.bf16.mxu0 0
        %1113 = vmatpush1.bf16.msra.mxu0 0
        %1114 = vmatprep.subr.bf16.mxu0 0
        %1115 = vmatpush1.bf16.msra.mxu0 0
        %1116 = vmatprep.subr.bf16.mxu0 0
        %1117 = vmatpush1.bf16.msra.mxu0 0
        %1118 = vmatprep.subr.bf16.mxu0 0
        %1119 = vmatpush1.bf16.msra.mxu0 0
        %1120 = vmatprep.subr.bf16.mxu0 0
        %1121 = vmatpush1.bf16.msra.mxu0 0
        %1122 = vmatprep.subr.bf16.mxu0 0
        %1123 = vmatpush1.bf16.msra.mxu0 0
        %1124 = vmatprep.mubr.bf16.mxu0 0
        %1125 = vmatmul.mubr.bf16.gmra.mrb[0].mxu0 %v436
        %v1126 = vpop.f32.mrb[0].mxu0
        %v1127 = vadd.f32 %v1078, %v1126
        %v1128 = vpop.f32.mrb[0].mxu0
        %v1129 = vpop.f32.mrb[0].mxu0
        %v1130 = vadd.f32 %v1081, %v1129
        %v1131 = vpop.f32.mrb[0].mxu0
        %1132 = vmatprep.mubr.bf16.mxu0 0
        %1133 = vmatmul.mubr.bf16.gmra.mrb[0].mxu0 %v445
        %v1134 = vpop.f32.mrb[0].mxu0
        %v1135 = vadd.f32 %v1086, %v1134
        %v1136 = vpop.f32.mrb[0].mxu0
        %v1137 = vpop.f32.mrb[0].mxu0
        %v1138 = vadd.f32 %v1089, %v1137
        %v1139 = vpop.f32.mrb[0].mxu0
        %1140 = vdwg.mxu0
        %v1141 = vmax.f32 %v1127, 0.0
        %v1142 = vmax.f32 %v1130, 0.0
        %v1143 = vmax.f32 %v1135, 0.0
        %v1144 = vmax.f32 %v1138, 0.0
        %v1145 = vpack.c.bf16 %v1142, %v1141
        %v1146 = vpack.c.bf16 %v1144, %v1143
        %v1149 = vunpack.c.l.b16 %v1145
        %v1150 = vunpack.c.h.b16 %v1145
        %v1151 = vunpack.c.l.b16 %v1146
        %v1152 = vunpack.c.h.b16 %v1146
        %v1153 = vpack.c.b16 %v1149, %v1149
        %v1154 = vpack.c.b16 %v1150, %v1150
        %v1155 = vpack.c.b16 %v1151, %v1151
        %v1156 = vpack.c.b16 %v1152, %v1152
        %1161 = vst [vmem:[%s177] sm:$0xf] %v1153
        %1162 = vst [vmem:[%s177 + $0x4] sm:$0xf] %v1154
        %1163 = vst [vmem:[%s177 + $0x8] sm:$0xf] %v1155
        %1164 = vst [vmem:[%s177 + $0xc] sm:$0xf] %v1156
        %s1165 = sand.u32 %s90, 1
        %s1166 = sand.u32 %s90, 1
        %s1167 = smul.addr %s1166, 16
        %s1168 = scalar_lea.vmem [#allocation2], %s1167
        // Predicated region
        $region33: #{critic_forward.6} parent=31 // pred_check
          %p1169 = pneg %p100
        $region34: #{critic_forward.6} parent=31 // pred_check_branch
          %1171 = sbr.rel (%p1169) target = $region36
        $region35: #{critic_forward.6} parent=31 // pred_region
          %s1172 = smul.u32 4, %s14
          %s1173 = ssub.s32 7, %s1172
          %p1174 = scmp.lt.s32.totalorder %s1173, 4
          %s1175 = scalar_select %p1174, %s1173, 4
          %s1176 = smul.u32 64, %s1175
          %p1177 = scmp.ne.s32.totalorder 0, %s1176
          %s1178 = smul.addr %s1172, 4
          %s1179 = scalar_lea.vmem %s3, %s1178
          // Predicated region
          $region37: #{critic_forward.6} parent=35 // pred_check
            %p1180 = pneg %p1177
          $region38: #{critic_forward.6} parent=35 // pred_check_branch
            %1182 = sbr.rel (%p1180) target = $region40
          $region39: #{critic_forward.6} parent=35 // pred_region
            // Predicated region
            $region41: #{critic_forward.6} parent=39 // pred_check
              _
            $region42: #{critic_forward.6} parent=39 // pred_check_branch
              %1184 = sbr.rel target = $region44
            $region43: #{critic_forward.6} parent=39 // pred_region
              // Predicated region
              $region63: #{critic_forward.6} parent=43 // pred_check
                _
              $region64: #{critic_forward.6} parent=43 // pred_check_branch
                %1239 = sbr.rel (0) target = $region66
              $region65: #{critic_forward.6} parent=43 // pred_region
                %s1241 = sshrl.u32 %s1175, 2
                // While loop
                $region67: #{critic_forward.6} parent=65 // loop_pre_header
                  _
                $region68: #{critic_forward.6} parent=65 // loop_header
                  %s1243 = sphi 0, %s1245
                  %p1244 = scmp.ge.s32.totalorder %s1243, %s1241
                  %s1248 = sphi 0, %s1261
                  %s1249 = sphi %s1168, %s1264
                  %s1250 = sphi %s1179, %s1265
                $region69: #{critic_forward.6} parent=65 // loop_header_branch
                  %1247 = sbr.rel (%p1244) target = $region73
                $region70: #{critic_forward.6} parent=65 // loop_body
                  %v1251 = vld [vmem:[%s1249] sm:$0xf]
                  %1252 = vst [vmem:[%s1250] sm:$0xf] %v1251
                  %v1253 = vld [vmem:[%s1249 + $0x4] sm:$0xf]
                  %1254 = vst [vmem:[%s1250 + $0x4] sm:$0xf] %v1253
                  %v1255 = vld [vmem:[%s1249 + $0x8] sm:$0xf]
                  %1256 = vst [vmem:[%s1250 + $0x8] sm:$0xf] %v1255
                  %v1257 = vld [vmem:[%s1249 + $0xc] sm:$0xf]
                  %1258 = vst [vmem:[%s1250 + $0xc] sm:$0xf] %v1257
                  %s1259 = sadd.s32 1, %s1248
                  %p1260 = scmp.ge.s32.totalorder %s1259, %s1241
                  %s1261 = scalar_select %p1260, 0, %s1259
                  %s1262 = smul.u32 %s1261, 16
                  %s1263 = smul.u32 %s1261, 16
                  %s1264 = scalar_lea.vmem %s1168, %s1262 [#allocation2]
                  %s1265 = scalar_lea.vmem %s1179, %s1263
                $region71: #{critic_forward.6} parent=65 // loop_footer
                  %s1245 = sadd.s32 %s1243, 1
                $region72: #{critic_forward.6} parent=65 // loop_footer_branch
                  %1242 = sbr.rel target = $region68
                $region73: #{critic_forward.6} parent=65 // loop_exit
                  _
                %s1266 = sshrl.u32 %s1175, 2
                %s1267 = sand.u32 %s1175, 3
                %s1268 = smul.u32 %s1266, 4
                %s1269 = smul.u32 4, %s1268
                %s1270 = scalar_lea.vmem %s1168, %s1269 [#allocation2]
                %s1271 = smul.u32 4, %s1268
                %s1272 = scalar_lea.vmem %s1179, %s1271
                // While loop
                $region74: #{critic_forward.6} parent=65 // loop_pre_header
                  _
                $region75: #{critic_forward.6} parent=65 // loop_header
                  %s1274 = sphi 0, %s1276
                  %p1275 = scmp.ge.s32.totalorder %s1274, %s1267
                  %s1279 = sphi 0, %s1286
                  %s1280 = sphi %s1270, %s1289
                  %s1281 = sphi %s1272, %s1290
                $region76: #{critic_forward.6} parent=65 // loop_header_branch
                  %1278 = sbr.rel (%p1275) target = $region80
                $region77: #{critic_forward.6} parent=65 // loop_body
                  %v1282 = vld [vmem:[%s1280] sm:$0xf]
                  %1283 = vst [vmem:[%s1281] sm:$0xf] %v1282
                  %s1284 = sadd.s32 1, %s1279
                  %p1285 = scmp.ge.s32.totalorder %s1284, %s1267
                  %s1286 = scalar_select %p1285, 0, %s1284
                  %s1287 = smul.u32 %s1286, 4
                  %s1288 = smul.u32 %s1286, 4
                  %s1289 = scalar_lea.vmem %s1270, %s1287 [#allocation2]
                  %s1290 = scalar_lea.vmem %s1272, %s1288
                $region78: #{critic_forward.6} parent=65 // loop_footer
                  %s1276 = sadd.s32 %s1274, 1
                $region79: #{critic_forward.6} parent=65 // loop_footer_branch
                  %1273 = sbr.rel target = $region75
                $region80: #{critic_forward.6} parent=65 // loop_exit
                  _
              $region66: #{critic_forward.6} parent=43 // pred_fallthru
                _
            $region44: #{critic_forward.6} parent=39 // pred_fallthru
              _
            // Predicated region
            $region45: #{critic_forward.6} parent=39 // pred_check
              _
            $region46: #{critic_forward.6} parent=39 // pred_check_branch
              %1186 = sbr.rel (0) target = $region48
            $region47: #{critic_forward.6} parent=39 // pred_region
              %s1188 = sshrl.u32 %s1175, 2
              // While loop
              $region49: #{critic_forward.6} parent=47 // loop_pre_header
                _
              $region50: #{critic_forward.6} parent=47 // loop_header
                %s1190 = sphi 0, %s1192
                %p1191 = scmp.ge.s32.totalorder %s1190, %s1188
                %s1195 = sphi 0, %s1208
                %s1196 = sphi %s1168, %s1211
                %s1197 = sphi %s1179, %s1212
              $region51: #{critic_forward.6} parent=47 // loop_header_branch
                %1194 = sbr.rel (%p1191) target = $region55
              $region52: #{critic_forward.6} parent=47 // loop_body
                %v1198 = vld [vmem:[%s1196] sm:$0xf]
                %1199 = vst [vmem:[%s1197] sm:$0xf] %v1198
                %v1200 = vld [vmem:[%s1196 + $0x4] sm:$0xf]
                %1201 = vst [vmem:[%s1197 + $0x4] sm:$0xf] %v1200
                %v1202 = vld [vmem:[%s1196 + $0x8] sm:$0xf]
                %1203 = vst [vmem:[%s1197 + $0x8] sm:$0xf] %v1202
                %v1204 = vld [vmem:[%s1196 + $0xc] sm:$0xf]
                %1205 = vst [vmem:[%s1197 + $0xc] sm:$0xf] %v1204
                %s1206 = sadd.s32 1, %s1195
                %p1207 = scmp.ge.s32.totalorder %s1206, %s1188
                %s1208 = scalar_select %p1207, 0, %s1206
                %s1209 = smul.u32 %s1208, 16
                %s1210 = smul.u32 %s1208, 16
                %s1211 = scalar_lea.vmem %s1168, %s1209 [#allocation2]
                %s1212 = scalar_lea.vmem %s1179, %s1210
              $region53: #{critic_forward.6} parent=47 // loop_footer
                %s1192 = sadd.s32 %s1190, 1
              $region54: #{critic_forward.6} parent=47 // loop_footer_branch
                %1189 = sbr.rel target = $region50
              $region55: #{critic_forward.6} parent=47 // loop_exit
                _
              %s1213 = sshrl.u32 %s1175, 2
              %s1214 = sand.u32 %s1175, 3
              %s1215 = smul.u32 %s1213, 4
              %s1216 = smul.u32 4, %s1215
              %s1217 = scalar_lea.vmem %s1168, %s1216 [#allocation2]
              %s1218 = smul.u32 4, %s1215
              %s1219 = scalar_lea.vmem %s1179, %s1218
              // While loop
              $region56: #{critic_forward.6} parent=47 // loop_pre_header
                _
              $region57: #{critic_forward.6} parent=47 // loop_header
                %s1221 = sphi 0, %s1223
                %p1222 = scmp.ge.s32.totalorder %s1221, %s1214
                %s1226 = sphi 0, %s1233
                %s1227 = sphi %s1217, %s1236
                %s1228 = sphi %s1219, %s1237
              $region58: #{critic_forward.6} parent=47 // loop_header_branch
                %1225 = sbr.rel (%p1222) target = $region62
              $region59: #{critic_forward.6} parent=47 // loop_body
                %v1229 = vld [vmem:[%s1227] sm:$0xf]
                %1230 = vst [vmem:[%s1228] sm:$0xf] %v1229
                %s1231 = sadd.s32 1, %s1226
                %p1232 = scmp.ge.s32.totalorder %s1231, %s1214
                %s1233 = scalar_select %p1232, 0, %s1231
                %s1234 = smul.u32 %s1233, 4
                %s1235 = smul.u32 %s1233, 4
                %s1236 = scalar_lea.vmem %s1217, %s1234 [#allocation2]
                %s1237 = scalar_lea.vmem %s1219, %s1235
              $region60: #{critic_forward.6} parent=47 // loop_footer
                %s1223 = sadd.s32 %s1221, 1
              $region61: #{critic_forward.6} parent=47 // loop_footer_branch
                %1220 = sbr.rel target = $region57
              $region62: #{critic_forward.6} parent=47 // loop_exit
                _
            $region48: #{critic_forward.6} parent=39 // pred_fallthru
              _
          $region40: #{critic_forward.6} parent=35 // pred_fallthru
            _
          %1291 = vnop
        $region36: #{critic_forward.6} parent=31 // pred_fallthru
          _
      $region32: #{critic_forward.6} parent=5 // pred_fallthru
        _
      %p1292 = scmp.le.s32.totalorder 2, %s9
      // Predicated region
      $region81: #{critic_forward.6} parent=5 // pred_check
        %p1293 = pneg %p1292
      $region82: #{critic_forward.6} parent=5 // pred_check_branch
        %1295 = sbr.rel (%p1293) target = $region84
      $region83: #{critic_forward.6} parent=5 // pred_region
        %s1296 = ssub.s32 %s9, 2
        // Predicated region
        $region85: #{critic_forward.6} parent=83 // pred_check
          %p1297 = pneg %p106
        $region86: #{critic_forward.6} parent=83 // pred_check_branch
          %1299 = sbr.rel (%p1297) target = $region88
        $region87: #{critic_forward.6} parent=83 // pred_region
          %s1300 = sand.u32 %s91, 1
          %s1301 = sand.u32 %s91, 1
          %s1302 = smul.addr %s1301, 16
          %s1303 = scalar_lea.vmem [#allocation2], %s1302
        $region88: #{critic_forward.6} parent=83 // pred_fallthru
          _
      $region84: #{critic_forward.6} parent=5 // pred_fallthru
        _
    $region6: #{critic_forward.6} parent=1 // loop_footer
      %s13 = sadd.s32 1, %s9
    $region7: #{critic_forward.6} parent=1 // loop_footer_branch
      %8 = sbr.rel target = $region3
    $region8: #{critic_forward.6} parent=1 // loop_exit
      _

// kernel: critic_forward.7
$region0: #{critic_forward.7}
  #allocation0 [shape = 'u32[]', space=smem, size = 0x4, offset = 0x4, fixed_abs, tag = 'smem constant byte address 0x4 - core index']
  #allocation1 [shape = 'u32[144,128]{1,0:T(1,128)}', space=vmem, size = 0x12000, scoped, tag = 'internal scratch']
  %s0 = inlined_call_operand.vmem [shape: bf16[8,3136], index: 0, kind: input, shape index: {}]
  %s1 = inlined_call_operand.vmem [shape: bf16[3136,512], index: 1, kind: input, shape index: {}]
  %s2 = inlined_call_operand.vmem [shape: f32[1,512], index: 2, kind: input, shape index: {}]
  %s3 = inlined_call_operand.vmem [shape: bf16[512,128], index: 3, kind: input, shape index: {}]
  %s4 = inlined_call_operand.vmem [shape: f32[1,128], index: 4, kind: input, shape index: {}]
  %s5 = inlined_call_operand.vmem [shape: f32[8,512], index: 5, kind: output, shape index: {0}]
  %s6 = inlined_call_operand.vmem [shape: f32[8,128], index: 6, kind: output, shape index: {1}]
  %7 = xla_tuple %s5, %s6
  %s8 = sld [smem:[#allocation0]]
  $region38: #{critic_forward.7} parent=0
    _
  %s10 = ssub.s32 1, %s8
  %s11 = scalar_select 0, %s10, %s8
  // Predicated region
  $region2: #{critic_forward.7} parent=0 // pred_check
    _
  $region3: #{critic_forward.7} parent=0 // pred_check_branch
    %13 = sbr.rel (0) target = $region5
  $region4: #{critic_forward.7} parent=0 // pred_region
    _
  $region5: #{critic_forward.7} parent=0 // pred_fallthru
    _
  // Predicated region
  $region6: #{critic_forward.7} parent=0 // pred_check
    _
  $region7: #{critic_forward.7} parent=0 // pred_check_branch
    %15 = sbr.rel (0) target = $region9
  $region8: #{critic_forward.7} parent=0 // pred_region
    _
  $region9: #{critic_forward.7} parent=0 // pred_fallthru
    _
  // Predicated region
  $region10: #{critic_forward.7} parent=0 // pred_check
    _
  $region11: #{critic_forward.7} parent=0 // pred_check_branch
    %17 = sbr.rel (0) target = $region13
  $region12: #{critic_forward.7} parent=0 // pred_region
    _
  $region13: #{critic_forward.7} parent=0 // pred_fallthru
    _
  // Predicated region
  $region14: #{critic_forward.7} parent=0 // pred_check
    _
  $region15: #{critic_forward.7} parent=0 // pred_check_branch
    %19 = sbr.rel (0) target = $region17
  $region16: #{critic_forward.7} parent=0 // pred_region
    _
  $region17: #{critic_forward.7} parent=0 // pred_fallthru
    _
  // Predicated region
  $region18: #{critic_forward.7} parent=0 // pred_check
    _
  $region19: #{critic_forward.7} parent=0 // pred_check_branch
    %21 = sbr.rel (0) target = $region21
  $region20: #{critic_forward.7} parent=0 // pred_region
    _
  $region21: #{critic_forward.7} parent=0 // pred_fallthru
    _
  %v23 = vld [vmem:[%s0] sm:$0xff]
  %v24 = vld [vmem:[%s0 + $0x8] sm:$0xff]
  %v25 = vld [vmem:[%s0 + $0x10] sm:$0xff]
  %v26 = vld [vmem:[%s0 + $0x18] sm:$0xff]
  %v27 = vld [vmem:[%s0 + $0x20] sm:$0xff]
  %v28 = vld [vmem:[%s0 + $0x28] sm:$0xff]
  %v29 = vld [vmem:[%s0 + $0x30] sm:$0xff]
  %v30 = vld [vmem:[%s0 + $0x38] sm:$0xff]
  %v31 = vld [vmem:[%s0 + $0x40] sm:$0xff]
  %v32 = vld [vmem:[%s0 + $0x48] sm:$0xff]
  %v33 = vld [vmem:[%s0 + $0x50] sm:$0xff]
  %v34 = vld [vmem:[%s0 + $0x58] sm:$0xff]
  %v35 = vld [vmem:[%s0 + $0x60] sm:$0xf]
  %v36 = vld [vmem:[%s1] sm:$0xff]
  %v37 = vld [vmem:[%s1 + $0x8] sm:$0xff]
  %v38 = vld [vmem:[%s1 + $0x10] sm:$0xff]
  %v39 = vld [vmem:[%s1 + $0x18] sm:$0xff]
  %v40 = vld [vmem:[%s1 + $0x20] sm:$0xff]
  %v41 = vld [vmem:[%s1 + $0x28] sm:$0xff]
  %v42 = vld [vmem:[%s1 + $0x30] sm:$0xff]
  %v43 = vld [vmem:[%s1 + $0x38] sm:$0xff]
  %v44 = vld [vmem:[%s1 + $0x40] sm:$0xff]
  %v45 = vld [vmem:[%s1 + $0x48] sm:$0xff]
  %v46 = vld [vmem:[%s1 + $0x50] sm:$0xff]
  %v47 = vld [vmem:[%s1 + $0x58] sm:$0xff]
  %v48 = vld [vmem:[%s1 + $0x60] sm:$0xff]
  %v49 = vld [vmem:[%s1 + $0x68] sm:$0xff]
  %v50 = vld [vmem:[%s1 + $0x70] sm:$0xff]
  %v51 = vld [vmem:[%s1 + $0x78] sm:$0xff]
  %v52 = vld [vmem:[%s1 + $0x80] sm:$0xff]
  %v53 = vld [vmem:[%s1 + $0x88] sm:$0xff]
  %v54 = vld [vmem:[%s1 + $0x90] sm:$0xff]
  %v55 = vld [vmem:[%s1 + $0x98] sm:$0xff]
  %v56 = vld [vmem:[%s1 + $0xa0] sm:$0xff]
  %v57 = vld [vmem:[%s1 + $0xa8] sm:$0xff]
  %v58 = vld [vmem:[%s1 + $0xb0] sm:$0xff]
  %v59 = vld [vmem:[%s1 + $0xb8] sm:$0xff]
  %v60 = vld [vmem:[%s1 + $0xc0] sm:$0xff]
  %v61 = vld [vmem:[%s1 + $0xc8] sm:$0xff]
  %v62 = vld [vmem:[%s1 + $0xd0] sm:$0xff]
  %v63 = vld [vmem:[%s1 + $0xd8] sm:$0xff]
  %v64 = vld [vmem:[%s1 + $0xe0] sm:$0xff]
  %v65 = vld [vmem:[%s1 + $0xe8] sm:$0xff]
  %v66 = vld [vmem:[%s1 + $0xf0] sm:$0xff]
  %v67 = vld [vmem:[%s1 + $0xf8] sm:$0xff]
  %v68 = vld [vmem:[%s1 + $0x100] sm:$0xff]
  %v69 = vld [vmem:[%s1 + $0x108] sm:$0xff]
  %v70 = vld [vmem:[%s1 + $0x110] sm:$0xff]
  %v71 = vld [vmem:[%s1 + $0x118] sm:$0xff]
  %v72 = vld [vmem:[%s1 + $0x120] sm:$0xff]
  %v73 = vld [vmem:[%s1 + $0x128] sm:$0xff]
  %v74 = vld [vmem:[%s1 + $0x130] sm:$0xff]
  %v75 = vld [vmem:[%s1 + $0x138] sm:$0xff]
  %v76 = vld [vmem:[%s1 + $0x140] sm:$0xff]
  %v77 = vld [vmem:[%s1 + $0x148] sm:$0xff]
  %v78 = vld [vmem:[%s1 + $0x150] sm:$0xff]
  %v79 = vld [vmem:[%s1 + $0x158] sm:$0xff]
  %v80 = vld [vmem:[%s1 + $0x160] sm:$0xff]
  %v81 = vld [vmem:[%s1 + $0x168] sm:$0xff]
  %v82 = vld [vmem:[%s1 + $0x170] sm:$0xff]
  %v83 = vld [vmem:[%s1 + $0x178] sm:$0xff]
  %v84 = vld [vmem:[%s1 + $0x180] sm:$0xff]
  %v85 = vld [vmem:[%s1 + $0x188] sm:$0xff]
  %v86 = vld [vmem:[%s1 + $0x190] sm:$0xff]
  %v87 = vld [vmem:[%s1 + $0x198] sm:$0xff]
  %v88 = vld [vmem:[%s1 + $0x1a0] sm:$0xff]
  %v89 = vld [vmem:[%s1 + $0x1a8] sm:$0xff]
  %v90 = vld [vmem:[%s1 + $0x1b0] sm:$0xff]
  %v91 = vld [vmem:[%s1 + $0x1b8] sm:$0xff]
  %v92 = vld [vmem:[%s1 + $0x1c0] sm:$0xff]
  %v93 = vld [vmem:[%s1 + $0x1c8] sm:$0xff]
  %v94 = vld [vmem:[%s1 + $0x1d0] sm:$0xff]
  %v95 = vld [vmem:[%s1 + $0x1d8] sm:$0xff]
  %v96 = vld [vmem:[%s1 + $0x1e0] sm:$0xff]
  %v97 = vld [vmem:[%s1 + $0x1e8] sm:$0xff]
  %v98 = vld [vmem:[%s1 + $0x1f0] sm:$0xff]
  %v99 = vld [vmem:[%s1 + $0x1f8] sm:$0xff]
  %v100 = vld [vmem:[%s1 + $0x200] sm:$0xff]
  %v101 = vld [vmem:[%s1 + $0x208] sm:$0xff]
  %v102 = vld [vmem:[%s1 + $0x210] sm:$0xff]
  %v103 = vld [vmem:[%s1 + $0x218] sm:$0xff]
  %v104 = vld [vmem:[%s1 + $0x220] sm:$0xff]
  %v105 = vld [vmem:[%s1 + $0x228] sm:$0xff]
  %v106 = vld [vmem:[%s1 + $0x230] sm:$0xff]
  %v107 = vld [vmem:[%s1 + $0x238] sm:$0xff]
  %v108 = vld [vmem:[%s1 + $0x240] sm:$0xff]
  %v109 = vld [vmem:[%s1 + $0x248] sm:$0xff]
  %v110 = vld [vmem:[%s1 + $0x250] sm:$0xff]
  %v111 = vld [vmem:[%s1 + $0x258] sm:$0xff]
  %v112 = vld [vmem:[%s1 + $0x260] sm:$0xff]
  %v113 = vld [vmem:[%s1 + $0x268] sm:$0xff]
  %v114 = vld [vmem:[%s1 + $0x270] sm:$0xff]
  %v115 = vld [vmem:[%s1 + $0x278] sm:$0xff]
  %v116 = vld [vmem:[%s1 + $0x280] sm:$0xff]
  %v117 = vld [vmem:[%s1 + $0x288] sm:$0xff]
  %v118 = vld [vmem:[%s1 + $0x290] sm:$0xff]
  %v119 = vld [vmem:[%s1 + $0x298] sm:$0xff]
  %v120 = vld [vmem:[%s1 + $0x2a0] sm:$0xff]
  %v121 = vld [vmem:[%s1 + $0x2a8] sm:$0xff]
  %v122 = vld [vmem:[%s1 + $0x2b0] sm:$0xff]
  %v123 = vld [vmem:[%s1 + $0x2b8] sm:$0xff]
  %v124 = vld [vmem:[%s1 + $0x2c0] sm:$0xff]
  %v125 = vld [vmem:[%s1 + $0x2c8] sm:$0xff]
  %v126 = vld [vmem:[%s1 + $0x2d0] sm:$0xff]
  %v127 = vld [vmem:[%s1 + $0x2d8] sm:$0xff]
  %v128 = vld [vmem:[%s1 + $0x2e0] sm:$0xff]
  %v129 = vld [vmem:[%s1 + $0x2e8] sm:$0xff]
  %v130 = vld [vmem:[%s1 + $0x2f0] sm:$0xff]
  %v131 = vld [vmem:[%s1 + $0x2f8] sm:$0xff]
  %v132 = vld [vmem:[%s1 + $0x300] sm:$0xff]
  %v133 = vld [vmem:[%s1 + $0x308] sm:$0xff]
  %v134 = vld [vmem:[%s1 + $0x310] sm:$0xff]
  %v135 = vld [vmem:[%s1 + $0x318] sm:$0xff]
  %v136 = vld [vmem:[%s1 + $0x320] sm:$0xff]
  %v137 = vld [vmem:[%s1 + $0x328] sm:$0xff]
  %v138 = vld [vmem:[%s1 + $0x330] sm:$0xff]
  %v139 = vld [vmem:[%s1 + $0x338] sm:$0xff]
  %v140 = vld [vmem:[%s1 + $0x340] sm:$0xff]
  %v141 = vld [vmem:[%s1 + $0x348] sm:$0xff]
  %v142 = vld [vmem:[%s1 + $0x350] sm:$0xff]
  %v143 = vld [vmem:[%s1 + $0x358] sm:$0xff]
  %v144 = vld [vmem:[%s1 + $0x360] sm:$0xff]
  %v145 = vld [vmem:[%s1 + $0x368] sm:$0xff]
  %v146 = vld [vmem:[%s1 + $0x370] sm:$0xff]
  %v147 = vld [vmem:[%s1 + $0x378] sm:$0xff]
  %v148 = vld [vmem:[%s1 + $0x380] sm:$0xff]
  %v149 = vld [vmem:[%s1 + $0x388] sm:$0xff]
  %v150 = vld [vmem:[%s1 + $0x390] sm:$0xff]
  %v151 = vld [vmem:[%s1 + $0x398] sm:$0xff]
  %v152 = vld [vmem:[%s1 + $0x3a0] sm:$0xff]
  %v153 = vld [vmem:[%s1 + $0x3a8] sm:$0xff]
  %v154 = vld [vmem:[%s1 + $0x3b0] sm:$0xff]
  %v155 = vld [vmem:[%s1 + $0x3b8] sm:$0xff]
  %v156 = vld [vmem:[%s1 + $0x3c0] sm:$0xff]
  %v157 = vld [vmem:[%s1 + $0x3c8] sm:$0xff]
  %v158 = vld [vmem:[%s1 + $0x3d0] sm:$0xff]
  %v159 = vld [vmem:[%s1 + $0x3d8] sm:$0xff]
  %v160 = vld [vmem:[%s1 + $0x3e0] sm:$0xff]
  %v161 = vld [vmem:[%s1 + $0x3e8] sm:$0xff]
  %v162 = vld [vmem:[%s1 + $0x3f0] sm:$0xff]
  %v163 = vld [vmem:[%s1 + $0x3f8] sm:$0xff]
  %v164 = vld [vmem:[%s1 + $0x400] sm:$0xff]
  %v165 = vld [vmem:[%s1 + $0x408] sm:$0xff]
  %v166 = vld [vmem:[%s1 + $0x410] sm:$0xff]
  %v167 = vld [vmem:[%s1 + $0x418] sm:$0xff]
  %v168 = vld [vmem:[%s1 + $0x420] sm:$0xff]
  %v169 = vld [vmem:[%s1 + $0x428] sm:$0xff]
  %v170 = vld [vmem:[%s1 + $0x430] sm:$0xff]
  %v171 = vld [vmem:[%s1 + $0x438] sm:$0xff]
  %v172 = vld [vmem:[%s1 + $0x440] sm:$0xff]
  %v173 = vld [vmem:[%s1 + $0x448] sm:$0xff]
  %v174 = vld [vmem:[%s1 + $0x450] sm:$0xff]
  %v175 = vld [vmem:[%s1 + $0x458] sm:$0xff]
  %v176 = vld [vmem:[%s1 + $0x460] sm:$0xff]
  %v177 = vld [vmem:[%s1 + $0x468] sm:$0xff]
  %v178 = vld [vmem:[%s1 + $0x470] sm:$0xff]
  %v179 = vld [vmem:[%s1 + $0x478] sm:$0xff]
  %v180 = vld [vmem:[%s1 + $0x480] sm:$0xff]
  %v181 = vld [vmem:[%s1 + $0x488] sm:$0xff]
  %v182 = vld [vmem:[%s1 + $0x490] sm:$0xff]
  %v183 = vld [vmem:[%s1 + $0x498] sm:$0xff]
  %v184 = vld [vmem:[%s1 + $0x4a0] sm:$0xff]
  %v185 = vld [vmem:[%s1 + $0x4a8] sm:$0xff]
  %v186 = vld [vmem:[%s1 + $0x4b0] sm:$0xff]
  %v187 = vld [vmem:[%s1 + $0x4b8] sm:$0xff]
  %v188 = vld [vmem:[%s1 + $0x4c0] sm:$0xff]
  %v189 = vld [vmem:[%s1 + $0x4c8] sm:$0xff]
  %v190 = vld [vmem:[%s1 + $0x4d0] sm:$0xff]
  %v191 = vld [vmem:[%s1 + $0x4d8] sm:$0xff]
  %v192 = vld [vmem:[%s1 + $0x4e0] sm:$0xff]
  %v193 = vld [vmem:[%s1 + $0x4e8] sm:$0xff]
  %v194 = vld [vmem:[%s1 + $0x4f0] sm:$0xff]
  %v195 = vld [vmem:[%s1 + $0x4f8] sm:$0xff]
  %v196 = vld [vmem:[%s1 + $0x500] sm:$0xff]
  %v197 = vld [vmem:[%s1 + $0x508] sm:$0xff]
  %v198 = vld [vmem:[%s1 + $0x510] sm:$0xff]
  %v199 = vld [vmem:[%s1 + $0x518] sm:$0xff]
  %v200 = vld [vmem:[%s1 + $0x520] sm:$0xff]
  %v201 = vld [vmem:[%s1 + $0x528] sm:$0xff]
  %v202 = vld [vmem:[%s1 + $0x530] sm:$0xff]
  %v203 = vld [vmem:[%s1 + $0x538] sm:$0xff]
  %v204 = vld [vmem:[%s1 + $0x540] sm:$0xff]
  %v205 = vld [vmem:[%s1 + $0x548] sm:$0xff]
  %v206 = vld [vmem:[%s1 + $0x550] sm:$0xff]
  %v207 = vld [vmem:[%s1 + $0x558] sm:$0xff]
  %v208 = vld [vmem:[%s1 + $0x560] sm:$0xff]
  %v209 = vld [vmem:[%s1 + $0x568] sm:$0xff]
  %v210 = vld [vmem:[%s1 + $0x570] sm:$0xff]
  %v211 = vld [vmem:[%s1 + $0x578] sm:$0xff]
  %v212 = vld [vmem:[%s1 + $0x580] sm:$0xff]
  %v213 = vld [vmem:[%s1 + $0x588] sm:$0xff]
  %v214 = vld [vmem:[%s1 + $0x590] sm:$0xff]
  %v215 = vld [vmem:[%s1 + $0x598] sm:$0xff]
  %v216 = vld [vmem:[%s1 + $0x5a0] sm:$0xff]
  %v217 = vld [vmem:[%s1 + $0x5a8] sm:$0xff]
  %v218 = vld [vmem:[%s1 + $0x5b0] sm:$0xff]
  %v219 = vld [vmem:[%s1 + $0x5b8] sm:$0xff]
  %v220 = vld [vmem:[%s1 + $0x5c0] sm:$0xff]
  %v221 = vld [vmem:[%s1 + $0x5c8] sm:$0xff]
  %v222 = vld [vmem:[%s1 + $0x5d0] sm:$0xff]
  %v223 = vld [vmem:[%s1 + $0x5d8] sm:$0xff]
  %v224 = vld [vmem:[%s1 + $0x5e0] sm:$0xff]
  %v225 = vld [vmem:[%s1 + $0x5e8] sm:$0xff]
  %v226 = vld [vmem:[%s1 + $0x5f0] sm:$0xff]
  %v227 = vld [vmem:[%s1 + $0x5f8] sm:$0xff]
  %v228 = vld [vmem:[%s1 + $0x600] sm:$0xff]
  %v229 = vld [vmem:[%s1 + $0x608] sm:$0xff]
  %v230 = vld [vmem:[%s1 + $0x610] sm:$0xff]
  %v231 = vld [vmem:[%s1 + $0x618] sm:$0xff]
  %v232 = vld [vmem:[%s1 + $0x620] sm:$0xff]
  %v233 = vld [vmem:[%s1 + $0x628] sm:$0xff]
  %v234 = vld [vmem:[%s1 + $0x630] sm:$0xff]
  %v235 = vld [vmem:[%s1 + $0x638] sm:$0xff]
  %v236 = vld [vmem:[%s1 + $0x640] sm:$0xff]
  %v237 = vld [vmem:[%s1 + $0x648] sm:$0xff]
  %v238 = vld [vmem:[%s1 + $0x650] sm:$0xff]
  %v239 = vld [vmem:[%s1 + $0x658] sm:$0xff]
  %v240 = vld [vmem:[%s1 + $0x660] sm:$0xff]
  %v241 = vld [vmem:[%s1 + $0x668] sm:$0xff]
  %v242 = vld [vmem:[%s1 + $0x670] sm:$0xff]
  %v243 = vld [vmem:[%s1 + $0x678] sm:$0xff]
  %v244 = vld [vmem:[%s1 + $0x680] sm:$0xff]
  %v245 = vld [vmem:[%s1 + $0x688] sm:$0xff]
  %v246 = vld [vmem:[%s1 + $0x690] sm:$0xff]
  %v247 = vld [vmem:[%s1 + $0x698] sm:$0xff]
  %v248 = vld [vmem:[%s1 + $0x6a0] sm:$0xff]
  %v249 = vld [vmem:[%s1 + $0x6a8] sm:$0xff]
  %v250 = vld [vmem:[%s1 + $0x6b0] sm:$0xff]
  %v251 = vld [vmem:[%s1 + $0x6b8] sm:$0xff]
  %v252 = vld [vmem:[%s1 + $0x6c0] sm:$0xff]
  %v253 = vld [vmem:[%s1 + $0x6c8] sm:$0xff]
  %v254 = vld [vmem:[%s1 + $0x6d0] sm:$0xff]
  %v255 = vld [vmem:[%s1 + $0x6d8] sm:$0xff]
  %v256 = vld [vmem:[%s1 + $0x6e0] sm:$0xff]
  %v257 = vld [vmem:[%s1 + $0x6e8] sm:$0xff]
  %v258 = vld [vmem:[%s1 + $0x6f0] sm:$0xff]
  %v259 = vld [vmem:[%s1 + $0x6f8] sm:$0xff]
  %v260 = vld [vmem:[%s1 + $0x700] sm:$0xff]
  %v261 = vld [vmem:[%s1 + $0x708] sm:$0xff]
  %v262 = vld [vmem:[%s1 + $0x710] sm:$0xff]
  %v263 = vld [vmem:[%s1 + $0x718] sm:$0xff]
  %v264 = vld [vmem:[%s1 + $0x720] sm:$0xff]
  %v265 = vld [vmem:[%s1 + $0x728] sm:$0xff]
  %v266 = vld [vmem:[%s1 + $0x730] sm:$0xff]
  %v267 = vld [vmem:[%s1 + $0x738] sm:$0xff]
  %v268 = vld [vmem:[%s1 + $0x740] sm:$0xff]
  %v269 = vld [vmem:[%s1 + $0x748] sm:$0xff]
  %v270 = vld [vmem:[%s1 + $0x750] sm:$0xff]
  %v271 = vld [vmem:[%s1 + $0x758] sm:$0xff]
  %v272 = vld [vmem:[%s1 + $0x760] sm:$0xff]
  %v273 = vld [vmem:[%s1 + $0x768] sm:$0xff]
  %v274 = vld [vmem:[%s1 + $0x770] sm:$0xff]
  %v275 = vld [vmem:[%s1 + $0x778] sm:$0xff]
  %v276 = vld [vmem:[%s1 + $0x780] sm:$0xff]
  %v277 = vld [vmem:[%s1 + $0x788] sm:$0xff]
  %v278 = vld [vmem:[%s1 + $0x790] sm:$0xff]
  %v279 = vld [vmem:[%s1 + $0x798] sm:$0xff]
  %v280 = vld [vmem:[%s1 + $0x7a0] sm:$0xff]
  %v281 = vld [vmem:[%s1 + $0x7a8] sm:$0xff]
  %v282 = vld [vmem:[%s1 + $0x7b0] sm:$0xff]
  %v283 = vld [vmem:[%s1 + $0x7b8] sm:$0xff]
  %v284 = vld [vmem:[%s1 + $0x7c0] sm:$0xff]
  %v285 = vld [vmem:[%s1 + $0x7c8] sm:$0xff]
  %v286 = vld [vmem:[%s1 + $0x7d0] sm:$0xff]
  %v287 = vld [vmem:[%s1 + $0x7d8] sm:$0xff]
  %v288 = vld [vmem:[%s1 + $0x7e0] sm:$0xff]
  %v289 = vld [vmem:[%s1 + $0x7e8] sm:$0xff]
  %v290 = vld [vmem:[%s1 + $0x7f0] sm:$0xff]
  %v291 = vld [vmem:[%s1 + $0x7f8] sm:$0xff]
  %v292 = vld [vmem:[%s1 + $0x800] sm:$0xff]
  %v293 = vld [vmem:[%s1 + $0x808] sm:$0xff]
  %v294 = vld [vmem:[%s1 + $0x810] sm:$0xff]
  %v295 = vld [vmem:[%s1 + $0x818] sm:$0xff]
  %v296 = vld [vmem:[%s1 + $0x820] sm:$0xff]
  %v297 = vld [vmem:[%s1 + $0x828] sm:$0xff]
  %v298 = vld [vmem:[%s1 + $0x830] sm:$0xff]
  %v299 = vld [vmem:[%s1 + $0x838] sm:$0xff]
  %v300 = vld [vmem:[%s1 + $0x840] sm:$0xff]
  %v301 = vld [vmem:[%s1 + $0x848] sm:$0xff]
  %v302 = vld [vmem:[%s1 + $0x850] sm:$0xff]
  %v303 = vld [vmem:[%s1 + $0x858] sm:$0xff]
  %v304 = vld [vmem:[%s1 + $0x860] sm:$0xff]
  %v305 = vld [vmem:[%s1 + $0x868] sm:$0xff]
  %v306 = vld [vmem:[%s1 + $0x870] sm:$0xff]
  %v307 = vld [vmem:[%s1 + $0x878] sm:$0xff]
  %v308 = vld [vmem:[%s1 + $0x880] sm:$0xff]
  %v309 = vld [vmem:[%s1 + $0x888] sm:$0xff]
  %v310 = vld [vmem:[%s1 + $0x890] sm:$0xff]
  %v311 = vld [vmem:[%s1 + $0x898] sm:$0xff]
  %v312 = vld [vmem:[%s1 + $0x8a0] sm:$0xff]
  %v313 = vld [vmem:[%s1 + $0x8a8] sm:$0xff]
  %v314 = vld [vmem:[%s1 + $0x8b0] sm:$0xff]
  %v315 = vld [vmem:[%s1 + $0x8b8] sm:$0xff]
  %v316 = vld [vmem:[%s1 + $0x8c0] sm:$0xff]
  %v317 = vld [vmem:[%s1 + $0x8c8] sm:$0xff]
  %v318 = vld [vmem:[%s1 + $0x8d0] sm:$0xff]
  %v319 = vld [vmem:[%s1 + $0x8d8] sm:$0xff]
  %v320 = vld [vmem:[%s1 + $0x8e0] sm:$0xff]
  %v321 = vld [vmem:[%s1 + $0x8e8] sm:$0xff]
  %v322 = vld [vmem:[%s1 + $0x8f0] sm:$0xff]
  %v323 = vld [vmem:[%s1 + $0x8f8] sm:$0xff]
  %v324 = vld [vmem:[%s1 + $0x900] sm:$0xff]
  %v325 = vld [vmem:[%s1 + $0x908] sm:$0xff]
  %v326 = vld [vmem:[%s1 + $0x910] sm:$0xff]
  %v327 = vld [vmem:[%s1 + $0x918] sm:$0xff]
  %v328 = vld [vmem:[%s1 + $0x920] sm:$0xff]
  %v329 = vld [vmem:[%s1 + $0x928] sm:$0xff]
  %v330 = vld [vmem:[%s1 + $0x930] sm:$0xff]
  %v331 = vld [vmem:[%s1 + $0x938] sm:$0xff]
  %v332 = vld [vmem:[%s1 + $0x940] sm:$0xff]
  %v333 = vld [vmem:[%s1 + $0x948] sm:$0xff]
  %v334 = vld [vmem:[%s1 + $0x950] sm:$0xff]
  %v335 = vld [vmem:[%s1 + $0x958] sm:$0xff]
  %v336 = vld [vmem:[%s1 + $0x960] sm:$0xff]
  %v337 = vld [vmem:[%s1 + $0x968] sm:$0xff]
  %v338 = vld [vmem:[%s1 + $0x970] sm:$0xff]
  %v339 = vld [vmem:[%s1 + $0x978] sm:$0xff]
  %v340 = vld [vmem:[%s1 + $0x980] sm:$0xff]
  %v341 = vld [vmem:[%s1 + $0x988] sm:$0xff]
  %v342 = vld [vmem:[%s1 + $0x990] sm:$0xff]
  %v343 = vld [vmem:[%s1 + $0x998] sm:$0xff]
  %v344 = vld [vmem:[%s1 + $0x9a0] sm:$0xff]
  %v345 = vld [vmem:[%s1 + $0x9a8] sm:$0xff]
  %v346 = vld [vmem:[%s1 + $0x9b0] sm:$0xff]
  %v347 = vld [vmem:[%s1 + $0x9b8] sm:$0xff]
  %v348 = vld [vmem:[%s1 + $0x9c0] sm:$0xff]
  %v349 = vld [vmem:[%s1 + $0x9c8] sm:$0xff]
  %v350 = vld [vmem:[%s1 + $0x9d0] sm:$0xff]
  %v351 = vld [vmem:[%s1 + $0x9d8] sm:$0xff]
  %v352 = vld [vmem:[%s1 + $0x9e0] sm:$0xff]
  %v353 = vld [vmem:[%s1 + $0x9e8] sm:$0xff]
  %v354 = vld [vmem:[%s1 + $0x9f0] sm:$0xff]
  %v355 = vld [vmem:[%s1 + $0x9f8] sm:$0xff]
  %v356 = vld [vmem:[%s1 + $0xa00] sm:$0xff]
  %v357 = vld [vmem:[%s1 + $0xa08] sm:$0xff]
  %v358 = vld [vmem:[%s1 + $0xa10] sm:$0xff]
  %v359 = vld [vmem:[%s1 + $0xa18] sm:$0xff]
  %v360 = vld [vmem:[%s1 + $0xa20] sm:$0xff]
  %v361 = vld [vmem:[%s1 + $0xa28] sm:$0xff]
  %v362 = vld [vmem:[%s1 + $0xa30] sm:$0xff]
  %v363 = vld [vmem:[%s1 + $0xa38] sm:$0xff]
  %v364 = vld [vmem:[%s1 + $0xa40] sm:$0xff]
  %v365 = vld [vmem:[%s1 + $0xa48] sm:$0xff]
  %v366 = vld [vmem:[%s1 + $0xa50] sm:$0xff]
  %v367 = vld [vmem:[%s1 + $0xa58] sm:$0xff]
  %v368 = vld [vmem:[%s1 + $0xa60] sm:$0xff]
  %v369 = vld [vmem:[%s1 + $0xa68] sm:$0xff]
  %v370 = vld [vmem:[%s1 + $0xa70] sm:$0xff]
  %v371 = vld [vmem:[%s1 + $0xa78] sm:$0xff]
  %v372 = vld [vmem:[%s1 + $0xa80] sm:$0xff]
  %v373 = vld [vmem:[%s1 + $0xa88] sm:$0xff]
  %v374 = vld [vmem:[%s1 + $0xa90] sm:$0xff]
  %v375 = vld [vmem:[%s1 + $0xa98] sm:$0xff]
  %v376 = vld [vmem:[%s1 + $0xaa0] sm:$0xff]
  %v377 = vld [vmem:[%s1 + $0xaa8] sm:$0xff]
  %v378 = vld [vmem:[%s1 + $0xab0] sm:$0xff]
  %v379 = vld [vmem:[%s1 + $0xab8] sm:$0xff]
  %v380 = vld [vmem:[%s1 + $0xac0] sm:$0xff]
  %v381 = vld [vmem:[%s1 + $0xac8] sm:$0xff]
  %v382 = vld [vmem:[%s1 + $0xad0] sm:$0xff]
  %v383 = vld [vmem:[%s1 + $0xad8] sm:$0xff]
  %v384 = vld [vmem:[%s1 + $0xae0] sm:$0xff]
  %v385 = vld [vmem:[%s1 + $0xae8] sm:$0xff]
  %v386 = vld [vmem:[%s1 + $0xaf0] sm:$0xff]
  %v387 = vld [vmem:[%s1 + $0xaf8] sm:$0xff]
  %v388 = vld [vmem:[%s1 + $0xb00] sm:$0xff]
  %v389 = vld [vmem:[%s1 + $0xb08] sm:$0xff]
  %v390 = vld [vmem:[%s1 + $0xb10] sm:$0xff]
  %v391 = vld [vmem:[%s1 + $0xb18] sm:$0xff]
  %v392 = vld [vmem:[%s1 + $0xb20] sm:$0xff]
  %v393 = vld [vmem:[%s1 + $0xb28] sm:$0xff]
  %v394 = vld [vmem:[%s1 + $0xb30] sm:$0xff]
  %v395 = vld [vmem:[%s1 + $0xb38] sm:$0xff]
  %v396 = vld [vmem:[%s1 + $0xb40] sm:$0xff]
  %v397 = vld [vmem:[%s1 + $0xb48] sm:$0xff]
  %v398 = vld [vmem:[%s1 + $0xb50] sm:$0xff]
  %v399 = vld [vmem:[%s1 + $0xb58] sm:$0xff]
  %v400 = vld [vmem:[%s1 + $0xb60] sm:$0xff]
  %v401 = vld [vmem:[%s1 + $0xb68] sm:$0xff]
  %v402 = vld [vmem:[%s1 + $0xb70] sm:$0xff]
  %v403 = vld [vmem:[%s1 + $0xb78] sm:$0xff]
  %v404 = vld [vmem:[%s1 + $0xb80] sm:$0xff]
  %v405 = vld [vmem:[%s1 + $0xb88] sm:$0xff]
  %v406 = vld [vmem:[%s1 + $0xb90] sm:$0xff]
  %v407 = vld [vmem:[%s1 + $0xb98] sm:$0xff]
  %v408 = vld [vmem:[%s1 + $0xba0] sm:$0xff]
  %v409 = vld [vmem:[%s1 + $0xba8] sm:$0xff]
  %v410 = vld [vmem:[%s1 + $0xbb0] sm:$0xff]
  %v411 = vld [vmem:[%s1 + $0xbb8] sm:$0xff]
  %v412 = vld [vmem:[%s1 + $0xbc0] sm:$0xff]
  %v413 = vld [vmem:[%s1 + $0xbc8] sm:$0xff]
  %v414 = vld [vmem:[%s1 + $0xbd0] sm:$0xff]
  %v415 = vld [vmem:[%s1 + $0xbd8] sm:$0xff]
  %v416 = vld [vmem:[%s1 + $0xbe0] sm:$0xff]
  %v417 = vld [vmem:[%s1 + $0xbe8] sm:$0xff]
  %v418 = vld [vmem:[%s1 + $0xbf0] sm:$0xff]
  %v419 = vld [vmem:[%s1 + $0xbf8] sm:$0xff]
  %v420 = vld [vmem:[%s1 + $0xc00] sm:$0xff]
  %v421 = vld [vmem:[%s1 + $0xc08] sm:$0xff]
  %v422 = vld [vmem:[%s1 + $0xc10] sm:$0xff]
  %v423 = vld [vmem:[%s1 + $0xc18] sm:$0xff]
  %v424 = vld [vmem:[%s1 + $0xc20] sm:$0xff]
  %v425 = vld [vmem:[%s1 + $0xc28] sm:$0xff]
  %v426 = vld [vmem:[%s1 + $0xc30] sm:$0xff]
  %v427 = vld [vmem:[%s1 + $0xc38] sm:$0xff]
  %v428 = vld [vmem:[%s1 + $0xc40] sm:$0xff]
  %v429 = vld [vmem:[%s1 + $0xc48] sm:$0xff]
  %v430 = vld [vmem:[%s1 + $0xc50] sm:$0xff]
  %v431 = vld [vmem:[%s1 + $0xc58] sm:$0xff]
  %v432 = vld [vmem:[%s1 + $0xc60] sm:$0xff]
  %v433 = vld [vmem:[%s1 + $0xc68] sm:$0xff]
  %v434 = vld [vmem:[%s1 + $0xc70] sm:$0xff]
  %v435 = vld [vmem:[%s1 + $0xc78] sm:$0xff]
  %v436 = vld [vmem:[%s1 + $0xc80] sm:$0xff]
  %v437 = vld [vmem:[%s1 + $0xc88] sm:$0xff]
  %v438 = vld [vmem:[%s1 + $0xc90] sm:$0xff]
  %v439 = vld [vmem:[%s1 + $0xc98] sm:$0xff]
  %v440 = vld [vmem:[%s1 + $0xca0] sm:$0xff]
  %v441 = vld [vmem:[%s1 + $0xca8] sm:$0xff]
  %v442 = vld [vmem:[%s1 + $0xcb0] sm:$0xff]
  %v443 = vld [vmem:[%s1 + $0xcb8] sm:$0xff]
  %v444 = vld [vmem:[%s1 + $0xcc0] sm:$0xff]
  %v445 = vld [vmem:[%s1 + $0xcc8] sm:$0xff]
  %v446 = vld [vmem:[%s1 + $0xcd0] sm:$0xff]
  %v447 = vld [vmem:[%s1 + $0xcd8] sm:$0xff]
  %v448 = vld [vmem:[%s1 + $0xce0] sm:$0xff]
  %v449 = vld [vmem:[%s1 + $0xce8] sm:$0xff]
  %v450 = vld [vmem:[%s1 + $0xcf0] sm:$0xff]
  %v451 = vld [vmem:[%s1 + $0xcf8] sm:$0xff]
  %v452 = vld [vmem:[%s1 + $0xd00] sm:$0xff]
  %v453 = vld [vmem:[%s1 + $0xd08] sm:$0xff]
  %v454 = vld [vmem:[%s1 + $0xd10] sm:$0xff]
  %v455 = vld [vmem:[%s1 + $0xd18] sm:$0xff]
  %v456 = vld [vmem:[%s1 + $0xd20] sm:$0xff]
  %v457 = vld [vmem:[%s1 + $0xd28] sm:$0xff]
  %v458 = vld [vmem:[%s1 + $0xd30] sm:$0xff]
  %v459 = vld [vmem:[%s1 + $0xd38] sm:$0xff]
  %v460 = vld [vmem:[%s1 + $0xd40] sm:$0xff]
  %v461 = vld [vmem:[%s1 + $0xd48] sm:$0xff]
  %v462 = vld [vmem:[%s1 + $0xd50] sm:$0xff]
  %v463 = vld [vmem:[%s1 + $0xd58] sm:$0xff]
  %v464 = vld [vmem:[%s1 + $0xd60] sm:$0xff]
  %v465 = vld [vmem:[%s1 + $0xd68] sm:$0xff]
  %v466 = vld [vmem:[%s1 + $0xd70] sm:$0xff]
  %v467 = vld [vmem:[%s1 + $0xd78] sm:$0xff]
  %v468 = vld [vmem:[%s1 + $0xd80] sm:$0xff]
  %v469 = vld [vmem:[%s1 + $0xd88] sm:$0xff]
  %v470 = vld [vmem:[%s1 + $0xd90] sm:$0xff]
  %v471 = vld [vmem:[%s1 + $0xd98] sm:$0xff]
  %v472 = vld [vmem:[%s1 + $0xda0] sm:$0xff]
  %v473 = vld [vmem:[%s1 + $0xda8] sm:$0xff]
  %v474 = vld [vmem:[%s1 + $0xdb0] sm:$0xff]
  %v475 = vld [vmem:[%s1 + $0xdb8] sm:$0xff]
  %v476 = vld [vmem:[%s1 + $0xdc0] sm:$0xff]
  %v477 = vld [vmem:[%s1 + $0xdc8] sm:$0xff]
  %v478 = vld [vmem:[%s1 + $0xdd0] sm:$0xff]
  %v479 = vld [vmem:[%s1 + $0xdd8] sm:$0xff]
  %v480 = vld [vmem:[%s1 + $0xde0] sm:$0xff]
  %v481 = vld [vmem:[%s1 + $0xde8] sm:$0xff]
  %v482 = vld [vmem:[%s1 + $0xdf0] sm:$0xff]
  %v483 = vld [vmem:[%s1 + $0xdf8] sm:$0xff]
  %v484 = vld [vmem:[%s1 + $0xe00] sm:$0xff]
  %v485 = vld [vmem:[%s1 + $0xe08] sm:$0xff]
  %v486 = vld [vmem:[%s1 + $0xe10] sm:$0xff]
  %v487 = vld [vmem:[%s1 + $0xe18] sm:$0xff]
  %v488 = vld [vmem:[%s1 + $0xe20] sm:$0xff]
  %v489 = vld [vmem:[%s1 + $0xe28] sm:$0xff]
  %v490 = vld [vmem:[%s1 + $0xe30] sm:$0xff]
  %v491 = vld [vmem:[%s1 + $0xe38] sm:$0xff]
  %v492 = vld [vmem:[%s1 + $0xe40] sm:$0xff]
  %v493 = vld [vmem:[%s1 + $0xe48] sm:$0xff]
  %v494 = vld [vmem:[%s1 + $0xe50] sm:$0xff]
  %v495 = vld [vmem:[%s1 + $0xe58] sm:$0xff]
  %v496 = vld [vmem:[%s1 + $0xe60] sm:$0xff]
  %v497 = vld [vmem:[%s1 + $0xe68] sm:$0xff]
  %v498 = vld [vmem:[%s1 + $0xe70] sm:$0xff]
  %v499 = vld [vmem:[%s1 + $0xe78] sm:$0xff]
  %v500 = vld [vmem:[%s1 + $0xe80] sm:$0xff]
  %v501 = vld [vmem:[%s1 + $0xe88] sm:$0xff]
  %v502 = vld [vmem:[%s1 + $0xe90] sm:$0xff]
  %v503 = vld [vmem:[%s1 + $0xe98] sm:$0xff]
  %v504 = vld [vmem:[%s1 + $0xea0] sm:$0xff]
  %v505 = vld [vmem:[%s1 + $0xea8] sm:$0xff]
  %v506 = vld [vmem:[%s1 + $0xeb0] sm:$0xff]
  %v507 = vld [vmem:[%s1 + $0xeb8] sm:$0xff]
  %v508 = vld [vmem:[%s1 + $0xec0] sm:$0xff]
  %v509 = vld [vmem:[%s1 + $0xec8] sm:$0xff]
  %v510 = vld [vmem:[%s1 + $0xed0] sm:$0xff]
  %v511 = vld [vmem:[%s1 + $0xed8] sm:$0xff]
  %v512 = vld [vmem:[%s1 + $0xee0] sm:$0xff]
  %v513 = vld [vmem:[%s1 + $0xee8] sm:$0xff]
  %v514 = vld [vmem:[%s1 + $0xef0] sm:$0xff]
  %v515 = vld [vmem:[%s1 + $0xef8] sm:$0xff]
  %v516 = vld [vmem:[%s1 + $0xf00] sm:$0xff]
  %v517 = vld [vmem:[%s1 + $0xf08] sm:$0xff]
  %v518 = vld [vmem:[%s1 + $0xf10] sm:$0xff]
  %v519 = vld [vmem:[%s1 + $0xf18] sm:$0xff]
  %v520 = vld [vmem:[%s1 + $0xf20] sm:$0xff]
  %v521 = vld [vmem:[%s1 + $0xf28] sm:$0xff]
  %v522 = vld [vmem:[%s1 + $0xf30] sm:$0xff]
  %v523 = vld [vmem:[%s1 + $0xf38] sm:$0xff]
  %v524 = vld [vmem:[%s1 + $0xf40] sm:$0xff]
  %v525 = vld [vmem:[%s1 + $0xf48] sm:$0xff]
  %v526 = vld [vmem:[%s1 + $0xf50] sm:$0xff]
  %v527 = vld [vmem:[%s1 + $0xf58] sm:$0xff]
  %v528 = vld [vmem:[%s1 + $0xf60] sm:$0xff]
  %v529 = vld [vmem:[%s1 + $0xf68] sm:$0xff]
  %v530 = vld [vmem:[%s1 + $0xf70] sm:$0xff]
  %v531 = vld [vmem:[%s1 + $0xf78] sm:$0xff]
  %v532 = vld [vmem:[%s1 + $0xf80] sm:$0xff]
  %v533 = vld [vmem:[%s1 + $0xf88] sm:$0xff]
  %v534 = vld [vmem:[%s1 + $0xf90] sm:$0xff]
  %v535 = vld [vmem:[%s1 + $0xf98] sm:$0xff]
  %v536 = vld [vmem:[%s1 + $0xfa0] sm:$0xff]
  %v537 = vld [vmem:[%s1 + $0xfa8] sm:$0xff]
  %v538 = vld [vmem:[%s1 + $0xfb0] sm:$0xff]
  %v539 = vld [vmem:[%s1 + $0xfb8] sm:$0xff]
  %v540 = vld [vmem:[%s1 + $0xfc0] sm:$0xff]
  %v541 = vld [vmem:[%s1 + $0xfc8] sm:$0xff]
  %v542 = vld [vmem:[%s1 + $0xfd0] sm:$0xff]
  %v543 = vld [vmem:[%s1 + $0xfd8] sm:$0xff]
  %v544 = vld [vmem:[%s1 + $0xfe0] sm:$0xff]
  %v545 = vld [vmem:[%s1 + $0xfe8] sm:$0xff]
  %v546 = vld [vmem:[%s1 + $0xff0] sm:$0xff]
  %v547 = vld [vmem:[%s1 + $0xff8] sm:$0xff]
  %v548 = vld [vmem:[%s1 + $0x1000] sm:$0xff]
  %v549 = vld [vmem:[%s1 + $0x1008] sm:$0xff]
  %v550 = vld [vmem:[%s1 + $0x1010] sm:$0xff]
  %v551 = vld [vmem:[%s1 + $0x1018] sm:$0xff]
  %v552 = vld [vmem:[%s1 + $0x1020] sm:$0xff]
  %v553 = vld [vmem:[%s1 + $0x1028] sm:$0xff]
  %v554 = vld [vmem:[%s1 + $0x1030] sm:$0xff]
  %v555 = vld [vmem:[%s1 + $0x1038] sm:$0xff]
  %v556 = vld [vmem:[%s1 + $0x1040] sm:$0xff]
  %v557 = vld [vmem:[%s1 + $0x1048] sm:$0xff]
  %v558 = vld [vmem:[%s1 + $0x1050] sm:$0xff]
  %v559 = vld [vmem:[%s1 + $0x1058] sm:$0xff]
  %v560 = vld [vmem:[%s1 + $0x1060] sm:$0xff]
  %v561 = vld [vmem:[%s1 + $0x1068] sm:$0xff]
  %v562 = vld [vmem:[%s1 + $0x1070] sm:$0xff]
  %v563 = vld [vmem:[%s1 + $0x1078] sm:$0xff]
  %v564 = vld [vmem:[%s1 + $0x1080] sm:$0xff]
  %v565 = vld [vmem:[%s1 + $0x1088] sm:$0xff]
  %v566 = vld [vmem:[%s1 + $0x1090] sm:$0xff]
  %v567 = vld [vmem:[%s1 + $0x1098] sm:$0xff]
  %v568 = vld [vmem:[%s1 + $0x10a0] sm:$0xff]
  %v569 = vld [vmem:[%s1 + $0x10a8] sm:$0xff]
  %v570 = vld [vmem:[%s1 + $0x10b0] sm:$0xff]
  %v571 = vld [vmem:[%s1 + $0x10b8] sm:$0xff]
  %v572 = vld [vmem:[%s1 + $0x10c0] sm:$0xff]
  %v573 = vld [vmem:[%s1 + $0x10c8] sm:$0xff]
  %v574 = vld [vmem:[%s1 + $0x10d0] sm:$0xff]
  %v575 = vld [vmem:[%s1 + $0x10d8] sm:$0xff]
  %v576 = vld [vmem:[%s1 + $0x10e0] sm:$0xff]
  %v577 = vld [vmem:[%s1 + $0x10e8] sm:$0xff]
  %v578 = vld [vmem:[%s1 + $0x10f0] sm:$0xff]
  %v579 = vld [vmem:[%s1 + $0x10f8] sm:$0xff]
  %v580 = vld [vmem:[%s1 + $0x1100] sm:$0xff]
  %v581 = vld [vmem:[%s1 + $0x1108] sm:$0xff]
  %v582 = vld [vmem:[%s1 + $0x1110] sm:$0xff]
  %v583 = vld [vmem:[%s1 + $0x1118] sm:$0xff]
  %v584 = vld [vmem:[%s1 + $0x1120] sm:$0xff]
  %v585 = vld [vmem:[%s1 + $0x1128] sm:$0xff]
  %v586 = vld [vmem:[%s1 + $0x1130] sm:$0xff]
  %v587 = vld [vmem:[%s1 + $0x1138] sm:$0xff]
  %v588 = vld [vmem:[%s1 + $0x1140] sm:$0xff]
  %v589 = vld [vmem:[%s1 + $0x1148] sm:$0xff]
  %v590 = vld [vmem:[%s1 + $0x1150] sm:$0xff]
  %v591 = vld [vmem:[%s1 + $0x1158] sm:$0xff]
  %v592 = vld [vmem:[%s1 + $0x1160] sm:$0xff]
  %v593 = vld [vmem:[%s1 + $0x1168] sm:$0xff]
  %v594 = vld [vmem:[%s1 + $0x1170] sm:$0xff]
  %v595 = vld [vmem:[%s1 + $0x1178] sm:$0xff]
  %v596 = vld [vmem:[%s1 + $0x1180] sm:$0xff]
  %v597 = vld [vmem:[%s1 + $0x1188] sm:$0xff]
  %v598 = vld [vmem:[%s1 + $0x1190] sm:$0xff]
  %v599 = vld [vmem:[%s1 + $0x1198] sm:$0xff]
  %v600 = vld [vmem:[%s1 + $0x11a0] sm:$0xff]
  %v601 = vld [vmem:[%s1 + $0x11a8] sm:$0xff]
  %v602 = vld [vmem:[%s1 + $0x11b0] sm:$0xff]
  %v603 = vld [vmem:[%s1 + $0x11b8] sm:$0xff]
  %v604 = vld [vmem:[%s1 + $0x11c0] sm:$0xff]
  %v605 = vld [vmem:[%s1 + $0x11c8] sm:$0xff]
  %v606 = vld [vmem:[%s1 + $0x11d0] sm:$0xff]
  %v607 = vld [vmem:[%s1 + $0x11d8] sm:$0xff]
  %v608 = vld [vmem:[%s1 + $0x11e0] sm:$0xff]
  %v609 = vld [vmem:[%s1 + $0x11e8] sm:$0xff]
  %v610 = vld [vmem:[%s1 + $0x11f0] sm:$0xff]
  %v611 = vld [vmem:[%s1 + $0x11f8] sm:$0xff]
  %v612 = vld [vmem:[%s1 + $0x1200] sm:$0xff]
  %v613 = vld [vmem:[%s1 + $0x1208] sm:$0xff]
  %v614 = vld [vmem:[%s1 + $0x1210] sm:$0xff]
  %v615 = vld [vmem:[%s1 + $0x1218] sm:$0xff]
  %v616 = vld [vmem:[%s1 + $0x1220] sm:$0xff]
  %v617 = vld [vmem:[%s1 + $0x1228] sm:$0xff]
  %v618 = vld [vmem:[%s1 + $0x1230] sm:$0xff]
  %v619 = vld [vmem:[%s1 + $0x1238] sm:$0xff]
  %v620 = vld [vmem:[%s1 + $0x1240] sm:$0xff]
  %v621 = vld [vmem:[%s1 + $0x1248] sm:$0xff]
  %v622 = vld [vmem:[%s1 + $0x1250] sm:$0xff]
  %v623 = vld [vmem:[%s1 + $0x1258] sm:$0xff]
  %v624 = vld [vmem:[%s1 + $0x1260] sm:$0xff]
  %v625 = vld [vmem:[%s1 + $0x1268] sm:$0xff]
  %v626 = vld [vmem:[%s1 + $0x1270] sm:$0xff]
  %v627 = vld [vmem:[%s1 + $0x1278] sm:$0xff]
  %v628 = vld [vmem:[%s1 + $0x1280] sm:$0xff]
  %v629 = vld [vmem:[%s1 + $0x1288] sm:$0xff]
  %v630 = vld [vmem:[%s1 + $0x1290] sm:$0xff]
  %v631 = vld [vmem:[%s1 + $0x1298] sm:$0xff]
  %v632 = vld [vmem:[%s1 + $0x12a0] sm:$0xff]
  %v633 = vld [vmem:[%s1 + $0x12a8] sm:$0xff]
  %v634 = vld [vmem:[%s1 + $0x12b0] sm:$0xff]
  %v635 = vld [vmem:[%s1 + $0x12b8] sm:$0xff]
  %v636 = vld [vmem:[%s1 + $0x12c0] sm:$0xff]
  %v637 = vld [vmem:[%s1 + $0x12c8] sm:$0xff]
  %v638 = vld [vmem:[%s1 + $0x12d0] sm:$0xff]
  %v639 = vld [vmem:[%s1 + $0x12d8] sm:$0xff]
  %v640 = vld [vmem:[%s1 + $0x12e0] sm:$0xff]
  %v641 = vld [vmem:[%s1 + $0x12e8] sm:$0xff]
  %v642 = vld [vmem:[%s1 + $0x12f0] sm:$0xff]
  %v643 = vld [vmem:[%s1 + $0x12f8] sm:$0xff]
  %v644 = vld [vmem:[%s1 + $0x1300] sm:$0xff]
  %v645 = vld [vmem:[%s1 + $0x1308] sm:$0xff]
  %v646 = vld [vmem:[%s1 + $0x1310] sm:$0xff]
  %v647 = vld [vmem:[%s1 + $0x1318] sm:$0xff]
  %v648 = vld [vmem:[%s1 + $0x1320] sm:$0xff]
  %v649 = vld [vmem:[%s1 + $0x1328] sm:$0xff]
  %v650 = vld [vmem:[%s1 + $0x1330] sm:$0xff]
  %v651 = vld [vmem:[%s1 + $0x1338] sm:$0xff]
  %v652 = vld [vmem:[%s1 + $0x1340] sm:$0xff]
  %v653 = vld [vmem:[%s1 + $0x1348] sm:$0xff]
  %v654 = vld [vmem:[%s1 + $0x1350] sm:$0xff]
  %v655 = vld [vmem:[%s1 + $0x1358] sm:$0xff]
  %v656 = vld [vmem:[%s1 + $0x1360] sm:$0xff]
  %v657 = vld [vmem:[%s1 + $0x1368] sm:$0xff]
  %v658 = vld [vmem:[%s1 + $0x1370] sm:$0xff]
  %v659 = vld [vmem:[%s1 + $0x1378] sm:$0xff]
  %v660 = vld [vmem:[%s1 + $0x1380] sm:$0xff]
  %v661 = vld [vmem:[%s1 + $0x1388] sm:$0xff]
  %v662 = vld [vmem:[%s1 + $0x1390] sm:$0xff]
  %v663 = vld [vmem:[%s1 + $0x1398] sm:$0xff]
  %v664 = vld [vmem:[%s1 + $0x13a0] sm:$0xff]
  %v665 = vld [vmem:[%s1 + $0x13a8] sm:$0xff]
  %v666 = vld [vmem:[%s1 + $0x13b0] sm:$0xff]
  %v667 = vld [vmem:[%s1 + $0x13b8] sm:$0xff]
  %v668 = vld [vmem:[%s1 + $0x13c0] sm:$0xff]
  %v669 = vld [vmem:[%s1 + $0x13c8] sm:$0xff]
  %v670 = vld [vmem:[%s1 + $0x13d0] sm:$0xff]
  %v671 = vld [vmem:[%s1 + $0x13d8] sm:$0xff]
  %v672 = vld [vmem:[%s1 + $0x13e0] sm:$0xff]
  %v673 = vld [vmem:[%s1 + $0x13e8] sm:$0xff]
  %v674 = vld [vmem:[%s1 + $0x13f0] sm:$0xff]
  %v675 = vld [vmem:[%s1 + $0x13f8] sm:$0xff]
  %v676 = vld [vmem:[%s1 + $0x1400] sm:$0xff]
  %v677 = vld [vmem:[%s1 + $0x1408] sm:$0xff]
  %v678 = vld [vmem:[%s1 + $0x1410] sm:$0xff]
  %v679 = vld [vmem:[%s1 + $0x1418] sm:$0xff]
  %v680 = vld [vmem:[%s1 + $0x1420] sm:$0xff]
  %v681 = vld [vmem:[%s1 + $0x1428] sm:$0xff]
  %v682 = vld [vmem:[%s1 + $0x1430] sm:$0xff]
  %v683 = vld [vmem:[%s1 + $0x1438] sm:$0xff]
  %v684 = vld [vmem:[%s1 + $0x1440] sm:$0xff]
  %v685 = vld [vmem:[%s1 + $0x1448] sm:$0xff]
  %v686 = vld [vmem:[%s1 + $0x1450] sm:$0xff]
  %v687 = vld [vmem:[%s1 + $0x1458] sm:$0xff]
  %v688 = vld [vmem:[%s1 + $0x1460] sm:$0xff]
  %v689 = vld [vmem:[%s1 + $0x1468] sm:$0xff]
  %v690 = vld [vmem:[%s1 + $0x1470] sm:$0xff]
  %v691 = vld [vmem:[%s1 + $0x1478] sm:$0xff]
  %v692 = vld [vmem:[%s1 + $0x1480] sm:$0xff]
  %v693 = vld [vmem:[%s1 + $0x1488] sm:$0xff]
  %v694 = vld [vmem:[%s1 + $0x1490] sm:$0xff]
  %v695 = vld [vmem:[%s1 + $0x1498] sm:$0xff]
  %v696 = vld [vmem:[%s1 + $0x14a0] sm:$0xff]
  %v697 = vld [vmem:[%s1 + $0x14a8] sm:$0xff]
  %v698 = vld [vmem:[%s1 + $0x14b0] sm:$0xff]
  %v699 = vld [vmem:[%s1 + $0x14b8] sm:$0xff]
  %v700 = vld [vmem:[%s1 + $0x14c0] sm:$0xff]
  %v701 = vld [vmem:[%s1 + $0x14c8] sm:$0xff]
  %v702 = vld [vmem:[%s1 + $0x14d0] sm:$0xff]
  %v703 = vld [vmem:[%s1 + $0x14d8] sm:$0xff]
  %v704 = vld [vmem:[%s1 + $0x14e0] sm:$0xff]
  %v705 = vld [vmem:[%s1 + $0x14e8] sm:$0xff]
  %v706 = vld [vmem:[%s1 + $0x14f0] sm:$0xff]
  %v707 = vld [vmem:[%s1 + $0x14f8] sm:$0xff]
  %v708 = vld [vmem:[%s1 + $0x1500] sm:$0xff]
  %v709 = vld [vmem:[%s1 + $0x1508] sm:$0xff]
  %v710 = vld [vmem:[%s1 + $0x1510] sm:$0xff]
  %v711 = vld [vmem:[%s1 + $0x1518] sm:$0xff]
  %v712 = vld [vmem:[%s1 + $0x1520] sm:$0xff]
  %v713 = vld [vmem:[%s1 + $0x1528] sm:$0xff]
  %v714 = vld [vmem:[%s1 + $0x1530] sm:$0xff]
  %v715 = vld [vmem:[%s1 + $0x1538] sm:$0xff]
  %v716 = vld [vmem:[%s1 + $0x1540] sm:$0xff]
  %v717 = vld [vmem:[%s1 + $0x1548] sm:$0xff]
  %v718 = vld [vmem:[%s1 + $0x1550] sm:$0xff]
  %v719 = vld [vmem:[%s1 + $0x1558] sm:$0xff]
  %v720 = vld [vmem:[%s1 + $0x1560] sm:$0xff]
  %v721 = vld [vmem:[%s1 + $0x1568] sm:$0xff]
  %v722 = vld [vmem:[%s1 + $0x1570] sm:$0xff]
  %v723 = vld [vmem:[%s1 + $0x1578] sm:$0xff]
  %v724 = vld [vmem:[%s1 + $0x1580] sm:$0xff]
  %v725 = vld [vmem:[%s1 + $0x1588] sm:$0xff]
  %v726 = vld [vmem:[%s1 + $0x1590] sm:$0xff]
  %v727 = vld [vmem:[%s1 + $0x1598] sm:$0xff]
  %v728 = vld [vmem:[%s1 + $0x15a0] sm:$0xff]
  %v729 = vld [vmem:[%s1 + $0x15a8] sm:$0xff]
  %v730 = vld [vmem:[%s1 + $0x15b0] sm:$0xff]
  %v731 = vld [vmem:[%s1 + $0x15b8] sm:$0xff]
  %v732 = vld [vmem:[%s1 + $0x15c0] sm:$0xff]
  %v733 = vld [vmem:[%s1 + $0x15c8] sm:$0xff]
  %v734 = vld [vmem:[%s1 + $0x15d0] sm:$0xff]
  %v735 = vld [vmem:[%s1 + $0x15d8] sm:$0xff]
  %v736 = vld [vmem:[%s1 + $0x15e0] sm:$0xff]
  %v737 = vld [vmem:[%s1 + $0x15e8] sm:$0xff]
  %v738 = vld [vmem:[%s1 + $0x15f0] sm:$0xff]
  %v739 = vld [vmem:[%s1 + $0x15f8] sm:$0xff]
  %v740 = vld [vmem:[%s1 + $0x1600] sm:$0xff]
  %v741 = vld [vmem:[%s1 + $0x1608] sm:$0xff]
  %v742 = vld [vmem:[%s1 + $0x1610] sm:$0xff]
  %v743 = vld [vmem:[%s1 + $0x1618] sm:$0xff]
  %v744 = vld [vmem:[%s1 + $0x1620] sm:$0xff]
  %v745 = vld [vmem:[%s1 + $0x1628] sm:$0xff]
  %v746 = vld [vmem:[%s1 + $0x1630] sm:$0xff]
  %v747 = vld [vmem:[%s1 + $0x1638] sm:$0xff]
  %v748 = vld [vmem:[%s1 + $0x1640] sm:$0xff]
  %v749 = vld [vmem:[%s1 + $0x1648] sm:$0xff]
  %v750 = vld [vmem:[%s1 + $0x1650] sm:$0xff]
  %v751 = vld [vmem:[%s1 + $0x1658] sm:$0xff]
  %v752 = vld [vmem:[%s1 + $0x1660] sm:$0xff]
  %v753 = vld [vmem:[%s1 + $0x1668] sm:$0xff]
  %v754 = vld [vmem:[%s1 + $0x1670] sm:$0xff]
  %v755 = vld [vmem:[%s1 + $0x1678] sm:$0xff]
  %v756 = vld [vmem:[%s1 + $0x1680] sm:$0xff]
  %v757 = vld [vmem:[%s1 + $0x1688] sm:$0xff]
  %v758 = vld [vmem:[%s1 + $0x1690] sm:$0xff]
  %v759 = vld [vmem:[%s1 + $0x1698] sm:$0xff]
  %v760 = vld [vmem:[%s1 + $0x16a0] sm:$0xff]
  %v761 = vld [vmem:[%s1 + $0x16a8] sm:$0xff]
  %v762 = vld [vmem:[%s1 + $0x16b0] sm:$0xff]
  %v763 = vld [vmem:[%s1 + $0x16b8] sm:$0xff]
  %v764 = vld [vmem:[%s1 + $0x16c0] sm:$0xff]
  %v765 = vld [vmem:[%s1 + $0x16c8] sm:$0xff]
  %v766 = vld [vmem:[%s1 + $0x16d0] sm:$0xff]
  %v767 = vld [vmem:[%s1 + $0x16d8] sm:$0xff]
  %v768 = vld [vmem:[%s1 + $0x16e0] sm:$0xff]
  %v769 = vld [vmem:[%s1 + $0x16e8] sm:$0xff]
  %v770 = vld [vmem:[%s1 + $0x16f0] sm:$0xff]
  %v771 = vld [vmem:[%s1 + $0x16f8] sm:$0xff]
  %v772 = vld [vmem:[%s1 + $0x1700] sm:$0xff]
  %v773 = vld [vmem:[%s1 + $0x1708] sm:$0xff]
  %v774 = vld [vmem:[%s1 + $0x1710] sm:$0xff]
  %v775 = vld [vmem:[%s1 + $0x1718] sm:$0xff]
  %v776 = vld [vmem:[%s1 + $0x1720] sm:$0xff]
  %v777 = vld [vmem:[%s1 + $0x1728] sm:$0xff]
  %v778 = vld [vmem:[%s1 + $0x1730] sm:$0xff]
  %v779 = vld [vmem:[%s1 + $0x1738] sm:$0xff]
  %v780 = vld [vmem:[%s1 + $0x1740] sm:$0xff]
  %v781 = vld [vmem:[%s1 + $0x1748] sm:$0xff]
  %v782 = vld [vmem:[%s1 + $0x1750] sm:$0xff]
  %v783 = vld [vmem:[%s1 + $0x1758] sm:$0xff]
  %v784 = vld [vmem:[%s1 + $0x1760] sm:$0xff]
  %v785 = vld [vmem:[%s1 + $0x1768] sm:$0xff]
  %v786 = vld [vmem:[%s1 + $0x1770] sm:$0xff]
  %v787 = vld [vmem:[%s1 + $0x1778] sm:$0xff]
  %v788 = vld [vmem:[%s1 + $0x1780] sm:$0xff]
  %v789 = vld [vmem:[%s1 + $0x1788] sm:$0xff]
  %v790 = vld [vmem:[%s1 + $0x1790] sm:$0xff]
  %v791 = vld [vmem:[%s1 + $0x1798] sm:$0xff]
  %v792 = vld [vmem:[%s1 + $0x17a0] sm:$0xff]
  %v793 = vld [vmem:[%s1 + $0x17a8] sm:$0xff]
  %v794 = vld [vmem:[%s1 + $0x17b0] sm:$0xff]
  %v795 = vld [vmem:[%s1 + $0x17b8] sm:$0xff]
  %v796 = vld [vmem:[%s1 + $0x17c0] sm:$0xff]
  %v797 = vld [vmem:[%s1 + $0x17c8] sm:$0xff]
  %v798 = vld [vmem:[%s1 + $0x17d0] sm:$0xff]
  %v799 = vld [vmem:[%s1 + $0x17d8] sm:$0xff]
  %v800 = vld [vmem:[%s1 + $0x17e0] sm:$0xff]
  %v801 = vld [vmem:[%s1 + $0x17e8] sm:$0xff]
  %v802 = vld [vmem:[%s1 + $0x17f0] sm:$0xff]
  %v803 = vld [vmem:[%s1 + $0x17f8] sm:$0xff]
  %v804 = vld [vmem:[%s1 + $0x1800] sm:$0xff]
  %v805 = vld [vmem:[%s1 + $0x1808] sm:$0xff]
  %v806 = vld [vmem:[%s1 + $0x1810] sm:$0xff]
  %v807 = vld [vmem:[%s1 + $0x1818] sm:$0xff]
  %v808 = vld [vmem:[%s1 + $0x1820] sm:$0xff]
  %v809 = vld [vmem:[%s1 + $0x1828] sm:$0xff]
  %v810 = vld [vmem:[%s1 + $0x1830] sm:$0xff]
  %v811 = vld [vmem:[%s1 + $0x1838] sm:$0xff]
  %v812 = vld [vmem:[%s1 + $0x1840] sm:$0xff]
  %v813 = vld [vmem:[%s1 + $0x1848] sm:$0xff]
  %v814 = vld [vmem:[%s1 + $0x1850] sm:$0xff]
  %v815 = vld [vmem:[%s1 + $0x1858] sm:$0xff]
  %v816 = vld [vmem:[%s1 + $0x1860] sm:$0xff]
  %v817 = vld [vmem:[%s1 + $0x1868] sm:$0xff]
  %v818 = vld [vmem:[%s1 + $0x1870] sm:$0xff]
  %v819 = vld [vmem:[%s1 + $0x1878] sm:$0xff]
  %v820 = vld [vmem:[%s2] sm:$0xf]
  %v822 = vlaneseq
  %v823 = vshrl.u32 %v822, 7
  %v824 = vsub.s32 0, %v823
  %v825 = vrot.slane %v820, %v824
  %v826 = vlaneseq
  %v827 = vshrl.u32 %v826, 7
  %v828 = vsub.s32 1, %v827
  %v829 = vrot.slane %v820, %v828
  %v830 = vlaneseq
  %v831 = vshrl.u32 %v830, 7
  %v832 = vsub.s32 2, %v831
  %v833 = vrot.slane %v820, %v832
  %v834 = vlaneseq
  %v835 = vshrl.u32 %v834, 7
  %v836 = vsub.s32 3, %v835
  %v837 = vrot.slane %v820, %v836
  %v855 = vunpack.c.l.b16 %v23
  %v856 = vunpack.c.h.b16 %v23
  %v857 = vunpack.c.l.b16 %v24
  %v858 = vunpack.c.h.b16 %v24
  %v859 = vunpack.c.l.b16 %v25
  %v860 = vunpack.c.h.b16 %v25
  %v861 = vunpack.c.l.b16 %v26
  %v862 = vunpack.c.h.b16 %v26
  %v863 = vunpack.c.l.b16 %v27
  %v864 = vunpack.c.h.b16 %v27
  %v865 = vunpack.c.l.b16 %v28
  %v866 = vunpack.c.h.b16 %v28
  %v867 = vunpack.c.l.b16 %v29
  %v868 = vunpack.c.h.b16 %v29
  %v869 = vunpack.c.l.b16 %v30
  %v870 = vunpack.c.h.b16 %v30
  %v871 = vunpack.c.l.b16 %v31
  %v872 = vunpack.c.h.b16 %v31
  %v873 = vunpack.c.l.b16 %v32
  %v874 = vunpack.c.h.b16 %v32
  %v875 = vunpack.c.l.b16 %v33
  %v876 = vunpack.c.h.b16 %v33
  %v877 = vunpack.c.l.b16 %v34
  %v878 = vunpack.c.h.b16 %v34
  %v879 = vunpack.c.l.b16 %v35
  %v880 = vpack.c.b16 %v855, %v855
  %v881 = vpack.c.b16 %v856, %v856
  %v882 = vpack.c.b16 %v857, %v857
  %v883 = vpack.c.b16 %v858, %v858
  %v884 = vpack.c.b16 %v859, %v859
  %v885 = vpack.c.b16 %v860, %v860
  %v886 = vpack.c.b16 %v861, %v861
  %v887 = vpack.c.b16 %v862, %v862
  %v888 = vpack.c.b16 %v863, %v863
  %v889 = vpack.c.b16 %v864, %v864
  %v890 = vpack.c.b16 %v865, %v865
  %v891 = vpack.c.b16 %v866, %v866
  %v892 = vpack.c.b16 %v867, %v867
  %v893 = vpack.c.b16 %v868, %v868
  %v894 = vpack.c.b16 %v869, %v869
  %v895 = vpack.c.b16 %v870, %v870
  %v896 = vpack.c.b16 %v871, %v871
  %v897 = vpack.c.b16 %v872, %v872
  %v898 = vpack.c.b16 %v873, %v873
  %v899 = vpack.c.b16 %v874, %v874
  %v900 = vpack.c.b16 %v875, %v875
  %v901 = vpack.c.b16 %v876, %v876
  %v902 = vpack.c.b16 %v877, %v877
  %v903 = vpack.c.b16 %v878, %v878
  %v904 = vpack.c.b16 %v879, %v879
  %v1713 = vunpack.c.l.b16 %v36
  %v1714 = vunpack.c.h.b16 %v36
  %v1715 = vunpack.c.l.b16 %v37
  %v1716 = vunpack.c.h.b16 %v37
  %v1717 = vunpack.c.l.b16 %v38
  %v1718 = vunpack.c.h.b16 %v38
  %v1719 = vunpack.c.l.b16 %v39
  %v1720 = vunpack.c.h.b16 %v39
  %v1721 = vunpack.c.l.b16 %v40
  %v1722 = vunpack.c.h.b16 %v40
  %v1723 = vunpack.c.l.b16 %v41
  %v1724 = vunpack.c.h.b16 %v41
  %v1725 = vunpack.c.l.b16 %v42
  %v1726 = vunpack.c.h.b16 %v42
  %v1727 = vunpack.c.l.b16 %v43
  %v1728 = vunpack.c.h.b16 %v43
  %v1729 = vunpack.c.l.b16 %v44
  %v1730 = vunpack.c.h.b16 %v44
  %v1731 = vunpack.c.l.b16 %v45
  %v1732 = vunpack.c.h.b16 %v45
  %v1733 = vunpack.c.l.b16 %v46
  %v1734 = vunpack.c.h.b16 %v46
  %v1735 = vunpack.c.l.b16 %v47
  %v1736 = vunpack.c.h.b16 %v47
  %v1737 = vunpack.c.l.b16 %v48
  %v1738 = vunpack.c.h.b16 %v48
  %v1739 = vunpack.c.l.b16 %v49
  %v1740 = vunpack.c.h.b16 %v49
  %v1741 = vunpack.c.l.b16 %v50
  %v1742 = vunpack.c.h.b16 %v50
  %v1743 = vunpack.c.l.b16 %v51
  %v1744 = vunpack.c.h.b16 %v51
  %v1745 = vunpack.c.l.b16 %v52
  %v1746 = vunpack.c.h.b16 %v52
  %v1747 = vunpack.c.l.b16 %v53
  %v1748 = vunpack.c.h.b16 %v53
  %v1749 = vunpack.c.l.b16 %v54
  %v1750 = vunpack.c.h.b16 %v54
  %v1751 = vunpack.c.l.b16 %v55
  %v1752 = vunpack.c.h.b16 %v55
  %v1753 = vunpack.c.l.b16 %v56
  %v1754 = vunpack.c.h.b16 %v56
  %v1755 = vunpack.c.l.b16 %v57
  %v1756 = vunpack.c.h.b16 %v57
  %v1757 = vunpack.c.l.b16 %v58
  %v1758 = vunpack.c.h.b16 %v58
  %v1759 = vunpack.c.l.b16 %v59
  %v1760 = vunpack.c.h.b16 %v59
  %v1761 = vunpack.c.l.b16 %v60
  %v1762 = vunpack.c.h.b16 %v60
  %v1763 = vunpack.c.l.b16 %v61
  %v1764 = vunpack.c.h.b16 %v61
  %v1765 = vunpack.c.l.b16 %v62
  %v1766 = vunpack.c.h.b16 %v62
  %v1767 = vunpack.c.l.b16 %v63
  %v1768 = vunpack.c.h.b16 %v63
  %v1769 = vunpack.c.l.b16 %v64
  %v1770 = vunpack.c.h.b16 %v64
  %v1771 = vunpack.c.l.b16 %v65
  %v1772 = vunpack.c.h.b16 %v65
  %v1773 = vunpack.c.l.b16 %v66
  %v1774 = vunpack.c.h.b16 %v66
  %v1775 = vunpack.c.l.b16 %v67
  %v1776 = vunpack.c.h.b16 %v67
  %v1777 = vunpack.c.l.b16 %v68
  %v1778 = vunpack.c.h.b16 %v68
  %v1779 = vunpack.c.l.b16 %v69
  %v1780 = vunpack.c.h.b16 %v69
  %v1781 = vunpack.c.l.b16 %v70
  %v1782 = vunpack.c.h.b16 %v70
  %v1783 = vunpack.c.l.b16 %v71
  %v1784 = vunpack.c.h.b16 %v71
  %v1785 = vunpack.c.l.b16 %v72
  %v1786 = vunpack.c.h.b16 %v72
  %v1787 = vunpack.c.l.b16 %v73
  %v1788 = vunpack.c.h.b16 %v73
  %v1789 = vunpack.c.l.b16 %v74
  %v1790 = vunpack.c.h.b16 %v74
  %v1791 = vunpack.c.l.b16 %v75
  %v1792 = vunpack.c.h.b16 %v75
  %v1793 = vunpack.c.l.b16 %v76
  %v1794 = vunpack.c.h.b16 %v76
  %v1795 = vunpack.c.l.b16 %v77
  %v1796 = vunpack.c.h.b16 %v77
  %v1797 = vunpack.c.l.b16 %v78
  %v1798 = vunpack.c.h.b16 %v78
  %v1799 = vunpack.c.l.b16 %v79
  %v1800 = vunpack.c.h.b16 %v79
  %v1801 = vunpack.c.l.b16 %v80
  %v1802 = vunpack.c.h.b16 %v80
  %v1803 = vunpack.c.l.b16 %v81
  %v1804 = vunpack.c.h.b16 %v81
  %v1805 = vunpack.c.l.b16 %v82
  %v1806 = vunpack.c.h.b16 %v82
  %v1807 = vunpack.c.l.b16 %v83
  %v1808 = vunpack.c.h.b16 %v83
  %v1809 = vunpack.c.l.b16 %v84
  %v1810 = vunpack.c.h.b16 %v84
  %v1811 = vunpack.c.l.b16 %v85
  %v1812 = vunpack.c.h.b16 %v85
  %v1813 = vunpack.c.l.b16 %v86
  %v1814 = vunpack.c.h.b16 %v86
  %v1815 = vunpack.c.l.b16 %v87
  %v1816 = vunpack.c.h.b16 %v87
  %v1817 = vunpack.c.l.b16 %v88
  %v1818 = vunpack.c.h.b16 %v88
  %v1819 = vunpack.c.l.b16 %v89
  %v1820 = vunpack.c.h.b16 %v89
  %v1821 = vunpack.c.l.b16 %v90
  %v1822 = vunpack.c.h.b16 %v90
  %v1823 = vunpack.c.l.b16 %v91
  %v1824 = vunpack.c.h.b16 %v91
  %v1825 = vunpack.c.l.b16 %v92
  %v1826 = vunpack.c.h.b16 %v92
  %v1827 = vunpack.c.l.b16 %v93
  %v1828 = vunpack.c.h.b16 %v93
  %v1829 = vunpack.c.l.b16 %v94
  %v1830 = vunpack.c.h.b16 %v94
  %v1831 = vunpack.c.l.b16 %v95
  %v1832 = vunpack.c.h.b16 %v95
  %v1833 = vunpack.c.l.b16 %v96
  %v1834 = vunpack.c.h.b16 %v96
  %v1835 = vunpack.c.l.b16 %v97
  %v1836 = vunpack.c.h.b16 %v97
  %v1837 = vunpack.c.l.b16 %v98
  %v1838 = vunpack.c.h.b16 %v98
  %v1839 = vunpack.c.l.b16 %v99
  %v1840 = vunpack.c.h.b16 %v99
  %v1841 = vunpack.c.l.b16 %v100
  %v1842 = vunpack.c.h.b16 %v100
  %v1843 = vunpack.c.l.b16 %v101
  %v1844 = vunpack.c.h.b16 %v101
  %v1845 = vunpack.c.l.b16 %v102
  %v1846 = vunpack.c.h.b16 %v102
  %v1847 = vunpack.c.l.b16 %v103
  %v1848 = vunpack.c.h.b16 %v103
  %v1849 = vunpack.c.l.b16 %v104
  %v1850 = vunpack.c.h.b16 %v104
  %v1851 = vunpack.c.l.b16 %v105
  %v1852 = vunpack.c.h.b16 %v105
  %v1853 = vunpack.c.l.b16 %v106
  %v1854 = vunpack.c.h.b16 %v106
  %v1855 = vunpack.c.l.b16 %v107
  %v1856 = vunpack.c.h.b16 %v107
  %v1857 = vunpack.c.l.b16 %v108
  %v1858 = vunpack.c.h.b16 %v108
  %v1859 = vunpack.c.l.b16 %v109
  %v1860 = vunpack.c.h.b16 %v109
  %v1861 = vunpack.c.l.b16 %v110
  %v1862 = vunpack.c.h.b16 %v110
  %v1863 = vunpack.c.l.b16 %v111
  %v1864 = vunpack.c.h.b16 %v111
  %v1865 = vunpack.c.l.b16 %v112
  %v1866 = vunpack.c.h.b16 %v112
  %v1867 = vunpack.c.l.b16 %v113
  %v1868 = vunpack.c.h.b16 %v113
  %v1869 = vunpack.c.l.b16 %v114
  %v1870 = vunpack.c.h.b16 %v114
  %v1871 = vunpack.c.l.b16 %v115
  %v1872 = vunpack.c.h.b16 %v115
  %v1873 = vunpack.c.l.b16 %v116
  %v1874 = vunpack.c.h.b16 %v116
  %v1875 = vunpack.c.l.b16 %v117
  %v1876 = vunpack.c.h.b16 %v117
  %v1877 = vunpack.c.l.b16 %v118
  %v1878 = vunpack.c.h.b16 %v118
  %v1879 = vunpack.c.l.b16 %v119
  %v1880 = vunpack.c.h.b16 %v119
  %v1881 = vunpack.c.l.b16 %v120
  %v1882 = vunpack.c.h.b16 %v120
  %v1883 = vunpack.c.l.b16 %v121
  %v1884 = vunpack.c.h.b16 %v121
  %v1885 = vunpack.c.l.b16 %v122
  %v1886 = vunpack.c.h.b16 %v122
  %v1887 = vunpack.c.l.b16 %v123
  %v1888 = vunpack.c.h.b16 %v123
  %v1889 = vunpack.c.l.b16 %v124
  %v1890 = vunpack.c.h.b16 %v124
  %v1891 = vunpack.c.l.b16 %v125
  %v1892 = vunpack.c.h.b16 %v125
  %v1893 = vunpack.c.l.b16 %v126
  %v1894 = vunpack.c.h.b16 %v126
  %v1895 = vunpack.c.l.b16 %v127
  %v1896 = vunpack.c.h.b16 %v127
  %v1897 = vunpack.c.l.b16 %v128
  %v1898 = vunpack.c.h.b16 %v128
  %v1899 = vunpack.c.l.b16 %v129
  %v1900 = vunpack.c.h.b16 %v129
  %v1901 = vunpack.c.l.b16 %v130
  %v1902 = vunpack.c.h.b16 %v130
  %v1903 = vunpack.c.l.b16 %v131
  %v1904 = vunpack.c.h.b16 %v131
  %v1905 = vunpack.c.l.b16 %v132
  %v1906 = vunpack.c.h.b16 %v132
  %v1907 = vunpack.c.l.b16 %v133
  %v1908 = vunpack.c.h.b16 %v133
  %v1909 = vunpack.c.l.b16 %v134
  %v1910 = vunpack.c.h.b16 %v134
  %v1911 = vunpack.c.l.b16 %v135
  %v1912 = vunpack.c.h.b16 %v135
  %v1913 = vunpack.c.l.b16 %v136
  %v1914 = vunpack.c.h.b16 %v136
  %v1915 = vunpack.c.l.b16 %v137
  %v1916 = vunpack.c.h.b16 %v137
  %v1917 = vunpack.c.l.b16 %v138
  %v1918 = vunpack.c.h.b16 %v138
  %v1919 = vunpack.c.l.b16 %v139
  %v1920 = vunpack.c.h.b16 %v139
  %v1921 = vunpack.c.l.b16 %v140
  %v1922 = vunpack.c.h.b16 %v140
  %v1923 = vunpack.c.l.b16 %v141
  %v1924 = vunpack.c.h.b16 %v141
  %v1925 = vunpack.c.l.b16 %v142
  %v1926 = vunpack.c.h.b16 %v142
  %v1927 = vunpack.c.l.b16 %v143
  %v1928 = vunpack.c.h.b16 %v143
  %v1929 = vunpack.c.l.b16 %v144
  %v1930 = vunpack.c.h.b16 %v144
  %v1931 = vunpack.c.l.b16 %v145
  %v1932 = vunpack.c.h.b16 %v145
  %v1933 = vunpack.c.l.b16 %v146
  %v1934 = vunpack.c.h.b16 %v146
  %v1935 = vunpack.c.l.b16 %v147
  %v1936 = vunpack.c.h.b16 %v147
  %v1937 = vunpack.c.l.b16 %v148
  %v1938 = vunpack.c.h.b16 %v148
  %v1939 = vunpack.c.l.b16 %v149
  %v1940 = vunpack.c.h.b16 %v149
  %v1941 = vunpack.c.l.b16 %v150
  %v1942 = vunpack.c.h.b16 %v150
  %v1943 = vunpack.c.l.b16 %v151
  %v1944 = vunpack.c.h.b16 %v151
  %v1945 = vunpack.c.l.b16 %v152
  %v1946 = vunpack.c.h.b16 %v152
  %v1947 = vunpack.c.l.b16 %v153
  %v1948 = vunpack.c.h.b16 %v153
  %v1949 = vunpack.c.l.b16 %v154
  %v1950 = vunpack.c.h.b16 %v154
  %v1951 = vunpack.c.l.b16 %v155
  %v1952 = vunpack.c.h.b16 %v155
  %v1953 = vunpack.c.l.b16 %v156
  %v1954 = vunpack.c.h.b16 %v156
  %v1955 = vunpack.c.l.b16 %v157
  %v1956 = vunpack.c.h.b16 %v157
  %v1957 = vunpack.c.l.b16 %v158
  %v1958 = vunpack.c.h.b16 %v158
  %v1959 = vunpack.c.l.b16 %v159
  %v1960 = vunpack.c.h.b16 %v159
  %v1961 = vunpack.c.l.b16 %v160
  %v1962 = vunpack.c.h.b16 %v160
  %v1963 = vunpack.c.l.b16 %v161
  %v1964 = vunpack.c.h.b16 %v161
  %v1965 = vunpack.c.l.b16 %v162
  %v1966 = vunpack.c.h.b16 %v162
  %v1967 = vunpack.c.l.b16 %v163
  %v1968 = vunpack.c.h.b16 %v163
  %v1969 = vunpack.c.l.b16 %v164
  %v1970 = vunpack.c.h.b16 %v164
  %v1971 = vunpack.c.l.b16 %v165
  %v1972 = vunpack.c.h.b16 %v165
  %v1973 = vunpack.c.l.b16 %v166
  %v1974 = vunpack.c.h.b16 %v166
  %v1975 = vunpack.c.l.b16 %v167
  %v1976 = vunpack.c.h.b16 %v167
  %v1977 = vunpack.c.l.b16 %v168
  %v1978 = vunpack.c.h.b16 %v168
  %v1979 = vunpack.c.l.b16 %v169
  %v1980 = vunpack.c.h.b16 %v169
  %v1981 = vunpack.c.l.b16 %v170
  %v1982 = vunpack.c.h.b16 %v170
  %v1983 = vunpack.c.l.b16 %v171
  %v1984 = vunpack.c.h.b16 %v171
  %v1985 = vunpack.c.l.b16 %v172
  %v1986 = vunpack.c.h.b16 %v172
  %v1987 = vunpack.c.l.b16 %v173
  %v1988 = vunpack.c.h.b16 %v173
  %v1989 = vunpack.c.l.b16 %v174
  %v1990 = vunpack.c.h.b16 %v174
  %v1991 = vunpack.c.l.b16 %v175
  %v1992 = vunpack.c.h.b16 %v175
  %v1993 = vunpack.c.l.b16 %v176
  %v1994 = vunpack.c.h.b16 %v176
  %v1995 = vunpack.c.l.b16 %v177
  %v1996 = vunpack.c.h.b16 %v177
  %v1997 = vunpack.c.l.b16 %v178
  %v1998 = vunpack.c.h.b16 %v178
  %v1999 = vunpack.c.l.b16 %v179
  %v2000 = vunpack.c.h.b16 %v179
  %v2001 = vunpack.c.l.b16 %v180
  %v2002 = vunpack.c.h.b16 %v180
  %v2003 = vunpack.c.l.b16 %v181
  %v2004 = vunpack.c.h.b16 %v181
  %v2005 = vunpack.c.l.b16 %v182
  %v2006 = vunpack.c.h.b16 %v182
  %v2007 = vunpack.c.l.b16 %v183
  %v2008 = vunpack.c.h.b16 %v183
  %v2009 = vunpack.c.l.b16 %v184
  %v2010 = vunpack.c.h.b16 %v184
  %v2011 = vunpack.c.l.b16 %v185
  %v2012 = vunpack.c.h.b16 %v185
  %v2013 = vunpack.c.l.b16 %v186
  %v2014 = vunpack.c.h.b16 %v186
  %v2015 = vunpack.c.l.b16 %v187
  %v2016 = vunpack.c.h.b16 %v187
  %v2017 = vunpack.c.l.b16 %v188
  %v2018 = vunpack.c.h.b16 %v188
  %v2019 = vunpack.c.l.b16 %v189
  %v2020 = vunpack.c.h.b16 %v189
  %v2021 = vunpack.c.l.b16 %v190
  %v2022 = vunpack.c.h.b16 %v190
  %v2023 = vunpack.c.l.b16 %v191
  %v2024 = vunpack.c.h.b16 %v191
  %v2025 = vunpack.c.l.b16 %v192
  %v2026 = vunpack.c.h.b16 %v192
  %v2027 = vunpack.c.l.b16 %v193
  %v2028 = vunpack.c.h.b16 %v193
  %v2029 = vunpack.c.l.b16 %v194
  %v2030 = vunpack.c.h.b16 %v194
  %v2031 = vunpack.c.l.b16 %v195
  %v2032 = vunpack.c.h.b16 %v195
  %v2033 = vunpack.c.l.b16 %v196
  %v2034 = vunpack.c.h.b16 %v196
  %v2035 = vunpack.c.l.b16 %v197
  %v2036 = vunpack.c.h.b16 %v197
  %v2037 = vunpack.c.l.b16 %v198
  %v2038 = vunpack.c.h.b16 %v198
  %v2039 = vunpack.c.l.b16 %v199
  %v2040 = vunpack.c.h.b16 %v199
  %v2041 = vunpack.c.l.b16 %v200
  %v2042 = vunpack.c.h.b16 %v200
  %v2043 = vunpack.c.l.b16 %v201
  %v2044 = vunpack.c.h.b16 %v201
  %v2045 = vunpack.c.l.b16 %v202
  %v2046 = vunpack.c.h.b16 %v202
  %v2047 = vunpack.c.l.b16 %v203
  %v2048 = vunpack.c.h.b16 %v203
  %v2049 = vunpack.c.l.b16 %v204
  %v2050 = vunpack.c.h.b16 %v204
  %v2051 = vunpack.c.l.b16 %v205
  %v2052 = vunpack.c.h.b16 %v205
  %v2053 = vunpack.c.l.b16 %v206
  %v2054 = vunpack.c.h.b16 %v206
  %v2055 = vunpack.c.l.b16 %v207
  %v2056 = vunpack.c.h.b16 %v207
  %v2057 = vunpack.c.l.b16 %v208
  %v2058 = vunpack.c.h.b16 %v208
  %v2059 = vunpack.c.l.b16 %v209
  %v2060 = vunpack.c.h.b16 %v209
  %v2061 = vunpack.c.l.b16 %v210
  %v2062 = vunpack.c.h.b16 %v210
  %v2063 = vunpack.c.l.b16 %v211
  %v2064 = vunpack.c.h.b16 %v211
  %v2065 = vunpack.c.l.b16 %v212
  %v2066 = vunpack.c.h.b16 %v212
  %v2067 = vunpack.c.l.b16 %v213
  %v2068 = vunpack.c.h.b16 %v213
  %v2069 = vunpack.c.l.b16 %v214
  %v2070 = vunpack.c.h.b16 %v214
  %v2071 = vunpack.c.l.b16 %v215
  %v2072 = vunpack.c.h.b16 %v215
  %v2073 = vunpack.c.l.b16 %v216
  %v2074 = vunpack.c.h.b16 %v216
  %v2075 = vunpack.c.l.b16 %v217
  %v2076 = vunpack.c.h.b16 %v217
  %v2077 = vunpack.c.l.b16 %v218
  %v2078 = vunpack.c.h.b16 %v218
  %v2079 = vunpack.c.l.b16 %v219
  %v2080 = vunpack.c.h.b16 %v219
  %v2081 = vunpack.c.l.b16 %v220
  %v2082 = vunpack.c.h.b16 %v220
  %v2083 = vunpack.c.l.b16 %v221
  %v2084 = vunpack.c.h.b16 %v221
  %v2085 = vunpack.c.l.b16 %v222
  %v2086 = vunpack.c.h.b16 %v222
  %v2087 = vunpack.c.l.b16 %v223
  %v2088 = vunpack.c.h.b16 %v223
  %v2089 = vunpack.c.l.b16 %v224
  %v2090 = vunpack.c.h.b16 %v224
  %v2091 = vunpack.c.l.b16 %v225
  %v2092 = vunpack.c.h.b16 %v225
  %v2093 = vunpack.c.l.b16 %v226
  %v2094 = vunpack.c.h.b16 %v226
  %v2095 = vunpack.c.l.b16 %v227
  %v2096 = vunpack.c.h.b16 %v227
  %v2097 = vunpack.c.l.b16 %v228
  %v2098 = vunpack.c.h.b16 %v228
  %v2099 = vunpack.c.l.b16 %v229
  %v2100 = vunpack.c.h.b16 %v229
  %v2101 = vunpack.c.l.b16 %v230
  %v2102 = vunpack.c.h.b16 %v230
  %v2103 = vunpack.c.l.b16 %v231
  %v2104 = vunpack.c.h.b16 %v231
  %v2105 = vunpack.c.l.b16 %v232
  %v2106 = vunpack.c.h.b16 %v232
  %v2107 = vunpack.c.l.b16 %v233
  %v2108 = vunpack.c.h.b16 %v233
  %v2109 = vunpack.c.l.b16 %v234
  %v2110 = vunpack.c.h.b16 %v234
  %v2111 = vunpack.c.l.b16 %v235
  %v2112 = vunpack.c.h.b16 %v235
  %v2113 = vunpack.c.l.b16 %v236
  %v2114 = vunpack.c.h.b16 %v236
  %v2115 = vunpack.c.l.b16 %v237
  %v2116 = vunpack.c.h.b16 %v237
  %v2117 = vunpack.c.l.b16 %v238
  %v2118 = vunpack.c.h.b16 %v238
  %v2119 = vunpack.c.l.b16 %v239
  %v2120 = vunpack.c.h.b16 %v239
  %v2121 = vunpack.c.l.b16 %v240
  %v2122 = vunpack.c.h.b16 %v240
  %v2123 = vunpack.c.l.b16 %v241
  %v2124 = vunpack.c.h.b16 %v241
  %v2125 = vunpack.c.l.b16 %v242
  %v2126 = vunpack.c.h.b16 %v242
  %v2127 = vunpack.c.l.b16 %v243
  %v2128 = vunpack.c.h.b16 %v243
  %v2129 = vunpack.c.l.b16 %v244
  %v2130 = vunpack.c.h.b16 %v244
  %v2131 = vunpack.c.l.b16 %v245
  %v2132 = vunpack.c.h.b16 %v245
  %v2133 = vunpack.c.l.b16 %v246
  %v2134 = vunpack.c.h.b16 %v246
  %v2135 = vunpack.c.l.b16 %v247
  %v2136 = vunpack.c.h.b16 %v247
  %v2137 = vunpack.c.l.b16 %v248
  %v2138 = vunpack.c.h.b16 %v248
  %v2139 = vunpack.c.l.b16 %v249
  %v2140 = vunpack.c.h.b16 %v249
  %v2141 = vunpack.c.l.b16 %v250
  %v2142 = vunpack.c.h.b16 %v250
  %v2143 = vunpack.c.l.b16 %v251
  %v2144 = vunpack.c.h.b16 %v251
  %v2145 = vunpack.c.l.b16 %v252
  %v2146 = vunpack.c.h.b16 %v252
  %v2147 = vunpack.c.l.b16 %v253
  %v2148 = vunpack.c.h.b16 %v253
  %v2149 = vunpack.c.l.b16 %v254
  %v2150 = vunpack.c.h.b16 %v254
  %v2151 = vunpack.c.l.b16 %v255
  %v2152 = vunpack.c.h.b16 %v255
  %v2153 = vunpack.c.l.b16 %v256
  %v2154 = vunpack.c.h.b16 %v256
  %v2155 = vunpack.c.l.b16 %v257
  %v2156 = vunpack.c.h.b16 %v257
  %v2157 = vunpack.c.l.b16 %v258
  %v2158 = vunpack.c.h.b16 %v258
  %v2159 = vunpack.c.l.b16 %v259
  %v2160 = vunpack.c.h.b16 %v259
  %v2161 = vunpack.c.l.b16 %v260
  %v2162 = vunpack.c.h.b16 %v260
  %v2163 = vunpack.c.l.b16 %v261
  %v2164 = vunpack.c.h.b16 %v261
  %v2165 = vunpack.c.l.b16 %v262
  %v2166 = vunpack.c.h.b16 %v262
  %v2167 = vunpack.c.l.b16 %v263
  %v2168 = vunpack.c.h.b16 %v263
  %v2169 = vunpack.c.l.b16 %v264
  %v2170 = vunpack.c.h.b16 %v264
  %v2171 = vunpack.c.l.b16 %v265
  %v2172 = vunpack.c.h.b16 %v265
  %v2173 = vunpack.c.l.b16 %v266
  %v2174 = vunpack.c.h.b16 %v266
  %v2175 = vunpack.c.l.b16 %v267
  %v2176 = vunpack.c.h.b16 %v267
  %v2177 = vunpack.c.l.b16 %v268
  %v2178 = vunpack.c.h.b16 %v268
  %v2179 = vunpack.c.l.b16 %v269
  %v2180 = vunpack.c.h.b16 %v269
  %v2181 = vunpack.c.l.b16 %v270
  %v2182 = vunpack.c.h.b16 %v270
  %v2183 = vunpack.c.l.b16 %v271
  %v2184 = vunpack.c.h.b16 %v271
  %v2185 = vunpack.c.l.b16 %v272
  %v2186 = vunpack.c.h.b16 %v272
  %v2187 = vunpack.c.l.b16 %v273
  %v2188 = vunpack.c.h.b16 %v273
  %v2189 = vunpack.c.l.b16 %v274
  %v2190 = vunpack.c.h.b16 %v274
  %v2191 = vunpack.c.l.b16 %v275
  %v2192 = vunpack.c.h.b16 %v275
  %v2193 = vunpack.c.l.b16 %v276
  %v2194 = vunpack.c.h.b16 %v276
  %v2195 = vunpack.c.l.b16 %v277
  %v2196 = vunpack.c.h.b16 %v277
  %v2197 = vunpack.c.l.b16 %v278
  %v2198 = vunpack.c.h.b16 %v278
  %v2199 = vunpack.c.l.b16 %v279
  %v2200 = vunpack.c.h.b16 %v279
  %v2201 = vunpack.c.l.b16 %v280
  %v2202 = vunpack.c.h.b16 %v280
  %v2203 = vunpack.c.l.b16 %v281
  %v2204 = vunpack.c.h.b16 %v281
  %v2205 = vunpack.c.l.b16 %v282
  %v2206 = vunpack.c.h.b16 %v282
  %v2207 = vunpack.c.l.b16 %v283
  %v2208 = vunpack.c.h.b16 %v283
  %v2209 = vunpack.c.l.b16 %v284
  %v2210 = vunpack.c.h.b16 %v284
  %v2211 = vunpack.c.l.b16 %v285
  %v2212 = vunpack.c.h.b16 %v285
  %v2213 = vunpack.c.l.b16 %v286
  %v2214 = vunpack.c.h.b16 %v286
  %v2215 = vunpack.c.l.b16 %v287
  %v2216 = vunpack.c.h.b16 %v287
  %v2217 = vunpack.c.l.b16 %v288
  %v2218 = vunpack.c.h.b16 %v288
  %v2219 = vunpack.c.l.b16 %v289
  %v2220 = vunpack.c.h.b16 %v289
  %v2221 = vunpack.c.l.b16 %v290
  %v2222 = vunpack.c.h.b16 %v290
  %v2223 = vunpack.c.l.b16 %v291
  %v2224 = vunpack.c.h.b16 %v291
  %v2225 = vunpack.c.l.b16 %v292
  %v2226 = vunpack.c.h.b16 %v292
  %v2227 = vunpack.c.l.b16 %v293
  %v2228 = vunpack.c.h.b16 %v293
  %v2229 = vunpack.c.l.b16 %v294
  %v2230 = vunpack.c.h.b16 %v294
  %v2231 = vunpack.c.l.b16 %v295
  %v2232 = vunpack.c.h.b16 %v295
  %v2233 = vunpack.c.l.b16 %v296
  %v2234 = vunpack.c.h.b16 %v296
  %v2235 = vunpack.c.l.b16 %v297
  %v2236 = vunpack.c.h.b16 %v297
  %v2237 = vunpack.c.l.b16 %v298
  %v2238 = vunpack.c.h.b16 %v298
  %v2239 = vunpack.c.l.b16 %v299
  %v2240 = vunpack.c.h.b16 %v299
  %v2241 = vunpack.c.l.b16 %v300
  %v2242 = vunpack.c.h.b16 %v300
  %v2243 = vunpack.c.l.b16 %v301
  %v2244 = vunpack.c.h.b16 %v301
  %v2245 = vunpack.c.l.b16 %v302
  %v2246 = vunpack.c.h.b16 %v302
  %v2247 = vunpack.c.l.b16 %v303
  %v2248 = vunpack.c.h.b16 %v303
  %v2249 = vunpack.c.l.b16 %v304
  %v2250 = vunpack.c.h.b16 %v304
  %v2251 = vunpack.c.l.b16 %v305
  %v2252 = vunpack.c.h.b16 %v305
  %v2253 = vunpack.c.l.b16 %v306
  %v2254 = vunpack.c.h.b16 %v306
  %v2255 = vunpack.c.l.b16 %v307
  %v2256 = vunpack.c.h.b16 %v307
  %v2257 = vunpack.c.l.b16 %v308
  %v2258 = vunpack.c.h.b16 %v308
  %v2259 = vunpack.c.l.b16 %v309
  %v2260 = vunpack.c.h.b16 %v309
  %v2261 = vunpack.c.l.b16 %v310
  %v2262 = vunpack.c.h.b16 %v310
  %v2263 = vunpack.c.l.b16 %v311
  %v2264 = vunpack.c.h.b16 %v311
  %v2265 = vunpack.c.l.b16 %v312
  %v2266 = vunpack.c.h.b16 %v312
  %v2267 = vunpack.c.l.b16 %v313
  %v2268 = vunpack.c.h.b16 %v313
  %v2269 = vunpack.c.l.b16 %v314
  %v2270 = vunpack.c.h.b16 %v314
  %v2271 = vunpack.c.l.b16 %v315
  %v2272 = vunpack.c.h.b16 %v315
  %v2273 = vunpack.c.l.b16 %v316
  %v2274 = vunpack.c.h.b16 %v316
  %v2275 = vunpack.c.l.b16 %v317
  %v2276 = vunpack.c.h.b16 %v317
  %v2277 = vunpack.c.l.b16 %v318
  %v2278 = vunpack.c.h.b16 %v318
  %v2279 = vunpack.c.l.b16 %v319
  %v2280 = vunpack.c.h.b16 %v319
  %v2281 = vunpack.c.l.b16 %v320
  %v2282 = vunpack.c.h.b16 %v320
  %v2283 = vunpack.c.l.b16 %v321
  %v2284 = vunpack.c.h.b16 %v321
  %v2285 = vunpack.c.l.b16 %v322
  %v2286 = vunpack.c.h.b16 %v322
  %v2287 = vunpack.c.l.b16 %v323
  %v2288 = vunpack.c.h.b16 %v323
  %v2289 = vunpack.c.l.b16 %v324
  %v2290 = vunpack.c.h.b16 %v324
  %v2291 = vunpack.c.l.b16 %v325
  %v2292 = vunpack.c.h.b16 %v325
  %v2293 = vunpack.c.l.b16 %v326
  %v2294 = vunpack.c.h.b16 %v326
  %v2295 = vunpack.c.l.b16 %v327
  %v2296 = vunpack.c.h.b16 %v327
  %v2297 = vunpack.c.l.b16 %v328
  %v2298 = vunpack.c.h.b16 %v328
  %v2299 = vunpack.c.l.b16 %v329
  %v2300 = vunpack.c.h.b16 %v329
  %v2301 = vunpack.c.l.b16 %v330
  %v2302 = vunpack.c.h.b16 %v330
  %v2303 = vunpack.c.l.b16 %v331
  %v2304 = vunpack.c.h.b16 %v331
  %v2305 = vunpack.c.l.b16 %v332
  %v2306 = vunpack.c.h.b16 %v332
  %v2307 = vunpack.c.l.b16 %v333
  %v2308 = vunpack.c.h.b16 %v333
  %v2309 = vunpack.c.l.b16 %v334
  %v2310 = vunpack.c.h.b16 %v334
  %v2311 = vunpack.c.l.b16 %v335
  %v2312 = vunpack.c.h.b16 %v335
  %v2313 = vunpack.c.l.b16 %v336
  %v2314 = vunpack.c.h.b16 %v336
  %v2315 = vunpack.c.l.b16 %v337
  %v2316 = vunpack.c.h.b16 %v337
  %v2317 = vunpack.c.l.b16 %v338
  %v2318 = vunpack.c.h.b16 %v338
  %v2319 = vunpack.c.l.b16 %v339
  %v2320 = vunpack.c.h.b16 %v339
  %v2321 = vunpack.c.l.b16 %v340
  %v2322 = vunpack.c.h.b16 %v340
  %v2323 = vunpack.c.l.b16 %v341
  %v2324 = vunpack.c.h.b16 %v341
  %v2325 = vunpack.c.l.b16 %v342
  %v2326 = vunpack.c.h.b16 %v342
  %v2327 = vunpack.c.l.b16 %v343
  %v2328 = vunpack.c.h.b16 %v343
  %v2329 = vunpack.c.l.b16 %v344
  %v2330 = vunpack.c.h.b16 %v344
  %v2331 = vunpack.c.l.b16 %v345
  %v2332 = vunpack.c.h.b16 %v345
  %v2333 = vunpack.c.l.b16 %v346
  %v2334 = vunpack.c.h.b16 %v346
  %v2335 = vunpack.c.l.b16 %v347
  %v2336 = vunpack.c.h.b16 %v347
  %v2337 = vunpack.c.l.b16 %v348
  %v2338 = vunpack.c.h.b16 %v348
  %v2339 = vunpack.c.l.b16 %v349
  %v2340 = vunpack.c.h.b16 %v349
  %v2341 = vunpack.c.l.b16 %v350
  %v2342 = vunpack.c.h.b16 %v350
  %v2343 = vunpack.c.l.b16 %v351
  %v2344 = vunpack.c.h.b16 %v351
  %v2345 = vunpack.c.l.b16 %v352
  %v2346 = vunpack.c.h.b16 %v352
  %v2347 = vunpack.c.l.b16 %v353
  %v2348 = vunpack.c.h.b16 %v353
  %v2349 = vunpack.c.l.b16 %v354
  %v2350 = vunpack.c.h.b16 %v354
  %v2351 = vunpack.c.l.b16 %v355
  %v2352 = vunpack.c.h.b16 %v355
  %v2353 = vunpack.c.l.b16 %v356
  %v2354 = vunpack.c.h.b16 %v356
  %v2355 = vunpack.c.l.b16 %v357
  %v2356 = vunpack.c.h.b16 %v357
  %v2357 = vunpack.c.l.b16 %v358
  %v2358 = vunpack.c.h.b16 %v358
  %v2359 = vunpack.c.l.b16 %v359
  %v2360 = vunpack.c.h.b16 %v359
  %v2361 = vunpack.c.l.b16 %v360
  %v2362 = vunpack.c.h.b16 %v360
  %v2363 = vunpack.c.l.b16 %v361
  %v2364 = vunpack.c.h.b16 %v361
  %v2365 = vunpack.c.l.b16 %v362
  %v2366 = vunpack.c.h.b16 %v362
  %v2367 = vunpack.c.l.b16 %v363
  %v2368 = vunpack.c.h.b16 %v363
  %v2369 = vunpack.c.l.b16 %v364
  %v2370 = vunpack.c.h.b16 %v364
  %v2371 = vunpack.c.l.b16 %v365
  %v2372 = vunpack.c.h.b16 %v365
  %v2373 = vunpack.c.l.b16 %v366
  %v2374 = vunpack.c.h.b16 %v366
  %v2375 = vunpack.c.l.b16 %v367
  %v2376 = vunpack.c.h.b16 %v367
  %v2377 = vunpack.c.l.b16 %v368
  %v2378 = vunpack.c.h.b16 %v368
  %v2379 = vunpack.c.l.b16 %v369
  %v2380 = vunpack.c.h.b16 %v369
  %v2381 = vunpack.c.l.b16 %v370
  %v2382 = vunpack.c.h.b16 %v370
  %v2383 = vunpack.c.l.b16 %v371
  %v2384 = vunpack.c.h.b16 %v371
  %v2385 = vunpack.c.l.b16 %v372
  %v2386 = vunpack.c.h.b16 %v372
  %v2387 = vunpack.c.l.b16 %v373
  %v2388 = vunpack.c.h.b16 %v373
  %v2389 = vunpack.c.l.b16 %v374
  %v2390 = vunpack.c.h.b16 %v374
  %v2391 = vunpack.c.l.b16 %v375
  %v2392 = vunpack.c.h.b16 %v375
  %v2393 = vunpack.c.l.b16 %v376
  %v2394 = vunpack.c.h.b16 %v376
  %v2395 = vunpack.c.l.b16 %v377
  %v2396 = vunpack.c.h.b16 %v377
  %v2397 = vunpack.c.l.b16 %v378
  %v2398 = vunpack.c.h.b16 %v378
  %v2399 = vunpack.c.l.b16 %v379
  %v2400 = vunpack.c.h.b16 %v379
  %v2401 = vunpack.c.l.b16 %v380
  %v2402 = vunpack.c.h.b16 %v380
  %v2403 = vunpack.c.l.b16 %v381
  %v2404 = vunpack.c.h.b16 %v381
  %v2405 = vunpack.c.l.b16 %v382
  %v2406 = vunpack.c.h.b16 %v382
  %v2407 = vunpack.c.l.b16 %v383
  %v2408 = vunpack.c.h.b16 %v383
  %v2409 = vunpack.c.l.b16 %v384
  %v2410 = vunpack.c.h.b16 %v384
  %v2411 = vunpack.c.l.b16 %v385
  %v2412 = vunpack.c.h.b16 %v385
  %v2413 = vunpack.c.l.b16 %v386
  %v2414 = vunpack.c.h.b16 %v386
  %v2415 = vunpack.c.l.b16 %v387
  %v2416 = vunpack.c.h.b16 %v387
  %v2417 = vunpack.c.l.b16 %v388
  %v2418 = vunpack.c.h.b16 %v388
  %v2419 = vunpack.c.l.b16 %v389
  %v2420 = vunpack.c.h.b16 %v389
  %v2421 = vunpack.c.l.b16 %v390
  %v2422 = vunpack.c.h.b16 %v390
  %v2423 = vunpack.c.l.b16 %v391
  %v2424 = vunpack.c.h.b16 %v391
  %v2425 = vunpack.c.l.b16 %v392
  %v2426 = vunpack.c.h.b16 %v392
  %v2427 = vunpack.c.l.b16 %v393
  %v2428 = vunpack.c.h.b16 %v393
  %v2429 = vunpack.c.l.b16 %v394
  %v2430 = vunpack.c.h.b16 %v394
  %v2431 = vunpack.c.l.b16 %v395
  %v2432 = vunpack.c.h.b16 %v395
  %v2433 = vunpack.c.l.b16 %v396
  %v2434 = vunpack.c.h.b16 %v396
  %v2435 = vunpack.c.l.b16 %v397
  %v2436 = vunpack.c.h.b16 %v397
  %v2437 = vunpack.c.l.b16 %v398
  %v2438 = vunpack.c.h.b16 %v398
  %v2439 = vunpack.c.l.b16 %v399
  %v2440 = vunpack.c.h.b16 %v399
  %v2441 = vunpack.c.l.b16 %v400
  %v2442 = vunpack.c.h.b16 %v400
  %v2443 = vunpack.c.l.b16 %v401
  %v2444 = vunpack.c.h.b16 %v401
  %v2445 = vunpack.c.l.b16 %v402
  %v2446 = vunpack.c.h.b16 %v402
  %v2447 = vunpack.c.l.b16 %v403
  %v2448 = vunpack.c.h.b16 %v403
  %v2449 = vunpack.c.l.b16 %v404
  %v2450 = vunpack.c.h.b16 %v404
  %v2451 = vunpack.c.l.b16 %v405
  %v2452 = vunpack.c.h.b16 %v405
  %v2453 = vunpack.c.l.b16 %v406
  %v2454 = vunpack.c.h.b16 %v406
  %v2455 = vunpack.c.l.b16 %v407
  %v2456 = vunpack.c.h.b16 %v407
  %v2457 = vunpack.c.l.b16 %v408
  %v2458 = vunpack.c.h.b16 %v408
  %v2459 = vunpack.c.l.b16 %v409
  %v2460 = vunpack.c.h.b16 %v409
  %v2461 = vunpack.c.l.b16 %v410
  %v2462 = vunpack.c.h.b16 %v410
  %v2463 = vunpack.c.l.b16 %v411
  %v2464 = vunpack.c.h.b16 %v411
  %v2465 = vunpack.c.l.b16 %v412
  %v2466 = vunpack.c.h.b16 %v412
  %v2467 = vunpack.c.l.b16 %v413
  %v2468 = vunpack.c.h.b16 %v413
  %v2469 = vunpack.c.l.b16 %v414
  %v2470 = vunpack.c.h.b16 %v414
  %v2471 = vunpack.c.l.b16 %v415
  %v2472 = vunpack.c.h.b16 %v415
  %v2473 = vunpack.c.l.b16 %v416
  %v2474 = vunpack.c.h.b16 %v416
  %v2475 = vunpack.c.l.b16 %v417
  %v2476 = vunpack.c.h.b16 %v417
  %v2477 = vunpack.c.l.b16 %v418
  %v2478 = vunpack.c.h.b16 %v418
  %v2479 = vunpack.c.l.b16 %v419
  %v2480 = vunpack.c.h.b16 %v419
  %v2481 = vunpack.c.l.b16 %v420
  %v2482 = vunpack.c.h.b16 %v420
  %v2483 = vunpack.c.l.b16 %v421
  %v2484 = vunpack.c.h.b16 %v421
  %v2485 = vunpack.c.l.b16 %v422
  %v2486 = vunpack.c.h.b16 %v422
  %v2487 = vunpack.c.l.b16 %v423
  %v2488 = vunpack.c.h.b16 %v423
  %v2489 = vunpack.c.l.b16 %v424
  %v2490 = vunpack.c.h.b16 %v424
  %v2491 = vunpack.c.l.b16 %v425
  %v2492 = vunpack.c.h.b16 %v425
  %v2493 = vunpack.c.l.b16 %v426
  %v2494 = vunpack.c.h.b16 %v426
  %v2495 = vunpack.c.l.b16 %v427
  %v2496 = vunpack.c.h.b16 %v427
  %v2497 = vunpack.c.l.b16 %v428
  %v2498 = vunpack.c.h.b16 %v428
  %v2499 = vunpack.c.l.b16 %v429
  %v2500 = vunpack.c.h.b16 %v429
  %v2501 = vunpack.c.l.b16 %v430
  %v2502 = vunpack.c.h.b16 %v430
  %v2503 = vunpack.c.l.b16 %v431
  %v2504 = vunpack.c.h.b16 %v431
  %v2505 = vunpack.c.l.b16 %v432
  %v2506 = vunpack.c.h.b16 %v432
  %v2507 = vunpack.c.l.b16 %v433
  %v2508 = vunpack.c.h.b16 %v433
  %v2509 = vunpack.c.l.b16 %v434
  %v2510 = vunpack.c.h.b16 %v434
  %v2511 = vunpack.c.l.b16 %v435
  %v2512 = vunpack.c.h.b16 %v435
  %v2513 = vunpack.c.l.b16 %v436
  %v2514 = vunpack.c.h.b16 %v436
  %v2515 = vunpack.c.l.b16 %v437
  %v2516 = vunpack.c.h.b16 %v437
  %v2517 = vunpack.c.l.b16 %v438
  %v2518 = vunpack.c.h.b16 %v438
  %v2519 = vunpack.c.l.b16 %v439
  %v2520 = vunpack.c.h.b16 %v439
  %v2521 = vunpack.c.l.b16 %v440
  %v2522 = vunpack.c.h.b16 %v440
  %v2523 = vunpack.c.l.b16 %v441
  %v2524 = vunpack.c.h.b16 %v441
  %v2525 = vunpack.c.l.b16 %v442
  %v2526 = vunpack.c.h.b16 %v442
  %v2527 = vunpack.c.l.b16 %v443
  %v2528 = vunpack.c.h.b16 %v443
  %v2529 = vunpack.c.l.b16 %v444
  %v2530 = vunpack.c.h.b16 %v444
  %v2531 = vunpack.c.l.b16 %v445
  %v2532 = vunpack.c.h.b16 %v445
  %v2533 = vunpack.c.l.b16 %v446
  %v2534 = vunpack.c.h.b16 %v446
  %v2535 = vunpack.c.l.b16 %v447
  %v2536 = vunpack.c.h.b16 %v447
  %v2537 = vunpack.c.l.b16 %v448
  %v2538 = vunpack.c.h.b16 %v448
  %v2539 = vunpack.c.l.b16 %v449
  %v2540 = vunpack.c.h.b16 %v449
  %v2541 = vunpack.c.l.b16 %v450
  %v2542 = vunpack.c.h.b16 %v450
  %v2543 = vunpack.c.l.b16 %v451
  %v2544 = vunpack.c.h.b16 %v451
  %v2545 = vunpack.c.l.b16 %v452
  %v2546 = vunpack.c.h.b16 %v452
  %v2547 = vunpack.c.l.b16 %v453
  %v2548 = vunpack.c.h.b16 %v453
  %v2549 = vunpack.c.l.b16 %v454
  %v2550 = vunpack.c.h.b16 %v454
  %v2551 = vunpack.c.l.b16 %v455
  %v2552 = vunpack.c.h.b16 %v455
  %v2553 = vunpack.c.l.b16 %v456
  %v2554 = vunpack.c.h.b16 %v456
  %v2555 = vunpack.c.l.b16 %v457
  %v2556 = vunpack.c.h.b16 %v457
  %v2557 = vunpack.c.l.b16 %v458
  %v2558 = vunpack.c.h.b16 %v458
  %v2559 = vunpack.c.l.b16 %v459
  %v2560 = vunpack.c.h.b16 %v459
  %v2561 = vunpack.c.l.b16 %v460
  %v2562 = vunpack.c.h.b16 %v460
  %v2563 = vunpack.c.l.b16 %v461
  %v2564 = vunpack.c.h.b16 %v461
  %v2565 = vunpack.c.l.b16 %v462
  %v2566 = vunpack.c.h.b16 %v462
  %v2567 = vunpack.c.l.b16 %v463
  %v2568 = vunpack.c.h.b16 %v463
  %v2569 = vunpack.c.l.b16 %v464
  %v2570 = vunpack.c.h.b16 %v464
  %v2571 = vunpack.c.l.b16 %v465
  %v2572 = vunpack.c.h.b16 %v465
  %v2573 = vunpack.c.l.b16 %v466
  %v2574 = vunpack.c.h.b16 %v466
  %v2575 = vunpack.c.l.b16 %v467
  %v2576 = vunpack.c.h.b16 %v467
  %v2577 = vunpack.c.l.b16 %v468
  %v2578 = vunpack.c.h.b16 %v468
  %v2579 = vunpack.c.l.b16 %v469
  %v2580 = vunpack.c.h.b16 %v469
  %v2581 = vunpack.c.l.b16 %v470
  %v2582 = vunpack.c.h.b16 %v470
  %v2583 = vunpack.c.l.b16 %v471
  %v2584 = vunpack.c.h.b16 %v471
  %v2585 = vunpack.c.l.b16 %v472
  %v2586 = vunpack.c.h.b16 %v472
  %v2587 = vunpack.c.l.b16 %v473
  %v2588 = vunpack.c.h.b16 %v473
  %v2589 = vunpack.c.l.b16 %v474
  %v2590 = vunpack.c.h.b16 %v474
  %v2591 = vunpack.c.l.b16 %v475
  %v2592 = vunpack.c.h.b16 %v475
  %v2593 = vunpack.c.l.b16 %v476
  %v2594 = vunpack.c.h.b16 %v476
  %v2595 = vunpack.c.l.b16 %v477
  %v2596 = vunpack.c.h.b16 %v477
  %v2597 = vunpack.c.l.b16 %v478
  %v2598 = vunpack.c.h.b16 %v478
  %v2599 = vunpack.c.l.b16 %v479
  %v2600 = vunpack.c.h.b16 %v479
  %v2601 = vunpack.c.l.b16 %v480
  %v2602 = vunpack.c.h.b16 %v480
  %v2603 = vunpack.c.l.b16 %v481
  %v2604 = vunpack.c.h.b16 %v481
  %v2605 = vunpack.c.l.b16 %v482
  %v2606 = vunpack.c.h.b16 %v482
  %v2607 = vunpack.c.l.b16 %v483
  %v2608 = vunpack.c.h.b16 %v483
  %v2609 = vunpack.c.l.b16 %v484
  %v2610 = vunpack.c.h.b16 %v484
  %v2611 = vunpack.c.l.b16 %v485
  %v2612 = vunpack.c.h.b16 %v485
  %v2613 = vunpack.c.l.b16 %v486
  %v2614 = vunpack.c.h.b16 %v486
  %v2615 = vunpack.c.l.b16 %v487
  %v2616 = vunpack.c.h.b16 %v487
  %v2617 = vunpack.c.l.b16 %v488
  %v2618 = vunpack.c.h.b16 %v488
  %v2619 = vunpack.c.l.b16 %v489
  %v2620 = vunpack.c.h.b16 %v489
  %v2621 = vunpack.c.l.b16 %v490
  %v2622 = vunpack.c.h.b16 %v490
  %v2623 = vunpack.c.l.b16 %v491
  %v2624 = vunpack.c.h.b16 %v491
  %v2625 = vunpack.c.l.b16 %v492
  %v2626 = vunpack.c.h.b16 %v492
  %v2627 = vunpack.c.l.b16 %v493
  %v2628 = vunpack.c.h.b16 %v493
  %v2629 = vunpack.c.l.b16 %v494
  %v2630 = vunpack.c.h.b16 %v494
  %v2631 = vunpack.c.l.b16 %v495
  %v2632 = vunpack.c.h.b16 %v495
  %v2633 = vunpack.c.l.b16 %v496
  %v2634 = vunpack.c.h.b16 %v496
  %v2635 = vunpack.c.l.b16 %v497
  %v2636 = vunpack.c.h.b16 %v497
  %v2637 = vunpack.c.l.b16 %v498
  %v2638 = vunpack.c.h.b16 %v498
  %v2639 = vunpack.c.l.b16 %v499
  %v2640 = vunpack.c.h.b16 %v499
  %v2641 = vunpack.c.l.b16 %v500
  %v2642 = vunpack.c.h.b16 %v500
  %v2643 = vunpack.c.l.b16 %v501
  %v2644 = vunpack.c.h.b16 %v501
  %v2645 = vunpack.c.l.b16 %v502
  %v2646 = vunpack.c.h.b16 %v502
  %v2647 = vunpack.c.l.b16 %v503
  %v2648 = vunpack.c.h.b16 %v503
  %v2649 = vunpack.c.l.b16 %v504
  %v2650 = vunpack.c.h.b16 %v504
  %v2651 = vunpack.c.l.b16 %v505
  %v2652 = vunpack.c.h.b16 %v505
  %v2653 = vunpack.c.l.b16 %v506
  %v2654 = vunpack.c.h.b16 %v506
  %v2655 = vunpack.c.l.b16 %v507
  %v2656 = vunpack.c.h.b16 %v507
  %v2657 = vunpack.c.l.b16 %v508
  %v2658 = vunpack.c.h.b16 %v508
  %v2659 = vunpack.c.l.b16 %v509
  %v2660 = vunpack.c.h.b16 %v509
  %v2661 = vunpack.c.l.b16 %v510
  %v2662 = vunpack.c.h.b16 %v510
  %v2663 = vunpack.c.l.b16 %v511
  %v2664 = vunpack.c.h.b16 %v511
  %v2665 = vunpack.c.l.b16 %v512
  %v2666 = vunpack.c.h.b16 %v512
  %v2667 = vunpack.c.l.b16 %v513
  %v2668 = vunpack.c.h.b16 %v513
  %v2669 = vunpack.c.l.b16 %v514
  %v2670 = vunpack.c.h.b16 %v514
  %v2671 = vunpack.c.l.b16 %v515
  %v2672 = vunpack.c.h.b16 %v515
  %v2673 = vunpack.c.l.b16 %v516
  %v2674 = vunpack.c.h.b16 %v516
  %v2675 = vunpack.c.l.b16 %v517
  %v2676 = vunpack.c.h.b16 %v517
  %v2677 = vunpack.c.l.b16 %v518
  %v2678 = vunpack.c.h.b16 %v518
  %v2679 = vunpack.c.l.b16 %v519
  %v2680 = vunpack.c.h.b16 %v519
  %v2681 = vunpack.c.l.b16 %v520
  %v2682 = vunpack.c.h.b16 %v520
  %v2683 = vunpack.c.l.b16 %v521
  %v2684 = vunpack.c.h.b16 %v521
  %v2685 = vunpack.c.l.b16 %v522
  %v2686 = vunpack.c.h.b16 %v522
  %v2687 = vunpack.c.l.b16 %v523
  %v2688 = vunpack.c.h.b16 %v523
  %v2689 = vunpack.c.l.b16 %v524
  %v2690 = vunpack.c.h.b16 %v524
  %v2691 = vunpack.c.l.b16 %v525
  %v2692 = vunpack.c.h.b16 %v525
  %v2693 = vunpack.c.l.b16 %v526
  %v2694 = vunpack.c.h.b16 %v526
  %v2695 = vunpack.c.l.b16 %v527
  %v2696 = vunpack.c.h.b16 %v527
  %v2697 = vunpack.c.l.b16 %v528
  %v2698 = vunpack.c.h.b16 %v528
  %v2699 = vunpack.c.l.b16 %v529
  %v2700 = vunpack.c.h.b16 %v529
  %v2701 = vunpack.c.l.b16 %v530
  %v2702 = vunpack.c.h.b16 %v530
  %v2703 = vunpack.c.l.b16 %v531
  %v2704 = vunpack.c.h.b16 %v531
  %v2705 = vunpack.c.l.b16 %v532
  %v2706 = vunpack.c.h.b16 %v532
  %v2707 = vunpack.c.l.b16 %v533
  %v2708 = vunpack.c.h.b16 %v533
  %v2709 = vunpack.c.l.b16 %v534
  %v2710 = vunpack.c.h.b16 %v534
  %v2711 = vunpack.c.l.b16 %v535
  %v2712 = vunpack.c.h.b16 %v535
  %v2713 = vunpack.c.l.b16 %v536
  %v2714 = vunpack.c.h.b16 %v536
  %v2715 = vunpack.c.l.b16 %v537
  %v2716 = vunpack.c.h.b16 %v537
  %v2717 = vunpack.c.l.b16 %v538
  %v2718 = vunpack.c.h.b16 %v538
  %v2719 = vunpack.c.l.b16 %v539
  %v2720 = vunpack.c.h.b16 %v539
  %v2721 = vunpack.c.l.b16 %v540
  %v2722 = vunpack.c.h.b16 %v540
  %v2723 = vunpack.c.l.b16 %v541
  %v2724 = vunpack.c.h.b16 %v541
  %v2725 = vunpack.c.l.b16 %v542
  %v2726 = vunpack.c.h.b16 %v542
  %v2727 = vunpack.c.l.b16 %v543
  %v2728 = vunpack.c.h.b16 %v543
  %v2729 = vunpack.c.l.b16 %v544
  %v2730 = vunpack.c.h.b16 %v544
  %v2731 = vunpack.c.l.b16 %v545
  %v2732 = vunpack.c.h.b16 %v545
  %v2733 = vunpack.c.l.b16 %v546
  %v2734 = vunpack.c.h.b16 %v546
  %v2735 = vunpack.c.l.b16 %v547
  %v2736 = vunpack.c.h.b16 %v547
  %v2737 = vunpack.c.l.b16 %v548
  %v2738 = vunpack.c.h.b16 %v548
  %v2739 = vunpack.c.l.b16 %v549
  %v2740 = vunpack.c.h.b16 %v549
  %v2741 = vunpack.c.l.b16 %v550
  %v2742 = vunpack.c.h.b16 %v550
  %v2743 = vunpack.c.l.b16 %v551
  %v2744 = vunpack.c.h.b16 %v551
  %v2745 = vunpack.c.l.b16 %v552
  %v2746 = vunpack.c.h.b16 %v552
  %v2747 = vunpack.c.l.b16 %v553
  %v2748 = vunpack.c.h.b16 %v553
  %v2749 = vunpack.c.l.b16 %v554
  %v2750 = vunpack.c.h.b16 %v554
  %v2751 = vunpack.c.l.b16 %v555
  %v2752 = vunpack.c.h.b16 %v555
  %v2753 = vunpack.c.l.b16 %v556
  %v2754 = vunpack.c.h.b16 %v556
  %v2755 = vunpack.c.l.b16 %v557
  %v2756 = vunpack.c.h.b16 %v557
  %v2757 = vunpack.c.l.b16 %v558
  %v2758 = vunpack.c.h.b16 %v558
  %v2759 = vunpack.c.l.b16 %v559
  %v2760 = vunpack.c.h.b16 %v559
  %v2761 = vunpack.c.l.b16 %v560
  %v2762 = vunpack.c.h.b16 %v560
  %v2763 = vunpack.c.l.b16 %v561
  %v2764 = vunpack.c.h.b16 %v561
  %v2765 = vunpack.c.l.b16 %v562
  %v2766 = vunpack.c.h.b16 %v562
  %v2767 = vunpack.c.l.b16 %v563
  %v2768 = vunpack.c.h.b16 %v563
  %v2769 = vunpack.c.l.b16 %v564
  %v2770 = vunpack.c.h.b16 %v564
  %v2771 = vunpack.c.l.b16 %v565
  %v2772 = vunpack.c.h.b16 %v565
  %v2773 = vunpack.c.l.b16 %v566
  %v2774 = vunpack.c.h.b16 %v566
  %v2775 = vunpack.c.l.b16 %v567
  %v2776 = vunpack.c.h.b16 %v567
  %v2777 = vunpack.c.l.b16 %v568
  %v2778 = vunpack.c.h.b16 %v568
  %v2779 = vunpack.c.l.b16 %v569
  %v2780 = vunpack.c.h.b16 %v569
  %v2781 = vunpack.c.l.b16 %v570
  %v2782 = vunpack.c.h.b16 %v570
  %v2783 = vunpack.c.l.b16 %v571
  %v2784 = vunpack.c.h.b16 %v571
  %v2785 = vunpack.c.l.b16 %v572
  %v2786 = vunpack.c.h.b16 %v572
  %v2787 = vunpack.c.l.b16 %v573
  %v2788 = vunpack.c.h.b16 %v573
  %v2789 = vunpack.c.l.b16 %v574
  %v2790 = vunpack.c.h.b16 %v574
  %v2791 = vunpack.c.l.b16 %v575
  %v2792 = vunpack.c.h.b16 %v575
  %v2793 = vunpack.c.l.b16 %v576
  %v2794 = vunpack.c.h.b16 %v576
  %v2795 = vunpack.c.l.b16 %v577
  %v2796 = vunpack.c.h.b16 %v577
  %v2797 = vunpack.c.l.b16 %v578
  %v2798 = vunpack.c.h.b16 %v578
  %v2799 = vunpack.c.l.b16 %v579
  %v2800 = vunpack.c.h.b16 %v579
  %v2801 = vunpack.c.l.b16 %v580
  %v2802 = vunpack.c.h.b16 %v580
  %v2803 = vunpack.c.l.b16 %v581
  %v2804 = vunpack.c.h.b16 %v581
  %v2805 = vunpack.c.l.b16 %v582
  %v2806 = vunpack.c.h.b16 %v582
  %v2807 = vunpack.c.l.b16 %v583
  %v2808 = vunpack.c.h.b16 %v583
  %v2809 = vunpack.c.l.b16 %v584
  %v2810 = vunpack.c.h.b16 %v584
  %v2811 = vunpack.c.l.b16 %v585
  %v2812 = vunpack.c.h.b16 %v585
  %v2813 = vunpack.c.l.b16 %v586
  %v2814 = vunpack.c.h.b16 %v586
  %v2815 = vunpack.c.l.b16 %v587
  %v2816 = vunpack.c.h.b16 %v587
  %v2817 = vunpack.c.l.b16 %v588
  %v2818 = vunpack.c.h.b16 %v588
  %v2819 = vunpack.c.l.b16 %v589
  %v2820 = vunpack.c.h.b16 %v589
  %v2821 = vunpack.c.l.b16 %v590
  %v2822 = vunpack.c.h.b16 %v590
  %v2823 = vunpack.c.l.b16 %v591
  %v2824 = vunpack.c.h.b16 %v591
  %v2825 = vunpack.c.l.b16 %v592
  %v2826 = vunpack.c.h.b16 %v592
  %v2827 = vunpack.c.l.b16 %v593
  %v2828 = vunpack.c.h.b16 %v593
  %v2829 = vunpack.c.l.b16 %v594
  %v2830 = vunpack.c.h.b16 %v594
  %v2831 = vunpack.c.l.b16 %v595
  %v2832 = vunpack.c.h.b16 %v595
  %v2833 = vunpack.c.l.b16 %v596
  %v2834 = vunpack.c.h.b16 %v596
  %v2835 = vunpack.c.l.b16 %v597
  %v2836 = vunpack.c.h.b16 %v597
  %v2837 = vunpack.c.l.b16 %v598
  %v2838 = vunpack.c.h.b16 %v598
  %v2839 = vunpack.c.l.b16 %v599
  %v2840 = vunpack.c.h.b16 %v599
  %v2841 = vunpack.c.l.b16 %v600
  %v2842 = vunpack.c.h.b16 %v600
  %v2843 = vunpack.c.l.b16 %v601
  %v2844 = vunpack.c.h.b16 %v601
  %v2845 = vunpack.c.l.b16 %v602
  %v2846 = vunpack.c.h.b16 %v602
  %v2847 = vunpack.c.l.b16 %v603
  %v2848 = vunpack.c.h.b16 %v603
  %v2849 = vunpack.c.l.b16 %v604
  %v2850 = vunpack.c.h.b16 %v604
  %v2851 = vunpack.c.l.b16 %v605
  %v2852 = vunpack.c.h.b16 %v605
  %v2853 = vunpack.c.l.b16 %v606
  %v2854 = vunpack.c.h.b16 %v606
  %v2855 = vunpack.c.l.b16 %v607
  %v2856 = vunpack.c.h.b16 %v607
  %v2857 = vunpack.c.l.b16 %v608
  %v2858 = vunpack.c.h.b16 %v608
  %v2859 = vunpack.c.l.b16 %v609
  %v2860 = vunpack.c.h.b16 %v609
  %v2861 = vunpack.c.l.b16 %v610
  %v2862 = vunpack.c.h.b16 %v610
  %v2863 = vunpack.c.l.b16 %v611
  %v2864 = vunpack.c.h.b16 %v611
  %v2865 = vunpack.c.l.b16 %v612
  %v2866 = vunpack.c.h.b16 %v612
  %v2867 = vunpack.c.l.b16 %v613
  %v2868 = vunpack.c.h.b16 %v613
  %v2869 = vunpack.c.l.b16 %v614
  %v2870 = vunpack.c.h.b16 %v614
  %v2871 = vunpack.c.l.b16 %v615
  %v2872 = vunpack.c.h.b16 %v615
  %v2873 = vunpack.c.l.b16 %v616
  %v2874 = vunpack.c.h.b16 %v616
  %v2875 = vunpack.c.l.b16 %v617
  %v2876 = vunpack.c.h.b16 %v617
  %v2877 = vunpack.c.l.b16 %v618
  %v2878 = vunpack.c.h.b16 %v618
  %v2879 = vunpack.c.l.b16 %v619
  %v2880 = vunpack.c.h.b16 %v619
  %v2881 = vunpack.c.l.b16 %v620
  %v2882 = vunpack.c.h.b16 %v620
  %v2883 = vunpack.c.l.b16 %v621
  %v2884 = vunpack.c.h.b16 %v621
  %v2885 = vunpack.c.l.b16 %v622
  %v2886 = vunpack.c.h.b16 %v622
  %v2887 = vunpack.c.l.b16 %v623
  %v2888 = vunpack.c.h.b16 %v623
  %v2889 = vunpack.c.l.b16 %v624
  %v2890 = vunpack.c.h.b16 %v624
  %v2891 = vunpack.c.l.b16 %v625
  %v2892 = vunpack.c.h.b16 %v625
  %v2893 = vunpack.c.l.b16 %v626
  %v2894 = vunpack.c.h.b16 %v626
  %v2895 = vunpack.c.l.b16 %v627
  %v2896 = vunpack.c.h.b16 %v627
  %v2897 = vunpack.c.l.b16 %v628
  %v2898 = vunpack.c.h.b16 %v628
  %v2899 = vunpack.c.l.b16 %v629
  %v2900 = vunpack.c.h.b16 %v629
  %v2901 = vunpack.c.l.b16 %v630
  %v2902 = vunpack.c.h.b16 %v630
  %v2903 = vunpack.c.l.b16 %v631
  %v2904 = vunpack.c.h.b16 %v631
  %v2905 = vunpack.c.l.b16 %v632
  %v2906 = vunpack.c.h.b16 %v632
  %v2907 = vunpack.c.l.b16 %v633
  %v2908 = vunpack.c.h.b16 %v633
  %v2909 = vunpack.c.l.b16 %v634
  %v2910 = vunpack.c.h.b16 %v634
  %v2911 = vunpack.c.l.b16 %v635
  %v2912 = vunpack.c.h.b16 %v635
  %v2913 = vunpack.c.l.b16 %v636
  %v2914 = vunpack.c.h.b16 %v636
  %v2915 = vunpack.c.l.b16 %v637
  %v2916 = vunpack.c.h.b16 %v637
  %v2917 = vunpack.c.l.b16 %v638
  %v2918 = vunpack.c.h.b16 %v638
  %v2919 = vunpack.c.l.b16 %v639
  %v2920 = vunpack.c.h.b16 %v639
  %v2921 = vunpack.c.l.b16 %v640
  %v2922 = vunpack.c.h.b16 %v640
  %v2923 = vunpack.c.l.b16 %v641
  %v2924 = vunpack.c.h.b16 %v641
  %v2925 = vunpack.c.l.b16 %v642
  %v2926 = vunpack.c.h.b16 %v642
  %v2927 = vunpack.c.l.b16 %v643
  %v2928 = vunpack.c.h.b16 %v643
  %v2929 = vunpack.c.l.b16 %v644
  %v2930 = vunpack.c.h.b16 %v644
  %v2931 = vunpack.c.l.b16 %v645
  %v2932 = vunpack.c.h.b16 %v645
  %v2933 = vunpack.c.l.b16 %v646
  %v2934 = vunpack.c.h.b16 %v646
  %v2935 = vunpack.c.l.b16 %v647
  %v2936 = vunpack.c.h.b16 %v647
  %v2937 = vunpack.c.l.b16 %v648
  %v2938 = vunpack.c.h.b16 %v648
  %v2939 = vunpack.c.l.b16 %v649
  %v2940 = vunpack.c.h.b16 %v649
  %v2941 = vunpack.c.l.b16 %v650
  %v2942 = vunpack.c.h.b16 %v650
  %v2943 = vunpack.c.l.b16 %v651
  %v2944 = vunpack.c.h.b16 %v651
  %v2945 = vunpack.c.l.b16 %v652
  %v2946 = vunpack.c.h.b16 %v652
  %v2947 = vunpack.c.l.b16 %v653
  %v2948 = vunpack.c.h.b16 %v653
  %v2949 = vunpack.c.l.b16 %v654
  %v2950 = vunpack.c.h.b16 %v654
  %v2951 = vunpack.c.l.b16 %v655
  %v2952 = vunpack.c.h.b16 %v655
  %v2953 = vunpack.c.l.b16 %v656
  %v2954 = vunpack.c.h.b16 %v656
  %v2955 = vunpack.c.l.b16 %v657
  %v2956 = vunpack.c.h.b16 %v657
  %v2957 = vunpack.c.l.b16 %v658
  %v2958 = vunpack.c.h.b16 %v658
  %v2959 = vunpack.c.l.b16 %v659
  %v2960 = vunpack.c.h.b16 %v659
  %v2961 = vunpack.c.l.b16 %v660
  %v2962 = vunpack.c.h.b16 %v660
  %v2963 = vunpack.c.l.b16 %v661
  %v2964 = vunpack.c.h.b16 %v661
  %v2965 = vunpack.c.l.b16 %v662
  %v2966 = vunpack.c.h.b16 %v662
  %v2967 = vunpack.c.l.b16 %v663
  %v2968 = vunpack.c.h.b16 %v663
  %v2969 = vunpack.c.l.b16 %v664
  %v2970 = vunpack.c.h.b16 %v664
  %v2971 = vunpack.c.l.b16 %v665
  %v2972 = vunpack.c.h.b16 %v665
  %v2973 = vunpack.c.l.b16 %v666
  %v2974 = vunpack.c.h.b16 %v666
  %v2975 = vunpack.c.l.b16 %v667
  %v2976 = vunpack.c.h.b16 %v667
  %v2977 = vunpack.c.l.b16 %v668
  %v2978 = vunpack.c.h.b16 %v668
  %v2979 = vunpack.c.l.b16 %v669
  %v2980 = vunpack.c.h.b16 %v669
  %v2981 = vunpack.c.l.b16 %v670
  %v2982 = vunpack.c.h.b16 %v670
  %v2983 = vunpack.c.l.b16 %v671
  %v2984 = vunpack.c.h.b16 %v671
  %v2985 = vunpack.c.l.b16 %v672
  %v2986 = vunpack.c.h.b16 %v672
  %v2987 = vunpack.c.l.b16 %v673
  %v2988 = vunpack.c.h.b16 %v673
  %v2989 = vunpack.c.l.b16 %v674
  %v2990 = vunpack.c.h.b16 %v674
  %v2991 = vunpack.c.l.b16 %v675
  %v2992 = vunpack.c.h.b16 %v675
  %v2993 = vunpack.c.l.b16 %v676
  %v2994 = vunpack.c.h.b16 %v676
  %v2995 = vunpack.c.l.b16 %v677
  %v2996 = vunpack.c.h.b16 %v677
  %v2997 = vunpack.c.l.b16 %v678
  %v2998 = vunpack.c.h.b16 %v678
  %v2999 = vunpack.c.l.b16 %v679
  %v3000 = vunpack.c.h.b16 %v679
  %v3001 = vunpack.c.l.b16 %v680
  %v3002 = vunpack.c.h.b16 %v680
  %v3003 = vunpack.c.l.b16 %v681
  %v3004 = vunpack.c.h.b16 %v681
  %v3005 = vunpack.c.l.b16 %v682
  %v3006 = vunpack.c.h.b16 %v682
  %v3007 = vunpack.c.l.b16 %v683
  %v3008 = vunpack.c.h.b16 %v683
  %v3009 = vunpack.c.l.b16 %v684
  %v3010 = vunpack.c.h.b16 %v684
  %v3011 = vunpack.c.l.b16 %v685
  %v3012 = vunpack.c.h.b16 %v685
  %v3013 = vunpack.c.l.b16 %v686
  %v3014 = vunpack.c.h.b16 %v686
  %v3015 = vunpack.c.l.b16 %v687
  %v3016 = vunpack.c.h.b16 %v687
  %v3017 = vunpack.c.l.b16 %v688
  %v3018 = vunpack.c.h.b16 %v688
  %v3019 = vunpack.c.l.b16 %v689
  %v3020 = vunpack.c.h.b16 %v689
  %v3021 = vunpack.c.l.b16 %v690
  %v3022 = vunpack.c.h.b16 %v690
  %v3023 = vunpack.c.l.b16 %v691
  %v3024 = vunpack.c.h.b16 %v691
  %v3025 = vunpack.c.l.b16 %v692
  %v3026 = vunpack.c.h.b16 %v692
  %v3027 = vunpack.c.l.b16 %v693
  %v3028 = vunpack.c.h.b16 %v693
  %v3029 = vunpack.c.l.b16 %v694
  %v3030 = vunpack.c.h.b16 %v694
  %v3031 = vunpack.c.l.b16 %v695
  %v3032 = vunpack.c.h.b16 %v695
  %v3033 = vunpack.c.l.b16 %v696
  %v3034 = vunpack.c.h.b16 %v696
  %v3035 = vunpack.c.l.b16 %v697
  %v3036 = vunpack.c.h.b16 %v697
  %v3037 = vunpack.c.l.b16 %v698
  %v3038 = vunpack.c.h.b16 %v698
  %v3039 = vunpack.c.l.b16 %v699
  %v3040 = vunpack.c.h.b16 %v699
  %v3041 = vunpack.c.l.b16 %v700
  %v3042 = vunpack.c.h.b16 %v700
  %v3043 = vunpack.c.l.b16 %v701
  %v3044 = vunpack.c.h.b16 %v701
  %v3045 = vunpack.c.l.b16 %v702
  %v3046 = vunpack.c.h.b16 %v702
  %v3047 = vunpack.c.l.b16 %v703
  %v3048 = vunpack.c.h.b16 %v703
  %v3049 = vunpack.c.l.b16 %v704
  %v3050 = vunpack.c.h.b16 %v704
  %v3051 = vunpack.c.l.b16 %v705
  %v3052 = vunpack.c.h.b16 %v705
  %v3053 = vunpack.c.l.b16 %v706
  %v3054 = vunpack.c.h.b16 %v706
  %v3055 = vunpack.c.l.b16 %v707
  %v3056 = vunpack.c.h.b16 %v707
  %v3057 = vunpack.c.l.b16 %v708
  %v3058 = vunpack.c.h.b16 %v708
  %v3059 = vunpack.c.l.b16 %v709
  %v3060 = vunpack.c.h.b16 %v709
  %v3061 = vunpack.c.l.b16 %v710
  %v3062 = vunpack.c.h.b16 %v710
  %v3063 = vunpack.c.l.b16 %v711
  %v3064 = vunpack.c.h.b16 %v711
  %v3065 = vunpack.c.l.b16 %v712
  %v3066 = vunpack.c.h.b16 %v712
  %v3067 = vunpack.c.l.b16 %v713
  %v3068 = vunpack.c.h.b16 %v713
  %v3069 = vunpack.c.l.b16 %v714
  %v3070 = vunpack.c.h.b16 %v714
  %v3071 = vunpack.c.l.b16 %v715
  %v3072 = vunpack.c.h.b16 %v715
  %v3073 = vunpack.c.l.b16 %v716
  %v3074 = vunpack.c.h.b16 %v716
  %v3075 = vunpack.c.l.b16 %v717
  %v3076 = vunpack.c.h.b16 %v717
  %v3077 = vunpack.c.l.b16 %v718
  %v3078 = vunpack.c.h.b16 %v718
  %v3079 = vunpack.c.l.b16 %v719
  %v3080 = vunpack.c.h.b16 %v719
  %v3081 = vunpack.c.l.b16 %v720
  %v3082 = vunpack.c.h.b16 %v720
  %v3083 = vunpack.c.l.b16 %v721
  %v3084 = vunpack.c.h.b16 %v721
  %v3085 = vunpack.c.l.b16 %v722
  %v3086 = vunpack.c.h.b16 %v722
  %v3087 = vunpack.c.l.b16 %v723
  %v3088 = vunpack.c.h.b16 %v723
  %v3089 = vunpack.c.l.b16 %v724
  %v3090 = vunpack.c.h.b16 %v724
  %v3091 = vunpack.c.l.b16 %v725
  %v3092 = vunpack.c.h.b16 %v725
  %v3093 = vunpack.c.l.b16 %v726
  %v3094 = vunpack.c.h.b16 %v726
  %v3095 = vunpack.c.l.b16 %v727
  %v3096 = vunpack.c.h.b16 %v727
  %v3097 = vunpack.c.l.b16 %v728
  %v3098 = vunpack.c.h.b16 %v728
  %v3099 = vunpack.c.l.b16 %v729
  %v3100 = vunpack.c.h.b16 %v729
  %v3101 = vunpack.c.l.b16 %v730
  %v3102 = vunpack.c.h.b16 %v730
  %v3103 = vunpack.c.l.b16 %v731
  %v3104 = vunpack.c.h.b16 %v731
  %v3105 = vunpack.c.l.b16 %v732
  %v3106 = vunpack.c.h.b16 %v732
  %v3107 = vunpack.c.l.b16 %v733
  %v3108 = vunpack.c.h.b16 %v733
  %v3109 = vunpack.c.l.b16 %v734
  %v3110 = vunpack.c.h.b16 %v734
  %v3111 = vunpack.c.l.b16 %v735
  %v3112 = vunpack.c.h.b16 %v735
  %v3113 = vunpack.c.l.b16 %v736
  %v3114 = vunpack.c.h.b16 %v736
  %v3115 = vunpack.c.l.b16 %v737
  %v3116 = vunpack.c.h.b16 %v737
  %v3117 = vunpack.c.l.b16 %v738
  %v3118 = vunpack.c.h.b16 %v738
  %v3119 = vunpack.c.l.b16 %v739
  %v3120 = vunpack.c.h.b16 %v739
  %v3121 = vunpack.c.l.b16 %v740
  %v3122 = vunpack.c.h.b16 %v740
  %v3123 = vunpack.c.l.b16 %v741
  %v3124 = vunpack.c.h.b16 %v741
  %v3125 = vunpack.c.l.b16 %v742
  %v3126 = vunpack.c.h.b16 %v742
  %v3127 = vunpack.c.l.b16 %v743
  %v3128 = vunpack.c.h.b16 %v743
  %v3129 = vunpack.c.l.b16 %v744
  %v3130 = vunpack.c.h.b16 %v744
  %v3131 = vunpack.c.l.b16 %v745
  %v3132 = vunpack.c.h.b16 %v745
  %v3133 = vunpack.c.l.b16 %v746
  %v3134 = vunpack.c.h.b16 %v746
  %v3135 = vunpack.c.l.b16 %v747
  %v3136 = vunpack.c.h.b16 %v747
  %v3137 = vunpack.c.l.b16 %v748
  %v3138 = vunpack.c.h.b16 %v748
  %v3139 = vunpack.c.l.b16 %v749
  %v3140 = vunpack.c.h.b16 %v749
  %v3141 = vunpack.c.l.b16 %v750
  %v3142 = vunpack.c.h.b16 %v750
  %v3143 = vunpack.c.l.b16 %v751
  %v3144 = vunpack.c.h.b16 %v751
  %v3145 = vunpack.c.l.b16 %v752
  %v3146 = vunpack.c.h.b16 %v752
  %v3147 = vunpack.c.l.b16 %v753
  %v3148 = vunpack.c.h.b16 %v753
  %v3149 = vunpack.c.l.b16 %v754
  %v3150 = vunpack.c.h.b16 %v754
  %v3151 = vunpack.c.l.b16 %v755
  %v3152 = vunpack.c.h.b16 %v755
  %v3153 = vunpack.c.l.b16 %v756
  %v3154 = vunpack.c.h.b16 %v756
  %v3155 = vunpack.c.l.b16 %v757
  %v3156 = vunpack.c.h.b16 %v757
  %v3157 = vunpack.c.l.b16 %v758
  %v3158 = vunpack.c.h.b16 %v758
  %v3159 = vunpack.c.l.b16 %v759
  %v3160 = vunpack.c.h.b16 %v759
  %v3161 = vunpack.c.l.b16 %v760
  %v3162 = vunpack.c.h.b16 %v760
  %v3163 = vunpack.c.l.b16 %v761
  %v3164 = vunpack.c.h.b16 %v761
  %v3165 = vunpack.c.l.b16 %v762
  %v3166 = vunpack.c.h.b16 %v762
  %v3167 = vunpack.c.l.b16 %v763
  %v3168 = vunpack.c.h.b16 %v763
  %v3169 = vunpack.c.l.b16 %v764
  %v3170 = vunpack.c.h.b16 %v764
  %v3171 = vunpack.c.l.b16 %v765
  %v3172 = vunpack.c.h.b16 %v765
  %v3173 = vunpack.c.l.b16 %v766
  %v3174 = vunpack.c.h.b16 %v766
  %v3175 = vunpack.c.l.b16 %v767
  %v3176 = vunpack.c.h.b16 %v767
  %v3177 = vunpack.c.l.b16 %v768
  %v3178 = vunpack.c.h.b16 %v768
  %v3179 = vunpack.c.l.b16 %v769
  %v3180 = vunpack.c.h.b16 %v769
  %v3181 = vunpack.c.l.b16 %v770
  %v3182 = vunpack.c.h.b16 %v770
  %v3183 = vunpack.c.l.b16 %v771
  %v3184 = vunpack.c.h.b16 %v771
  %v3185 = vunpack.c.l.b16 %v772
  %v3186 = vunpack.c.h.b16 %v772
  %v3187 = vunpack.c.l.b16 %v773
  %v3188 = vunpack.c.h.b16 %v773
  %v3189 = vunpack.c.l.b16 %v774
  %v3190 = vunpack.c.h.b16 %v774
  %v3191 = vunpack.c.l.b16 %v775
  %v3192 = vunpack.c.h.b16 %v775
  %v3193 = vunpack.c.l.b16 %v776
  %v3194 = vunpack.c.h.b16 %v776
  %v3195 = vunpack.c.l.b16 %v777
  %v3196 = vunpack.c.h.b16 %v777
  %v3197 = vunpack.c.l.b16 %v778
  %v3198 = vunpack.c.h.b16 %v778
  %v3199 = vunpack.c.l.b16 %v779
  %v3200 = vunpack.c.h.b16 %v779
  %v3201 = vunpack.c.l.b16 %v780
  %v3202 = vunpack.c.h.b16 %v780
  %v3203 = vunpack.c.l.b16 %v781
  %v3204 = vunpack.c.h.b16 %v781
  %v3205 = vunpack.c.l.b16 %v782
  %v3206 = vunpack.c.h.b16 %v782
  %v3207 = vunpack.c.l.b16 %v783
  %v3208 = vunpack.c.h.b16 %v783
  %v3209 = vunpack.c.l.b16 %v784
  %v3210 = vunpack.c.h.b16 %v784
  %v3211 = vunpack.c.l.b16 %v785
  %v3212 = vunpack.c.h.b16 %v785
  %v3213 = vunpack.c.l.b16 %v786
  %v3214 = vunpack.c.h.b16 %v786
  %v3215 = vunpack.c.l.b16 %v787
  %v3216 = vunpack.c.h.b16 %v787
  %v3217 = vunpack.c.l.b16 %v788
  %v3218 = vunpack.c.h.b16 %v788
  %v3219 = vunpack.c.l.b16 %v789
  %v3220 = vunpack.c.h.b16 %v789
  %v3221 = vunpack.c.l.b16 %v790
  %v3222 = vunpack.c.h.b16 %v790
  %v3223 = vunpack.c.l.b16 %v791
  %v3224 = vunpack.c.h.b16 %v791
  %v3225 = vunpack.c.l.b16 %v792
  %v3226 = vunpack.c.h.b16 %v792
  %v3227 = vunpack.c.l.b16 %v793
  %v3228 = vunpack.c.h.b16 %v793
  %v3229 = vunpack.c.l.b16 %v794
  %v3230 = vunpack.c.h.b16 %v794
  %v3231 = vunpack.c.l.b16 %v795
  %v3232 = vunpack.c.h.b16 %v795
  %v3233 = vunpack.c.l.b16 %v796
  %v3234 = vunpack.c.h.b16 %v796
  %v3235 = vunpack.c.l.b16 %v797
  %v3236 = vunpack.c.h.b16 %v797
  %v3237 = vunpack.c.l.b16 %v798
  %v3238 = vunpack.c.h.b16 %v798
  %v3239 = vunpack.c.l.b16 %v799
  %v3240 = vunpack.c.h.b16 %v799
  %v3241 = vunpack.c.l.b16 %v800
  %v3242 = vunpack.c.h.b16 %v800
  %v3243 = vunpack.c.l.b16 %v801
  %v3244 = vunpack.c.h.b16 %v801
  %v3245 = vunpack.c.l.b16 %v802
  %v3246 = vunpack.c.h.b16 %v802
  %v3247 = vunpack.c.l.b16 %v803
  %v3248 = vunpack.c.h.b16 %v803
  %v3249 = vunpack.c.l.b16 %v804
  %v3250 = vunpack.c.h.b16 %v804
  %v3251 = vunpack.c.l.b16 %v805
  %v3252 = vunpack.c.h.b16 %v805
  %v3253 = vunpack.c.l.b16 %v806
  %v3254 = vunpack.c.h.b16 %v806
  %v3255 = vunpack.c.l.b16 %v807
  %v3256 = vunpack.c.h.b16 %v807
  %v3257 = vunpack.c.l.b16 %v808
  %v3258 = vunpack.c.h.b16 %v808
  %v3259 = vunpack.c.l.b16 %v809
  %v3260 = vunpack.c.h.b16 %v809
  %v3261 = vunpack.c.l.b16 %v810
  %v3262 = vunpack.c.h.b16 %v810
  %v3263 = vunpack.c.l.b16 %v811
  %v3264 = vunpack.c.h.b16 %v811
  %v3265 = vunpack.c.l.b16 %v812
  %v3266 = vunpack.c.h.b16 %v812
  %v3267 = vunpack.c.l.b16 %v813
  %v3268 = vunpack.c.h.b16 %v813
  %v3269 = vunpack.c.l.b16 %v814
  %v3270 = vunpack.c.h.b16 %v814
  %v3271 = vunpack.c.l.b16 %v815
  %v3272 = vunpack.c.h.b16 %v815
  %v3273 = vunpack.c.l.b16 %v816
  %v3274 = vunpack.c.h.b16 %v816
  %v3275 = vunpack.c.l.b16 %v817
  %v3276 = vunpack.c.h.b16 %v817
  %v3277 = vunpack.c.l.b16 %v818
  %v3278 = vunpack.c.h.b16 %v818
  %v3279 = vunpack.c.l.b16 %v819
  %v3280 = vunpack.c.h.b16 %v819
  %v3281 = vpack.c.b16 %v1717, %v1713
  %v3282 = vpack.c.b16 %v1718, %v1714
  %v3283 = vpack.c.b16 %v1719, %v1715
  %v3284 = vpack.c.b16 %v1720, %v1716
  %v3285 = vpack.c.b16 %v1725, %v1721
  %v3286 = vpack.c.b16 %v1726, %v1722
  %v3287 = vpack.c.b16 %v1727, %v1723
  %v3288 = vpack.c.b16 %v1728, %v1724
  %v3289 = vpack.c.b16 %v1733, %v1729
  %v3290 = vpack.c.b16 %v1734, %v1730
  %v3291 = vpack.c.b16 %v1735, %v1731
  %v3292 = vpack.c.b16 %v1736, %v1732
  %v3293 = vpack.c.b16 %v1741, %v1737
  %v3294 = vpack.c.b16 %v1742, %v1738
  %v3295 = vpack.c.b16 %v1743, %v1739
  %v3296 = vpack.c.b16 %v1744, %v1740
  %v3297 = vpack.c.b16 %v1749, %v1745
  %v3298 = vpack.c.b16 %v1750, %v1746
  %v3299 = vpack.c.b16 %v1751, %v1747
  %v3300 = vpack.c.b16 %v1752, %v1748
  %v3301 = vpack.c.b16 %v1757, %v1753
  %v3302 = vpack.c.b16 %v1758, %v1754
  %v3303 = vpack.c.b16 %v1759, %v1755
  %v3304 = vpack.c.b16 %v1760, %v1756
  %v3305 = vpack.c.b16 %v1765, %v1761
  %v3306 = vpack.c.b16 %v1766, %v1762
  %v3307 = vpack.c.b16 %v1767, %v1763
  %v3308 = vpack.c.b16 %v1768, %v1764
  %v3309 = vpack.c.b16 %v1773, %v1769
  %v3310 = vpack.c.b16 %v1774, %v1770
  %v3311 = vpack.c.b16 %v1775, %v1771
  %v3312 = vpack.c.b16 %v1776, %v1772
  %v3313 = vpack.c.b16 %v1781, %v1777
  %v3314 = vpack.c.b16 %v1782, %v1778
  %v3315 = vpack.c.b16 %v1783, %v1779
  %v3316 = vpack.c.b16 %v1784, %v1780
  %v3317 = vpack.c.b16 %v1789, %v1785
  %v3318 = vpack.c.b16 %v1790, %v1786
  %v3319 = vpack.c.b16 %v1791, %v1787
  %v3320 = vpack.c.b16 %v1792, %v1788
  %v3321 = vpack.c.b16 %v1797, %v1793
  %v3322 = vpack.c.b16 %v1798, %v1794
  %v3323 = vpack.c.b16 %v1799, %v1795
  %v3324 = vpack.c.b16 %v1800, %v1796
  %v3325 = vpack.c.b16 %v1805, %v1801
  %v3326 = vpack.c.b16 %v1806, %v1802
  %v3327 = vpack.c.b16 %v1807, %v1803
  %v3328 = vpack.c.b16 %v1808, %v1804
  %v3329 = vpack.c.b16 %v1813, %v1809
  %v3330 = vpack.c.b16 %v1814, %v1810
  %v3331 = vpack.c.b16 %v1815, %v1811
  %v3332 = vpack.c.b16 %v1816, %v1812
  %v3333 = vpack.c.b16 %v1821, %v1817
  %v3334 = vpack.c.b16 %v1822, %v1818
  %v3335 = vpack.c.b16 %v1823, %v1819
  %v3336 = vpack.c.b16 %v1824, %v1820
  %v3337 = vpack.c.b16 %v1829, %v1825
  %v3338 = vpack.c.b16 %v1830, %v1826
  %v3339 = vpack.c.b16 %v1831, %v1827
  %v3340 = vpack.c.b16 %v1832, %v1828
  %v3341 = vpack.c.b16 %v1837, %v1833
  %v3342 = vpack.c.b16 %v1838, %v1834
  %v3343 = vpack.c.b16 %v1839, %v1835
  %v3344 = vpack.c.b16 %v1840, %v1836
  %v3345 = vpack.c.b16 %v1845, %v1841
  %v3346 = vpack.c.b16 %v1846, %v1842
  %v3347 = vpack.c.b16 %v1847, %v1843
  %v3348 = vpack.c.b16 %v1848, %v1844
  %v3349 = vpack.c.b16 %v1853, %v1849
  %v3350 = vpack.c.b16 %v1854, %v1850
  %v3351 = vpack.c.b16 %v1855, %v1851
  %v3352 = vpack.c.b16 %v1856, %v1852
  %v3353 = vpack.c.b16 %v1861, %v1857
  %v3354 = vpack.c.b16 %v1862, %v1858
  %v3355 = vpack.c.b16 %v1863, %v1859
  %v3356 = vpack.c.b16 %v1864, %v1860
  %v3357 = vpack.c.b16 %v1869, %v1865
  %v3358 = vpack.c.b16 %v1870, %v1866
  %v3359 = vpack.c.b16 %v1871, %v1867
  %v3360 = vpack.c.b16 %v1872, %v1868
  %v3361 = vpack.c.b16 %v1877, %v1873
  %v3362 = vpack.c.b16 %v1878, %v1874
  %v3363 = vpack.c.b16 %v1879, %v1875
  %v3364 = vpack.c.b16 %v1880, %v1876
  %v3365 = vpack.c.b16 %v1885, %v1881
  %v3366 = vpack.c.b16 %v1886, %v1882
  %v3367 = vpack.c.b16 %v1887, %v1883
  %v3368 = vpack.c.b16 %v1888, %v1884
  %v3369 = vpack.c.b16 %v1893, %v1889
  %v3370 = vpack.c.b16 %v1894, %v1890
  %v3371 = vpack.c.b16 %v1895, %v1891
  %v3372 = vpack.c.b16 %v1896, %v1892
  %v3373 = vpack.c.b16 %v1901, %v1897
  %v3374 = vpack.c.b16 %v1902, %v1898
  %v3375 = vpack.c.b16 %v1903, %v1899
  %v3376 = vpack.c.b16 %v1904, %v1900
  %v3377 = vpack.c.b16 %v1909, %v1905
  %v3378 = vpack.c.b16 %v1910, %v1906
  %v3379 = vpack.c.b16 %v1911, %v1907
  %v3380 = vpack.c.b16 %v1912, %v1908
  %v3381 = vpack.c.b16 %v1917, %v1913
  %v3382 = vpack.c.b16 %v1918, %v1914
  %v3383 = vpack.c.b16 %v1919, %v1915
  %v3384 = vpack.c.b16 %v1920, %v1916
  %v3385 = vpack.c.b16 %v1925, %v1921
  %v3386 = vpack.c.b16 %v1926, %v1922
  %v3387 = vpack.c.b16 %v1927, %v1923
  %v3388 = vpack.c.b16 %v1928, %v1924
  %v3389 = vpack.c.b16 %v1933, %v1929
  %v3390 = vpack.c.b16 %v1934, %v1930
  %v3391 = vpack.c.b16 %v1935, %v1931
  %v3392 = vpack.c.b16 %v1936, %v1932
  %v3393 = vpack.c.b16 %v1941, %v1937
  %v3394 = vpack.c.b16 %v1942, %v1938
  %v3395 = vpack.c.b16 %v1943, %v1939
  %v3396 = vpack.c.b16 %v1944, %v1940
  %v3397 = vpack.c.b16 %v1949, %v1945
  %v3398 = vpack.c.b16 %v1950, %v1946
  %v3399 = vpack.c.b16 %v1951, %v1947
  %v3400 = vpack.c.b16 %v1952, %v1948
  %v3401 = vpack.c.b16 %v1957, %v1953
  %v3402 = vpack.c.b16 %v1958, %v1954
  %v3403 = vpack.c.b16 %v1959, %v1955
  %v3404 = vpack.c.b16 %v1960, %v1956
  %v3405 = vpack.c.b16 %v1965, %v1961
  %v3406 = vpack.c.b16 %v1966, %v1962
  %v3407 = vpack.c.b16 %v1967, %v1963
  %v3408 = vpack.c.b16 %v1968, %v1964
  %v3409 = vpack.c.b16 %v1973, %v1969
  %v3410 = vpack.c.b16 %v1974, %v1970
  %v3411 = vpack.c.b16 %v1975, %v1971
  %v3412 = vpack.c.b16 %v1976, %v1972
  %v3413 = vpack.c.b16 %v1981, %v1977
  %v3414 = vpack.c.b16 %v1982, %v1978
  %v3415 = vpack.c.b16 %v1983, %v1979
  %v3416 = vpack.c.b16 %v1984, %v1980
  %v3417 = vpack.c.b16 %v1989, %v1985
  %v3418 = vpack.c.b16 %v1990, %v1986
  %v3419 = vpack.c.b16 %v1991, %v1987
  %v3420 = vpack.c.b16 %v1992, %v1988
  %v3421 = vpack.c.b16 %v1997, %v1993
  %v3422 = vpack.c.b16 %v1998, %v1994
  %v3423 = vpack.c.b16 %v1999, %v1995
  %v3424 = vpack.c.b16 %v2000, %v1996
  %v3425 = vpack.c.b16 %v2005, %v2001
  %v3426 = vpack.c.b16 %v2006, %v2002
  %v3427 = vpack.c.b16 %v2007, %v2003
  %v3428 = vpack.c.b16 %v2008, %v2004
  %v3429 = vpack.c.b16 %v2013, %v2009
  %v3430 = vpack.c.b16 %v2014, %v2010
  %v3431 = vpack.c.b16 %v2015, %v2011
  %v3432 = vpack.c.b16 %v2016, %v2012
  %v3433 = vpack.c.b16 %v2021, %v2017
  %v3434 = vpack.c.b16 %v2022, %v2018
  %v3435 = vpack.c.b16 %v2023, %v2019
  %v3436 = vpack.c.b16 %v2024, %v2020
  %v3437 = vpack.c.b16 %v2029, %v2025
  %v3438 = vpack.c.b16 %v2030, %v2026
  %v3439 = vpack.c.b16 %v2031, %v2027
  %v3440 = vpack.c.b16 %v2032, %v2028
  %v3441 = vpack.c.b16 %v2037, %v2033
  %v3442 = vpack.c.b16 %v2038, %v2034
  %v3443 = vpack.c.b16 %v2039, %v2035
  %v3444 = vpack.c.b16 %v2040, %v2036
  %v3445 = vpack.c.b16 %v2045, %v2041
  %v3446 = vpack.c.b16 %v2046, %v2042
  %v3447 = vpack.c.b16 %v2047, %v2043
  %v3448 = vpack.c.b16 %v2048, %v2044
  %v3449 = vpack.c.b16 %v2053, %v2049
  %v3450 = vpack.c.b16 %v2054, %v2050
  %v3451 = vpack.c.b16 %v2055, %v2051
  %v3452 = vpack.c.b16 %v2056, %v2052
  %v3453 = vpack.c.b16 %v2061, %v2057
  %v3454 = vpack.c.b16 %v2062, %v2058
  %v3455 = vpack.c.b16 %v2063, %v2059
  %v3456 = vpack.c.b16 %v2064, %v2060
  %v3457 = vpack.c.b16 %v2069, %v2065
  %v3458 = vpack.c.b16 %v2070, %v2066
  %v3459 = vpack.c.b16 %v2071, %v2067
  %v3460 = vpack.c.b16 %v2072, %v2068
  %v3461 = vpack.c.b16 %v2077, %v2073
  %v3462 = vpack.c.b16 %v2078, %v2074
  %v3463 = vpack.c.b16 %v2079, %v2075
  %v3464 = vpack.c.b16 %v2080, %v2076
  %v3465 = vpack.c.b16 %v2085, %v2081
  %v3466 = vpack.c.b16 %v2086, %v2082
  %v3467 = vpack.c.b16 %v2087, %v2083
  %v3468 = vpack.c.b16 %v2088, %v2084
  %v3469 = vpack.c.b16 %v2093, %v2089
  %v3470 = vpack.c.b16 %v2094, %v2090
  %v3471 = vpack.c.b16 %v2095, %v2091
  %v3472 = vpack.c.b16 %v2096, %v2092
  %v3473 = vpack.c.b16 %v2101, %v2097
  %v3474 = vpack.c.b16 %v2102, %v2098
  %v3475 = vpack.c.b16 %v2103, %v2099
  %v3476 = vpack.c.b16 %v2104, %v2100
  %v3477 = vpack.c.b16 %v2109, %v2105
  %v3478 = vpack.c.b16 %v2110, %v2106
  %v3479 = vpack.c.b16 %v2111, %v2107
  %v3480 = vpack.c.b16 %v2112, %v2108
  %v3481 = vpack.c.b16 %v2117, %v2113
  %v3482 = vpack.c.b16 %v2118, %v2114
  %v3483 = vpack.c.b16 %v2119, %v2115
  %v3484 = vpack.c.b16 %v2120, %v2116
  %v3485 = vpack.c.b16 %v2125, %v2121
  %v3486 = vpack.c.b16 %v2126, %v2122
  %v3487 = vpack.c.b16 %v2127, %v2123
  %v3488 = vpack.c.b16 %v2128, %v2124
  %v3489 = vpack.c.b16 %v2133, %v2129
  %v3490 = vpack.c.b16 %v2134, %v2130
  %v3491 = vpack.c.b16 %v2135, %v2131
  %v3492 = vpack.c.b16 %v2136, %v2132
  %v3493 = vpack.c.b16 %v2141, %v2137
  %v3494 = vpack.c.b16 %v2142, %v2138
  %v3495 = vpack.c.b16 %v2143, %v2139
  %v3496 = vpack.c.b16 %v2144, %v2140
  %v3497 = vpack.c.b16 %v2149, %v2145
  %v3498 = vpack.c.b16 %v2150, %v2146
  %v3499 = vpack.c.b16 %v2151, %v2147
  %v3500 = vpack.c.b16 %v2152, %v2148
  %v3501 = vpack.c.b16 %v2157, %v2153
  %v3502 = vpack.c.b16 %v2158, %v2154
  %v3503 = vpack.c.b16 %v2159, %v2155
  %v3504 = vpack.c.b16 %v2160, %v2156
  %v3505 = vpack.c.b16 %v2165, %v2161
  %v3506 = vpack.c.b16 %v2166, %v2162
  %v3507 = vpack.c.b16 %v2167, %v2163
  %v3508 = vpack.c.b16 %v2168, %v2164
  %v3509 = vpack.c.b16 %v2173, %v2169
  %v3510 = vpack.c.b16 %v2174, %v2170
  %v3511 = vpack.c.b16 %v2175, %v2171
  %v3512 = vpack.c.b16 %v2176, %v2172
  %v3513 = vpack.c.b16 %v2181, %v2177
  %v3514 = vpack.c.b16 %v2182, %v2178
  %v3515 = vpack.c.b16 %v2183, %v2179
  %v3516 = vpack.c.b16 %v2184, %v2180
  %v3517 = vpack.c.b16 %v2189, %v2185
  %v3518 = vpack.c.b16 %v2190, %v2186
  %v3519 = vpack.c.b16 %v2191, %v2187
  %v3520 = vpack.c.b16 %v2192, %v2188
  %v3521 = vpack.c.b16 %v2197, %v2193
  %v3522 = vpack.c.b16 %v2198, %v2194
  %v3523 = vpack.c.b16 %v2199, %v2195
  %v3524 = vpack.c.b16 %v2200, %v2196
  %v3525 = vpack.c.b16 %v2205, %v2201
  %v3526 = vpack.c.b16 %v2206, %v2202
  %v3527 = vpack.c.b16 %v2207, %v2203
  %v3528 = vpack.c.b16 %v2208, %v2204
  %v3529 = vpack.c.b16 %v2213, %v2209
  %v3530 = vpack.c.b16 %v2214, %v2210
  %v3531 = vpack.c.b16 %v2215, %v2211
  %v3532 = vpack.c.b16 %v2216, %v2212
  %v3533 = vpack.c.b16 %v2221, %v2217
  %v3534 = vpack.c.b16 %v2222, %v2218
  %v3535 = vpack.c.b16 %v2223, %v2219
  %v3536 = vpack.c.b16 %v2224, %v2220
  %v3537 = vpack.c.b16 %v2229, %v2225
  %v3538 = vpack.c.b16 %v2230, %v2226
  %v3539 = vpack.c.b16 %v2231, %v2227
  %v3540 = vpack.c.b16 %v2232, %v2228
  %v3541 = vpack.c.b16 %v2237, %v2233
  %v3542 = vpack.c.b16 %v2238, %v2234
  %v3543 = vpack.c.b16 %v2239, %v2235
  %v3544 = vpack.c.b16 %v2240, %v2236
  %v3545 = vpack.c.b16 %v2245, %v2241
  %v3546 = vpack.c.b16 %v2246, %v2242
  %v3547 = vpack.c.b16 %v2247, %v2243
  %v3548 = vpack.c.b16 %v2248, %v2244
  %v3549 = vpack.c.b16 %v2253, %v2249
  %v3550 = vpack.c.b16 %v2254, %v2250
  %v3551 = vpack.c.b16 %v2255, %v2251
  %v3552 = vpack.c.b16 %v2256, %v2252
  %v3553 = vpack.c.b16 %v2261, %v2257
  %v3554 = vpack.c.b16 %v2262, %v2258
  %v3555 = vpack.c.b16 %v2263, %v2259
  %v3556 = vpack.c.b16 %v2264, %v2260
  %v3557 = vpack.c.b16 %v2269, %v2265
  %v3558 = vpack.c.b16 %v2270, %v2266
  %v3559 = vpack.c.b16 %v2271, %v2267
  %v3560 = vpack.c.b16 %v2272, %v2268
  %v3561 = vpack.c.b16 %v2277, %v2273
  %v3562 = vpack.c.b16 %v2278, %v2274
  %v3563 = vpack.c.b16 %v2279, %v2275
  %v3564 = vpack.c.b16 %v2280, %v2276
  %v3565 = vpack.c.b16 %v2285, %v2281
  %v3566 = vpack.c.b16 %v2286, %v2282
  %v3567 = vpack.c.b16 %v2287, %v2283
  %v3568 = vpack.c.b16 %v2288, %v2284
  %v3569 = vpack.c.b16 %v2293, %v2289
  %v3570 = vpack.c.b16 %v2294, %v2290
  %v3571 = vpack.c.b16 %v2295, %v2291
  %v3572 = vpack.c.b16 %v2296, %v2292
  %v3573 = vpack.c.b16 %v2301, %v2297
  %v3574 = vpack.c.b16 %v2302, %v2298
  %v3575 = vpack.c.b16 %v2303, %v2299
  %v3576 = vpack.c.b16 %v2304, %v2300
  %v3577 = vpack.c.b16 %v2309, %v2305
  %v3578 = vpack.c.b16 %v2310, %v2306
  %v3579 = vpack.c.b16 %v2311, %v2307
  %v3580 = vpack.c.b16 %v2312, %v2308
  %v3581 = vpack.c.b16 %v2317, %v2313
  %v3582 = vpack.c.b16 %v2318, %v2314
  %v3583 = vpack.c.b16 %v2319, %v2315
  %v3584 = vpack.c.b16 %v2320, %v2316
  %v3585 = vpack.c.b16 %v2325, %v2321
  %v3586 = vpack.c.b16 %v2326, %v2322
  %v3587 = vpack.c.b16 %v2327, %v2323
  %v3588 = vpack.c.b16 %v2328, %v2324
  %v3589 = vpack.c.b16 %v2333, %v2329
  %v3590 = vpack.c.b16 %v2334, %v2330
  %v3591 = vpack.c.b16 %v2335, %v2331
  %v3592 = vpack.c.b16 %v2336, %v2332
  %v3593 = vpack.c.b16 %v2341, %v2337
  %v3594 = vpack.c.b16 %v2342, %v2338
  %v3595 = vpack.c.b16 %v2343, %v2339
  %v3596 = vpack.c.b16 %v2344, %v2340
  %v3597 = vpack.c.b16 %v2349, %v2345
  %v3598 = vpack.c.b16 %v2350, %v2346
  %v3599 = vpack.c.b16 %v2351, %v2347
  %v3600 = vpack.c.b16 %v2352, %v2348
  %v3601 = vpack.c.b16 %v2357, %v2353
  %v3602 = vpack.c.b16 %v2358, %v2354
  %v3603 = vpack.c.b16 %v2359, %v2355
  %v3604 = vpack.c.b16 %v2360, %v2356
  %v3605 = vpack.c.b16 %v2365, %v2361
  %v3606 = vpack.c.b16 %v2366, %v2362
  %v3607 = vpack.c.b16 %v2367, %v2363
  %v3608 = vpack.c.b16 %v2368, %v2364
  %v3609 = vpack.c.b16 %v2373, %v2369
  %v3610 = vpack.c.b16 %v2374, %v2370
  %v3611 = vpack.c.b16 %v2375, %v2371
  %v3612 = vpack.c.b16 %v2376, %v2372
  %v3613 = vpack.c.b16 %v2381, %v2377
  %v3614 = vpack.c.b16 %v2382, %v2378
  %v3615 = vpack.c.b16 %v2383, %v2379
  %v3616 = vpack.c.b16 %v2384, %v2380
  %v3617 = vpack.c.b16 %v2389, %v2385
  %v3618 = vpack.c.b16 %v2390, %v2386
  %v3619 = vpack.c.b16 %v2391, %v2387
  %v3620 = vpack.c.b16 %v2392, %v2388
  %v3621 = vpack.c.b16 %v2397, %v2393
  %v3622 = vpack.c.b16 %v2398, %v2394
  %v3623 = vpack.c.b16 %v2399, %v2395
  %v3624 = vpack.c.b16 %v2400, %v2396
  %v3625 = vpack.c.b16 %v2405, %v2401
  %v3626 = vpack.c.b16 %v2406, %v2402
  %v3627 = vpack.c.b16 %v2407, %v2403
  %v3628 = vpack.c.b16 %v2408, %v2404
  %v3629 = vpack.c.b16 %v2413, %v2409
  %v3630 = vpack.c.b16 %v2414, %v2410
  %v3631 = vpack.c.b16 %v2415, %v2411
  %v3632 = vpack.c.b16 %v2416, %v2412
  %v3633 = vpack.c.b16 %v2421, %v2417
  %v3634 = vpack.c.b16 %v2422, %v2418
  %v3635 = vpack.c.b16 %v2423, %v2419
  %v3636 = vpack.c.b16 %v2424, %v2420
  %v3637 = vpack.c.b16 %v2429, %v2425
  %v3638 = vpack.c.b16 %v2430, %v2426
  %v3639 = vpack.c.b16 %v2431, %v2427
  %v3640 = vpack.c.b16 %v2432, %v2428
  %v3641 = vpack.c.b16 %v2437, %v2433
  %v3642 = vpack.c.b16 %v2438, %v2434
  %v3643 = vpack.c.b16 %v2439, %v2435
  %v3644 = vpack.c.b16 %v2440, %v2436
  %v3645 = vpack.c.b16 %v2445, %v2441
  %v3646 = vpack.c.b16 %v2446, %v2442
  %v3647 = vpack.c.b16 %v2447, %v2443
  %v3648 = vpack.c.b16 %v2448, %v2444
  %v3649 = vpack.c.b16 %v2453, %v2449
  %v3650 = vpack.c.b16 %v2454, %v2450
  %v3651 = vpack.c.b16 %v2455, %v2451
  %v3652 = vpack.c.b16 %v2456, %v2452
  %v3653 = vpack.c.b16 %v2461, %v2457
  %v3654 = vpack.c.b16 %v2462, %v2458
  %v3655 = vpack.c.b16 %v2463, %v2459
  %v3656 = vpack.c.b16 %v2464, %v2460
  %v3657 = vpack.c.b16 %v2469, %v2465
  %v3658 = vpack.c.b16 %v2470, %v2466
  %v3659 = vpack.c.b16 %v2471, %v2467
  %v3660 = vpack.c.b16 %v2472, %v2468
  %v3661 = vpack.c.b16 %v2477, %v2473
  %v3662 = vpack.c.b16 %v2478, %v2474
  %v3663 = vpack.c.b16 %v2479, %v2475
  %v3664 = vpack.c.b16 %v2480, %v2476
  %v3665 = vpack.c.b16 %v2485, %v2481
  %v3666 = vpack.c.b16 %v2486, %v2482
  %v3667 = vpack.c.b16 %v2487, %v2483
  %v3668 = vpack.c.b16 %v2488, %v2484
  %v3669 = vpack.c.b16 %v2493, %v2489
  %v3670 = vpack.c.b16 %v2494, %v2490
  %v3671 = vpack.c.b16 %v2495, %v2491
  %v3672 = vpack.c.b16 %v2496, %v2492
  %v3673 = vpack.c.b16 %v2501, %v2497
  %v3674 = vpack.c.b16 %v2502, %v2498
  %v3675 = vpack.c.b16 %v2503, %v2499
  %v3676 = vpack.c.b16 %v2504, %v2500
  %v3677 = vpack.c.b16 %v2509, %v2505
  %v3678 = vpack.c.b16 %v2510, %v2506
  %v3679 = vpack.c.b16 %v2511, %v2507
  %v3680 = vpack.c.b16 %v2512, %v2508
  %v3681 = vpack.c.b16 %v2517, %v2513
  %v3682 = vpack.c.b16 %v2518, %v2514
  %v3683 = vpack.c.b16 %v2519, %v2515
  %v3684 = vpack.c.b16 %v2520, %v2516
  %v3685 = vpack.c.b16 %v2525, %v2521
  %v3686 = vpack.c.b16 %v2526, %v2522
  %v3687 = vpack.c.b16 %v2527, %v2523
  %v3688 = vpack.c.b16 %v2528, %v2524
  %v3689 = vpack.c.b16 %v2533, %v2529
  %v3690 = vpack.c.b16 %v2534, %v2530
  %v3691 = vpack.c.b16 %v2535, %v2531
  %v3692 = vpack.c.b16 %v2536, %v2532
  %v3693 = vpack.c.b16 %v2541, %v2537
  %v3694 = vpack.c.b16 %v2542, %v2538
  %v3695 = vpack.c.b16 %v2543, %v2539
  %v3696 = vpack.c.b16 %v2544, %v2540
  %v3697 = vpack.c.b16 %v2549, %v2545
  %v3698 = vpack.c.b16 %v2550, %v2546
  %v3699 = vpack.c.b16 %v2551, %v2547
  %v3700 = vpack.c.b16 %v2552, %v2548
  %v3701 = vpack.c.b16 %v2557, %v2553
  %v3702 = vpack.c.b16 %v2558, %v2554
  %v3703 = vpack.c.b16 %v2559, %v2555
  %v3704 = vpack.c.b16 %v2560, %v2556
  %v3705 = vpack.c.b16 %v2565, %v2561
  %v3706 = vpack.c.b16 %v2566, %v2562
  %v3707 = vpack.c.b16 %v2567, %v2563
  %v3708 = vpack.c.b16 %v2568, %v2564
  %v3709 = vpack.c.b16 %v2573, %v2569
  %v3710 = vpack.c.b16 %v2574, %v2570
  %v3711 = vpack.c.b16 %v2575, %v2571
  %v3712 = vpack.c.b16 %v2576, %v2572
  %v3713 = vpack.c.b16 %v2581, %v2577
  %v3714 = vpack.c.b16 %v2582, %v2578
  %v3715 = vpack.c.b16 %v2583, %v2579
  %v3716 = vpack.c.b16 %v2584, %v2580
  %v3717 = vpack.c.b16 %v2589, %v2585
  %v3718 = vpack.c.b16 %v2590, %v2586
  %v3719 = vpack.c.b16 %v2591, %v2587
  %v3720 = vpack.c.b16 %v2592, %v2588
  %v3721 = vpack.c.b16 %v2597, %v2593
  %v3722 = vpack.c.b16 %v2598, %v2594
  %v3723 = vpack.c.b16 %v2599, %v2595
  %v3724 = vpack.c.b16 %v2600, %v2596
  %v3725 = vpack.c.b16 %v2605, %v2601
  %v3726 = vpack.c.b16 %v2606, %v2602
  %v3727 = vpack.c.b16 %v2607, %v2603
  %v3728 = vpack.c.b16 %v2608, %v2604
  %v3729 = vpack.c.b16 %v2613, %v2609
  %v3730 = vpack.c.b16 %v2614, %v2610
  %v3731 = vpack.c.b16 %v2615, %v2611
  %v3732 = vpack.c.b16 %v2616, %v2612
  %v3733 = vpack.c.b16 %v2621, %v2617
  %v3734 = vpack.c.b16 %v2622, %v2618
  %v3735 = vpack.c.b16 %v2623, %v2619
  %v3736 = vpack.c.b16 %v2624, %v2620
  %v3737 = vpack.c.b16 %v2629, %v2625
  %v3738 = vpack.c.b16 %v2630, %v2626
  %v3739 = vpack.c.b16 %v2631, %v2627
  %v3740 = vpack.c.b16 %v2632, %v2628
  %v3741 = vpack.c.b16 %v2637, %v2633
  %v3742 = vpack.c.b16 %v2638, %v2634
  %v3743 = vpack.c.b16 %v2639, %v2635
  %v3744 = vpack.c.b16 %v2640, %v2636
  %v3745 = vpack.c.b16 %v2645, %v2641
  %v3746 = vpack.c.b16 %v2646, %v2642
  %v3747 = vpack.c.b16 %v2647, %v2643
  %v3748 = vpack.c.b16 %v2648, %v2644
  %v3749 = vpack.c.b16 %v2653, %v2649
  %v3750 = vpack.c.b16 %v2654, %v2650
  %v3751 = vpack.c.b16 %v2655, %v2651
  %v3752 = vpack.c.b16 %v2656, %v2652
  %v3753 = vpack.c.b16 %v2661, %v2657
  %v3754 = vpack.c.b16 %v2662, %v2658
  %v3755 = vpack.c.b16 %v2663, %v2659
  %v3756 = vpack.c.b16 %v2664, %v2660
  %v3757 = vpack.c.b16 %v2669, %v2665
  %v3758 = vpack.c.b16 %v2670, %v2666
  %v3759 = vpack.c.b16 %v2671, %v2667
  %v3760 = vpack.c.b16 %v2672, %v2668
  %v3761 = vpack.c.b16 %v2677, %v2673
  %v3762 = vpack.c.b16 %v2678, %v2674
  %v3763 = vpack.c.b16 %v2679, %v2675
  %v3764 = vpack.c.b16 %v2680, %v2676
  %v3765 = vpack.c.b16 %v2685, %v2681
  %v3766 = vpack.c.b16 %v2686, %v2682
  %v3767 = vpack.c.b16 %v2687, %v2683
  %v3768 = vpack.c.b16 %v2688, %v2684
  %v3769 = vpack.c.b16 %v2693, %v2689
  %v3770 = vpack.c.b16 %v2694, %v2690
  %v3771 = vpack.c.b16 %v2695, %v2691
  %v3772 = vpack.c.b16 %v2696, %v2692
  %v3773 = vpack.c.b16 %v2701, %v2697
  %v3774 = vpack.c.b16 %v2702, %v2698
  %v3775 = vpack.c.b16 %v2703, %v2699
  %v3776 = vpack.c.b16 %v2704, %v2700
  %v3777 = vpack.c.b16 %v2709, %v2705
  %v3778 = vpack.c.b16 %v2710, %v2706
  %v3779 = vpack.c.b16 %v2711, %v2707
  %v3780 = vpack.c.b16 %v2712, %v2708
  %v3781 = vpack.c.b16 %v2717, %v2713
  %v3782 = vpack.c.b16 %v2718, %v2714
  %v3783 = vpack.c.b16 %v2719, %v2715
  %v3784 = vpack.c.b16 %v2720, %v2716
  %v3785 = vpack.c.b16 %v2725, %v2721
  %v3786 = vpack.c.b16 %v2726, %v2722
  %v3787 = vpack.c.b16 %v2727, %v2723
  %v3788 = vpack.c.b16 %v2728, %v2724
  %v3789 = vpack.c.b16 %v2733, %v2729
  %v3790 = vpack.c.b16 %v2734, %v2730
  %v3791 = vpack.c.b16 %v2735, %v2731
  %v3792 = vpack.c.b16 %v2736, %v2732
  %v3793 = vpack.c.b16 %v2741, %v2737
  %v3794 = vpack.c.b16 %v2742, %v2738
  %v3795 = vpack.c.b16 %v2743, %v2739
  %v3796 = vpack.c.b16 %v2744, %v2740
  %v3797 = vpack.c.b16 %v2749, %v2745
  %v3798 = vpack.c.b16 %v2750, %v2746
  %v3799 = vpack.c.b16 %v2751, %v2747
  %v3800 = vpack.c.b16 %v2752, %v2748
  %v3801 = vpack.c.b16 %v2757, %v2753
  %v3802 = vpack.c.b16 %v2758, %v2754
  %v3803 = vpack.c.b16 %v2759, %v2755
  %v3804 = vpack.c.b16 %v2760, %v2756
  %v3805 = vpack.c.b16 %v2765, %v2761
  %v3806 = vpack.c.b16 %v2766, %v2762
  %v3807 = vpack.c.b16 %v2767, %v2763
  %v3808 = vpack.c.b16 %v2768, %v2764
  %v3809 = vpack.c.b16 %v2773, %v2769
  %v3810 = vpack.c.b16 %v2774, %v2770
  %v3811 = vpack.c.b16 %v2775, %v2771
  %v3812 = vpack.c.b16 %v2776, %v2772
  %v3813 = vpack.c.b16 %v2781, %v2777
  %v3814 = vpack.c.b16 %v2782, %v2778
  %v3815 = vpack.c.b16 %v2783, %v2779
  %v3816 = vpack.c.b16 %v2784, %v2780
  %v3817 = vpack.c.b16 %v2789, %v2785
  %v3818 = vpack.c.b16 %v2790, %v2786
  %v3819 = vpack.c.b16 %v2791, %v2787
  %v3820 = vpack.c.b16 %v2792, %v2788
  %v3821 = vpack.c.b16 %v2797, %v2793
  %v3822 = vpack.c.b16 %v2798, %v2794
  %v3823 = vpack.c.b16 %v2799, %v2795
  %v3824 = vpack.c.b16 %v2800, %v2796
  %v3825 = vpack.c.b16 %v2805, %v2801
  %v3826 = vpack.c.b16 %v2806, %v2802
  %v3827 = vpack.c.b16 %v2807, %v2803
  %v3828 = vpack.c.b16 %v2808, %v2804
  %v3829 = vpack.c.b16 %v2813, %v2809
  %v3830 = vpack.c.b16 %v2814, %v2810
  %v3831 = vpack.c.b16 %v2815, %v2811
  %v3832 = vpack.c.b16 %v2816, %v2812
  %v3833 = vpack.c.b16 %v2821, %v2817
  %v3834 = vpack.c.b16 %v2822, %v2818
  %v3835 = vpack.c.b16 %v2823, %v2819
  %v3836 = vpack.c.b16 %v2824, %v2820
  %v3837 = vpack.c.b16 %v2829, %v2825
  %v3838 = vpack.c.b16 %v2830, %v2826
  %v3839 = vpack.c.b16 %v2831, %v2827
  %v3840 = vpack.c.b16 %v2832, %v2828
  %v3841 = vpack.c.b16 %v2837, %v2833
  %v3842 = vpack.c.b16 %v2838, %v2834
  %v3843 = vpack.c.b16 %v2839, %v2835
  %v3844 = vpack.c.b16 %v2840, %v2836
  %v3845 = vpack.c.b16 %v2845, %v2841
  %v3846 = vpack.c.b16 %v2846, %v2842
  %v3847 = vpack.c.b16 %v2847, %v2843
  %v3848 = vpack.c.b16 %v2848, %v2844
  %v3849 = vpack.c.b16 %v2853, %v2849
  %v3850 = vpack.c.b16 %v2854, %v2850
  %v3851 = vpack.c.b16 %v2855, %v2851
  %v3852 = vpack.c.b16 %v2856, %v2852
  %v3853 = vpack.c.b16 %v2861, %v2857
  %v3854 = vpack.c.b16 %v2862, %v2858
  %v3855 = vpack.c.b16 %v2863, %v2859
  %v3856 = vpack.c.b16 %v2864, %v2860
  %v3857 = vpack.c.b16 %v2869, %v2865
  %v3858 = vpack.c.b16 %v2870, %v2866
  %v3859 = vpack.c.b16 %v2871, %v2867
  %v3860 = vpack.c.b16 %v2872, %v2868
  %v3861 = vpack.c.b16 %v2877, %v2873
  %v3862 = vpack.c.b16 %v2878, %v2874
  %v3863 = vpack.c.b16 %v2879, %v2875
  %v3864 = vpack.c.b16 %v2880, %v2876
  %v3865 = vpack.c.b16 %v2885, %v2881
  %v3866 = vpack.c.b16 %v2886, %v2882
  %v3867 = vpack.c.b16 %v2887, %v2883
  %v3868 = vpack.c.b16 %v2888, %v2884
  %v3869 = vpack.c.b16 %v2893, %v2889
  %v3870 = vpack.c.b16 %v2894, %v2890
  %v3871 = vpack.c.b16 %v2895, %v2891
  %v3872 = vpack.c.b16 %v2896, %v2892
  %v3873 = vpack.c.b16 %v2901, %v2897
  %v3874 = vpack.c.b16 %v2902, %v2898
  %v3875 = vpack.c.b16 %v2903, %v2899
  %v3876 = vpack.c.b16 %v2904, %v2900
  %v3877 = vpack.c.b16 %v2909, %v2905
  %v3878 = vpack.c.b16 %v2910, %v2906
  %v3879 = vpack.c.b16 %v2911, %v2907
  %v3880 = vpack.c.b16 %v2912, %v2908
  %v3881 = vpack.c.b16 %v2917, %v2913
  %v3882 = vpack.c.b16 %v2918, %v2914
  %v3883 = vpack.c.b16 %v2919, %v2915
  %v3884 = vpack.c.b16 %v2920, %v2916
  %v3885 = vpack.c.b16 %v2925, %v2921
  %v3886 = vpack.c.b16 %v2926, %v2922
  %v3887 = vpack.c.b16 %v2927, %v2923
  %v3888 = vpack.c.b16 %v2928, %v2924
  %v3889 = vpack.c.b16 %v2933, %v2929
  %v3890 = vpack.c.b16 %v2934, %v2930
  %v3891 = vpack.c.b16 %v2935, %v2931
  %v3892 = vpack.c.b16 %v2936, %v2932
  %v3893 = vpack.c.b16 %v2941, %v2937
  %v3894 = vpack.c.b16 %v2942, %v2938
  %v3895 = vpack.c.b16 %v2943, %v2939
  %v3896 = vpack.c.b16 %v2944, %v2940
  %v3897 = vpack.c.b16 %v2949, %v2945
  %v3898 = vpack.c.b16 %v2950, %v2946
  %v3899 = vpack.c.b16 %v2951, %v2947
  %v3900 = vpack.c.b16 %v2952, %v2948
  %v3901 = vpack.c.b16 %v2957, %v2953
  %v3902 = vpack.c.b16 %v2958, %v2954
  %v3903 = vpack.c.b16 %v2959, %v2955
  %v3904 = vpack.c.b16 %v2960, %v2956
  %v3905 = vpack.c.b16 %v2965, %v2961
  %v3906 = vpack.c.b16 %v2966, %v2962
  %v3907 = vpack.c.b16 %v2967, %v2963
  %v3908 = vpack.c.b16 %v2968, %v2964
  %v3909 = vpack.c.b16 %v2973, %v2969
  %v3910 = vpack.c.b16 %v2974, %v2970
  %v3911 = vpack.c.b16 %v2975, %v2971
  %v3912 = vpack.c.b16 %v2976, %v2972
  %v3913 = vpack.c.b16 %v2981, %v2977
  %v3914 = vpack.c.b16 %v2982, %v2978
  %v3915 = vpack.c.b16 %v2983, %v2979
  %v3916 = vpack.c.b16 %v2984, %v2980
  %v3917 = vpack.c.b16 %v2989, %v2985
  %v3918 = vpack.c.b16 %v2990, %v2986
  %v3919 = vpack.c.b16 %v2991, %v2987
  %v3920 = vpack.c.b16 %v2992, %v2988
  %v3921 = vpack.c.b16 %v2997, %v2993
  %v3922 = vpack.c.b16 %v2998, %v2994
  %v3923 = vpack.c.b16 %v2999, %v2995
  %v3924 = vpack.c.b16 %v3000, %v2996
  %v3925 = vpack.c.b16 %v3005, %v3001
  %v3926 = vpack.c.b16 %v3006, %v3002
  %v3927 = vpack.c.b16 %v3007, %v3003
  %v3928 = vpack.c.b16 %v3008, %v3004
  %v3929 = vpack.c.b16 %v3013, %v3009
  %v3930 = vpack.c.b16 %v3014, %v3010
  %v3931 = vpack.c.b16 %v3015, %v3011
  %v3932 = vpack.c.b16 %v3016, %v3012
  %v3933 = vpack.c.b16 %v3021, %v3017
  %v3934 = vpack.c.b16 %v3022, %v3018
  %v3935 = vpack.c.b16 %v3023, %v3019
  %v3936 = vpack.c.b16 %v3024, %v3020
  %v3937 = vpack.c.b16 %v3029, %v3025
  %v3938 = vpack.c.b16 %v3030, %v3026
  %v3939 = vpack.c.b16 %v3031, %v3027
  %v3940 = vpack.c.b16 %v3032, %v3028
  %v3941 = vpack.c.b16 %v3037, %v3033
  %v3942 = vpack.c.b16 %v3038, %v3034
  %v3943 = vpack.c.b16 %v3039, %v3035
  %v3944 = vpack.c.b16 %v3040, %v3036
  %v3945 = vpack.c.b16 %v3045, %v3041
  %v3946 = vpack.c.b16 %v3046, %v3042
  %v3947 = vpack.c.b16 %v3047, %v3043
  %v3948 = vpack.c.b16 %v3048, %v3044
  %v3949 = vpack.c.b16 %v3053, %v3049
  %v3950 = vpack.c.b16 %v3054, %v3050
  %v3951 = vpack.c.b16 %v3055, %v3051
  %v3952 = vpack.c.b16 %v3056, %v3052
  %v3953 = vpack.c.b16 %v3061, %v3057
  %v3954 = vpack.c.b16 %v3062, %v3058
  %v3955 = vpack.c.b16 %v3063, %v3059
  %v3956 = vpack.c.b16 %v3064, %v3060
  %v3957 = vpack.c.b16 %v3069, %v3065
  %v3958 = vpack.c.b16 %v3070, %v3066
  %v3959 = vpack.c.b16 %v3071, %v3067
  %v3960 = vpack.c.b16 %v3072, %v3068
  %v3961 = vpack.c.b16 %v3077, %v3073
  %v3962 = vpack.c.b16 %v3078, %v3074
  %v3963 = vpack.c.b16 %v3079, %v3075
  %v3964 = vpack.c.b16 %v3080, %v3076
  %v3965 = vpack.c.b16 %v3085, %v3081
  %v3966 = vpack.c.b16 %v3086, %v3082
  %v3967 = vpack.c.b16 %v3087, %v3083
  %v3968 = vpack.c.b16 %v3088, %v3084
  %v3969 = vpack.c.b16 %v3093, %v3089
  %v3970 = vpack.c.b16 %v3094, %v3090
  %v3971 = vpack.c.b16 %v3095, %v3091
  %v3972 = vpack.c.b16 %v3096, %v3092
  %v3973 = vpack.c.b16 %v3101, %v3097
  %v3974 = vpack.c.b16 %v3102, %v3098
  %v3975 = vpack.c.b16 %v3103, %v3099
  %v3976 = vpack.c.b16 %v3104, %v3100
  %v3977 = vpack.c.b16 %v3109, %v3105
  %v3978 = vpack.c.b16 %v3110, %v3106
  %v3979 = vpack.c.b16 %v3111, %v3107
  %v3980 = vpack.c.b16 %v3112, %v3108
  %v3981 = vpack.c.b16 %v3117, %v3113
  %v3982 = vpack.c.b16 %v3118, %v3114
  %v3983 = vpack.c.b16 %v3119, %v3115
  %v3984 = vpack.c.b16 %v3120, %v3116
  %v3985 = vpack.c.b16 %v3125, %v3121
  %v3986 = vpack.c.b16 %v3126, %v3122
  %v3987 = vpack.c.b16 %v3127, %v3123
  %v3988 = vpack.c.b16 %v3128, %v3124
  %v3989 = vpack.c.b16 %v3133, %v3129
  %v3990 = vpack.c.b16 %v3134, %v3130
  %v3991 = vpack.c.b16 %v3135, %v3131
  %v3992 = vpack.c.b16 %v3136, %v3132
  %v3993 = vpack.c.b16 %v3141, %v3137
  %v3994 = vpack.c.b16 %v3142, %v3138
  %v3995 = vpack.c.b16 %v3143, %v3139
  %v3996 = vpack.c.b16 %v3144, %v3140
  %v3997 = vpack.c.b16 %v3149, %v3145
  %v3998 = vpack.c.b16 %v3150, %v3146
  %v3999 = vpack.c.b16 %v3151, %v3147
  %v4000 = vpack.c.b16 %v3152, %v3148
  %v4001 = vpack.c.b16 %v3157, %v3153
  %v4002 = vpack.c.b16 %v3158, %v3154
  %v4003 = vpack.c.b16 %v3159, %v3155
  %v4004 = vpack.c.b16 %v3160, %v3156
  %v4005 = vpack.c.b16 %v3165, %v3161
  %v4006 = vpack.c.b16 %v3166, %v3162
  %v4007 = vpack.c.b16 %v3167, %v3163
  %v4008 = vpack.c.b16 %v3168, %v3164
  %v4009 = vpack.c.b16 %v3173, %v3169
  %v4010 = vpack.c.b16 %v3174, %v3170
  %v4011 = vpack.c.b16 %v3175, %v3171
  %v4012 = vpack.c.b16 %v3176, %v3172
  %v4013 = vpack.c.b16 %v3181, %v3177
  %v4014 = vpack.c.b16 %v3182, %v3178
  %v4015 = vpack.c.b16 %v3183, %v3179
  %v4016 = vpack.c.b16 %v3184, %v3180
  %v4017 = vpack.c.b16 %v3189, %v3185
  %v4018 = vpack.c.b16 %v3190, %v3186
  %v4019 = vpack.c.b16 %v3191, %v3187
  %v4020 = vpack.c.b16 %v3192, %v3188
  %v4021 = vpack.c.b16 %v3197, %v3193
  %v4022 = vpack.c.b16 %v3198, %v3194
  %v4023 = vpack.c.b16 %v3199, %v3195
  %v4024 = vpack.c.b16 %v3200, %v3196
  %v4025 = vpack.c.b16 %v3205, %v3201
  %v4026 = vpack.c.b16 %v3206, %v3202
  %v4027 = vpack.c.b16 %v3207, %v3203
  %v4028 = vpack.c.b16 %v3208, %v3204
  %v4029 = vpack.c.b16 %v3213, %v3209
  %v4030 = vpack.c.b16 %v3214, %v3210
  %v4031 = vpack.c.b16 %v3215, %v3211
  %v4032 = vpack.c.b16 %v3216, %v3212
  %v4033 = vpack.c.b16 %v3221, %v3217
  %v4034 = vpack.c.b16 %v3222, %v3218
  %v4035 = vpack.c.b16 %v3223, %v3219
  %v4036 = vpack.c.b16 %v3224, %v3220
  %v4037 = vpack.c.b16 %v3229, %v3225
  %v4038 = vpack.c.b16 %v3230, %v3226
  %v4039 = vpack.c.b16 %v3231, %v3227
  %v4040 = vpack.c.b16 %v3232, %v3228
  %v4041 = vpack.c.b16 %v3237, %v3233
  %v4042 = vpack.c.b16 %v3238, %v3234
  %v4043 = vpack.c.b16 %v3239, %v3235
  %v4044 = vpack.c.b16 %v3240, %v3236
  %v4045 = vpack.c.b16 %v3245, %v3241
  %v4046 = vpack.c.b16 %v3246, %v3242
  %v4047 = vpack.c.b16 %v3247, %v3243
  %v4048 = vpack.c.b16 %v3248, %v3244
  %v4049 = vpack.c.b16 %v3253, %v3249
  %v4050 = vpack.c.b16 %v3254, %v3250
  %v4051 = vpack.c.b16 %v3255, %v3251
  %v4052 = vpack.c.b16 %v3256, %v3252
  %v4053 = vpack.c.b16 %v3261, %v3257
  %v4054 = vpack.c.b16 %v3262, %v3258
  %v4055 = vpack.c.b16 %v3263, %v3259
  %v4056 = vpack.c.b16 %v3264, %v3260
  %v4057 = vpack.c.b16 %v3269, %v3265
  %v4058 = vpack.c.b16 %v3270, %v3266
  %v4059 = vpack.c.b16 %v3271, %v3267
  %v4060 = vpack.c.b16 %v3272, %v3268
  %v4061 = vpack.c.b16 %v3277, %v3273
  %v4062 = vpack.c.b16 %v3278, %v3274
  %v4063 = vpack.c.b16 %v3279, %v3275
  %v4064 = vpack.c.b16 %v3280, %v3276
  %vm4849 = vcmask 523264
  %v4851 = vsel %vm4849, %v904, 0
  %4853 = vmatprep.subr.bf16.mxu0 %v3282
  %4854 = vmatpush1.bf16.msra.mxu0 %v3281
  %4855 = vmatprep.subr.bf16.mxu0 %v3286
  %4856 = vmatpush1.bf16.msra.mxu0 %v3285
  %4857 = vmatprep.subr.bf16.mxu0 %v3290
  %4858 = vmatpush1.bf16.msra.mxu0 %v3289
  %4859 = vmatprep.subr.bf16.mxu0 %v3294
  %4860 = vmatpush1.bf16.msra.mxu0 %v3293
  %4861 = vmatprep.subr.bf16.mxu0 %v3298
  %4862 = vmatpush1.bf16.msra.mxu0 %v3297
  %4863 = vmatprep.subr.bf16.mxu0 %v3302
  %4864 = vmatpush1.bf16.msra.mxu0 %v3301
  %4865 = vmatprep.subr.bf16.mxu0 %v3306
  %4866 = vmatpush1.bf16.msra.mxu0 %v3305
  %4867 = vmatprep.subr.bf16.mxu0 %v3310
  %4868 = vmatpush1.bf16.msra.mxu0 %v3309
  %4869 = vmatprep.subr.bf16.mxu0 %v3314
  %4870 = vmatpush1.bf16.msra.mxu0 %v3313
  %4871 = vmatprep.subr.bf16.mxu0 %v3318
  %4872 = vmatpush1.bf16.msra.mxu0 %v3317
  %4873 = vmatprep.subr.bf16.mxu0 %v3322
  %4874 = vmatpush1.bf16.msra.mxu0 %v3321
  %4875 = vmatprep.subr.bf16.mxu0 %v3326
  %4876 = vmatpush1.bf16.msra.mxu0 %v3325
  %4877 = vmatprep.subr.bf16.mxu0 %v3330
  %4878 = vmatpush1.bf16.msra.mxu0 %v3329
  %4879 = vmatprep.subr.bf16.mxu0 %v3334
  %4880 = vmatpush1.bf16.msra.mxu0 %v3333
  %4881 = vmatprep.subr.bf16.mxu0 %v3338
  %4882 = vmatpush1.bf16.msra.mxu0 %v3337
  %4883 = vmatprep.subr.bf16.mxu0 %v3342
  %4884 = vmatpush1.bf16.msra.mxu0 %v3341
  %4885 = vmatprep.mubr.bf16.mxu0 %v881
  %4886 = vmatmul.mubr.bf16.gmra.mrb[0].mxu0 %v880
  %v4887 = vpop.f32.mrb[0].mxu0
  %v4888 = vadd.f32 %v825, %v4887
  %v4889 = vpop.f32.mrb[0].mxu0
  %v4890 = vadd.f32 %v829, %v4889
  %v4891 = vpop.f32.mrb[0].mxu0
  %v4892 = vpop.f32.mrb[0].mxu0
  %4893 = vdwg.mxu0
  %4894 = vmatprep.subr.bf16.mxu0 %v3346
  %4895 = vmatpush1.bf16.msra.mxu0 %v3345
  %4896 = vmatprep.subr.bf16.mxu0 %v3350
  %4897 = vmatpush1.bf16.msra.mxu0 %v3349
  %4898 = vmatprep.subr.bf16.mxu0 %v3354
  %4899 = vmatpush1.bf16.msra.mxu0 %v3353
  %4900 = vmatprep.subr.bf16.mxu0 %v3358
  %4901 = vmatpush1.bf16.msra.mxu0 %v3357
  %4902 = vmatprep.subr.bf16.mxu0 %v3362
  %4903 = vmatpush1.bf16.msra.mxu0 %v3361
  %4904 = vmatprep.subr.bf16.mxu0 %v3366
  %4905 = vmatpush1.bf16.msra.mxu0 %v3365
  %4906 = vmatprep.subr.bf16.mxu0 %v3370
  %4907 = vmatpush1.bf16.msra.mxu0 %v3369
  %4908 = vmatprep.subr.bf16.mxu0 %v3374
  %4909 = vmatpush1.bf16.msra.mxu0 %v3373
  %4910 = vmatprep.subr.bf16.mxu0 %v3378
  %4911 = vmatpush1.bf16.msra.mxu0 %v3377
  %4912 = vmatprep.subr.bf16.mxu0 %v3382
  %4913 = vmatpush1.bf16.msra.mxu0 %v3381
  %4914 = vmatprep.subr.bf16.mxu0 %v3386
  %4915 = vmatpush1.bf16.msra.mxu0 %v3385
  %4916 = vmatprep.subr.bf16.mxu0 %v3390
  %4917 = vmatpush1.bf16.msra.mxu0 %v3389
  %4918 = vmatprep.subr.bf16.mxu0 %v3394
  %4919 = vmatpush1.bf16.msra.mxu0 %v3393
  %4920 = vmatprep.subr.bf16.mxu0 %v3398
  %4921 = vmatpush1.bf16.msra.mxu0 %v3397
  %4922 = vmatprep.subr.bf16.mxu0 %v3402
  %4923 = vmatpush1.bf16.msra.mxu0 %v3401
  %4924 = vmatprep.subr.bf16.mxu0 %v3406
  %4925 = vmatpush1.bf16.msra.mxu0 %v3405
  %4926 = vmatprep.mubr.bf16.mxu0 %v883
  %4927 = vmatmul.mubr.bf16.gmra.mrb[0].mxu0 %v882
  %v4928 = vpop.f32.mrb[0].mxu0
  %v4929 = vadd.f32 %v4888, %v4928
  %v4930 = vpop.f32.mrb[0].mxu0
  %v4931 = vadd.f32 %v4890, %v4930
  %v4932 = vpop.f32.mrb[0].mxu0
  %v4933 = vpop.f32.mrb[0].mxu0
  %4934 = vdwg.mxu0
  %4935 = vmatprep.subr.bf16.mxu0 %v3410
  %4936 = vmatpush1.bf16.msra.mxu0 %v3409
  %4937 = vmatprep.subr.bf16.mxu0 %v3414
  %4938 = vmatpush1.bf16.msra.mxu0 %v3413
  %4939 = vmatprep.subr.bf16.mxu0 %v3418
  %4940 = vmatpush1.bf16.msra.mxu0 %v3417
  %4941 = vmatprep.subr.bf16.mxu0 %v3422
  %4942 = vmatpush1.bf16.msra.mxu0 %v3421
  %4943 = vmatprep.subr.bf16.mxu0 %v3426
  %4944 = vmatpush1.bf16.msra.mxu0 %v3425
  %4945 = vmatprep.subr.bf16.mxu0 %v3430
  %4946 = vmatpush1.bf16.msra.mxu0 %v3429
  %4947 = vmatprep.subr.bf16.mxu0 %v3434
  %4948 = vmatpush1.bf16.msra.mxu0 %v3433
  %4949 = vmatprep.subr.bf16.mxu0 %v3438
  %4950 = vmatpush1.bf16.msra.mxu0 %v3437
  %4951 = vmatprep.subr.bf16.mxu0 %v3442
  %4952 = vmatpush1.bf16.msra.mxu0 %v3441
  %4953 = vmatprep.subr.bf16.mxu0 %v3446
  %4954 = vmatpush1.bf16.msra.mxu0 %v3445
  %4955 = vmatprep.subr.bf16.mxu0 %v3450
  %4956 = vmatpush1.bf16.msra.mxu0 %v3449
  %4957 = vmatprep.subr.bf16.mxu0 %v3454
  %4958 = vmatpush1.bf16.msra.mxu0 %v3453
  %4959 = vmatprep.subr.bf16.mxu0 %v3458
  %4960 = vmatpush1.bf16.msra.mxu0 %v3457
  %4961 = vmatprep.subr.bf16.mxu0 %v3462
  %4962 = vmatpush1.bf16.msra.mxu0 %v3461
  %4963 = vmatprep.subr.bf16.mxu0 %v3466
  %4964 = vmatpush1.bf16.msra.mxu0 %v3465
  %4965 = vmatprep.subr.bf16.mxu0 %v3470
  %4966 = vmatpush1.bf16.msra.mxu0 %v3469
  %4967 = vmatprep.mubr.bf16.mxu0 %v885
  %4968 = vmatmul.mubr.bf16.gmra.mrb[0].mxu0 %v884
  %v4969 = vpop.f32.mrb[0].mxu0
  %v4970 = vadd.f32 %v4929, %v4969
  %v4971 = vpop.f32.mrb[0].mxu0
  %v4972 = vadd.f32 %v4931, %v4971
  %v4973 = vpop.f32.mrb[0].mxu0
  %v4974 = vpop.f32.mrb[0].mxu0
  %4975 = vdwg.mxu0
  %4976 = vmatprep.subr.bf16.mxu0 %v3474
  %4977 = vmatpush1.bf16.msra.mxu0 %v3473
  %4978 = vmatprep.subr.bf16.mxu0 %v3478
  %4979 = vmatpush1.bf16.msra.mxu0 %v3477
  %4980 = vmatprep.subr.bf16.mxu0 %v3482
  %4981 = vmatpush1.bf16.msra.mxu0 %v3481
  %4982 = vmatprep.subr.bf16.mxu0 %v3486
  %4983 = vmatpush1.bf16.msra.mxu0 %v3485
  %4984 = vmatprep.subr.bf16.mxu0 %v3490
  %4985 = vmatpush1.bf16.msra.mxu0 %v3489
  %4986 = vmatprep.subr.bf16.mxu0 %v3494
  %4987 = vmatpush1.bf16.msra.mxu0 %v3493
  %4988 = vmatprep.subr.bf16.mxu0 %v3498
  %4989 = vmatpush1.bf16.msra.mxu0 %v3497
  %4990 = vmatprep.subr.bf16.mxu0 %v3502
  %4991 = vmatpush1.bf16.msra.mxu0 %v3501
  %4992 = vmatprep.subr.bf16.mxu0 %v3506
  %4993 = vmatpush1.bf16.msra.mxu0 %v3505
  %4994 = vmatprep.subr.bf16.mxu0 %v3510
  %4995 = vmatpush1.bf16.msra.mxu0 %v3509
  %4996 = vmatprep.subr.bf16.mxu0 %v3514
  %4997 = vmatpush1.bf16.msra.mxu0 %v3513
  %4998 = vmatprep.subr.bf16.mxu0 %v3518
  %4999 = vmatpush1.bf16.msra.mxu0 %v3517
  %5000 = vmatprep.subr.bf16.mxu0 %v3522
  %5001 = vmatpush1.bf16.msra.mxu0 %v3521
  %5002 = vmatprep.subr.bf16.mxu0 %v3526
  %5003 = vmatpush1.bf16.msra.mxu0 %v3525
  %5004 = vmatprep.subr.bf16.mxu0 %v3530
  %5005 = vmatpush1.bf16.msra.mxu0 %v3529
  %5006 = vmatprep.subr.bf16.mxu0 %v3534
  %5007 = vmatpush1.bf16.msra.mxu0 %v3533
  %5008 = vmatprep.mubr.bf16.mxu0 %v887
  %5009 = vmatmul.mubr.bf16.gmra.mrb[0].mxu0 %v886
  %v5010 = vpop.f32.mrb[0].mxu0
  %v5011 = vadd.f32 %v4970, %v5010
  %v5012 = vpop.f32.mrb[0].mxu0
  %v5013 = vadd.f32 %v4972, %v5012
  %v5014 = vpop.f32.mrb[0].mxu0
  %v5015 = vpop.f32.mrb[0].mxu0
  %5016 = vdwg.mxu0
  %5017 = vmatprep.subr.bf16.mxu0 %v3538
  %5018 = vmatpush1.bf16.msra.mxu0 %v3537
  %5019 = vmatprep.subr.bf16.mxu0 %v3542
  %5020 = vmatpush1.bf16.msra.mxu0 %v3541
  %5021 = vmatprep.subr.bf16.mxu0 %v3546
  %5022 = vmatpush1.bf16.msra.mxu0 %v3545
  %5023 = vmatprep.subr.bf16.mxu0 %v3550
  %5024 = vmatpush1.bf16.msra.mxu0 %v3549
  %5025 = vmatprep.subr.bf16.mxu0 %v3554
  %5026 = vmatpush1.bf16.msra.mxu0 %v3553
  %5027 = vmatprep.subr.bf16.mxu0 %v3558
  %5028 = vmatpush1.bf16.msra.mxu0 %v3557
  %5029 = vmatprep.subr.bf16.mxu0 %v3562
  %5030 = vmatpush1.bf16.msra.mxu0 %v3561
  %5031 = vmatprep.subr.bf16.mxu0 %v3566
  %5032 = vmatpush1.bf16.msra.mxu0 %v3565
  %5033 = vmatprep.subr.bf16.mxu0 %v3570
  %5034 = vmatpush1.bf16.msra.mxu0 %v3569
  %5035 = vmatprep.subr.bf16.mxu0 %v3574
  %5036 = vmatpush1.bf16.msra.mxu0 %v3573
  %5037 = vmatprep.subr.bf16.mxu0 %v3578
  %5038 = vmatpush1.bf16.msra.mxu0 %v3577
  %5039 = vmatprep.subr.bf16.mxu0 %v3582
  %5040 = vmatpush1.bf16.msra.mxu0 %v3581
  %5041 = vmatprep.subr.bf16.mxu0 %v3586
  %5042 = vmatpush1.bf16.msra.mxu0 %v3585
  %5043 = vmatprep.subr.bf16.mxu0 %v3590
  %5044 = vmatpush1.bf16.msra.mxu0 %v3589
  %5045 = vmatprep.subr.bf16.mxu0 %v3594
  %5046 = vmatpush1.bf16.msra.mxu0 %v3593
  %5047 = vmatprep.subr.bf16.mxu0 %v3598
  %5048 = vmatpush1.bf16.msra.mxu0 %v3597
  %5049 = vmatprep.mubr.bf16.mxu0 %v889
  %5050 = vmatmul.mubr.bf16.gmra.mrb[0].mxu0 %v888
  %v5051 = vpop.f32.mrb[0].mxu0
  %v5052 = vadd.f32 %v5011, %v5051
  %v5053 = vpop.f32.mrb[0].mxu0
  %v5054 = vadd.f32 %v5013, %v5053
  %v5055 = vpop.f32.mrb[0].mxu0
  %v5056 = vpop.f32.mrb[0].mxu0
  %5057 = vdwg.mxu0
  %5058 = vmatprep.subr.bf16.mxu0 %v3602
  %5059 = vmatpush1.bf16.msra.mxu0 %v3601
  %5060 = vmatprep.subr.bf16.mxu0 %v3606
  %5061 = vmatpush1.bf16.msra.mxu0 %v3605
  %5062 = vmatprep.subr.bf16.mxu0 %v3610
  %5063 = vmatpush1.bf16.msra.mxu0 %v3609
  %5064 = vmatprep.subr.bf16.mxu0 %v3614
  %5065 = vmatpush1.bf16.msra.mxu0 %v3613
  %5066 = vmatprep.subr.bf16.mxu0 %v3618
  %5067 = vmatpush1.bf16.msra.mxu0 %v3617
  %5068 = vmatprep.subr.bf16.mxu0 %v3622
  %5069 = vmatpush1.bf16.msra.mxu0 %v3621
  %5070 = vmatprep.subr.bf16.mxu0 %v3626
  %5071 = vmatpush1.bf16.msra.mxu0 %v3625
  %5072 = vmatprep.subr.bf16.mxu0 %v3630
  %5073 = vmatpush1.bf16.msra.mxu0 %v3629
  %5074 = vmatprep.subr.bf16.mxu0 %v3634
  %5075 = vmatpush1.bf16.msra.mxu0 %v3633
  %5076 = vmatprep.subr.bf16.mxu0 %v3638
  %5077 = vmatpush1.bf16.msra.mxu0 %v3637
  %5078 = vmatprep.subr.bf16.mxu0 %v3642
  %5079 = vmatpush1.bf16.msra.mxu0 %v3641
  %5080 = vmatprep.subr.bf16.mxu0 %v3646
  %5081 = vmatpush1.bf16.msra.mxu0 %v3645
  %5082 = vmatprep.subr.bf16.mxu0 %v3650
  %5083 = vmatpush1.bf16.msra.mxu0 %v3649
  %5084 = vmatprep.subr.bf16.mxu0 %v3654
  %5085 = vmatpush1.bf16.msra.mxu0 %v3653
  %5086 = vmatprep.subr.bf16.mxu0 %v3658
  %5087 = vmatpush1.bf16.msra.mxu0 %v3657
  %5088 = vmatprep.subr.bf16.mxu0 %v3662
  %5089 = vmatpush1.bf16.msra.mxu0 %v3661
  %5090 = vmatprep.mubr.bf16.mxu0 %v891
  %5091 = vmatmul.mubr.bf16.gmra.mrb[0].mxu0 %v890
  %v5092 = vpop.f32.mrb[0].mxu0
  %v5093 = vadd.f32 %v5052, %v5092
  %v5094 = vpop.f32.mrb[0].mxu0
  %v5095 = vadd.f32 %v5054, %v5094
  %v5096 = vpop.f32.mrb[0].mxu0
  %v5097 = vpop.f32.mrb[0].mxu0
  %5098 = vdwg.mxu0
  %5099 = vmatprep.subr.bf16.mxu0 %v3666
  %5100 = vmatpush1.bf16.msra.mxu0 %v3665
  %5101 = vmatprep.subr.bf16.mxu0 %v3670
  %5102 = vmatpush1.bf16.msra.mxu0 %v3669
  %5103 = vmatprep.subr.bf16.mxu0 %v3674
  %5104 = vmatpush1.bf16.msra.mxu0 %v3673
  %5105 = vmatprep.subr.bf16.mxu0 %v3678
  %5106 = vmatpush1.bf16.msra.mxu0 %v3677
  %5107 = vmatprep.subr.bf16.mxu0 %v3682
  %5108 = vmatpush1.bf16.msra.mxu0 %v3681
  %5109 = vmatprep.subr.bf16.mxu0 %v3686
  %5110 = vmatpush1.bf16.msra.mxu0 %v3685
  %5111 = vmatprep.subr.bf16.mxu0 %v3690
  %5112 = vmatpush1.bf16.msra.mxu0 %v3689
  %5113 = vmatprep.subr.bf16.mxu0 %v3694
  %5114 = vmatpush1.bf16.msra.mxu0 %v3693
  %5115 = vmatprep.subr.bf16.mxu0 %v3698
  %5116 = vmatpush1.bf16.msra.mxu0 %v3697
  %5117 = vmatprep.subr.bf16.mxu0 %v3702
  %5118 = vmatpush1.bf16.msra.mxu0 %v3701
  %5119 = vmatprep.subr.bf16.mxu0 %v3706
  %5120 = vmatpush1.bf16.msra.mxu0 %v3705
  %5121 = vmatprep.subr.bf16.mxu0 %v3710
  %5122 = vmatpush1.bf16.msra.mxu0 %v3709
  %5123 = vmatprep.subr.bf16.mxu0 %v3714
  %5124 = vmatpush1.bf16.msra.mxu0 %v3713
  %5125 = vmatprep.subr.bf16.mxu0 %v3718
  %5126 = vmatpush1.bf16.msra.mxu0 %v3717
  %5127 = vmatprep.subr.bf16.mxu0 %v3722
  %5128 = vmatpush1.bf16.msra.mxu0 %v3721
  %5129 = vmatprep.subr.bf16.mxu0 %v3726
  %5130 = vmatpush1.bf16.msra.mxu0 %v3725
  %5131 = vmatprep.mubr.bf16.mxu0 %v893
  %5132 = vmatmul.mubr.bf16.gmra.mrb[0].mxu0 %v892
  %v5133 = vpop.f32.mrb[0].mxu0
  %v5134 = vadd.f32 %v5093, %v5133
  %v5135 = vpop.f32.mrb[0].mxu0
  %v5136 = vadd.f32 %v5095, %v5135
  %v5137 = vpop.f32.mrb[0].mxu0
  %v5138 = vpop.f32.mrb[0].mxu0
  %5139 = vdwg.mxu0
  %5140 = vmatprep.subr.bf16.mxu0 %v3730
  %5141 = vmatpush1.bf16.msra.mxu0 %v3729
  %5142 = vmatprep.subr.bf16.mxu0 %v3734
  %5143 = vmatpush1.bf16.msra.mxu0 %v3733
  %5144 = vmatprep.subr.bf16.mxu0 %v3738
  %5145 = vmatpush1.bf16.msra.mxu0 %v3737
  %5146 = vmatprep.subr.bf16.mxu0 %v3742
  %5147 = vmatpush1.bf16.msra.mxu0 %v3741
  %5148 = vmatprep.subr.bf16.mxu0 %v3746
  %5149 = vmatpush1.bf16.msra.mxu0 %v3745
  %5150 = vmatprep.subr.bf16.mxu0 %v3750
  %5151 = vmatpush1.bf16.msra.mxu0 %v3749
  %5152 = vmatprep.subr.bf16.mxu0 %v3754
  %5153 = vmatpush1.bf16.msra.mxu0 %v3753
  %5154 = vmatprep.subr.bf16.mxu0 %v3758
  %5155 = vmatpush1.bf16.msra.mxu0 %v3757
  %5156 = vmatprep.subr.bf16.mxu0 %v3762
  %5157 = vmatpush1.bf16.msra.mxu0 %v3761
  %5158 = vmatprep.subr.bf16.mxu0 %v3766
  %5159 = vmatpush1.bf16.msra.mxu0 %v3765
  %5160 = vmatprep.subr.bf16.mxu0 %v3770
  %5161 = vmatpush1.bf16.msra.mxu0 %v3769
  %5162 = vmatprep.subr.bf16.mxu0 %v3774
  %5163 = vmatpush1.bf16.msra.mxu0 %v3773
  %5164 = vmatprep.subr.bf16.mxu0 %v3778
  %5165 = vmatpush1.bf16.msra.mxu0 %v3777
  %5166 = vmatprep.subr.bf16.mxu0 %v3782
  %5167 = vmatpush1.bf16.msra.mxu0 %v3781
  %5168 = vmatprep.subr.bf16.mxu0 %v3786
  %5169 = vmatpush1.bf16.msra.mxu0 %v3785
  %5170 = vmatprep.subr.bf16.mxu0 %v3790
  %5171 = vmatpush1.bf16.msra.mxu0 %v3789
  %5172 = vmatprep.mubr.bf16.mxu0 %v895
  %5173 = vmatmul.mubr.bf16.gmra.mrb[0].mxu0 %v894
  %v5174 = vpop.f32.mrb[0].mxu0
  %v5175 = vadd.f32 %v5134, %v5174
  %v5176 = vpop.f32.mrb[0].mxu0
  %v5177 = vadd.f32 %v5136, %v5176
  %v5178 = vpop.f32.mrb[0].mxu0
  %v5179 = vpop.f32.mrb[0].mxu0
  %5180 = vdwg.mxu0
  %5181 = vmatprep.subr.bf16.mxu0 %v3794
  %5182 = vmatpush1.bf16.msra.mxu0 %v3793
  %5183 = vmatprep.subr.bf16.mxu0 %v3798
  %5184 = vmatpush1.bf16.msra.mxu0 %v3797
  %5185 = vmatprep.subr.bf16.mxu0 %v3802
  %5186 = vmatpush1.bf16.msra.mxu0 %v3801
  %5187 = vmatprep.subr.bf16.mxu0 %v3806
  %5188 = vmatpush1.bf16.msra.mxu0 %v3805
  %5189 = vmatprep.subr.bf16.mxu0 %v3810
  %5190 = vmatpush1.bf16.msra.mxu0 %v3809
  %5191 = vmatprep.subr.bf16.mxu0 %v3814
  %5192 = vmatpush1.bf16.msra.mxu0 %v3813
  %5193 = vmatprep.subr.bf16.mxu0 %v3818
  %5194 = vmatpush1.bf16.msra.mxu0 %v3817
  %5195 = vmatprep.subr.bf16.mxu0 %v3822
  %5196 = vmatpush1.bf16.msra.mxu0 %v3821
  %5197 = vmatprep.subr.bf16.mxu0 %v3826
  %5198 = vmatpush1.bf16.msra.mxu0 %v3825
  %5199 = vmatprep.subr.bf16.mxu0 %v3830
  %5200 = vmatpush1.bf16.msra.mxu0 %v3829
  %5201 = vmatprep.subr.bf16.mxu0 %v3834
  %5202 = vmatpush1.bf16.msra.mxu0 %v3833
  %5203 = vmatprep.subr.bf16.mxu0 %v3838
  %5204 = vmatpush1.bf16.msra.mxu0 %v3837
  %5205 = vmatprep.subr.bf16.mxu0 %v3842
  %5206 = vmatpush1.bf16.msra.mxu0 %v3841
  %5207 = vmatprep.subr.bf16.mxu0 %v3846
  %5208 = vmatpush1.bf16.msra.mxu0 %v3845
  %5209 = vmatprep.subr.bf16.mxu0 %v3850
  %5210 = vmatpush1.bf16.msra.mxu0 %v3849
  %5211 = vmatprep.subr.bf16.mxu0 %v3854
  %5212 = vmatpush1.bf16.msra.mxu0 %v3853
  %5213 = vmatprep.mubr.bf16.mxu0 %v897
  %5214 = vmatmul.mubr.bf16.gmra.mrb[0].mxu0 %v896
  %v5215 = vpop.f32.mrb[0].mxu0
  %v5216 = vadd.f32 %v5175, %v5215
  %v5217 = vpop.f32.mrb[0].mxu0
  %v5218 = vadd.f32 %v5177, %v5217
  %v5219 = vpop.f32.mrb[0].mxu0
  %v5220 = vpop.f32.mrb[0].mxu0
  %5221 = vdwg.mxu0
  %5222 = vmatprep.subr.bf16.mxu0 %v3858
  %5223 = vmatpush1.bf16.msra.mxu0 %v3857
  %5224 = vmatprep.subr.bf16.mxu0 %v3862
  %5225 = vmatpush1.bf16.msra.mxu0 %v3861
  %5226 = vmatprep.subr.bf16.mxu0 %v3866
  %5227 = vmatpush1.bf16.msra.mxu0 %v3865
  %5228 = vmatprep.subr.bf16.mxu0 %v3870
  %5229 = vmatpush1.bf16.msra.mxu0 %v3869
  %5230 = vmatprep.subr.bf16.mxu0 %v3874
  %5231 = vmatpush1.bf16.msra.mxu0 %v3873
  %5232 = vmatprep.subr.bf16.mxu0 %v3878
  %5233 = vmatpush1.bf16.msra.mxu0 %v3877
  %5234 = vmatprep.subr.bf16.mxu0 %v3882
  %5235 = vmatpush1.bf16.msra.mxu0 %v3881
  %5236 = vmatprep.subr.bf16.mxu0 %v3886
  %5237 = vmatpush1.bf16.msra.mxu0 %v3885
  %5238 = vmatprep.subr.bf16.mxu0 %v3890
  %5239 = vmatpush1.bf16.msra.mxu0 %v3889
  %5240 = vmatprep.subr.bf16.mxu0 %v3894
  %5241 = vmatpush1.bf16.msra.mxu0 %v3893
  %5242 = vmatprep.subr.bf16.mxu0 %v3898
  %5243 = vmatpush1.bf16.msra.mxu0 %v3897
  %5244 = vmatprep.subr.bf16.mxu0 %v3902
  %5245 = vmatpush1.bf16.msra.mxu0 %v3901
  %5246 = vmatprep.subr.bf16.mxu0 %v3906
  %5247 = vmatpush1.bf16.msra.mxu0 %v3905
  %5248 = vmatprep.subr.bf16.mxu0 %v3910
  %5249 = vmatpush1.bf16.msra.mxu0 %v3909
  %5250 = vmatprep.subr.bf16.mxu0 %v3914
  %5251 = vmatpush1.bf16.msra.mxu0 %v3913
  %5252 = vmatprep.subr.bf16.mxu0 %v3918
  %5253 = vmatpush1.bf16.msra.mxu0 %v3917
  %5254 = vmatprep.mubr.bf16.mxu0 %v899
  %5255 = vmatmul.mubr.bf16.gmra.mrb[0].mxu0 %v898
  %v5256 = vpop.f32.mrb[0].mxu0
  %v5257 = vadd.f32 %v5216, %v5256
  %v5258 = vpop.f32.mrb[0].mxu0
  %v5259 = vadd.f32 %v5218, %v5258
  %v5260 = vpop.f32.mrb[0].mxu0
  %v5261 = vpop.f32.mrb[0].mxu0
  %5262 = vdwg.mxu0
  %5263 = vmatprep.subr.bf16.mxu0 %v3922
  %5264 = vmatpush1.bf16.msra.mxu0 %v3921
  %5265 = vmatprep.subr.bf16.mxu0 %v3926
  %5266 = vmatpush1.bf16.msra.mxu0 %v3925
  %5267 = vmatprep.subr.bf16.mxu0 %v3930
  %5268 = vmatpush1.bf16.msra.mxu0 %v3929
  %5269 = vmatprep.subr.bf16.mxu0 %v3934
  %5270 = vmatpush1.bf16.msra.mxu0 %v3933
  %5271 = vmatprep.subr.bf16.mxu0 %v3938
  %5272 = vmatpush1.bf16.msra.mxu0 %v3937
  %5273 = vmatprep.subr.bf16.mxu0 %v3942
  %5274 = vmatpush1.bf16.msra.mxu0 %v3941
  %5275 = vmatprep.subr.bf16.mxu0 %v3946
  %5276 = vmatpush1.bf16.msra.mxu0 %v3945
  %5277 = vmatprep.subr.bf16.mxu0 %v3950
  %5278 = vmatpush1.bf16.msra.mxu0 %v3949
  %5279 = vmatprep.subr.bf16.mxu0 %v3954
  %5280 = vmatpush1.bf16.msra.mxu0 %v3953
  %5281 = vmatprep.subr.bf16.mxu0 %v3958
  %5282 = vmatpush1.bf16.msra.mxu0 %v3957
  %5283 = vmatprep.subr.bf16.mxu0 %v3962
  %5284 = vmatpush1.bf16.msra.mxu0 %v3961
  %5285 = vmatprep.subr.bf16.mxu0 %v3966
  %5286 = vmatpush1.bf16.msra.mxu0 %v3965
  %5287 = vmatprep.subr.bf16.mxu0 %v3970
  %5288 = vmatpush1.bf16.msra.mxu0 %v3969
  %5289 = vmatprep.subr.bf16.mxu0 %v3974
  %5290 = vmatpush1.bf16.msra.mxu0 %v3973
  %5291 = vmatprep.subr.bf16.mxu0 %v3978
  %5292 = vmatpush1.bf16.msra.mxu0 %v3977
  %5293 = vmatprep.subr.bf16.mxu0 %v3982
  %5294 = vmatpush1.bf16.msra.mxu0 %v3981
  %5295 = vmatprep.mubr.bf16.mxu0 %v901
  %5296 = vmatmul.mubr.bf16.gmra.mrb[0].mxu0 %v900
  %v5297 = vpop.f32.mrb[0].mxu0
  %v5298 = vadd.f32 %v5257, %v5297
  %v5299 = vpop.f32.mrb[0].mxu0
  %v5300 = vadd.f32 %v5259, %v5299
  %v5301 = vpop.f32.mrb[0].mxu0
  %v5302 = vpop.f32.mrb[0].mxu0
  %5303 = vdwg.mxu0
  %5304 = vmatprep.subr.bf16.mxu0 %v3986
  %5305 = vmatpush1.bf16.msra.mxu0 %v3985
  %5306 = vmatprep.subr.bf16.mxu0 %v3990
  %5307 = vmatpush1.bf16.msra.mxu0 %v3989
  %5308 = vmatprep.subr.bf16.mxu0 %v3994
  %5309 = vmatpush1.bf16.msra.mxu0 %v3993
  %5310 = vmatprep.subr.bf16.mxu0 %v3998
  %5311 = vmatpush1.bf16.msra.mxu0 %v3997
  %5312 = vmatprep.subr.bf16.mxu0 %v4002
  %5313 = vmatpush1.bf16.msra.mxu0 %v4001
  %5314 = vmatprep.subr.bf16.mxu0 %v4006
  %5315 = vmatpush1.bf16.msra.mxu0 %v4005
  %5316 = vmatprep.subr.bf16.mxu0 %v4010
  %5317 = vmatpush1.bf16.msra.mxu0 %v4009
  %5318 = vmatprep.subr.bf16.mxu0 %v4014
  %5319 = vmatpush1.bf16.msra.mxu0 %v4013
  %5320 = vmatprep.subr.bf16.mxu0 %v4018
  %5321 = vmatpush1.bf16.msra.mxu0 %v4017
  %5322 = vmatprep.subr.bf16.mxu0 %v4022
  %5323 = vmatpush1.bf16.msra.mxu0 %v4021
  %5324 = vmatprep.subr.bf16.mxu0 %v4026
  %5325 = vmatpush1.bf16.msra.mxu0 %v4025
  %5326 = vmatprep.subr.bf16.mxu0 %v4030
  %5327 = vmatpush1.bf16.msra.mxu0 %v4029
  %5328 = vmatprep.subr.bf16.mxu0 %v4034
  %5329 = vmatpush1.bf16.msra.mxu0 %v4033
  %5330 = vmatprep.subr.bf16.mxu0 %v4038
  %5331 = vmatpush1.bf16.msra.mxu0 %v4037
  %5332 = vmatprep.subr.bf16.mxu0 %v4042
  %5333 = vmatpush1.bf16.msra.mxu0 %v4041
  %5334 = vmatprep.subr.bf16.mxu0 %v4046
  %5335 = vmatpush1.bf16.msra.mxu0 %v4045
  %5336 = vmatprep.mubr.bf16.mxu0 %v903
  %5337 = vmatmul.mubr.bf16.gmra.mrb[0].mxu0 %v902
  %v5338 = vpop.f32.mrb[0].mxu0
  %v5339 = vadd.f32 %v5298, %v5338
  %v5340 = vpop.f32.mrb[0].mxu0
  %v5341 = vadd.f32 %v5300, %v5340
  %v5342 = vpop.f32.mrb[0].mxu0
  %v5343 = vpop.f32.mrb[0].mxu0
  %5344 = vdwg.mxu0
  %5345 = vmatprep.subr.bf16.mxu0 %v4050
  %5346 = vmatpush1.bf16.msra.mxu0 %v4049
  %5347 = vmatprep.subr.bf16.mxu0 %v4054
  %5348 = vmatpush1.bf16.msra.mxu0 %v4053
  %5349 = vmatprep.subr.bf16.mxu0 %v4058
  %5350 = vmatpush1.bf16.msra.mxu0 %v4057
  %5351 = vmatprep.subr.bf16.mxu0 %v4062
  %5352 = vmatpush1.bf16.msra.mxu0 %v4061
  %5353 = vmatprep.subr.bf16.mxu0 0
  %5354 = vmatpush1.bf16.msra.mxu0 0
  %5355 = vmatprep.subr.bf16.mxu0 0
  %5356 = vmatpush1.bf16.msra.mxu0 0
  %5357 = vmatprep.subr.bf16.mxu0 0
  %5358 = vmatpush1.bf16.msra.mxu0 0
  %5359 = vmatprep.subr.bf16.mxu0 0
  %5360 = vmatpush1.bf16.msra.mxu0 0
  %5361 = vmatprep.subr.bf16.mxu0 0
  %5362 = vmatpush1.bf16.msra.mxu0 0
  %5363 = vmatprep.subr.bf16.mxu0 0
  %5364 = vmatpush1.bf16.msra.mxu0 0
  %5365 = vmatprep.subr.bf16.mxu0 0
  %5366 = vmatpush1.bf16.msra.mxu0 0
  %5367 = vmatprep.subr.bf16.mxu0 0
  %5368 = vmatpush1.bf16.msra.mxu0 0
  %5369 = vmatprep.subr.bf16.mxu0 0
  %5370 = vmatpush1.bf16.msra.mxu0 0
  %5371 = vmatprep.subr.bf16.mxu0 0
  %5372 = vmatpush1.bf16.msra.mxu0 0
  %5373 = vmatprep.subr.bf16.mxu0 0
  %5374 = vmatpush1.bf16.msra.mxu0 0
  %5375 = vmatprep.subr.bf16.mxu0 0
  %5376 = vmatpush1.bf16.msra.mxu0 0
  %5377 = vmatprep.mubr.bf16.mxu0 0
  %5378 = vmatmul.mubr.bf16.gmra.mrb[0].mxu0 %v4851
  %v5379 = vpop.f32.mrb[0].mxu0
  %v5380 = vadd.f32 %v5339, %v5379
  %v5381 = vpop.f32.mrb[0].mxu0
  %v5382 = vadd.f32 %v5341, %v5381
  %v5383 = vpop.f32.mrb[0].mxu0
  %v5384 = vpop.f32.mrb[0].mxu0
  %5385 = vdwg.mxu0
  %5386 = vmatprep.subr.bf16.mxu0 %v3284
  %5387 = vmatpush1.bf16.msra.mxu0 %v3283
  %5388 = vmatprep.subr.bf16.mxu0 %v3288
  %5389 = vmatpush1.bf16.msra.mxu0 %v3287
  %5390 = vmatprep.subr.bf16.mxu0 %v3292
  %5391 = vmatpush1.bf16.msra.mxu0 %v3291
  %5392 = vmatprep.subr.bf16.mxu0 %v3296
  %5393 = vmatpush1.bf16.msra.mxu0 %v3295
  %5394 = vmatprep.subr.bf16.mxu0 %v3300
  %5395 = vmatpush1.bf16.msra.mxu0 %v3299
  %5396 = vmatprep.subr.bf16.mxu0 %v3304
  %5397 = vmatpush1.bf16.msra.mxu0 %v3303
  %5398 = vmatprep.subr.bf16.mxu0 %v3308
  %5399 = vmatpush1.bf16.msra.mxu0 %v3307
  %5400 = vmatprep.subr.bf16.mxu0 %v3312
  %5401 = vmatpush1.bf16.msra.mxu0 %v3311
  %5402 = vmatprep.subr.bf16.mxu0 %v3316
  %5403 = vmatpush1.bf16.msra.mxu0 %v3315
  %5404 = vmatprep.subr.bf16.mxu0 %v3320
  %5405 = vmatpush1.bf16.msra.mxu0 %v3319
  %5406 = vmatprep.subr.bf16.mxu0 %v3324
  %5407 = vmatpush1.bf16.msra.mxu0 %v3323
  %5408 = vmatprep.subr.bf16.mxu0 %v3328
  %5409 = vmatpush1.bf16.msra.mxu0 %v3327
  %5410 = vmatprep.subr.bf16.mxu0 %v3332
  %5411 = vmatpush1.bf16.msra.mxu0 %v3331
  %5412 = vmatprep.subr.bf16.mxu0 %v3336
  %5413 = vmatpush1.bf16.msra.mxu0 %v3335
  %5414 = vmatprep.subr.bf16.mxu0 %v3340
  %5415 = vmatpush1.bf16.msra.mxu0 %v3339
  %5416 = vmatprep.subr.bf16.mxu0 %v3344
  %5417 = vmatpush1.bf16.msra.mxu0 %v3343
  %5418 = vmatprep.mubr.bf16.mxu0 %v881
  %5419 = vmatmul.mubr.bf16.gmra.mrb[0].mxu0 %v880
  %v5420 = vpop.f32.mrb[0].mxu0
  %v5421 = vadd.f32 %v833, %v5420
  %v5422 = vpop.f32.mrb[0].mxu0
  %v5423 = vadd.f32 %v837, %v5422
  %v5424 = vpop.f32.mrb[0].mxu0
  %v5425 = vpop.f32.mrb[0].mxu0
  %5426 = vdwg.mxu0
  %5427 = vmatprep.subr.bf16.mxu0 %v3348
  %5428 = vmatpush1.bf16.msra.mxu0 %v3347
  %5429 = vmatprep.subr.bf16.mxu0 %v3352
  %5430 = vmatpush1.bf16.msra.mxu0 %v3351
  %5431 = vmatprep.subr.bf16.mxu0 %v3356
  %5432 = vmatpush1.bf16.msra.mxu0 %v3355
  %5433 = vmatprep.subr.bf16.mxu0 %v3360
  %5434 = vmatpush1.bf16.msra.mxu0 %v3359
  %5435 = vmatprep.subr.bf16.mxu0 %v3364
  %5436 = vmatpush1.bf16.msra.mxu0 %v3363
  %5437 = vmatprep.subr.bf16.mxu0 %v3368
  %5438 = vmatpush1.bf16.msra.mxu0 %v3367
  %5439 = vmatprep.subr.bf16.mxu0 %v3372
  %5440 = vmatpush1.bf16.msra.mxu0 %v3371
  %5441 = vmatprep.subr.bf16.mxu0 %v3376
  %5442 = vmatpush1.bf16.msra.mxu0 %v3375
  %5443 = vmatprep.subr.bf16.mxu0 %v3380
  %5444 = vmatpush1.bf16.msra.mxu0 %v3379
  %5445 = vmatprep.subr.bf16.mxu0 %v3384
  %5446 = vmatpush1.bf16.msra.mxu0 %v3383
  %5447 = vmatprep.subr.bf16.mxu0 %v3388
  %5448 = vmatpush1.bf16.msra.mxu0 %v3387
  %5449 = vmatprep.subr.bf16.mxu0 %v3392
  %5450 = vmatpush1.bf16.msra.mxu0 %v3391
  %5451 = vmatprep.subr.bf16.mxu0 %v3396
  %5452 = vmatpush1.bf16.msra.mxu0 %v3395
  %5453 = vmatprep.subr.bf16.mxu0 %v3400
  %5454 = vmatpush1.bf16.msra.mxu0 %v3399
  %5455 = vmatprep.subr.bf16.mxu0 %v3404
  %5456 = vmatpush1.bf16.msra.mxu0 %v3403
  %5457 = vmatprep.subr.bf16.mxu0 %v3408
  %5458 = vmatpush1.bf16.msra.mxu0 %v3407
  %5459 = vmatprep.mubr.bf16.mxu0 %v883
  %5460 = vmatmul.mubr.bf16.gmra.mrb[0].mxu0 %v882
  %v5461 = vpop.f32.mrb[0].mxu0
  %v5462 = vadd.f32 %v5421, %v5461
  %v5463 = vpop.f32.mrb[0].mxu0
  %v5464 = vadd.f32 %v5423, %v5463
  %v5465 = vpop.f32.mrb[0].mxu0
  %v5466 = vpop.f32.mrb[0].mxu0
  %5467 = vdwg.mxu0
  %5468 = vmatprep.subr.bf16.mxu0 %v3412
  %5469 = vmatpush1.bf16.msra.mxu0 %v3411
  %5470 = vmatprep.subr.bf16.mxu0 %v3416
  %5471 = vmatpush1.bf16.msra.mxu0 %v3415
  %5472 = vmatprep.subr.bf16.mxu0 %v3420
  %5473 = vmatpush1.bf16.msra.mxu0 %v3419
  %5474 = vmatprep.subr.bf16.mxu0 %v3424
  %5475 = vmatpush1.bf16.msra.mxu0 %v3423
  %5476 = vmatprep.subr.bf16.mxu0 %v3428
  %5477 = vmatpush1.bf16.msra.mxu0 %v3427
  %5478 = vmatprep.subr.bf16.mxu0 %v3432
  %5479 = vmatpush1.bf16.msra.mxu0 %v3431
  %5480 = vmatprep.subr.bf16.mxu0 %v3436
  %5481 = vmatpush1.bf16.msra.mxu0 %v3435
  %5482 = vmatprep.subr.bf16.mxu0 %v3440
  %5483 = vmatpush1.bf16.msra.mxu0 %v3439
  %5484 = vmatprep.subr.bf16.mxu0 %v3444
  %5485 = vmatpush1.bf16.msra.mxu0 %v3443
  %5486 = vmatprep.subr.bf16.mxu0 %v3448
  %5487 = vmatpush1.bf16.msra.mxu0 %v3447
  %5488 = vmatprep.subr.bf16.mxu0 %v3452
  %5489 = vmatpush1.bf16.msra.mxu0 %v3451
  %5490 = vmatprep.subr.bf16.mxu0 %v3456
  %5491 = vmatpush1.bf16.msra.mxu0 %v3455
  %5492 = vmatprep.subr.bf16.mxu0 %v3460
  %5493 = vmatpush1.bf16.msra.mxu0 %v3459
  %5494 = vmatprep.subr.bf16.mxu0 %v3464
  %5495 = vmatpush1.bf16.msra.mxu0 %v3463
  %5496 = vmatprep.subr.bf16.mxu0 %v3468
  %5497 = vmatpush1.bf16.msra.mxu0 %v3467
  %5498 = vmatprep.subr.bf16.mxu0 %v3472
  %5499 = vmatpush1.bf16.msra.mxu0 %v3471
  %5500 = vmatprep.mubr.bf16.mxu0 %v885
  %5501 = vmatmul.mubr.bf16.gmra.mrb[0].mxu0 %v884
  %v5502 = vpop.f32.mrb[0].mxu0
  %v5503 = vadd.f32 %v5462, %v5502
  %v5504 = vpop.f32.mrb[0].mxu0
  %v5505 = vadd.f32 %v5464, %v5504
  %v5506 = vpop.f32.mrb[0].mxu0
  %v5507 = vpop.f32.mrb[0].mxu0
  %5508 = vdwg.mxu0
  %5509 = vmatprep.subr.bf16.mxu0 %v3476
  %5510 = vmatpush1.bf16.msra.mxu0 %v3475
  %5511 = vmatprep.subr.bf16.mxu0 %v3480
  %5512 = vmatpush1.bf16.msra.mxu0 %v3479
  %5513 = vmatprep.subr.bf16.mxu0 %v3484
  %5514 = vmatpush1.bf16.msra.mxu0 %v3483
  %5515 = vmatprep.subr.bf16.mxu0 %v3488
  %5516 = vmatpush1.bf16.msra.mxu0 %v3487
  %5517 = vmatprep.subr.bf16.mxu0 %v3492
  %5518 = vmatpush1.bf16.msra.mxu0 %v3491
  %5519 = vmatprep.subr.bf16.mxu0 %v3496
  %5520 = vmatpush1.bf16.msra.mxu0 %v3495
  %5521 = vmatprep.subr.bf16.mxu0 %v3500
  %5522 = vmatpush1.bf16.msra.mxu0 %v3499
  %5523 = vmatprep.subr.bf16.mxu0 %v3504
  %5524 = vmatpush1.bf16.msra.mxu0 %v3503
  %5525 = vmatprep.subr.bf16.mxu0 %v3508
  %5526 = vmatpush1.bf16.msra.mxu0 %v3507
  %5527 = vmatprep.subr.bf16.mxu0 %v3512
  %5528 = vmatpush1.bf16.msra.mxu0 %v3511
  %5529 = vmatprep.subr.bf16.mxu0 %v3516
  %5530 = vmatpush1.bf16.msra.mxu0 %v3515
  %5531 = vmatprep.subr.bf16.mxu0 %v3520
  %5532 = vmatpush1.bf16.msra.mxu0 %v3519
  %5533 = vmatprep.subr.bf16.mxu0 %v3524
  %5534 = vmatpush1.bf16.msra.mxu0 %v3523
  %5535 = vmatprep.subr.bf16.mxu0 %v3528
  %5536 = vmatpush1.bf16.msra.mxu0 %v3527
  %5537 = vmatprep.subr.bf16.mxu0 %v3532
  %5538 = vmatpush1.bf16.msra.mxu0 %v3531
  %5539 = vmatprep.subr.bf16.mxu0 %v3536
  %5540 = vmatpush1.bf16.msra.mxu0 %v3535
  %5541 = vmatprep.mubr.bf16.mxu0 %v887
  %5542 = vmatmul.mubr.bf16.gmra.mrb[0].mxu0 %v886
  %v5543 = vpop.f32.mrb[0].mxu0
  %v5544 = vadd.f32 %v5503, %v5543
  %v5545 = vpop.f32.mrb[0].mxu0
  %v5546 = vadd.f32 %v5505, %v5545
  %v5547 = vpop.f32.mrb[0].mxu0
  %v5548 = vpop.f32.mrb[0].mxu0
  %5549 = vdwg.mxu0
  %5550 = vmatprep.subr.bf16.mxu0 %v3540
  %5551 = vmatpush1.bf16.msra.mxu0 %v3539
  %5552 = vmatprep.subr.bf16.mxu0 %v3544
  %5553 = vmatpush1.bf16.msra.mxu0 %v3543
  %5554 = vmatprep.subr.bf16.mxu0 %v3548
  %5555 = vmatpush1.bf16.msra.mxu0 %v3547
  %5556 = vmatprep.subr.bf16.mxu0 %v3552
  %5557 = vmatpush1.bf16.msra.mxu0 %v3551
  %5558 = vmatprep.subr.bf16.mxu0 %v3556
  %5559 = vmatpush1.bf16.msra.mxu0 %v3555
  %5560 = vmatprep.subr.bf16.mxu0 %v3560
  %5561 = vmatpush1.bf16.msra.mxu0 %v3559
  %5562 = vmatprep.subr.bf16.mxu0 %v3564
  %5563 = vmatpush1.bf16.msra.mxu0 %v3563
  %5564 = vmatprep.subr.bf16.mxu0 %v3568
  %5565 = vmatpush1.bf16.msra.mxu0 %v3567
  %5566 = vmatprep.subr.bf16.mxu0 %v3572
  %5567 = vmatpush1.bf16.msra.mxu0 %v3571
  %5568 = vmatprep.subr.bf16.mxu0 %v3576
  %5569 = vmatpush1.bf16.msra.mxu0 %v3575
  %5570 = vmatprep.subr.bf16.mxu0 %v3580
  %5571 = vmatpush1.bf16.msra.mxu0 %v3579
  %5572 = vmatprep.subr.bf16.mxu0 %v3584
  %5573 = vmatpush1.bf16.msra.mxu0 %v3583
  %5574 = vmatprep.subr.bf16.mxu0 %v3588
  %5575 = vmatpush1.bf16.msra.mxu0 %v3587
  %5576 = vmatprep.subr.bf16.mxu0 %v3592
  %5577 = vmatpush1.bf16.msra.mxu0 %v3591
  %5578 = vmatprep.subr.bf16.mxu0 %v3596
  %5579 = vmatpush1.bf16.msra.mxu0 %v3595
  %5580 = vmatprep.subr.bf16.mxu0 %v3600
  %5581 = vmatpush1.bf16.msra.mxu0 %v3599
  %5582 = vmatprep.mubr.bf16.mxu0 %v889
  %5583 = vmatmul.mubr.bf16.gmra.mrb[0].mxu0 %v888
  %v5584 = vpop.f32.mrb[0].mxu0
  %v5585 = vadd.f32 %v5544, %v5584
  %v5586 = vpop.f32.mrb[0].mxu0
  %v5587 = vadd.f32 %v5546, %v5586
  %v5588 = vpop.f32.mrb[0].mxu0
  %v5589 = vpop.f32.mrb[0].mxu0
  %5590 = vdwg.mxu0
  %5591 = vmatprep.subr.bf16.mxu0 %v3604
  %5592 = vmatpush1.bf16.msra.mxu0 %v3603
  %5593 = vmatprep.subr.bf16.mxu0 %v3608
  %5594 = vmatpush1.bf16.msra.mxu0 %v3607
  %5595 = vmatprep.subr.bf16.mxu0 %v3612
  %5596 = vmatpush1.bf16.msra.mxu0 %v3611
  %5597 = vmatprep.subr.bf16.mxu0 %v3616
  %5598 = vmatpush1.bf16.msra.mxu0 %v3615
  %5599 = vmatprep.subr.bf16.mxu0 %v3620
  %5600 = vmatpush1.bf16.msra.mxu0 %v3619
  %5601 = vmatprep.subr.bf16.mxu0 %v3624
  %5602 = vmatpush1.bf16.msra.mxu0 %v3623
  %5603 = vmatprep.subr.bf16.mxu0 %v3628
  %5604 = vmatpush1.bf16.msra.mxu0 %v3627
  %5605 = vmatprep.subr.bf16.mxu0 %v3632
  %5606 = vmatpush1.bf16.msra.mxu0 %v3631
  %5607 = vmatprep.subr.bf16.mxu0 %v3636
  %5608 = vmatpush1.bf16.msra.mxu0 %v3635
  %5609 = vmatprep.subr.bf16.mxu0 %v3640
  %5610 = vmatpush1.bf16.msra.mxu0 %v3639
  %5611 = vmatprep.subr.bf16.mxu0 %v3644
  %5612 = vmatpush1.bf16.msra.mxu0 %v3643
  %5613 = vmatprep.subr.bf16.mxu0 %v3648
  %5614 = vmatpush1.bf16.msra.mxu0 %v3647
  %5615 = vmatprep.subr.bf16.mxu0 %v3652
  %5616 = vmatpush1.bf16.msra.mxu0 %v3651
  %5617 = vmatprep.subr.bf16.mxu0 %v3656
  %5618 = vmatpush1.bf16.msra.mxu0 %v3655
  %5619 = vmatprep.subr.bf16.mxu0 %v3660
  %5620 = vmatpush1.bf16.msra.mxu0 %v3659
  %5621 = vmatprep.subr.bf16.mxu0 %v3664
  %5622 = vmatpush1.bf16.msra.mxu0 %v3663
  %5623 = vmatprep.mubr.bf16.mxu0 %v891
  %5624 = vmatmul.mubr.bf16.gmra.mrb[0].mxu0 %v890
  %v5625 = vpop.f32.mrb[0].mxu0
  %v5626 = vadd.f32 %v5585, %v5625
  %v5627 = vpop.f32.mrb[0].mxu0
  %v5628 = vadd.f32 %v5587, %v5627
  %v5629 = vpop.f32.mrb[0].mxu0
  %v5630 = vpop.f32.mrb[0].mxu0
  %5631 = vdwg.mxu0
  %5632 = vmatprep.subr.bf16.mxu0 %v3668
  %5633 = vmatpush1.bf16.msra.mxu0 %v3667
  %5634 = vmatprep.subr.bf16.mxu0 %v3672
  %5635 = vmatpush1.bf16.msra.mxu0 %v3671
  %5636 = vmatprep.subr.bf16.mxu0 %v3676
  %5637 = vmatpush1.bf16.msra.mxu0 %v3675
  %5638 = vmatprep.subr.bf16.mxu0 %v3680
  %5639 = vmatpush1.bf16.msra.mxu0 %v3679
  %5640 = vmatprep.subr.bf16.mxu0 %v3684
  %5641 = vmatpush1.bf16.msra.mxu0 %v3683
  %5642 = vmatprep.subr.bf16.mxu0 %v3688
  %5643 = vmatpush1.bf16.msra.mxu0 %v3687
  %5644 = vmatprep.subr.bf16.mxu0 %v3692
  %5645 = vmatpush1.bf16.msra.mxu0 %v3691
  %5646 = vmatprep.subr.bf16.mxu0 %v3696
  %5647 = vmatpush1.bf16.msra.mxu0 %v3695
  %5648 = vmatprep.subr.bf16.mxu0 %v3700
  %5649 = vmatpush1.bf16.msra.mxu0 %v3699
  %5650 = vmatprep.subr.bf16.mxu0 %v3704
  %5651 = vmatpush1.bf16.msra.mxu0 %v3703
  %5652 = vmatprep.subr.bf16.mxu0 %v3708
  %5653 = vmatpush1.bf16.msra.mxu0 %v3707
  %5654 = vmatprep.subr.bf16.mxu0 %v3712
  %5655 = vmatpush1.bf16.msra.mxu0 %v3711
  %5656 = vmatprep.subr.bf16.mxu0 %v3716
  %5657 = vmatpush1.bf16.msra.mxu0 %v3715
  %5658 = vmatprep.subr.bf16.mxu0 %v3720
  %5659 = vmatpush1.bf16.msra.mxu0 %v3719
  %5660 = vmatprep.subr.bf16.mxu0 %v3724
  %5661 = vmatpush1.bf16.msra.mxu0 %v3723
  %5662 = vmatprep.subr.bf16.mxu0 %v3728
  %5663 = vmatpush1.bf16.msra.mxu0 %v3727
  %5664 = vmatprep.mubr.bf16.mxu0 %v893
  %5665 = vmatmul.mubr.bf16.gmra.mrb[0].mxu0 %v892
  %v5666 = vpop.f32.mrb[0].mxu0
  %v5667 = vadd.f32 %v5626, %v5666
  %v5668 = vpop.f32.mrb[0].mxu0
  %v5669 = vadd.f32 %v5628, %v5668
  %v5670 = vpop.f32.mrb[0].mxu0
  %v5671 = vpop.f32.mrb[0].mxu0
  %5672 = vdwg.mxu0
  %5673 = vmatprep.subr.bf16.mxu0 %v3732
  %5674 = vmatpush1.bf16.msra.mxu0 %v3731
  %5675 = vmatprep.subr.bf16.mxu0 %v3736
  %5676 = vmatpush1.bf16.msra.mxu0 %v3735
  %5677 = vmatprep.subr.bf16.mxu0 %v3740
  %5678 = vmatpush1.bf16.msra.mxu0 %v3739
  %5679 = vmatprep.subr.bf16.mxu0 %v3744
  %5680 = vmatpush1.bf16.msra.mxu0 %v3743
  %5681 = vmatprep.subr.bf16.mxu0 %v3748
  %5682 = vmatpush1.bf16.msra.mxu0 %v3747
  %5683 = vmatprep.subr.bf16.mxu0 %v3752
  %5684 = vmatpush1.bf16.msra.mxu0 %v3751
  %5685 = vmatprep.subr.bf16.mxu0 %v3756
  %5686 = vmatpush1.bf16.msra.mxu0 %v3755
  %5687 = vmatprep.subr.bf16.mxu0 %v3760
  %5688 = vmatpush1.bf16.msra.mxu0 %v3759
  %5689 = vmatprep.subr.bf16.mxu0 %v3764
  %5690 = vmatpush1.bf16.msra.mxu0 %v3763
  %5691 = vmatprep.subr.bf16.mxu0 %v3768
  %5692 = vmatpush1.bf16.msra.mxu0 %v3767
  %5693 = vmatprep.subr.bf16.mxu0 %v3772
  %5694 = vmatpush1.bf16.msra.mxu0 %v3771
  %5695 = vmatprep.subr.bf16.mxu0 %v3776
  %5696 = vmatpush1.bf16.msra.mxu0 %v3775
  %5697 = vmatprep.subr.bf16.mxu0 %v3780
  %5698 = vmatpush1.bf16.msra.mxu0 %v3779
  %5699 = vmatprep.subr.bf16.mxu0 %v3784
  %5700 = vmatpush1.bf16.msra.mxu0 %v3783
  %5701 = vmatprep.subr.bf16.mxu0 %v3788
  %5702 = vmatpush1.bf16.msra.mxu0 %v3787
  %5703 = vmatprep.subr.bf16.mxu0 %v3792
  %5704 = vmatpush1.bf16.msra.mxu0 %v3791
  %5705 = vmatprep.mubr.bf16.mxu0 %v895
  %5706 = vmatmul.mubr.bf16.gmra.mrb[0].mxu0 %v894
  %v5707 = vpop.f32.mrb[0].mxu0
  %v5708 = vadd.f32 %v5667, %v5707
  %v5709 = vpop.f32.mrb[0].mxu0
  %v5710 = vadd.f32 %v5669, %v5709
  %v5711 = vpop.f32.mrb[0].mxu0
  %v5712 = vpop.f32.mrb[0].mxu0
  %5713 = vdwg.mxu0
  %5714 = vmatprep.subr.bf16.mxu0 %v3796
  %5715 = vmatpush1.bf16.msra.mxu0 %v3795
  %5716 = vmatprep.subr.bf16.mxu0 %v3800
  %5717 = vmatpush1.bf16.msra.mxu0 %v3799
  %5718 = vmatprep.subr.bf16.mxu0 %v3804
  %5719 = vmatpush1.bf16.msra.mxu0 %v3803
  %5720 = vmatprep.subr.bf16.mxu0 %v3808
  %5721 = vmatpush1.bf16.msra.mxu0 %v3807
  %5722 = vmatprep.subr.bf16.mxu0 %v3812
  %5723 = vmatpush1.bf16.msra.mxu0 %v3811
  %5724 = vmatprep.subr.bf16.mxu0 %v3816
  %5725 = vmatpush1.bf16.msra.mxu0 %v3815
  %5726 = vmatprep.subr.bf16.mxu0 %v3820
  %5727 = vmatpush1.bf16.msra.mxu0 %v3819
  %5728 = vmatprep.subr.bf16.mxu0 %v3824
  %5729 = vmatpush1.bf16.msra.mxu0 %v3823
  %5730 = vmatprep.subr.bf16.mxu0 %v3828
  %5731 = vmatpush1.bf16.msra.mxu0 %v3827
  %5732 = vmatprep.subr.bf16.mxu0 %v3832
  %5733 = vmatpush1.bf16.msra.mxu0 %v3831
  %5734 = vmatprep.subr.bf16.mxu0 %v3836
  %5735 = vmatpush1.bf16.msra.mxu0 %v3835
  %5736 = vmatprep.subr.bf16.mxu0 %v3840
  %5737 = vmatpush1.bf16.msra.mxu0 %v3839
  %5738 = vmatprep.subr.bf16.mxu0 %v3844
  %5739 = vmatpush1.bf16.msra.mxu0 %v3843
  %5740 = vmatprep.subr.bf16.mxu0 %v3848
  %5741 = vmatpush1.bf16.msra.mxu0 %v3847
  %5742 = vmatprep.subr.bf16.mxu0 %v3852
  %5743 = vmatpush1.bf16.msra.mxu0 %v3851
  %5744 = vmatprep.subr.bf16.mxu0 %v3856
  %5745 = vmatpush1.bf16.msra.mxu0 %v3855
  %5746 = vmatprep.mubr.bf16.mxu0 %v897
  %5747 = vmatmul.mubr.bf16.gmra.mrb[0].mxu0 %v896
  %v5748 = vpop.f32.mrb[0].mxu0
  %v5749 = vadd.f32 %v5708, %v5748
  %v5750 = vpop.f32.mrb[0].mxu0
  %v5751 = vadd.f32 %v5710, %v5750
  %v5752 = vpop.f32.mrb[0].mxu0
  %v5753 = vpop.f32.mrb[0].mxu0
  %5754 = vdwg.mxu0
  %5755 = vmatprep.subr.bf16.mxu0 %v3860
  %5756 = vmatpush1.bf16.msra.mxu0 %v3859
  %5757 = vmatprep.subr.bf16.mxu0 %v3864
  %5758 = vmatpush1.bf16.msra.mxu0 %v3863
  %5759 = vmatprep.subr.bf16.mxu0 %v3868
  %5760 = vmatpush1.bf16.msra.mxu0 %v3867
  %5761 = vmatprep.subr.bf16.mxu0 %v3872
  %5762 = vmatpush1.bf16.msra.mxu0 %v3871
  %5763 = vmatprep.subr.bf16.mxu0 %v3876
  %5764 = vmatpush1.bf16.msra.mxu0 %v3875
  %5765 = vmatprep.subr.bf16.mxu0 %v3880
  %5766 = vmatpush1.bf16.msra.mxu0 %v3879
  %5767 = vmatprep.subr.bf16.mxu0 %v3884
  %5768 = vmatpush1.bf16.msra.mxu0 %v3883
  %5769 = vmatprep.subr.bf16.mxu0 %v3888
  %5770 = vmatpush1.bf16.msra.mxu0 %v3887
  %5771 = vmatprep.subr.bf16.mxu0 %v3892
  %5772 = vmatpush1.bf16.msra.mxu0 %v3891
  %5773 = vmatprep.subr.bf16.mxu0 %v3896
  %5774 = vmatpush1.bf16.msra.mxu0 %v3895
  %5775 = vmatprep.subr.bf16.mxu0 %v3900
  %5776 = vmatpush1.bf16.msra.mxu0 %v3899
  %5777 = vmatprep.subr.bf16.mxu0 %v3904
  %5778 = vmatpush1.bf16.msra.mxu0 %v3903
  %5779 = vmatprep.subr.bf16.mxu0 %v3908
  %5780 = vmatpush1.bf16.msra.mxu0 %v3907
  %5781 = vmatprep.subr.bf16.mxu0 %v3912
  %5782 = vmatpush1.bf16.msra.mxu0 %v3911
  %5783 = vmatprep.subr.bf16.mxu0 %v3916
  %5784 = vmatpush1.bf16.msra.mxu0 %v3915
  %5785 = vmatprep.subr.bf16.mxu0 %v3920
  %5786 = vmatpush1.bf16.msra.mxu0 %v3919
  %5787 = vmatprep.mubr.bf16.mxu0 %v899
  %5788 = vmatmul.mubr.bf16.gmra.mrb[0].mxu0 %v898
  %v5789 = vpop.f32.mrb[0].mxu0
  %v5790 = vadd.f32 %v5749, %v5789
  %v5791 = vpop.f32.mrb[0].mxu0
  %v5792 = vadd.f32 %v5751, %v5791
  %v5793 = vpop.f32.mrb[0].mxu0
  %v5794 = vpop.f32.mrb[0].mxu0
  %5795 = vdwg.mxu0
  %5796 = vmatprep.subr.bf16.mxu0 %v3924
  %5797 = vmatpush1.bf16.msra.mxu0 %v3923
  %5798 = vmatprep.subr.bf16.mxu0 %v3928
  %5799 = vmatpush1.bf16.msra.mxu0 %v3927
  %5800 = vmatprep.subr.bf16.mxu0 %v3932
  %5801 = vmatpush1.bf16.msra.mxu0 %v3931
  %5802 = vmatprep.subr.bf16.mxu0 %v3936
  %5803 = vmatpush1.bf16.msra.mxu0 %v3935
  %5804 = vmatprep.subr.bf16.mxu0 %v3940
  %5805 = vmatpush1.bf16.msra.mxu0 %v3939
  %5806 = vmatprep.subr.bf16.mxu0 %v3944
  %5807 = vmatpush1.bf16.msra.mxu0 %v3943
  %5808 = vmatprep.subr.bf16.mxu0 %v3948
  %5809 = vmatpush1.bf16.msra.mxu0 %v3947
  %5810 = vmatprep.subr.bf16.mxu0 %v3952
  %5811 = vmatpush1.bf16.msra.mxu0 %v3951
  %5812 = vmatprep.subr.bf16.mxu0 %v3956
  %5813 = vmatpush1.bf16.msra.mxu0 %v3955
  %5814 = vmatprep.subr.bf16.mxu0 %v3960
  %5815 = vmatpush1.bf16.msra.mxu0 %v3959
  %5816 = vmatprep.subr.bf16.mxu0 %v3964
  %5817 = vmatpush1.bf16.msra.mxu0 %v3963
  %5818 = vmatprep.subr.bf16.mxu0 %v3968
  %5819 = vmatpush1.bf16.msra.mxu0 %v3967
  %5820 = vmatprep.subr.bf16.mxu0 %v3972
  %5821 = vmatpush1.bf16.msra.mxu0 %v3971
  %5822 = vmatprep.subr.bf16.mxu0 %v3976
  %5823 = vmatpush1.bf16.msra.mxu0 %v3975
  %5824 = vmatprep.subr.bf16.mxu0 %v3980
  %5825 = vmatpush1.bf16.msra.mxu0 %v3979
  %5826 = vmatprep.subr.bf16.mxu0 %v3984
  %5827 = vmatpush1.bf16.msra.mxu0 %v3983
  %5828 = vmatprep.mubr.bf16.mxu0 %v901
  %5829 = vmatmul.mubr.bf16.gmra.mrb[0].mxu0 %v900
  %v5830 = vpop.f32.mrb[0].mxu0
  %v5831 = vadd.f32 %v5790, %v5830
  %v5832 = vpop.f32.mrb[0].mxu0
  %v5833 = vadd.f32 %v5792, %v5832
  %v5834 = vpop.f32.mrb[0].mxu0
  %v5835 = vpop.f32.mrb[0].mxu0
  %5836 = vdwg.mxu0
  %5837 = vmatprep.subr.bf16.mxu0 %v3988
  %5838 = vmatpush1.bf16.msra.mxu0 %v3987
  %5839 = vmatprep.subr.bf16.mxu0 %v3992
  %5840 = vmatpush1.bf16.msra.mxu0 %v3991
  %5841 = vmatprep.subr.bf16.mxu0 %v3996
  %5842 = vmatpush1.bf16.msra.mxu0 %v3995
  %5843 = vmatprep.subr.bf16.mxu0 %v4000
  %5844 = vmatpush1.bf16.msra.mxu0 %v3999
  %5845 = vmatprep.subr.bf16.mxu0 %v4004
  %5846 = vmatpush1.bf16.msra.mxu0 %v4003
  %5847 = vmatprep.subr.bf16.mxu0 %v4008
  %5848 = vmatpush1.bf16.msra.mxu0 %v4007
  %5849 = vmatprep.subr.bf16.mxu0 %v4012
  %5850 = vmatpush1.bf16.msra.mxu0 %v4011
  %5851 = vmatprep.subr.bf16.mxu0 %v4016
  %5852 = vmatpush1.bf16.msra.mxu0 %v4015
  %5853 = vmatprep.subr.bf16.mxu0 %v4020
  %5854 = vmatpush1.bf16.msra.mxu0 %v4019
  %5855 = vmatprep.subr.bf16.mxu0 %v4024
  %5856 = vmatpush1.bf16.msra.mxu0 %v4023
  %5857 = vmatprep.subr.bf16.mxu0 %v4028
  %5858 = vmatpush1.bf16.msra.mxu0 %v4027
  %5859 = vmatprep.subr.bf16.mxu0 %v4032
  %5860 = vmatpush1.bf16.msra.mxu0 %v4031
  %5861 = vmatprep.subr.bf16.mxu0 %v4036
  %5862 = vmatpush1.bf16.msra.mxu0 %v4035
  %5863 = vmatprep.subr.bf16.mxu0 %v4040
  %5864 = vmatpush1.bf16.msra.mxu0 %v4039
  %5865 = vmatprep.subr.bf16.mxu0 %v4044
  %5866 = vmatpush1.bf16.msra.mxu0 %v4043
  %5867 = vmatprep.subr.bf16.mxu0 %v4048
  %5868 = vmatpush1.bf16.msra.mxu0 %v4047
  %5869 = vmatprep.mubr.bf16.mxu0 %v903
  %5870 = vmatmul.mubr.bf16.gmra.mrb[0].mxu0 %v902
  %v5871 = vpop.f32.mrb[0].mxu0
  %v5872 = vadd.f32 %v5831, %v5871
  %v5873 = vpop.f32.mrb[0].mxu0
  %v5874 = vadd.f32 %v5833, %v5873
  %v5875 = vpop.f32.mrb[0].mxu0
  %v5876 = vpop.f32.mrb[0].mxu0
  %5877 = vdwg.mxu0
  %5878 = vmatprep.subr.bf16.mxu0 %v4052
  %5879 = vmatpush1.bf16.msra.mxu0 %v4051
  %5880 = vmatprep.subr.bf16.mxu0 %v4056
  %5881 = vmatpush1.bf16.msra.mxu0 %v4055
  %5882 = vmatprep.subr.bf16.mxu0 %v4060
  %5883 = vmatpush1.bf16.msra.mxu0 %v4059
  %5884 = vmatprep.subr.bf16.mxu0 %v4064
  %5885 = vmatpush1.bf16.msra.mxu0 %v4063
  %5886 = vmatprep.subr.bf16.mxu0 0
  %5887 = vmatpush1.bf16.msra.mxu0 0
  %5888 = vmatprep.subr.bf16.mxu0 0
  %5889 = vmatpush1.bf16.msra.mxu0 0
  %5890 = vmatprep.subr.bf16.mxu0 0
  %5891 = vmatpush1.bf16.msra.mxu0 0
  %5892 = vmatprep.subr.bf16.mxu0 0
  %5893 = vmatpush1.bf16.msra.mxu0 0
  %5894 = vmatprep.subr.bf16.mxu0 0
  %5895 = vmatpush1.bf16.msra.mxu0 0
  %5896 = vmatprep.subr.bf16.mxu0 0
  %5897 = vmatpush1.bf16.msra.mxu0 0
  %5898 = vmatprep.subr.bf16.mxu0 0
  %5899 = vmatpush1.bf16.msra.mxu0 0
  %5900 = vmatprep.subr.bf16.mxu0 0
  %5901 = vmatpush1.bf16.msra.mxu0 0
  %5902 = vmatprep.subr.bf16.mxu0 0
  %5903 = vmatpush1.bf16.msra.mxu0 0
  %5904 = vmatprep.subr.bf16.mxu0 0
  %5905 = vmatpush1.bf16.msra.mxu0 0
  %5906 = vmatprep.subr.bf16.mxu0 0
  %5907 = vmatpush1.bf16.msra.mxu0 0
  %5908 = vmatprep.subr.bf16.mxu0 0
  %5909 = vmatpush1.bf16.msra.mxu0 0
  %5910 = vmatprep.mubr.bf16.mxu0 0
  %5911 = vmatmul.mubr.bf16.gmra.mrb[0].mxu0 %v4851
  %v5912 = vpop.f32.mrb[0].mxu0
  %v5913 = vadd.f32 %v5872, %v5912
  %v5914 = vpop.f32.mrb[0].mxu0
  %v5915 = vadd.f32 %v5874, %v5914
  %v5916 = vpop.f32.mrb[0].mxu0
  %v5917 = vpop.f32.mrb[0].mxu0
  %5918 = vdwg.mxu0
  %v5919 = vmax.f32 %v5380, 0.0
  %v5920 = vmax.f32 %v5382, 0.0
  %v5921 = vmax.f32 %v5913, 0.0
  %v5922 = vmax.f32 %v5915, 0.0
  %5923 = vst [vmem:[%s5] sm:$0xff] %v5919
  %5924 = vst [vmem:[%s5 + $0x8] sm:$0xff] %v5920
  %5925 = vst [vmem:[%s5 + $0x10] sm:$0xff] %v5921
  %5926 = vst [vmem:[%s5 + $0x18] sm:$0xff] %v5922
  %v5927 = vpack.c.bf16 %v5919, %v5919
  %v5928 = vpack.c.bf16 %v5920, %v5920
  %v5929 = vpack.c.bf16 %v5921, %v5921
  %v5930 = vpack.c.bf16 %v5922, %v5922
  %v5931 = vld [vmem:[%s3] sm:$0xf]
  %v5932 = vld [vmem:[%s3 + $0x4] sm:$0xf]
  %v5933 = vld [vmem:[%s3 + $0x8] sm:$0xf]
  %v5934 = vld [vmem:[%s3 + $0xc] sm:$0xf]
  %v5935 = vld [vmem:[%s3 + $0x10] sm:$0xf]
  %v5936 = vld [vmem:[%s3 + $0x14] sm:$0xf]
  %v5937 = vld [vmem:[%s3 + $0x18] sm:$0xf]
  %v5938 = vld [vmem:[%s3 + $0x1c] sm:$0xf]
  %v5939 = vld [vmem:[%s3 + $0x20] sm:$0xf]
  %v5940 = vld [vmem:[%s3 + $0x24] sm:$0xf]
  %v5941 = vld [vmem:[%s3 + $0x28] sm:$0xf]
  %v5942 = vld [vmem:[%s3 + $0x2c] sm:$0xf]
  %v5943 = vld [vmem:[%s3 + $0x30] sm:$0xf]
  %v5944 = vld [vmem:[%s3 + $0x34] sm:$0xf]
  %v5945 = vld [vmem:[%s3 + $0x38] sm:$0xf]
  %v5946 = vld [vmem:[%s3 + $0x3c] sm:$0xf]
  %v5947 = vld [vmem:[%s3 + $0x40] sm:$0xf]
  %v5948 = vld [vmem:[%s3 + $0x44] sm:$0xf]
  %v5949 = vld [vmem:[%s3 + $0x48] sm:$0xf]
  %v5950 = vld [vmem:[%s3 + $0x4c] sm:$0xf]
  %v5951 = vld [vmem:[%s3 + $0x50] sm:$0xf]
  %v5952 = vld [vmem:[%s3 + $0x54] sm:$0xf]
  %v5953 = vld [vmem:[%s3 + $0x58] sm:$0xf]
  %v5954 = vld [vmem:[%s3 + $0x5c] sm:$0xf]
  %v5955 = vld [vmem:[%s3 + $0x60] sm:$0xf]
  %v5956 = vld [vmem:[%s3 + $0x64] sm:$0xf]
  %v5957 = vld [vmem:[%s3 + $0x68] sm:$0xf]
  %v5958 = vld [vmem:[%s3 + $0x6c] sm:$0xf]
  %v5959 = vld [vmem:[%s3 + $0x70] sm:$0xf]
  %v5960 = vld [vmem:[%s3 + $0x74] sm:$0xf]
  %v5961 = vld [vmem:[%s3 + $0x78] sm:$0xf]
  %v5962 = vld [vmem:[%s3 + $0x7c] sm:$0xf]
  %v5963 = vld [vmem:[%s3 + $0x80] sm:$0xf]
  %v5964 = vld [vmem:[%s3 + $0x84] sm:$0xf]
  %v5965 = vld [vmem:[%s3 + $0x88] sm:$0xf]
  %v5966 = vld [vmem:[%s3 + $0x8c] sm:$0xf]
  %v5967 = vld [vmem:[%s3 + $0x90] sm:$0xf]
  %v5968 = vld [vmem:[%s3 + $0x94] sm:$0xf]
  %v5969 = vld [vmem:[%s3 + $0x98] sm:$0xf]
  %v5970 = vld [vmem:[%s3 + $0x9c] sm:$0xf]
  %v5971 = vld [vmem:[%s3 + $0xa0] sm:$0xf]
  %v5972 = vld [vmem:[%s3 + $0xa4] sm:$0xf]
  %v5973 = vld [vmem:[%s3 + $0xa8] sm:$0xf]
  %v5974 = vld [vmem:[%s3 + $0xac] sm:$0xf]
  %v5975 = vld [vmem:[%s3 + $0xb0] sm:$0xf]
  %v5976 = vld [vmem:[%s3 + $0xb4] sm:$0xf]
  %v5977 = vld [vmem:[%s3 + $0xb8] sm:$0xf]
  %v5978 = vld [vmem:[%s3 + $0xbc] sm:$0xf]
  %v5979 = vld [vmem:[%s3 + $0xc0] sm:$0xf]
  %v5980 = vld [vmem:[%s3 + $0xc4] sm:$0xf]
  %v5981 = vld [vmem:[%s3 + $0xc8] sm:$0xf]
  %v5982 = vld [vmem:[%s3 + $0xcc] sm:$0xf]
  %v5983 = vld [vmem:[%s3 + $0xd0] sm:$0xf]
  %v5984 = vld [vmem:[%s3 + $0xd4] sm:$0xf]
  %v5985 = vld [vmem:[%s3 + $0xd8] sm:$0xf]
  %v5986 = vld [vmem:[%s3 + $0xdc] sm:$0xf]
  %v5987 = vld [vmem:[%s3 + $0xe0] sm:$0xf]
  %v5988 = vld [vmem:[%s3 + $0xe4] sm:$0xf]
  %v5989 = vld [vmem:[%s3 + $0xe8] sm:$0xf]
  %v5990 = vld [vmem:[%s3 + $0xec] sm:$0xf]
  %v5991 = vld [vmem:[%s3 + $0xf0] sm:$0xf]
  %v5992 = vld [vmem:[%s3 + $0xf4] sm:$0xf]
  %v5993 = vld [vmem:[%s3 + $0xf8] sm:$0xf]
  %v5994 = vld [vmem:[%s3 + $0xfc] sm:$0xf]
  %v5995 = vld [vmem:[%s4] sm:$0x1]
  %v5997 = vlaneseq
  %v5998 = vshrl.u32 %v5997, 7
  %v5999 = vsub.s32 0, %v5998
  %v6000 = vrot.slane %v5995, %v5999
  %v6066 = vunpack.c.l.b16 %v5931
  %v6067 = vunpack.c.l.b16 %v5932
  %v6068 = vunpack.c.l.b16 %v5933
  %v6069 = vunpack.c.l.b16 %v5934
  %v6070 = vunpack.c.l.b16 %v5935
  %v6071 = vunpack.c.l.b16 %v5936
  %v6072 = vunpack.c.l.b16 %v5937
  %v6073 = vunpack.c.l.b16 %v5938
  %v6074 = vunpack.c.l.b16 %v5939
  %v6075 = vunpack.c.l.b16 %v5940
  %v6076 = vunpack.c.l.b16 %v5941
  %v6077 = vunpack.c.l.b16 %v5942
  %v6078 = vunpack.c.l.b16 %v5943
  %v6079 = vunpack.c.l.b16 %v5944
  %v6080 = vunpack.c.l.b16 %v5945
  %v6081 = vunpack.c.l.b16 %v5946
  %v6082 = vunpack.c.l.b16 %v5947
  %v6083 = vunpack.c.l.b16 %v5948
  %v6084 = vunpack.c.l.b16 %v5949
  %v6085 = vunpack.c.l.b16 %v5950
  %v6086 = vunpack.c.l.b16 %v5951
  %v6087 = vunpack.c.l.b16 %v5952
  %v6088 = vunpack.c.l.b16 %v5953
  %v6089 = vunpack.c.l.b16 %v5954
  %v6090 = vunpack.c.l.b16 %v5955
  %v6091 = vunpack.c.l.b16 %v5956
  %v6092 = vunpack.c.l.b16 %v5957
  %v6093 = vunpack.c.l.b16 %v5958
  %v6094 = vunpack.c.l.b16 %v5959
  %v6095 = vunpack.c.l.b16 %v5960
  %v6096 = vunpack.c.l.b16 %v5961
  %v6097 = vunpack.c.l.b16 %v5962
  %v6098 = vunpack.c.l.b16 %v5963
  %v6099 = vunpack.c.l.b16 %v5964
  %v6100 = vunpack.c.l.b16 %v5965
  %v6101 = vunpack.c.l.b16 %v5966
  %v6102 = vunpack.c.l.b16 %v5967
  %v6103 = vunpack.c.l.b16 %v5968
  %v6104 = vunpack.c.l.b16 %v5969
  %v6105 = vunpack.c.l.b16 %v5970
  %v6106 = vunpack.c.l.b16 %v5971
  %v6107 = vunpack.c.l.b16 %v5972
  %v6108 = vunpack.c.l.b16 %v5973
  %v6109 = vunpack.c.l.b16 %v5974
  %v6110 = vunpack.c.l.b16 %v5975
  %v6111 = vunpack.c.l.b16 %v5976
  %v6112 = vunpack.c.l.b16 %v5977
  %v6113 = vunpack.c.l.b16 %v5978
  %v6114 = vunpack.c.l.b16 %v5979
  %v6115 = vunpack.c.l.b16 %v5980
  %v6116 = vunpack.c.l.b16 %v5981
  %v6117 = vunpack.c.l.b16 %v5982
  %v6118 = vunpack.c.l.b16 %v5983
  %v6119 = vunpack.c.l.b16 %v5984
  %v6120 = vunpack.c.l.b16 %v5985
  %v6121 = vunpack.c.l.b16 %v5986
  %v6122 = vunpack.c.l.b16 %v5987
  %v6123 = vunpack.c.l.b16 %v5988
  %v6124 = vunpack.c.l.b16 %v5989
  %v6125 = vunpack.c.l.b16 %v5990
  %v6126 = vunpack.c.l.b16 %v5991
  %v6127 = vunpack.c.l.b16 %v5992
  %v6128 = vunpack.c.l.b16 %v5993
  %v6129 = vunpack.c.l.b16 %v5994
  %v6130 = vpack.c.b16 %v6067, %v6066
  %v6131 = vpack.c.b16 %v6069, %v6068
  %v6132 = vpack.c.b16 %v6071, %v6070
  %v6133 = vpack.c.b16 %v6073, %v6072
  %v6134 = vpack.c.b16 %v6075, %v6074
  %v6135 = vpack.c.b16 %v6077, %v6076
  %v6136 = vpack.c.b16 %v6079, %v6078
  %v6137 = vpack.c.b16 %v6081, %v6080
  %v6138 = vpack.c.b16 %v6083, %v6082
  %v6139 = vpack.c.b16 %v6085, %v6084
  %v6140 = vpack.c.b16 %v6087, %v6086
  %v6141 = vpack.c.b16 %v6089, %v6088
  %v6142 = vpack.c.b16 %v6091, %v6090
  %v6143 = vpack.c.b16 %v6093, %v6092
  %v6144 = vpack.c.b16 %v6095, %v6094
  %v6145 = vpack.c.b16 %v6097, %v6096
  %v6146 = vpack.c.b16 %v6099, %v6098
  %v6147 = vpack.c.b16 %v6101, %v6100
  %v6148 = vpack.c.b16 %v6103, %v6102
  %v6149 = vpack.c.b16 %v6105, %v6104
  %v6150 = vpack.c.b16 %v6107, %v6106
  %v6151 = vpack.c.b16 %v6109, %v6108
  %v6152 = vpack.c.b16 %v6111, %v6110
  %v6153 = vpack.c.b16 %v6113, %v6112
  %v6154 = vpack.c.b16 %v6115, %v6114
  %v6155 = vpack.c.b16 %v6117, %v6116
  %v6156 = vpack.c.b16 %v6119, %v6118
  %v6157 = vpack.c.b16 %v6121, %v6120
  %v6158 = vpack.c.b16 %v6123, %v6122
  %v6159 = vpack.c.b16 %v6125, %v6124
  %v6160 = vpack.c.b16 %v6127, %v6126
  %v6161 = vpack.c.b16 %v6129, %v6128
  %6194 = vmatprep.subr.bf16.mxu0 0
  %6195 = vmatpush1.bf16.msra.mxu0 %v6130
  %6196 = vmatprep.subr.bf16.mxu0 0
  %6197 = vmatpush1.bf16.msra.mxu0 %v6131
  %6198 = vmatprep.subr.bf16.mxu0 0
  %6199 = vmatpush1.bf16.msra.mxu0 %v6132
  %6200 = vmatprep.subr.bf16.mxu0 0
  %6201 = vmatpush1.bf16.msra.mxu0 %v6133
  %6202 = vmatprep.subr.bf16.mxu0 0
  %6203 = vmatpush1.bf16.msra.mxu0 %v6134
  %6204 = vmatprep.subr.bf16.mxu0 0
  %6205 = vmatpush1.bf16.msra.mxu0 %v6135
  %6206 = vmatprep.subr.bf16.mxu0 0
  %6207 = vmatpush1.bf16.msra.mxu0 %v6136
  %6208 = vmatprep.subr.bf16.mxu0 0
  %6209 = vmatpush1.bf16.msra.mxu0 %v6137
  %6210 = vmatprep.subr.bf16.mxu0 0
  %6211 = vmatpush1.bf16.msra.mxu0 %v6138
  %6212 = vmatprep.subr.bf16.mxu0 0
  %6213 = vmatpush1.bf16.msra.mxu0 %v6139
  %6214 = vmatprep.subr.bf16.mxu0 0
  %6215 = vmatpush1.bf16.msra.mxu0 %v6140
  %6216 = vmatprep.subr.bf16.mxu0 0
  %6217 = vmatpush1.bf16.msra.mxu0 %v6141
  %6218 = vmatprep.subr.bf16.mxu0 0
  %6219 = vmatpush1.bf16.msra.mxu0 %v6142
  %6220 = vmatprep.subr.bf16.mxu0 0
  %6221 = vmatpush1.bf16.msra.mxu0 %v6143
  %6222 = vmatprep.subr.bf16.mxu0 0
  %6223 = vmatpush1.bf16.msra.mxu0 %v6144
  %6224 = vmatprep.subr.bf16.mxu0 0
  %6225 = vmatpush1.bf16.msra.mxu0 %v6145
  %6226 = vmatprep.mubr.bf16.mxu0 %v5928
  %6227 = vmatmul.mubr.bf16.gmra.mrb[0].mxu0 %v5927
  %v6228 = vpop.f32.mrb[0].mxu0
  %v6229 = vadd.f32 %v6000, %v6228
  %v6230 = vpop.f32.mrb[0].mxu0
  %v6231 = vpop.f32.mrb[0].mxu0
  %v6232 = vpop.f32.mrb[0].mxu0
  %6233 = vdwg.mxu0
  %6234 = vmatprep.subr.bf16.mxu0 0
  %6235 = vmatpush1.bf16.msra.mxu0 %v6146
  %6236 = vmatprep.subr.bf16.mxu0 0
  %6237 = vmatpush1.bf16.msra.mxu0 %v6147
  %6238 = vmatprep.subr.bf16.mxu0 0
  %6239 = vmatpush1.bf16.msra.mxu0 %v6148
  %6240 = vmatprep.subr.bf16.mxu0 0
  %6241 = vmatpush1.bf16.msra.mxu0 %v6149
  %6242 = vmatprep.subr.bf16.mxu0 0
  %6243 = vmatpush1.bf16.msra.mxu0 %v6150
  %6244 = vmatprep.subr.bf16.mxu0 0
  %6245 = vmatpush1.bf16.msra.mxu0 %v6151
  %6246 = vmatprep.subr.bf16.mxu0 0
  %6247 = vmatpush1.bf16.msra.mxu0 %v6152
  %6248 = vmatprep.subr.bf16.mxu0 0
  %6249 = vmatpush1.bf16.msra.mxu0 %v6153
  %6250 = vmatprep.subr.bf16.mxu0 0
  %6251 = vmatpush1.bf16.msra.mxu0 %v6154
  %6252 = vmatprep.subr.bf16.mxu0 0
  %6253 = vmatpush1.bf16.msra.mxu0 %v6155
  %6254 = vmatprep.subr.bf16.mxu0 0
  %6255 = vmatpush1.bf16.msra.mxu0 %v6156
  %6256 = vmatprep.subr.bf16.mxu0 0
  %6257 = vmatpush1.bf16.msra.mxu0 %v6157
  %6258 = vmatprep.subr.bf16.mxu0 0
  %6259 = vmatpush1.bf16.msra.mxu0 %v6158
  %6260 = vmatprep.subr.bf16.mxu0 0
  %6261 = vmatpush1.bf16.msra.mxu0 %v6159
  %6262 = vmatprep.subr.bf16.mxu0 0
  %6263 = vmatpush1.bf16.msra.mxu0 %v6160
  %6264 = vmatprep.subr.bf16.mxu0 0
  %6265 = vmatpush1.bf16.msra.mxu0 %v6161
  %6266 = vmatprep.mubr.bf16.mxu0 %v5930
  %6267 = vmatmul.mubr.bf16.gmra.mrb[0].mxu0 %v5929
  %v6268 = vpop.f32.mrb[0].mxu0
  %v6269 = vadd.f32 %v6229, %v6268
  %v6270 = vpop.f32.mrb[0].mxu0
  %v6271 = vpop.f32.mrb[0].mxu0
  %v6272 = vpop.f32.mrb[0].mxu0
  %6273 = vdwg.mxu0
  %6274 = vst [vmem:[%s6] sm:$0xff] %v6269
  // Predicated region
  $region22: #{critic_forward.7} parent=0 // pred_check
    _
  $region23: #{critic_forward.7} parent=0 // pred_check_branch
    %6276 = sbr.rel (0) target = $region25
  $region24: #{critic_forward.7} parent=0 // pred_region
    _
  $region25: #{critic_forward.7} parent=0 // pred_fallthru
    _
  // Predicated region
  $region26: #{critic_forward.7} parent=0 // pred_check
    _
  $region27: #{critic_forward.7} parent=0 // pred_check_branch
    %6278 = sbr.rel (0) target = $region29
  $region28: #{critic_forward.7} parent=0 // pred_region
    _
  $region29: #{critic_forward.7} parent=0 // pred_fallthru
    _
  // Predicated region
  $region30: #{critic_forward.7} parent=0 // pred_check
    _
  $region31: #{critic_forward.7} parent=0 // pred_check_branch
    %6280 = sbr.rel (0) target = $region33
  $region32: #{critic_forward.7} parent=0 // pred_region
    _
  $region33: #{critic_forward.7} parent=0 // pred_fallthru
    _
  // Predicated region
  $region34: #{critic_forward.7} parent=0 // pred_check
    _
  $region35: #{critic_forward.7} parent=0 // pred_check_branch
    %6282 = sbr.rel (0) target = $region37
  $region36: #{critic_forward.7} parent=0 // pred_region
    _
  $region37: #{critic_forward.7} parent=0 // pred_fallthru
    _

</llo_original>
